<compile_context>
chip_gen: v6e
topology: v6e:2x2x1
jax: 0.10.0
libtpu: 0.0.40
codegen_flags: <defaults>
</compile_context>

<pallas_src>
import jax
import jax.numpy as jnp
from jax.experimental import pallas as pl
from jax.experimental.pallas import tpu as pltpu


def mlp_kernel(x_ref, w1_ref, s1_ref, b1_ref, w2_ref, b2_ref,
               w3_ref, s3_ref, b3_ref, o_ref):
    # Layer 1: int8 weights widened to bf16 (exact), MXU matmul with f32
    # accumulation, per-column dequant scale applied to the small f32 result.
    w1 = w1_ref[...].astype(jnp.bfloat16)
    h1 = jnp.dot(x_ref[...], w1, preferred_element_type=jnp.float32)
    h1 = jnp.maximum(h1 * s1_ref[...] + b1_ref[...], 0.0)

    # Layer 2: bf16 weights (small), f32 accumulate.
    h2 = jnp.dot(h1.astype(jnp.bfloat16), w2_ref[...],
                 preferred_element_type=jnp.float32)
    h2 = jnp.maximum(h2 + b2_ref[...], 0.0)

    # Layer 3: int8 weights, dequant on the result, f32 bias, f32 store.
    w3 = w3_ref[...].astype(jnp.bfloat16)
    out = jnp.dot(h2.astype(jnp.bfloat16), w3,
                  preferred_element_type=jnp.float32)
    o_ref[...] = (out * s3_ref[...] + b3_ref[...]).astype(o_ref.dtype)


def _round_up(n, m):
    return (n + m - 1) // m * m


def _device_kind():
    try:
        return jax.devices()[0].device_kind.lower()
    except Exception:
        return ""


def _quantize_int8(w):
    """Per-output-channel symmetric int8 quantization of w: (in, out) f32."""
    amax = jnp.max(jnp.abs(w), axis=0, keepdims=True)            # (1, out)
    scale = jnp.where(amax > 0, amax / 127.0, 1.0).astype(jnp.float32)
    q = jnp.clip(jnp.round(w / scale), -127, 127).astype(jnp.int8)
    return q, scale


def prepare_params(params_f32, out_dim):
    """Inference-time weight prep:
       * pad d_in and d_out to multiples of 128 (lane-aligned loads/stores),
       * quantize W1/W3 to int8 with per-output-channel f32 scales,
       * W2 -> bf16, biases stay f32."""
    w1, b1, w2, b2, w3, b3 = params_f32
    d_in = w1.shape[0]
    d_in_pad = _round_up(d_in, 128)
    d_out_pad = _round_up(out_dim, 128)
    if d_in_pad > d_in:
        w1 = jnp.pad(w1, ((0, d_in_pad - d_in), (0, 0)))
    if d_out_pad > out_dim:
        w3 = jnp.pad(w3, ((0, 0), (0, d_out_pad - out_dim)))
        b3 = jnp.pad(b3, ((0, 0), (0, d_out_pad - out_dim)))
    w1_q, s1 = _quantize_int8(w1)
    w3_q, s3 = _quantize_int8(w3)
    return (w1_q, s1, b1.astype(jnp.float32),
            w2.astype(jnp.bfloat16), b2.astype(jnp.float32),
            w3_q, s3, b3.astype(jnp.float32))


def flatten3d_to_2d(x, params, output_shape, *, batch_tile=None):
    """x: (B, input_dim) f32. params: output of prepare_params.
    Returns (B, output_shape[0], output_shape[1]) in float32."""
    w1, s1, b1, w2, b2, w3, s3, b3 = params
    B, d_in = x.shape
    d_in_pad, h1 = w1.shape
    h2 = w2.shape[1]
    d_out_pad = w3.shape[1]
    d_out = output_shape[0] * output_shape[1]
    assert d_out_pad >= d_out

    kind = _device_kind()
    if batch_tile is None:
        # v6e: 2x256x256 MXU -> 256-row tiles; v5e (128x128 MXU) and v7x
        # (keep VMEM headroom under its 64 MiB) stay at 128.
        batch_tile = 256 if "v6" in kind else 128
    vmem_limit = (40 if "v7" in kind else 48) * 1024 * 1024

    x = x.astype(jnp.bfloat16)
    if d_in_pad > d_in:
        x = jnp.pad(x, ((0, 0), (0, d_in_pad - d_in)))

    bm = B if B <= batch_tile else batch_tile
    grid = (pl.cdiv(B, bm),)

    def build_call(single_buffer_weights):
        resident = ({"pipeline_mode": pl.Buffered(1)}
                    if single_buffer_weights else {})
        return pl.pallas_call(
            mlp_kernel,
            out_shape=jax.ShapeDtypeStruct((B, d_out_pad), jnp.float32),
            grid_spec=pltpu.PrefetchScalarGridSpec(
                num_scalar_prefetch=0,
                grid=grid,
                in_specs=[
                    pl.BlockSpec((bm, d_in_pad), lambda i: (i, 0)),   # x tile
                    # Grid-invariant weights/scales/biases: single-buffered.
                    pl.BlockSpec((d_in_pad, h1), lambda i: (0, 0), **resident),
                    pl.BlockSpec((1, h1), lambda i: (0, 0), **resident),
                    pl.BlockSpec((1, h1), lambda i: (0, 0), **resident),
                    pl.BlockSpec((h1, h2), lambda i: (0, 0), **resident),
                    pl.BlockSpec((1, h2), lambda i: (0, 0), **resident),
                    pl.BlockSpec((h2, d_out_pad), lambda i: (0, 0), **resident),
                    pl.BlockSpec((1, d_out_pad), lambda i: (0, 0), **resident),
                    pl.BlockSpec((1, d_out_pad), lambda i: (0, 0), **resident),
                ],
                out_specs=pl.BlockSpec((bm, d_out_pad), lambda i: (i, 0)),
            ),
            compiler_params=pltpu.CompilerParams(
                dimension_semantics=("parallel",),
                vmem_limit_bytes=vmem_limit,
            ),
        )

    args = (x, w1, s1, b1, w2, b2, w3, s3, b3)
    try:
        out_flat = build_call(True)(*args)
    except Exception:
        # Fallback if this jax build rejects pipeline_mode=pl.Buffered(1):
        # default double-buffering still fits the demo and v5e/v6e real shapes.
        out_flat = build_call(False)(*args)

    return out_flat[:, :d_out].reshape(B, *output_shape)


def init_params(key, input_dim, hidden1, hidden2, out_dim, dtype=jnp.float32):
    """Deterministic synthetic init (torch-Linear-style uniform bounds)."""
    ks = jax.random.split(key, 6)

    def lin(kw, kb, fan_in, fan_out):
        bound = 1.0 / jnp.sqrt(fan_in)
        w = jax.random.uniform(kw, (fan_in, fan_out), dtype, -bound, bound)
        b = jax.random.uniform(kb, (1, fan_out), dtype, -bound, bound)
        return w, b

    w1, b1 = lin(ks[0], ks[1], input_dim, hidden1)
    w2, b2 = lin(ks[2], ks[3], hidden1, hidden2)
    w3, b3 = lin(ks[4], ks[5], hidden2, out_dim)
    return (w1, b1, w2, b2, w3, b3)


if __name__ == "__main__":
    # Small analogue of the default module: x is (batch, input_dim), MLP is
    # input_dim -> 1024 -> 512 -> prod(output_shape), output reshaped to
    # (batch, *output_shape).  288 and 544 are both 32 mod 128, exercising the
    # d_in and d_out padding paths of the real (4384, 4384) configuration.
    batch = 2
    input_dim = 288
    hidden1 = 1024
    hidden2 = 512
    output_shape = (8, 68)
    out_dim = output_shape[0] * output_shape[1]

    key = jax.random.PRNGKey(0)
    kx, kp = jax.random.split(key)
    x = jax.random.normal(kx, (batch, input_dim), dtype=jnp.float32)
    params_f32 = init_params(kp, input_dim, hidden1, hidden2, out_dim)
    params = prepare_params(params_f32, out_dim)

    out = flatten3d_to_2d(x, params, output_shape)
    out = jax.block_until_ready(out)

    # Full-precision (f32) reference = original module semantics.
    w1, b1, w2, b2, w3, b3 = params_f32
    hp = jax.lax.Precision.HIGHEST
    r = jnp.maximum(jnp.dot(x, w1, precision=hp) + b1, 0.0)
    r = jnp.maximum(jnp.dot(r, w2, precision=hp) + b2, 0.0)
    r = (jnp.dot(r, w3, precision=hp) + b3).reshape(batch, *output_shape)

    assert out.shape == (batch, *output_shape)
    max_err = float(jnp.max(jnp.abs(out - r)))
    assert jnp.allclose(out, r, atol=2e-2, rtol=2e-2), max_err

    print("KERNEL_OK")
</pallas_src>

<mosaic_0001>
module attributes {stable_mosaic.version = 11 : i64} {
  func.func @mlp_kernel(%arg0: i32, %arg1: memref<2x384xbf16, #tpu.memory_space<vmem>>, %arg2: memref<384x1024xi8, #tpu.memory_space<vmem>>, %arg3: memref<1x1024xf32, #tpu.memory_space<vmem>>, %arg4: memref<1x1024xf32, #tpu.memory_space<vmem>>, %arg5: memref<1024x512xbf16, #tpu.memory_space<vmem>>, %arg6: memref<1x512xf32, #tpu.memory_space<vmem>>, %arg7: memref<512x640xi8, #tpu.memory_space<vmem>>, %arg8: memref<1x640xf32, #tpu.memory_space<vmem>>, %arg9: memref<1x640xf32, #tpu.memory_space<vmem>>, %arg10: memref<2x640xf32, #tpu.memory_space<vmem>>) attributes {dimension_semantics = [#tpu.dimension_semantics<parallel>], iteration_bounds = array<i64: 1>, scalar_prefetch = 0 : i64, scratch_operands = 0 : i64, tpu.core_type = #tpu.core_type<tc>, window_params = [{transform_indices = @transform_0, window_bounds = array<i64: 2, 384>}, {pipeline_mode = #tpu.pipeline_mode<synchronous>, transform_indices = @transform_1, window_bounds = array<i64: 384, 1024>}, {pipeline_mode = #tpu.pipeline_mode<synchronous>, transform_indices = @transform_2, window_bounds = array<i64: 1, 1024>}, {pipeline_mode = #tpu.pipeline_mode<synchronous>, transform_indices = @transform_3, window_bounds = array<i64: 1, 1024>}, {pipeline_mode = #tpu.pipeline_mode<synchronous>, transform_indices = @transform_4, window_bounds = array<i64: 1024, 512>}, {pipeline_mode = #tpu.pipeline_mode<synchronous>, transform_indices = @transform_5, window_bounds = array<i64: 1, 512>}, {pipeline_mode = #tpu.pipeline_mode<synchronous>, transform_indices = @transform_6, window_bounds = array<i64: 512, 640>}, {pipeline_mode = #tpu.pipeline_mode<synchronous>, transform_indices = @transform_7, window_bounds = array<i64: 1, 640>}, {pipeline_mode = #tpu.pipeline_mode<synchronous>, transform_indices = @transform_8, window_bounds = array<i64: 1, 640>}, {transform_indices = @transform_9, window_bounds = array<i64: 2, 640>}]} {
    %c0 = arith.constant 0 : index
    %c0_0 = arith.constant 0 : index
    %0 = vector.load %arg2[%c0, %c0_0] : memref<384x1024xi8, #tpu.memory_space<vmem>>, vector<384x1024xi8>
    %1 = arith.sitofp %0 : vector<384x1024xi8> to vector<384x1024xbf16>
    %c0_1 = arith.constant 0 : index
    %c0_2 = arith.constant 0 : index
    %2 = vector.load %arg1[%c0_1, %c0_2] : memref<2x384xbf16, #tpu.memory_space<vmem>>, vector<2x384xbf16>
    %cst = arith.constant dense<0.000000e+00> : vector<2x1024xf32>
    %3 = tpu.matmul %2, %1, %cst {dimension_numbers = #tpu.dot_dimension_numbers<[1], [0], [0], [1], [0, 0, 1, 1], [], []>} : vector<2x384xbf16>, vector<384x1024xbf16>, vector<2x1024xf32> -> vector<2x1024xf32>
    %c0_3 = arith.constant 0 : index
    %c0_4 = arith.constant 0 : index
    %4 = vector.load %arg3[%c0_3, %c0_4] : memref<1x1024xf32, #tpu.memory_space<vmem>>, vector<1x1024xf32>
    %5 = vector.broadcast %4 : vector<1x1024xf32> to vector<2x1024xf32>
    %6 = arith.mulf %3, %5 : vector<2x1024xf32>
    %c0_5 = arith.constant 0 : index
    %c0_6 = arith.constant 0 : index
    %7 = vector.load %arg4[%c0_5, %c0_6] : memref<1x1024xf32, #tpu.memory_space<vmem>>, vector<1x1024xf32>
    %8 = vector.broadcast %7 : vector<1x1024xf32> to vector<2x1024xf32>
    %9 = arith.addf %6, %8 : vector<2x1024xf32>
    %cst_7 = arith.constant 0.000000e+00 : f32
    %10 = vector.broadcast %cst_7 : f32 to vector<2x1024xf32>
    %11 = arith.maximumf %9, %10 : vector<2x1024xf32>
    %12 = arith.truncf %11 : vector<2x1024xf32> to vector<2x1024xbf16>
    %c0_8 = arith.constant 0 : index
    %c0_9 = arith.constant 0 : index
    %13 = vector.load %arg5[%c0_8, %c0_9] : memref<1024x512xbf16, #tpu.memory_space<vmem>>, vector<1024x512xbf16>
    %cst_10 = arith.constant dense<0.000000e+00> : vector<2x512xf32>
    %14 = tpu.matmul %12, %13, %cst_10 {dimension_numbers = #tpu.dot_dimension_numbers<[1], [0], [0], [1], [0, 0, 1, 1], [], []>} : vector<2x1024xbf16>, vector<1024x512xbf16>, vector<2x512xf32> -> vector<2x512xf32>
    %c0_11 = arith.constant 0 : index
    %c0_12 = arith.constant 0 : index
    %15 = vector.load %arg6[%c0_11, %c0_12] : memref<1x512xf32, #tpu.memory_space<vmem>>, vector<1x512xf32>
    %16 = vector.broadcast %15 : vector<1x512xf32> to vector<2x512xf32>
    %17 = arith.addf %14, %16 : vector<2x512xf32>
    %cst_13 = arith.constant 0.000000e+00 : f32
    %18 = vector.broadcast %cst_13 : f32 to vector<2x512xf32>
    %19 = arith.maximumf %17, %18 : vector<2x512xf32>
    %c0_14 = arith.constant 0 : index
    %c0_15 = arith.constant 0 : index
    %20 = vector.load %arg7[%c0_14, %c0_15] : memref<512x640xi8, #tpu.memory_space<vmem>>, vector<512x640xi8>
    %21 = arith.sitofp %20 : vector<512x640xi8> to vector<512x640xbf16>
    %22 = arith.truncf %19 : vector<2x512xf32> to vector<2x512xbf16>
    %cst_16 = arith.constant dense<0.000000e+00> : vector<2x640xf32>
    %23 = tpu.matmul %22, %21, %cst_16 {dimension_numbers = #tpu.dot_dimension_numbers<[1], [0], [0], [1], [0, 0, 1, 1], [], []>} : vector<2x512xbf16>, vector<512x640xbf16>, vector<2x640xf32> -> vector<2x640xf32>
    %c0_17 = arith.constant 0 : index
    %c0_18 = arith.constant 0 : index
    %24 = vector.load %arg8[%c0_17, %c0_18] : memref<1x640xf32, #tpu.memory_space<vmem>>, vector<1x640xf32>
    %25 = vector.broadcast %24 : vector<1x640xf32> to vector<2x640xf32>
    %26 = arith.mulf %23, %25 : vector<2x640xf32>
    %c0_19 = arith.constant 0 : index
    %c0_20 = arith.constant 0 : index
    %27 = vector.load %arg9[%c0_19, %c0_20] : memref<1x640xf32, #tpu.memory_space<vmem>>, vector<1x640xf32>
    %28 = vector.broadcast %27 : vector<1x640xf32> to vector<2x640xf32>
    %29 = arith.addf %26, %28 : vector<2x640xf32>
    %c0_21 = arith.constant 0 : index
    %c0_22 = arith.constant 0 : index
    %30 = vector.load %arg10[%c0_21, %c0_22] : memref<2x640xf32, #tpu.memory_space<vmem>>, vector<2x640xf32>
    tpu.vector_store %arg10[%c0_21, %c0_22], %29 {strides = array<i32>} : memref<2x640xf32, #tpu.memory_space<vmem>>, vector<2x640xf32>,
    return
  }
  func.func @transform_0(%arg0: i32) -> (i32, i32) {
    %c0_i32 = arith.constant 0 : i32
    %c0_i32_0 = arith.constant 0 : i32
    return %arg0, %c0_i32 : i32, i32
  }
  func.func @transform_1(%arg0: i32) -> (i32, i32) {
    %c0_i32 = arith.constant 0 : i32
    %c0_i32_0 = arith.constant 0 : i32
    %c0_i32_1 = arith.constant 0 : i32
    return %c0_i32, %c0_i32_0 : i32, i32
  }
  func.func @transform_2(%arg0: i32) -> (i32, i32) {
    %c0_i32 = arith.constant 0 : i32
    %c0_i32_0 = arith.constant 0 : i32
    %c0_i32_1 = arith.constant 0 : i32
    return %c0_i32, %c0_i32_0 : i32, i32
  }
  func.func @transform_3(%arg0: i32) -> (i32, i32) {
    %c0_i32 = arith.constant 0 : i32
    %c0_i32_0 = arith.constant 0 : i32
    %c0_i32_1 = arith.constant 0 : i32
    return %c0_i32, %c0_i32_0 : i32, i32
  }
  func.func @transform_4(%arg0: i32) -> (i32, i32) {
    %c0_i32 = arith.constant 0 : i32
    %c0_i32_0 = arith.constant 0 : i32
    %c0_i32_1 = arith.constant 0 : i32
    return %c0_i32, %c0_i32_0 : i32, i32
  }
  func.func @transform_5(%arg0: i32) -> (i32, i32) {
    %c0_i32 = arith.constant 0 : i32
    %c0_i32_0 = arith.constant 0 : i32
    %c0_i32_1 = arith.constant 0 : i32
    return %c0_i32, %c0_i32_0 : i32, i32
  }
  func.func @transform_6(%arg0: i32) -> (i32, i32) {
    %c0_i32 = arith.constant 0 : i32
    %c0_i32_0 = arith.constant 0 : i32
    %c0_i32_1 = arith.constant 0 : i32
    return %c0_i32, %c0_i32_0 : i32, i32
  }
  func.func @transform_7(%arg0: i32) -> (i32, i32) {
    %c0_i32 = arith.constant 0 : i32
    %c0_i32_0 = arith.constant 0 : i32
    %c0_i32_1 = arith.constant 0 : i32
    return %c0_i32, %c0_i32_0 : i32, i32
  }
  func.func @transform_8(%arg0: i32) -> (i32, i32) {
    %c0_i32 = arith.constant 0 : i32
    %c0_i32_0 = arith.constant 0 : i32
    %c0_i32_1 = arith.constant 0 : i32
    return %c0_i32, %c0_i32_0 : i32, i32
  }
  func.func @transform_9(%arg0: i32) -> (i32, i32) {
    %c0_i32 = arith.constant 0 : i32
    %c0_i32_0 = arith.constant 0 : i32
    return %arg0, %c0_i32 : i32, i32
  }
}

module attributes {stable_mosaic.version = 11 : i64} {
  func.func @mlp_kernel(%arg0: i32, %arg1: memref<2x384xbf16, #tpu.memory_space<vmem>>, %arg2: memref<384x1024xi8, #tpu.memory_space<vmem>>, %arg3: memref<1x1024xf32, #tpu.memory_space<vmem>>, %arg4: memref<1x1024xf32, #tpu.memory_space<vmem>>, %arg5: memref<1024x512xbf16, #tpu.memory_space<vmem>>, %arg6: memref<1x512xf32, #tpu.memory_space<vmem>>, %arg7: memref<512x640xi8, #tpu.memory_space<vmem>>, %arg8: memref<1x640xf32, #tpu.memory_space<vmem>>, %arg9: memref<1x640xf32, #tpu.memory_space<vmem>>, %arg10: memref<2x640xf32, #tpu.memory_space<vmem>>) attributes {dimension_semantics = [#tpu.dimension_semantics<parallel>], iteration_bounds = array<i64: 1>, scalar_prefetch = 0 : i64, scratch_operands = 0 : i64, tpu.core_type = #tpu.core_type<tc>, window_params = [{transform_indices = @transform_0, window_bounds = array<i64: 2, 384>}, {pipeline_mode = #tpu.pipeline_mode<synchronous>, transform_indices = @transform_1, window_bounds = array<i64: 384, 1024>}, {pipeline_mode = #tpu.pipeline_mode<synchronous>, transform_indices = @transform_2, window_bounds = array<i64: 1, 1024>}, {pipeline_mode = #tpu.pipeline_mode<synchronous>, transform_indices = @transform_3, window_bounds = array<i64: 1, 1024>}, {pipeline_mode = #tpu.pipeline_mode<synchronous>, transform_indices = @transform_4, window_bounds = array<i64: 1024, 512>}, {pipeline_mode = #tpu.pipeline_mode<synchronous>, transform_indices = @transform_5, window_bounds = array<i64: 1, 512>}, {pipeline_mode = #tpu.pipeline_mode<synchronous>, transform_indices = @transform_6, window_bounds = array<i64: 512, 640>}, {pipeline_mode = #tpu.pipeline_mode<synchronous>, transform_indices = @transform_7, window_bounds = array<i64: 1, 640>}, {pipeline_mode = #tpu.pipeline_mode<synchronous>, transform_indices = @transform_8, window_bounds = array<i64: 1, 640>}, {transform_indices = @transform_9, window_bounds = array<i64: 2, 640>}]} {
    %c0 = arith.constant 0 : index
    %c0_0 = arith.constant 0 : index
    %0 = vector.load %arg2[%c0, %c0_0] : memref<384x1024xi8, #tpu.memory_space<vmem>>, vector<384x1024xi8>
    %1 = arith.sitofp %0 : vector<384x1024xi8> to vector<384x1024xbf16>
    %c0_1 = arith.constant 0 : index
    %c0_2 = arith.constant 0 : index
    %2 = vector.load %arg1[%c0_1, %c0_2] : memref<2x384xbf16, #tpu.memory_space<vmem>>, vector<2x384xbf16>
    %cst = arith.constant dense<0.000000e+00> : vector<2x1024xf32>
    %3 = tpu.matmul %2, %1, %cst {dimension_numbers = #tpu.dot_dimension_numbers<[1], [0], [0], [1], [0, 0, 1, 1], [], []>} : vector<2x384xbf16>, vector<384x1024xbf16>, vector<2x1024xf32> -> vector<2x1024xf32>
    %c0_3 = arith.constant 0 : index
    %c0_4 = arith.constant 0 : index
    %4 = vector.load %arg3[%c0_3, %c0_4] : memref<1x1024xf32, #tpu.memory_space<vmem>>, vector<1x1024xf32>
    %5 = vector.broadcast %4 : vector<1x1024xf32> to vector<2x1024xf32>
    %6 = arith.mulf %3, %5 : vector<2x1024xf32>
    %c0_5 = arith.constant 0 : index
    %c0_6 = arith.constant 0 : index
    %7 = vector.load %arg4[%c0_5, %c0_6] : memref<1x1024xf32, #tpu.memory_space<vmem>>, vector<1x1024xf32>
    %8 = vector.broadcast %7 : vector<1x1024xf32> to vector<2x1024xf32>
    %9 = arith.addf %6, %8 : vector<2x1024xf32>
    %cst_7 = arith.constant 0.000000e+00 : f32
    %10 = vector.broadcast %cst_7 : f32 to vector<2x1024xf32>
    %11 = arith.maximumf %9, %10 : vector<2x1024xf32>
    %12 = arith.truncf %11 : vector<2x1024xf32> to vector<2x1024xbf16>
    %c0_8 = arith.constant 0 : index
    %c0_9 = arith.constant 0 : index
    %13 = vector.load %arg5[%c0_8, %c0_9] : memref<1024x512xbf16, #tpu.memory_space<vmem>>, vector<1024x512xbf16>
    %cst_10 = arith.constant dense<0.000000e+00> : vector<2x512xf32>
    %14 = tpu.matmul %12, %13, %cst_10 {dimension_numbers = #tpu.dot_dimension_numbers<[1], [0], [0], [1], [0, 0, 1, 1], [], []>} : vector<2x1024xbf16>, vector<1024x512xbf16>, vector<2x512xf32> -> vector<2x512xf32>
    %c0_11 = arith.constant 0 : index
    %c0_12 = arith.constant 0 : index
    %15 = vector.load %arg6[%c0_11, %c0_12] : memref<1x512xf32, #tpu.memory_space<vmem>>, vector<1x512xf32>
    %16 = vector.broadcast %15 : vector<1x512xf32> to vector<2x512xf32>
    %17 = arith.addf %14, %16 : vector<2x512xf32>
    %cst_13 = arith.constant 0.000000e+00 : f32
    %18 = vector.broadcast %cst_13 : f32 to vector<2x512xf32>
    %19 = arith.maximumf %17, %18 : vector<2x512xf32>
    %c0_14 = arith.constant 0 : index
    %c0_15 = arith.constant 0 : index
    %20 = vector.load %arg7[%c0_14, %c0_15] : memref<512x640xi8, #tpu.memory_space<vmem>>, vector<512x640xi8>
    %21 = arith.sitofp %20 : vector<512x640xi8> to vector<512x640xbf16>
    %22 = arith.truncf %19 : vector<2x512xf32> to vector<2x512xbf16>
    %cst_16 = arith.constant dense<0.000000e+00> : vector<2x640xf32>
    %23 = tpu.matmul %22, %21, %cst_16 {dimension_numbers = #tpu.dot_dimension_numbers<[1], [0], [0], [1], [0, 0, 1, 1], [], []>} : vector<2x512xbf16>, vector<512x640xbf16>, vector<2x640xf32> -> vector<2x640xf32>
    %c0_17 = arith.constant 0 : index
    %c0_18 = arith.constant 0 : index
    %24 = vector.load %arg8[%c0_17, %c0_18] : memref<1x640xf32, #tpu.memory_space<vmem>>, vector<1x640xf32>
    %25 = vector.broadcast %24 : vector<1x640xf32> to vector<2x640xf32>
    %26 = arith.mulf %23, %25 : vector<2x640xf32>
    %c0_19 = arith.constant 0 : index
    %c0_20 = arith.constant 0 : index
    %27 = vector.load %arg9[%c0_19, %c0_20] : memref<1x640xf32, #tpu.memory_space<vmem>>, vector<1x640xf32>
    %28 = vector.broadcast %27 : vector<1x640xf32> to vector<2x640xf32>
    %29 = arith.addf %26, %28 : vector<2x640xf32>
    %c0_21 = arith.constant 0 : index
    %c0_22 = arith.constant 0 : index
    %30 = vector.load %arg10[%c0_21, %c0_22] : memref<2x640xf32, #tpu.memory_space<vmem>>, vector<2x640xf32>
    tpu.vector_store %arg10[%c0_21, %c0_22], %29 {strides = array<i32>} : memref<2x640xf32, #tpu.memory_space<vmem>>, vector<2x640xf32>,
    return
  }
  func.func @transform_0(%arg0: i32) -> (i32, i32) {
    %c0_i32 = arith.constant 0 : i32
    %c0_i32_0 = arith.constant 0 : i32
    return %arg0, %c0_i32 : i32, i32
  }
  func.func @transform_1(%arg0: i32) -> (i32, i32) {
    %c0_i32 = arith.constant 0 : i32
    %c0_i32_0 = arith.constant 0 : i32
    %c0_i32_1 = arith.constant 0 : i32
    return %c0_i32, %c0_i32_0 : i32, i32
  }
  func.func @transform_2(%arg0: i32) -> (i32, i32) {
    %c0_i32 = arith.constant 0 : i32
    %c0_i32_0 = arith.constant 0 : i32
    %c0_i32_1 = arith.constant 0 : i32
    return %c0_i32, %c0_i32_0 : i32, i32
  }
  func.func @transform_3(%arg0: i32) -> (i32, i32) {
    %c0_i32 = arith.constant 0 : i32
    %c0_i32_0 = arith.constant 0 : i32
    %c0_i32_1 = arith.constant 0 : i32
    return %c0_i32, %c0_i32_0 : i32, i32
  }
  func.func @transform_4(%arg0: i32) -> (i32, i32) {
    %c0_i32 = arith.constant 0 : i32
    %c0_i32_0 = arith.constant 0 : i32
    %c0_i32_1 = arith.constant 0 : i32
    return %c0_i32, %c0_i32_0 : i32, i32
  }
  func.func @transform_5(%arg0: i32) -> (i32, i32) {
    %c0_i32 = arith.constant 0 : i32
    %c0_i32_0 = arith.constant 0 : i32
    %c0_i32_1 = arith.constant 0 : i32
    return %c0_i32, %c0_i32_0 : i32, i32
  }
  func.func @transform_6(%arg0: i32) -> (i32, i32) {
    %c0_i32 = arith.constant 0 : i32
    %c0_i32_0 = arith.constant 0 : i32
    %c0_i32_1 = arith.constant 0 : i32
    return %c0_i32, %c0_i32_0 : i32, i32
  }
  func.func @transform_7(%arg0: i32) -> (i32, i32) {
    %c0_i32 = arith.constant 0 : i32
    %c0_i32_0 = arith.constant 0 : i32
    %c0_i32_1 = arith.constant 0 : i32
    return %c0_i32, %c0_i32_0 : i32, i32
  }
  func.func @transform_8(%arg0: i32) -> (i32, i32) {
    %c0_i32 = arith.constant 0 : i32
    %c0_i32_0 = arith.constant 0 : i32
    %c0_i32_1 = arith.constant 0 : i32
    return %c0_i32, %c0_i32_0 : i32, i32
  }
  func.func @transform_9(%arg0: i32) -> (i32, i32) {
    %c0_i32 = arith.constant 0 : i32
    %c0_i32_0 = arith.constant 0 : i32
    return %arg0, %c0_i32 : i32, i32
  }
}

</mosaic_0001>

<llo_original>
// kernel: tpu_custom_call.1
$region0: #{tpu_custom_call.1}
  #allocation0 [shape = 'u32[]', space=smem, size = 0x4, offset = 0x4, fixed_abs, tag = 'smem constant byte address 0x4 - core index']
  #allocation1 [shape = 'u32[144,128]{1,0:T(1,128)}', space=vmem, size = 0x12000, scoped, tag = 'internal scratch']
  %s0 = inlined_call_operand.hbm [shape: bf16[2,384], index: 0, kind: input, shape index: {}]
  %s1 = inlined_call_operand.hbm [shape: s8[384,1024], index: 1, kind: input, shape index: {}]
  %s2 = inlined_call_operand.hbm [shape: f32[1,1024], index: 2, kind: input, shape index: {}]
  %s3 = inlined_call_operand.hbm [shape: f32[1,1024], index: 3, kind: input, shape index: {}]
  %s4 = inlined_call_operand.hbm [shape: bf16[1024,512], index: 4, kind: input, shape index: {}]
  %s5 = inlined_call_operand.hbm [shape: f32[1,512], index: 5, kind: input, shape index: {}]
  %s6 = inlined_call_operand.hbm [shape: s8[512,640], index: 6, kind: input, shape index: {}]
  %s7 = inlined_call_operand.vmem [shape: f32[1,640], index: 7, kind: input, shape index: {}]
  %s8 = inlined_call_operand.vmem [shape: f32[1,640], index: 8, kind: input, shape index: {}]
  %s9 = inlined_call_operand.hbm [shape: f32[2,640], index: 9, kind: output, shape index: {}]
  %s10 = sld [smem:[#allocation0]]
  $region74: #{tpu_custom_call.1} parent=0
    _
  %s12 = ssub.s32 1, %s10
  %s13 = scalar_select 0, %s12, %s10
  $region1: #{tpu_custom_call.1} parent=0
    #allocation2 [shape = 'u8[1536]{0}', space=vmem, size = 0x800, scoped, tag = 'input window, operand 0, single buffered']
    #allocation3 [shape = 's32[1]{0}', space=sflag, size = 0x4, scoped, tag = 'scoped memory for tpu_custom_call.1']
    #allocation4 [shape = 's32[1]{0}', space=sflag, size = 0x4, scoped, tag = 'scoped memory for tpu_custom_call.1']
    #allocation5 [shape = 'u8[393216]{0}', space=vmem, size = 0x60000, scoped, tag = 'input window, operand 1, single buffered']
    #allocation6 [shape = 's32[1]{0}', space=sflag, size = 0x4, scoped, tag = 'scoped memory for tpu_custom_call.1']
    #allocation7 [shape = 'u8[4096]{0}', space=vmem, size = 0x1000, scoped, tag = 'input window, operand 2, single buffered']
    #allocation8 [shape = 'u8[4096]{0}', space=vmem, size = 0x1000, scoped, tag = 'input window, operand 3, single buffered']
    #allocation9 [shape = 's32[1]{0}', space=sflag, size = 0x4, scoped, tag = 'scoped memory for tpu_custom_call.1']
    #allocation10 [shape = 'u8[1048576]{0}', space=vmem, size = 0x100000, scoped, tag = 'input window, operand 4, single buffered']
    #allocation11 [shape = 'u8[2048]{0}', space=vmem, size = 0x800, scoped, tag = 'input window, operand 5, single buffered']
    #allocation12 [shape = 's32[1]{0}', space=sflag, size = 0x4, scoped, tag = 'scoped memory for tpu_custom_call.1']
    #allocation13 [shape = 'u8[327680]{0}', space=vmem, size = 0x50000, scoped, tag = 'input window, operand 6, single buffered']
    #allocation14 [shape = 'u8[5120]{0}', space=vmem, size = 0x1400, scoped, tag = 'output window, operand 0, single buffered']
    %14 = vsyncpa [#allocation3], 0
    %15 = vsyncpa [#allocation6], 0
    %16 = vsyncpa [#allocation9], 0
    %17 = vsyncpa [#allocation12], 0
    %18 = vsyncpa [#allocation4], 0
    // Predicated region
    $region2: #{tpu_custom_call.1} parent=1 // pred_check
      _
    $region3: #{tpu_custom_call.1} parent=1 // pred_check_branch
      %20 = sbr.rel (0) target = $region5
    $region4: #{tpu_custom_call.1} parent=1 // pred_region
      %s22 = ssub.s32 48, 48
      %23 = vsyncadd [#allocation3], %s22
      %s25 = sshll.u32 [#allocation2], 4
      %s26 = int_to_ptr.vmem [resolvable:$true] %s25
      %28 = dma.hbm_to_vmem [thread:$0]  %s0, 48, %s26, [#allocation3]
    $region5: #{tpu_custom_call.1} parent=1 // pred_fallthru
      _
    // Predicated region
    $region6: #{tpu_custom_call.1} parent=1 // pred_check
      _
    $region7: #{tpu_custom_call.1} parent=1 // pred_check_branch
      %30 = sbr.rel (0) target = $region9
    $region8: #{tpu_custom_call.1} parent=1 // pred_region
      %s32 = ssub.s32 12288, 12288
      %33 = vsyncadd [#allocation6], %s32
      %s34 = sshll.u32 [#allocation5], 4
      %s35 = int_to_ptr.vmem [resolvable:$true] %s34
      %40 = dma.hbm_to_vmem [thread:$0]  %s1, 12288, %s35, [#allocation6], 1024, 1024, 64
    $region9: #{tpu_custom_call.1} parent=1 // pred_fallthru
      _
    // Predicated region
    $region10: #{tpu_custom_call.1} parent=1 // pred_check
      _
    $region11: #{tpu_custom_call.1} parent=1 // pred_check_branch
      %42 = sbr.rel (0) target = $region13
    $region12: #{tpu_custom_call.1} parent=1 // pred_region
      %s44 = ssub.s32 128, 128
      %45 = vsyncadd [#allocation6], %s44
      %s47 = sshll.u32 [#allocation7], 4
      %s48 = int_to_ptr.vmem [resolvable:$true] %s47
      %50 = dma.hbm_to_vmem [thread:$0]  %s2, 128, %s48, [#allocation6]
    $region13: #{tpu_custom_call.1} parent=1 // pred_fallthru
      _
    // Predicated region
    $region14: #{tpu_custom_call.1} parent=1 // pred_check
      _
    $region15: #{tpu_custom_call.1} parent=1 // pred_check_branch
      %52 = sbr.rel (0) target = $region17
    $region16: #{tpu_custom_call.1} parent=1 // pred_region
      %s54 = ssub.s32 128, 128
      %55 = vsyncadd [#allocation9], %s54
      %s57 = sshll.u32 [#allocation8], 4
      %s58 = int_to_ptr.vmem [resolvable:$true] %s57
      %60 = dma.hbm_to_vmem [thread:$0]  %s3, 128, %s58, [#allocation9]
    $region17: #{tpu_custom_call.1} parent=1 // pred_fallthru
      _
    // Predicated region
    $region18: #{tpu_custom_call.1} parent=1 // pred_check
      _
    $region19: #{tpu_custom_call.1} parent=1 // pred_check_branch
      %62 = sbr.rel (0) target = $region21
    $region20: #{tpu_custom_call.1} parent=1 // pred_region
      %s64 = ssub.s32 32768, 32768
      %65 = vsyncadd [#allocation9], %s64
      %s66 = sshll.u32 [#allocation10], 4
      %s67 = int_to_ptr.vmem [resolvable:$true] %s66
      %72 = dma.hbm_to_vmem [thread:$0]  %s4, 32768, %s67, [#allocation9], 256, 256, 16
    $region21: #{tpu_custom_call.1} parent=1 // pred_fallthru
      _
    // Predicated region
    $region22: #{tpu_custom_call.1} parent=1 // pred_check
      _
    $region23: #{tpu_custom_call.1} parent=1 // pred_check_branch
      %74 = sbr.rel (0) target = $region25
    $region24: #{tpu_custom_call.1} parent=1 // pred_region
      %s76 = ssub.s32 64, 64
      %77 = vsyncadd [#allocation12], %s76
      %s79 = sshll.u32 [#allocation11], 4
      %s80 = int_to_ptr.vmem [resolvable:$true] %s79
      %82 = dma.hbm_to_vmem [thread:$0]  %s5, 64, %s80, [#allocation12]
    $region25: #{tpu_custom_call.1} parent=1 // pred_fallthru
      _
    // Predicated region
    $region26: #{tpu_custom_call.1} parent=1 // pred_check
      _
    $region27: #{tpu_custom_call.1} parent=1 // pred_check_branch
      %84 = sbr.rel (0) target = $region29
    $region28: #{tpu_custom_call.1} parent=1 // pred_region
      %s86 = ssub.s32 10240, 10240
      %87 = vsyncadd [#allocation12], %s86
      %s88 = sshll.u32 [#allocation13], 4
      %s89 = int_to_ptr.vmem [resolvable:$true] %s88
      %94 = dma.hbm_to_vmem [thread:$0]  %s6, 10240, %s89, [#allocation12], 640, 640, 40
    $region29: #{tpu_custom_call.1} parent=1 // pred_fallthru
      _
    // Predicated region
    $region30: #{tpu_custom_call.1} parent=1 // pred_check
      _
    $region31: #{tpu_custom_call.1} parent=1 // pred_check_branch
      %96 = sbr.rel (0) target = $region33
    $region32: #{tpu_custom_call.1} parent=1 // pred_region
      _
    $region33: #{tpu_custom_call.1} parent=1 // pred_fallthru
      _
    // Predicated region
    $region34: #{tpu_custom_call.1} parent=1 // pred_check
      _
    $region35: #{tpu_custom_call.1} parent=1 // pred_check_branch
      %98 = sbr.rel (0) target = $region37
    $region36: #{tpu_custom_call.1} parent=1 // pred_region
      _
    $region37: #{tpu_custom_call.1} parent=1 // pred_fallthru
      _
    // Predicated region
    $region38: #{tpu_custom_call.1} parent=1 // pred_check
      _
    $region39: #{tpu_custom_call.1} parent=1 // pred_check_branch
      %100 = sbr.rel (0) target = $region41
    $region40: #{tpu_custom_call.1} parent=1 // pred_region
      %101 = dma.done [#allocation3], 48
    $region41: #{tpu_custom_call.1} parent=1 // pred_fallthru
      _
    // Predicated region
    $region42: #{tpu_custom_call.1} parent=1 // pred_check
      _
    $region43: #{tpu_custom_call.1} parent=1 // pred_check_branch
      %103 = sbr.rel (0) target = $region45
    $region44: #{tpu_custom_call.1} parent=1 // pred_region
      %104 = dma.done [#allocation6], 12288
    $region45: #{tpu_custom_call.1} parent=1 // pred_fallthru
      _
    // Predicated region
    $region46: #{tpu_custom_call.1} parent=1 // pred_check
      _
    $region47: #{tpu_custom_call.1} parent=1 // pred_check_branch
      %106 = sbr.rel (0) target = $region49
    $region48: #{tpu_custom_call.1} parent=1 // pred_region
      %107 = dma.done [#allocation6], 128
    $region49: #{tpu_custom_call.1} parent=1 // pred_fallthru
      _
    // Predicated region
    $region50: #{tpu_custom_call.1} parent=1 // pred_check
      _
    $region51: #{tpu_custom_call.1} parent=1 // pred_check_branch
      %109 = sbr.rel (0) target = $region53
    $region52: #{tpu_custom_call.1} parent=1 // pred_region
      %110 = dma.done [#allocation9], 128
    $region53: #{tpu_custom_call.1} parent=1 // pred_fallthru
      _
    // Predicated region
    $region54: #{tpu_custom_call.1} parent=1 // pred_check
      _
    $region55: #{tpu_custom_call.1} parent=1 // pred_check_branch
      %112 = sbr.rel (0) target = $region57
    $region56: #{tpu_custom_call.1} parent=1 // pred_region
      %113 = dma.done [#allocation9], 32768
    $region57: #{tpu_custom_call.1} parent=1 // pred_fallthru
      _
    // Predicated region
    $region58: #{tpu_custom_call.1} parent=1 // pred_check
      _
    $region59: #{tpu_custom_call.1} parent=1 // pred_check_branch
      %115 = sbr.rel (0) target = $region61
    $region60: #{tpu_custom_call.1} parent=1 // pred_region
      %116 = dma.done [#allocation12], 64
    $region61: #{tpu_custom_call.1} parent=1 // pred_fallthru
      _
    // Predicated region
    $region62: #{tpu_custom_call.1} parent=1 // pred_check
      _
    $region63: #{tpu_custom_call.1} parent=1 // pred_check_branch
      %118 = sbr.rel (0) target = $region65
    $region64: #{tpu_custom_call.1} parent=1 // pred_region
      %119 = dma.done [#allocation12], 10240
    $region65: #{tpu_custom_call.1} parent=1 // pred_fallthru
      _
    %v121 = vld [vmem:[#allocation5] sm:$0xff]
    %v122 = vld [vmem:[#allocation5 + $0x8] sm:$0xff]
    %v123 = vld [vmem:[#allocation5 + $0x10] sm:$0xff]
    %v124 = vld [vmem:[#allocation5 + $0x18] sm:$0xff]
    %v125 = vld [vmem:[#allocation5 + $0x20] sm:$0xff]
    %v126 = vld [vmem:[#allocation5 + $0x28] sm:$0xff]
    %v127 = vld [vmem:[#allocation5 + $0x30] sm:$0xff]
    %v128 = vld [vmem:[#allocation5 + $0x38] sm:$0xff]
    %v129 = vld [vmem:[#allocation5 + $0x40] sm:$0xff]
    %v130 = vld [vmem:[#allocation5 + $0x48] sm:$0xff]
    %v131 = vld [vmem:[#allocation5 + $0x50] sm:$0xff]
    %v132 = vld [vmem:[#allocation5 + $0x58] sm:$0xff]
    %v133 = vld [vmem:[#allocation5 + $0x60] sm:$0xff]
    %v134 = vld [vmem:[#allocation5 + $0x68] sm:$0xff]
    %v135 = vld [vmem:[#allocation5 + $0x70] sm:$0xff]
    %v136 = vld [vmem:[#allocation5 + $0x78] sm:$0xff]
    %v137 = vld [vmem:[#allocation5 + $0x80] sm:$0xff]
    %v138 = vld [vmem:[#allocation5 + $0x88] sm:$0xff]
    %v139 = vld [vmem:[#allocation5 + $0x90] sm:$0xff]
    %v140 = vld [vmem:[#allocation5 + $0x98] sm:$0xff]
    %v141 = vld [vmem:[#allocation5 + $0xa0] sm:$0xff]
    %v142 = vld [vmem:[#allocation5 + $0xa8] sm:$0xff]
    %v143 = vld [vmem:[#allocation5 + $0xb0] sm:$0xff]
    %v144 = vld [vmem:[#allocation5 + $0xb8] sm:$0xff]
    %v145 = vld [vmem:[#allocation5 + $0xc0] sm:$0xff]
    %v146 = vld [vmem:[#allocation5 + $0xc8] sm:$0xff]
    %v147 = vld [vmem:[#allocation5 + $0xd0] sm:$0xff]
    %v148 = vld [vmem:[#allocation5 + $0xd8] sm:$0xff]
    %v149 = vld [vmem:[#allocation5 + $0xe0] sm:$0xff]
    %v150 = vld [vmem:[#allocation5 + $0xe8] sm:$0xff]
    %v151 = vld [vmem:[#allocation5 + $0xf0] sm:$0xff]
    %v152 = vld [vmem:[#allocation5 + $0xf8] sm:$0xff]
    %v153 = vld [vmem:[#allocation5 + $0x100] sm:$0xff]
    %v154 = vld [vmem:[#allocation5 + $0x108] sm:$0xff]
    %v155 = vld [vmem:[#allocation5 + $0x110] sm:$0xff]
    %v156 = vld [vmem:[#allocation5 + $0x118] sm:$0xff]
    %v157 = vld [vmem:[#allocation5 + $0x120] sm:$0xff]
    %v158 = vld [vmem:[#allocation5 + $0x128] sm:$0xff]
    %v159 = vld [vmem:[#allocation5 + $0x130] sm:$0xff]
    %v160 = vld [vmem:[#allocation5 + $0x138] sm:$0xff]
    %v161 = vld [vmem:[#allocation5 + $0x140] sm:$0xff]
    %v162 = vld [vmem:[#allocation5 + $0x148] sm:$0xff]
    %v163 = vld [vmem:[#allocation5 + $0x150] sm:$0xff]
    %v164 = vld [vmem:[#allocation5 + $0x158] sm:$0xff]
    %v165 = vld [vmem:[#allocation5 + $0x160] sm:$0xff]
    %v166 = vld [vmem:[#allocation5 + $0x168] sm:$0xff]
    %v167 = vld [vmem:[#allocation5 + $0x170] sm:$0xff]
    %v168 = vld [vmem:[#allocation5 + $0x178] sm:$0xff]
    %v169 = vld [vmem:[#allocation5 + $0x180] sm:$0xff]
    %v170 = vld [vmem:[#allocation5 + $0x188] sm:$0xff]
    %v171 = vld [vmem:[#allocation5 + $0x190] sm:$0xff]
    %v172 = vld [vmem:[#allocation5 + $0x198] sm:$0xff]
    %v173 = vld [vmem:[#allocation5 + $0x1a0] sm:$0xff]
    %v174 = vld [vmem:[#allocation5 + $0x1a8] sm:$0xff]
    %v175 = vld [vmem:[#allocation5 + $0x1b0] sm:$0xff]
    %v176 = vld [vmem:[#allocation5 + $0x1b8] sm:$0xff]
    %v177 = vld [vmem:[#allocation5 + $0x1c0] sm:$0xff]
    %v178 = vld [vmem:[#allocation5 + $0x1c8] sm:$0xff]
    %v179 = vld [vmem:[#allocation5 + $0x1d0] sm:$0xff]
    %v180 = vld [vmem:[#allocation5 + $0x1d8] sm:$0xff]
    %v181 = vld [vmem:[#allocation5 + $0x1e0] sm:$0xff]
    %v182 = vld [vmem:[#allocation5 + $0x1e8] sm:$0xff]
    %v183 = vld [vmem:[#allocation5 + $0x1f0] sm:$0xff]
    %v184 = vld [vmem:[#allocation5 + $0x1f8] sm:$0xff]
    %v185 = vld [vmem:[#allocation5 + $0x200] sm:$0xff]
    %v186 = vld [vmem:[#allocation5 + $0x208] sm:$0xff]
    %v187 = vld [vmem:[#allocation5 + $0x210] sm:$0xff]
    %v188 = vld [vmem:[#allocation5 + $0x218] sm:$0xff]
    %v189 = vld [vmem:[#allocation5 + $0x220] sm:$0xff]
    %v190 = vld [vmem:[#allocation5 + $0x228] sm:$0xff]
    %v191 = vld [vmem:[#allocation5 + $0x230] sm:$0xff]
    %v192 = vld [vmem:[#allocation5 + $0x238] sm:$0xff]
    %v193 = vld [vmem:[#allocation5 + $0x240] sm:$0xff]
    %v194 = vld [vmem:[#allocation5 + $0x248] sm:$0xff]
    %v195 = vld [vmem:[#allocation5 + $0x250] sm:$0xff]
    %v196 = vld [vmem:[#allocation5 + $0x258] sm:$0xff]
    %v197 = vld [vmem:[#allocation5 + $0x260] sm:$0xff]
    %v198 = vld [vmem:[#allocation5 + $0x268] sm:$0xff]
    %v199 = vld [vmem:[#allocation5 + $0x270] sm:$0xff]
    %v200 = vld [vmem:[#allocation5 + $0x278] sm:$0xff]
    %v201 = vld [vmem:[#allocation5 + $0x280] sm:$0xff]
    %v202 = vld [vmem:[#allocation5 + $0x288] sm:$0xff]
    %v203 = vld [vmem:[#allocation5 + $0x290] sm:$0xff]
    %v204 = vld [vmem:[#allocation5 + $0x298] sm:$0xff]
    %v205 = vld [vmem:[#allocation5 + $0x2a0] sm:$0xff]
    %v206 = vld [vmem:[#allocation5 + $0x2a8] sm:$0xff]
    %v207 = vld [vmem:[#allocation5 + $0x2b0] sm:$0xff]
    %v208 = vld [vmem:[#allocation5 + $0x2b8] sm:$0xff]
    %v209 = vld [vmem:[#allocation5 + $0x2c0] sm:$0xff]
    %v210 = vld [vmem:[#allocation5 + $0x2c8] sm:$0xff]
    %v211 = vld [vmem:[#allocation5 + $0x2d0] sm:$0xff]
    %v212 = vld [vmem:[#allocation5 + $0x2d8] sm:$0xff]
    %v213 = vld [vmem:[#allocation5 + $0x2e0] sm:$0xff]
    %v214 = vld [vmem:[#allocation5 + $0x2e8] sm:$0xff]
    %v215 = vld [vmem:[#allocation5 + $0x2f0] sm:$0xff]
    %v216 = vld [vmem:[#allocation5 + $0x2f8] sm:$0xff]
    %v217 = vunpack.c.l.s8.bf16 %v121
    %v218 = vunpack.c.l.s8.bf16 %v122
    %v219 = vunpack.c.l.s8.bf16 %v123
    %v220 = vunpack.c.l.s8.bf16 %v124
    %v221 = vunpack.c.l.s8.bf16 %v125
    %v222 = vunpack.c.l.s8.bf16 %v126
    %v223 = vunpack.c.l.s8.bf16 %v127
    %v224 = vunpack.c.l.s8.bf16 %v128
    %v225 = vunpack.c.h.s8.bf16 %v121
    %v226 = vunpack.c.h.s8.bf16 %v122
    %v227 = vunpack.c.h.s8.bf16 %v123
    %v228 = vunpack.c.h.s8.bf16 %v124
    %v229 = vunpack.c.h.s8.bf16 %v125
    %v230 = vunpack.c.h.s8.bf16 %v126
    %v231 = vunpack.c.h.s8.bf16 %v127
    %v232 = vunpack.c.h.s8.bf16 %v128
    %v233 = vunpack.c.l.s8.bf16 %v129
    %v234 = vunpack.c.l.s8.bf16 %v130
    %v235 = vunpack.c.l.s8.bf16 %v131
    %v236 = vunpack.c.l.s8.bf16 %v132
    %v237 = vunpack.c.l.s8.bf16 %v133
    %v238 = vunpack.c.l.s8.bf16 %v134
    %v239 = vunpack.c.l.s8.bf16 %v135
    %v240 = vunpack.c.l.s8.bf16 %v136
    %v241 = vunpack.c.h.s8.bf16 %v129
    %v242 = vunpack.c.h.s8.bf16 %v130
    %v243 = vunpack.c.h.s8.bf16 %v131
    %v244 = vunpack.c.h.s8.bf16 %v132
    %v245 = vunpack.c.h.s8.bf16 %v133
    %v246 = vunpack.c.h.s8.bf16 %v134
    %v247 = vunpack.c.h.s8.bf16 %v135
    %v248 = vunpack.c.h.s8.bf16 %v136
    %v249 = vunpack.c.l.s8.bf16 %v137
    %v250 = vunpack.c.l.s8.bf16 %v138
    %v251 = vunpack.c.l.s8.bf16 %v139
    %v252 = vunpack.c.l.s8.bf16 %v140
    %v253 = vunpack.c.l.s8.bf16 %v141
    %v254 = vunpack.c.l.s8.bf16 %v142
    %v255 = vunpack.c.l.s8.bf16 %v143
    %v256 = vunpack.c.l.s8.bf16 %v144
    %v257 = vunpack.c.h.s8.bf16 %v137
    %v258 = vunpack.c.h.s8.bf16 %v138
    %v259 = vunpack.c.h.s8.bf16 %v139
    %v260 = vunpack.c.h.s8.bf16 %v140
    %v261 = vunpack.c.h.s8.bf16 %v141
    %v262 = vunpack.c.h.s8.bf16 %v142
    %v263 = vunpack.c.h.s8.bf16 %v143
    %v264 = vunpack.c.h.s8.bf16 %v144
    %v265 = vunpack.c.l.s8.bf16 %v145
    %v266 = vunpack.c.l.s8.bf16 %v146
    %v267 = vunpack.c.l.s8.bf16 %v147
    %v268 = vunpack.c.l.s8.bf16 %v148
    %v269 = vunpack.c.l.s8.bf16 %v149
    %v270 = vunpack.c.l.s8.bf16 %v150
    %v271 = vunpack.c.l.s8.bf16 %v151
    %v272 = vunpack.c.l.s8.bf16 %v152
    %v273 = vunpack.c.h.s8.bf16 %v145
    %v274 = vunpack.c.h.s8.bf16 %v146
    %v275 = vunpack.c.h.s8.bf16 %v147
    %v276 = vunpack.c.h.s8.bf16 %v148
    %v277 = vunpack.c.h.s8.bf16 %v149
    %v278 = vunpack.c.h.s8.bf16 %v150
    %v279 = vunpack.c.h.s8.bf16 %v151
    %v280 = vunpack.c.h.s8.bf16 %v152
    %v281 = vunpack.c.l.s8.bf16 %v153
    %v282 = vunpack.c.l.s8.bf16 %v154
    %v283 = vunpack.c.l.s8.bf16 %v155
    %v284 = vunpack.c.l.s8.bf16 %v156
    %v285 = vunpack.c.l.s8.bf16 %v157
    %v286 = vunpack.c.l.s8.bf16 %v158
    %v287 = vunpack.c.l.s8.bf16 %v159
    %v288 = vunpack.c.l.s8.bf16 %v160
    %v289 = vunpack.c.h.s8.bf16 %v153
    %v290 = vunpack.c.h.s8.bf16 %v154
    %v291 = vunpack.c.h.s8.bf16 %v155
    %v292 = vunpack.c.h.s8.bf16 %v156
    %v293 = vunpack.c.h.s8.bf16 %v157
    %v294 = vunpack.c.h.s8.bf16 %v158
    %v295 = vunpack.c.h.s8.bf16 %v159
    %v296 = vunpack.c.h.s8.bf16 %v160
    %v297 = vunpack.c.l.s8.bf16 %v161
    %v298 = vunpack.c.l.s8.bf16 %v162
    %v299 = vunpack.c.l.s8.bf16 %v163
    %v300 = vunpack.c.l.s8.bf16 %v164
    %v301 = vunpack.c.l.s8.bf16 %v165
    %v302 = vunpack.c.l.s8.bf16 %v166
    %v303 = vunpack.c.l.s8.bf16 %v167
    %v304 = vunpack.c.l.s8.bf16 %v168
    %v305 = vunpack.c.h.s8.bf16 %v161
    %v306 = vunpack.c.h.s8.bf16 %v162
    %v307 = vunpack.c.h.s8.bf16 %v163
    %v308 = vunpack.c.h.s8.bf16 %v164
    %v309 = vunpack.c.h.s8.bf16 %v165
    %v310 = vunpack.c.h.s8.bf16 %v166
    %v311 = vunpack.c.h.s8.bf16 %v167
    %v312 = vunpack.c.h.s8.bf16 %v168
    %v313 = vunpack.c.l.s8.bf16 %v169
    %v314 = vunpack.c.l.s8.bf16 %v170
    %v315 = vunpack.c.l.s8.bf16 %v171
    %v316 = vunpack.c.l.s8.bf16 %v172
    %v317 = vunpack.c.l.s8.bf16 %v173
    %v318 = vunpack.c.l.s8.bf16 %v174
    %v319 = vunpack.c.l.s8.bf16 %v175
    %v320 = vunpack.c.l.s8.bf16 %v176
    %v321 = vunpack.c.h.s8.bf16 %v169
    %v322 = vunpack.c.h.s8.bf16 %v170
    %v323 = vunpack.c.h.s8.bf16 %v171
    %v324 = vunpack.c.h.s8.bf16 %v172
    %v325 = vunpack.c.h.s8.bf16 %v173
    %v326 = vunpack.c.h.s8.bf16 %v174
    %v327 = vunpack.c.h.s8.bf16 %v175
    %v328 = vunpack.c.h.s8.bf16 %v176
    %v329 = vunpack.c.l.s8.bf16 %v177
    %v330 = vunpack.c.l.s8.bf16 %v178
    %v331 = vunpack.c.l.s8.bf16 %v179
    %v332 = vunpack.c.l.s8.bf16 %v180
    %v333 = vunpack.c.l.s8.bf16 %v181
    %v334 = vunpack.c.l.s8.bf16 %v182
    %v335 = vunpack.c.l.s8.bf16 %v183
    %v336 = vunpack.c.l.s8.bf16 %v184
    %v337 = vunpack.c.h.s8.bf16 %v177
    %v338 = vunpack.c.h.s8.bf16 %v178
    %v339 = vunpack.c.h.s8.bf16 %v179
    %v340 = vunpack.c.h.s8.bf16 %v180
    %v341 = vunpack.c.h.s8.bf16 %v181
    %v342 = vunpack.c.h.s8.bf16 %v182
    %v343 = vunpack.c.h.s8.bf16 %v183
    %v344 = vunpack.c.h.s8.bf16 %v184
    %v345 = vunpack.c.l.s8.bf16 %v185
    %v346 = vunpack.c.l.s8.bf16 %v186
    %v347 = vunpack.c.l.s8.bf16 %v187
    %v348 = vunpack.c.l.s8.bf16 %v188
    %v349 = vunpack.c.l.s8.bf16 %v189
    %v350 = vunpack.c.l.s8.bf16 %v190
    %v351 = vunpack.c.l.s8.bf16 %v191
    %v352 = vunpack.c.l.s8.bf16 %v192
    %v353 = vunpack.c.h.s8.bf16 %v185
    %v354 = vunpack.c.h.s8.bf16 %v186
    %v355 = vunpack.c.h.s8.bf16 %v187
    %v356 = vunpack.c.h.s8.bf16 %v188
    %v357 = vunpack.c.h.s8.bf16 %v189
    %v358 = vunpack.c.h.s8.bf16 %v190
    %v359 = vunpack.c.h.s8.bf16 %v191
    %v360 = vunpack.c.h.s8.bf16 %v192
    %v361 = vunpack.c.l.s8.bf16 %v193
    %v362 = vunpack.c.l.s8.bf16 %v194
    %v363 = vunpack.c.l.s8.bf16 %v195
    %v364 = vunpack.c.l.s8.bf16 %v196
    %v365 = vunpack.c.l.s8.bf16 %v197
    %v366 = vunpack.c.l.s8.bf16 %v198
    %v367 = vunpack.c.l.s8.bf16 %v199
    %v368 = vunpack.c.l.s8.bf16 %v200
    %v369 = vunpack.c.h.s8.bf16 %v193
    %v370 = vunpack.c.h.s8.bf16 %v194
    %v371 = vunpack.c.h.s8.bf16 %v195
    %v372 = vunpack.c.h.s8.bf16 %v196
    %v373 = vunpack.c.h.s8.bf16 %v197
    %v374 = vunpack.c.h.s8.bf16 %v198
    %v375 = vunpack.c.h.s8.bf16 %v199
    %v376 = vunpack.c.h.s8.bf16 %v200
    %v377 = vunpack.c.l.s8.bf16 %v201
    %v378 = vunpack.c.l.s8.bf16 %v202
    %v379 = vunpack.c.l.s8.bf16 %v203
    %v380 = vunpack.c.l.s8.bf16 %v204
    %v381 = vunpack.c.l.s8.bf16 %v205
    %v382 = vunpack.c.l.s8.bf16 %v206
    %v383 = vunpack.c.l.s8.bf16 %v207
    %v384 = vunpack.c.l.s8.bf16 %v208
    %v385 = vunpack.c.h.s8.bf16 %v201
    %v386 = vunpack.c.h.s8.bf16 %v202
    %v387 = vunpack.c.h.s8.bf16 %v203
    %v388 = vunpack.c.h.s8.bf16 %v204
    %v389 = vunpack.c.h.s8.bf16 %v205
    %v390 = vunpack.c.h.s8.bf16 %v206
    %v391 = vunpack.c.h.s8.bf16 %v207
    %v392 = vunpack.c.h.s8.bf16 %v208
    %v393 = vunpack.c.l.s8.bf16 %v209
    %v394 = vunpack.c.l.s8.bf16 %v210
    %v395 = vunpack.c.l.s8.bf16 %v211
    %v396 = vunpack.c.l.s8.bf16 %v212
    %v397 = vunpack.c.l.s8.bf16 %v213
    %v398 = vunpack.c.l.s8.bf16 %v214
    %v399 = vunpack.c.l.s8.bf16 %v215
    %v400 = vunpack.c.l.s8.bf16 %v216
    %v401 = vunpack.c.h.s8.bf16 %v209
    %v402 = vunpack.c.h.s8.bf16 %v210
    %v403 = vunpack.c.h.s8.bf16 %v211
    %v404 = vunpack.c.h.s8.bf16 %v212
    %v405 = vunpack.c.h.s8.bf16 %v213
    %v406 = vunpack.c.h.s8.bf16 %v214
    %v407 = vunpack.c.h.s8.bf16 %v215
    %v408 = vunpack.c.h.s8.bf16 %v216
    %v409 = vld [vmem:[#allocation2] sm:$0x7]
    %v412 = vunpack.c.l.s4 1966171168
    %v413 = vunpack.c.0.s8 %v412
    %v414 = vlaneseq
    %v415 = vshrl.u32 %v414, 7
    %v416 = vsub.s32 %v413, %v415
    %v417 = vrot.slane %v409, %v416
    %v418 = vcombine.high %v417, %v417
    %v420 = vunpack.c.l.s4 1966171168
    %v421 = vunpack.c.0.s8 %v420
    %v422 = vlaneseq
    %v423 = vshrl.u32 %v422, 7
    %v424 = vsub.s32 %v421, %v423
    %v425 = vrot.slane %v417, %v424
    %v427 = vunpack.c.l.s4 1966171168
    %v428 = vunpack.c.0.s8 %v427
    %v429 = vlaneseq
    %v430 = vshrl.u32 %v429, 7
    %v431 = vsub.s32 %v428, %v430
    %v432 = vrot.slane %v418, %v431
    %v433 = vcombine.high %v425, %v425
    %437 = vmatprep.subr.bf16.mxu0 %v274
    %438 = vmatpush1.bf16.msra.mxu0 %v273
    %439 = vmatprep.subr.bf16.mxu0 %v266
    %440 = vmatpush1.bf16.msra.mxu0 %v265
    %441 = vmatprep.subr.bf16.mxu0 %v258
    %442 = vmatpush1.bf16.msra.mxu0 %v257
    %443 = vmatprep.subr.bf16.mxu0 %v250
    %444 = vmatpush1.bf16.msra.mxu0 %v249
    %445 = vmatprep.subr.bf16.mxu0 %v242
    %446 = vmatpush1.bf16.msra.mxu0 %v241
    %447 = vmatprep.subr.bf16.mxu0 %v234
    %448 = vmatpush1.bf16.msra.mxu0 %v233
    %449 = vmatprep.subr.bf16.mxu0 %v226
    %450 = vmatpush1.bf16.msra.mxu0 %v225
    %451 = vmatprep.subr.bf16.mxu0 %v218
    %452 = vmatpush1.bf16.msra.mxu0 %v217
    %453 = vmatprep.subr.bf16.mxu0 %v338
    %454 = vmatpush2.bf16.msra.mxu0 %v337
    %455 = vmatprep.subr.bf16.mxu0 %v330
    %456 = vmatpush2.bf16.msra.mxu0 %v329
    %457 = vmatprep.subr.bf16.mxu0 %v322
    %458 = vmatpush2.bf16.msra.mxu0 %v321
    %459 = vmatprep.subr.bf16.mxu0 %v314
    %460 = vmatpush2.bf16.msra.mxu0 %v313
    %461 = vmatprep.subr.bf16.mxu0 %v306
    %462 = vmatpush2.bf16.msra.mxu0 %v305
    %463 = vmatprep.subr.bf16.mxu0 %v298
    %464 = vmatpush2.bf16.msra.mxu0 %v297
    %465 = vmatprep.subr.bf16.mxu0 %v290
    %466 = vmatpush2.bf16.msra.mxu0 %v289
    %467 = vmatprep.subr.bf16.mxu0 %v282
    %468 = vmatpush2.bf16.msra.mxu0 %v281
    %469 = vmatprep.mubr.bf16.mxu0 %v432
    %470 = vmatmul.mubr.bf16.gmra.mxu0 %v425
    %v471 = vpop.f32.mrf.mxu0
    %v472 = vadd.f32 0.0, %v471
    %v473 = vpop.f32.mrf.mxu0
    %v474 = vadd.f32 0.0, %v473
    %v475 = vpop.f32.mrf.mxu0
    %v476 = vpop.f32.mrf.mxu0
    %477 = vdwg.mxu0
    %478 = vmatprep.subr.bf16.mxu0 %v402
    %479 = vmatpush1.bf16.msra.mxu0 %v401
    %480 = vmatprep.subr.bf16.mxu0 %v394
    %481 = vmatpush1.bf16.msra.mxu0 %v393
    %482 = vmatprep.subr.bf16.mxu0 %v386
    %483 = vmatpush1.bf16.msra.mxu0 %v385
    %484 = vmatprep.subr.bf16.mxu0 %v378
    %485 = vmatpush1.bf16.msra.mxu0 %v377
    %486 = vmatprep.subr.bf16.mxu0 %v370
    %487 = vmatpush1.bf16.msra.mxu0 %v369
    %488 = vmatprep.subr.bf16.mxu0 %v362
    %489 = vmatpush1.bf16.msra.mxu0 %v361
    %490 = vmatprep.subr.bf16.mxu0 %v354
    %491 = vmatpush1.bf16.msra.mxu0 %v353
    %492 = vmatprep.subr.bf16.mxu0 %v346
    %493 = vmatpush1.bf16.msra.mxu0 %v345
    %494 = vmatprep.subr.bf16.mxu0 0
    %495 = vmatpush2.bf16.msra.mxu0 0
    %496 = vmatprep.subr.bf16.mxu0 0
    %497 = vmatpush2.bf16.msra.mxu0 0
    %498 = vmatprep.subr.bf16.mxu0 0
    %499 = vmatpush2.bf16.msra.mxu0 0
    %500 = vmatprep.subr.bf16.mxu0 0
    %501 = vmatpush2.bf16.msra.mxu0 0
    %502 = vmatprep.subr.bf16.mxu0 0
    %503 = vmatpush2.bf16.msra.mxu0 0
    %504 = vmatprep.subr.bf16.mxu0 0
    %505 = vmatpush2.bf16.msra.mxu0 0
    %506 = vmatprep.subr.bf16.mxu0 0
    %507 = vmatpush2.bf16.msra.mxu0 0
    %508 = vmatprep.subr.bf16.mxu0 0
    %509 = vmatpush2.bf16.msra.mxu0 0
    %510 = vmatprep.mubr.bf16.mxu0 0
    %511 = vmatmul.mubr.bf16.gmra.mxu0 %v433
    %v512 = vpop.f32.mrf.mxu0
    %v513 = vadd.f32 %v472, %v512
    %v514 = vpop.f32.mrf.mxu0
    %v515 = vadd.f32 %v474, %v514
    %v516 = vpop.f32.mrf.mxu0
    %v517 = vpop.f32.mrf.mxu0
    %518 = vdwg.mxu0
    %519 = vmatprep.subr.bf16.mxu0 %v276
    %520 = vmatpush1.bf16.msra.mxu0 %v275
    %521 = vmatprep.subr.bf16.mxu0 %v268
    %522 = vmatpush1.bf16.msra.mxu0 %v267
    %523 = vmatprep.subr.bf16.mxu0 %v260
    %524 = vmatpush1.bf16.msra.mxu0 %v259
    %525 = vmatprep.subr.bf16.mxu0 %v252
    %526 = vmatpush1.bf16.msra.mxu0 %v251
    %527 = vmatprep.subr.bf16.mxu0 %v244
    %528 = vmatpush1.bf16.msra.mxu0 %v243
    %529 = vmatprep.subr.bf16.mxu0 %v236
    %530 = vmatpush1.bf16.msra.mxu0 %v235
    %531 = vmatprep.subr.bf16.mxu0 %v228
    %532 = vmatpush1.bf16.msra.mxu0 %v227
    %533 = vmatprep.subr.bf16.mxu0 %v220
    %534 = vmatpush1.bf16.msra.mxu0 %v219
    %535 = vmatprep.subr.bf16.mxu0 %v340
    %536 = vmatpush2.bf16.msra.mxu0 %v339
    %537 = vmatprep.subr.bf16.mxu0 %v332
    %538 = vmatpush2.bf16.msra.mxu0 %v331
    %539 = vmatprep.subr.bf16.mxu0 %v324
    %540 = vmatpush2.bf16.msra.mxu0 %v323
    %541 = vmatprep.subr.bf16.mxu0 %v316
    %542 = vmatpush2.bf16.msra.mxu0 %v315
    %543 = vmatprep.subr.bf16.mxu0 %v308
    %544 = vmatpush2.bf16.msra.mxu0 %v307
    %545 = vmatprep.subr.bf16.mxu0 %v300
    %546 = vmatpush2.bf16.msra.mxu0 %v299
    %547 = vmatprep.subr.bf16.mxu0 %v292
    %548 = vmatpush2.bf16.msra.mxu0 %v291
    %549 = vmatprep.subr.bf16.mxu0 %v284
    %550 = vmatpush2.bf16.msra.mxu0 %v283
    %551 = vmatprep.mubr.bf16.mxu0 %v432
    %552 = vmatmul.mubr.bf16.gmra.mxu0 %v425
    %v553 = vpop.f32.mrf.mxu0
    %v554 = vadd.f32 0.0, %v553
    %v555 = vpop.f32.mrf.mxu0
    %v556 = vadd.f32 0.0, %v555
    %v557 = vpop.f32.mrf.mxu0
    %v558 = vpop.f32.mrf.mxu0
    %559 = vdwg.mxu0
    %560 = vmatprep.subr.bf16.mxu0 %v404
    %561 = vmatpush1.bf16.msra.mxu0 %v403
    %562 = vmatprep.subr.bf16.mxu0 %v396
    %563 = vmatpush1.bf16.msra.mxu0 %v395
    %564 = vmatprep.subr.bf16.mxu0 %v388
    %565 = vmatpush1.bf16.msra.mxu0 %v387
    %566 = vmatprep.subr.bf16.mxu0 %v380
    %567 = vmatpush1.bf16.msra.mxu0 %v379
    %568 = vmatprep.subr.bf16.mxu0 %v372
    %569 = vmatpush1.bf16.msra.mxu0 %v371
    %570 = vmatprep.subr.bf16.mxu0 %v364
    %571 = vmatpush1.bf16.msra.mxu0 %v363
    %572 = vmatprep.subr.bf16.mxu0 %v356
    %573 = vmatpush1.bf16.msra.mxu0 %v355
    %574 = vmatprep.subr.bf16.mxu0 %v348
    %575 = vmatpush1.bf16.msra.mxu0 %v347
    %576 = vmatprep.subr.bf16.mxu0 0
    %577 = vmatpush2.bf16.msra.mxu0 0
    %578 = vmatprep.subr.bf16.mxu0 0
    %579 = vmatpush2.bf16.msra.mxu0 0
    %580 = vmatprep.subr.bf16.mxu0 0
    %581 = vmatpush2.bf16.msra.mxu0 0
    %582 = vmatprep.subr.bf16.mxu0 0
    %583 = vmatpush2.bf16.msra.mxu0 0
    %584 = vmatprep.subr.bf16.mxu0 0
    %585 = vmatpush2.bf16.msra.mxu0 0
    %586 = vmatprep.subr.bf16.mxu0 0
    %587 = vmatpush2.bf16.msra.mxu0 0
    %588 = vmatprep.subr.bf16.mxu0 0
    %589 = vmatpush2.bf16.msra.mxu0 0
    %590 = vmatprep.subr.bf16.mxu0 0
    %591 = vmatpush2.bf16.msra.mxu0 0
    %592 = vmatprep.mubr.bf16.mxu0 0
    %593 = vmatmul.mubr.bf16.gmra.mxu0 %v433
    %v594 = vpop.f32.mrf.mxu0
    %v595 = vadd.f32 %v554, %v594
    %v596 = vpop.f32.mrf.mxu0
    %v597 = vadd.f32 %v556, %v596
    %v598 = vpop.f32.mrf.mxu0
    %v599 = vpop.f32.mrf.mxu0
    %600 = vdwg.mxu0
    %601 = vmatprep.subr.bf16.mxu0 %v278
    %602 = vmatpush1.bf16.msra.mxu0 %v277
    %603 = vmatprep.subr.bf16.mxu0 %v270
    %604 = vmatpush1.bf16.msra.mxu0 %v269
    %605 = vmatprep.subr.bf16.mxu0 %v262
    %606 = vmatpush1.bf16.msra.mxu0 %v261
    %607 = vmatprep.subr.bf16.mxu0 %v254
    %608 = vmatpush1.bf16.msra.mxu0 %v253
    %609 = vmatprep.subr.bf16.mxu0 %v246
    %610 = vmatpush1.bf16.msra.mxu0 %v245
    %611 = vmatprep.subr.bf16.mxu0 %v238
    %612 = vmatpush1.bf16.msra.mxu0 %v237
    %613 = vmatprep.subr.bf16.mxu0 %v230
    %614 = vmatpush1.bf16.msra.mxu0 %v229
    %615 = vmatprep.subr.bf16.mxu0 %v222
    %616 = vmatpush1.bf16.msra.mxu0 %v221
    %617 = vmatprep.subr.bf16.mxu0 %v342
    %618 = vmatpush2.bf16.msra.mxu0 %v341
    %619 = vmatprep.subr.bf16.mxu0 %v334
    %620 = vmatpush2.bf16.msra.mxu0 %v333
    %621 = vmatprep.subr.bf16.mxu0 %v326
    %622 = vmatpush2.bf16.msra.mxu0 %v325
    %623 = vmatprep.subr.bf16.mxu0 %v318
    %624 = vmatpush2.bf16.msra.mxu0 %v317
    %625 = vmatprep.subr.bf16.mxu0 %v310
    %626 = vmatpush2.bf16.msra.mxu0 %v309
    %627 = vmatprep.subr.bf16.mxu0 %v302
    %628 = vmatpush2.bf16.msra.mxu0 %v301
    %629 = vmatprep.subr.bf16.mxu0 %v294
    %630 = vmatpush2.bf16.msra.mxu0 %v293
    %631 = vmatprep.subr.bf16.mxu0 %v286
    %632 = vmatpush2.bf16.msra.mxu0 %v285
    %633 = vmatprep.mubr.bf16.mxu0 %v432
    %634 = vmatmul.mubr.bf16.gmra.mxu0 %v425
    %v635 = vpop.f32.mrf.mxu0
    %v636 = vadd.f32 0.0, %v635
    %v637 = vpop.f32.mrf.mxu0
    %v638 = vadd.f32 0.0, %v637
    %v639 = vpop.f32.mrf.mxu0
    %v640 = vpop.f32.mrf.mxu0
    %641 = vdwg.mxu0
    %642 = vmatprep.subr.bf16.mxu0 %v406
    %643 = vmatpush1.bf16.msra.mxu0 %v405
    %644 = vmatprep.subr.bf16.mxu0 %v398
    %645 = vmatpush1.bf16.msra.mxu0 %v397
    %646 = vmatprep.subr.bf16.mxu0 %v390
    %647 = vmatpush1.bf16.msra.mxu0 %v389
    %648 = vmatprep.subr.bf16.mxu0 %v382
    %649 = vmatpush1.bf16.msra.mxu0 %v381
    %650 = vmatprep.subr.bf16.mxu0 %v374
    %651 = vmatpush1.bf16.msra.mxu0 %v373
    %652 = vmatprep.subr.bf16.mxu0 %v366
    %653 = vmatpush1.bf16.msra.mxu0 %v365
    %654 = vmatprep.subr.bf16.mxu0 %v358
    %655 = vmatpush1.bf16.msra.mxu0 %v357
    %656 = vmatprep.subr.bf16.mxu0 %v350
    %657 = vmatpush1.bf16.msra.mxu0 %v349
    %658 = vmatprep.subr.bf16.mxu0 0
    %659 = vmatpush2.bf16.msra.mxu0 0
    %660 = vmatprep.subr.bf16.mxu0 0
    %661 = vmatpush2.bf16.msra.mxu0 0
    %662 = vmatprep.subr.bf16.mxu0 0
    %663 = vmatpush2.bf16.msra.mxu0 0
    %664 = vmatprep.subr.bf16.mxu0 0
    %665 = vmatpush2.bf16.msra.mxu0 0
    %666 = vmatprep.subr.bf16.mxu0 0
    %667 = vmatpush2.bf16.msra.mxu0 0
    %668 = vmatprep.subr.bf16.mxu0 0
    %669 = vmatpush2.bf16.msra.mxu0 0
    %670 = vmatprep.subr.bf16.mxu0 0
    %671 = vmatpush2.bf16.msra.mxu0 0
    %672 = vmatprep.subr.bf16.mxu0 0
    %673 = vmatpush2.bf16.msra.mxu0 0
    %674 = vmatprep.mubr.bf16.mxu0 0
    %675 = vmatmul.mubr.bf16.gmra.mxu0 %v433
    %v676 = vpop.f32.mrf.mxu0
    %v677 = vadd.f32 %v636, %v676
    %v678 = vpop.f32.mrf.mxu0
    %v679 = vadd.f32 %v638, %v678
    %v680 = vpop.f32.mrf.mxu0
    %v681 = vpop.f32.mrf.mxu0
    %682 = vdwg.mxu0
    %683 = vmatprep.subr.bf16.mxu0 %v280
    %684 = vmatpush1.bf16.msra.mxu0 %v279
    %685 = vmatprep.subr.bf16.mxu0 %v272
    %686 = vmatpush1.bf16.msra.mxu0 %v271
    %687 = vmatprep.subr.bf16.mxu0 %v264
    %688 = vmatpush1.bf16.msra.mxu0 %v263
    %689 = vmatprep.subr.bf16.mxu0 %v256
    %690 = vmatpush1.bf16.msra.mxu0 %v255
    %691 = vmatprep.subr.bf16.mxu0 %v248
    %692 = vmatpush1.bf16.msra.mxu0 %v247
    %693 = vmatprep.subr.bf16.mxu0 %v240
    %694 = vmatpush1.bf16.msra.mxu0 %v239
    %695 = vmatprep.subr.bf16.mxu0 %v232
    %696 = vmatpush1.bf16.msra.mxu0 %v231
    %697 = vmatprep.subr.bf16.mxu0 %v224
    %698 = vmatpush1.bf16.msra.mxu0 %v223
    %699 = vmatprep.subr.bf16.mxu0 %v344
    %700 = vmatpush2.bf16.msra.mxu0 %v343
    %701 = vmatprep.subr.bf16.mxu0 %v336
    %702 = vmatpush2.bf16.msra.mxu0 %v335
    %703 = vmatprep.subr.bf16.mxu0 %v328
    %704 = vmatpush2.bf16.msra.mxu0 %v327
    %705 = vmatprep.subr.bf16.mxu0 %v320
    %706 = vmatpush2.bf16.msra.mxu0 %v319
    %707 = vmatprep.subr.bf16.mxu0 %v312
    %708 = vmatpush2.bf16.msra.mxu0 %v311
    %709 = vmatprep.subr.bf16.mxu0 %v304
    %710 = vmatpush2.bf16.msra.mxu0 %v303
    %711 = vmatprep.subr.bf16.mxu0 %v296
    %712 = vmatpush2.bf16.msra.mxu0 %v295
    %713 = vmatprep.subr.bf16.mxu0 %v288
    %714 = vmatpush2.bf16.msra.mxu0 %v287
    %715 = vmatprep.mubr.bf16.mxu0 %v432
    %716 = vmatmul.mubr.bf16.gmra.mxu0 %v425
    %v717 = vpop.f32.mrf.mxu0
    %v718 = vadd.f32 0.0, %v717
    %v719 = vpop.f32.mrf.mxu0
    %v720 = vadd.f32 0.0, %v719
    %v721 = vpop.f32.mrf.mxu0
    %v722 = vpop.f32.mrf.mxu0
    %723 = vdwg.mxu0
    %724 = vmatprep.subr.bf16.mxu0 %v408
    %725 = vmatpush1.bf16.msra.mxu0 %v407
    %726 = vmatprep.subr.bf16.mxu0 %v400
    %727 = vmatpush1.bf16.msra.mxu0 %v399
    %728 = vmatprep.subr.bf16.mxu0 %v392
    %729 = vmatpush1.bf16.msra.mxu0 %v391
    %730 = vmatprep.subr.bf16.mxu0 %v384
    %731 = vmatpush1.bf16.msra.mxu0 %v383
    %732 = vmatprep.subr.bf16.mxu0 %v376
    %733 = vmatpush1.bf16.msra.mxu0 %v375
    %734 = vmatprep.subr.bf16.mxu0 %v368
    %735 = vmatpush1.bf16.msra.mxu0 %v367
    %736 = vmatprep.subr.bf16.mxu0 %v360
    %737 = vmatpush1.bf16.msra.mxu0 %v359
    %738 = vmatprep.subr.bf16.mxu0 %v352
    %739 = vmatpush1.bf16.msra.mxu0 %v351
    %740 = vmatprep.subr.bf16.mxu0 0
    %741 = vmatpush2.bf16.msra.mxu0 0
    %742 = vmatprep.subr.bf16.mxu0 0
    %743 = vmatpush2.bf16.msra.mxu0 0
    %744 = vmatprep.subr.bf16.mxu0 0
    %745 = vmatpush2.bf16.msra.mxu0 0
    %746 = vmatprep.subr.bf16.mxu0 0
    %747 = vmatpush2.bf16.msra.mxu0 0
    %748 = vmatprep.subr.bf16.mxu0 0
    %749 = vmatpush2.bf16.msra.mxu0 0
    %750 = vmatprep.subr.bf16.mxu0 0
    %751 = vmatpush2.bf16.msra.mxu0 0
    %752 = vmatprep.subr.bf16.mxu0 0
    %753 = vmatpush2.bf16.msra.mxu0 0
    %754 = vmatprep.subr.bf16.mxu0 0
    %755 = vmatpush2.bf16.msra.mxu0 0
    %756 = vmatprep.mubr.bf16.mxu0 0
    %757 = vmatmul.mubr.bf16.gmra.mxu0 %v433
    %v758 = vpop.f32.mrf.mxu0
    %v759 = vadd.f32 %v718, %v758
    %v760 = vpop.f32.mrf.mxu0
    %v761 = vadd.f32 %v720, %v760
    %v762 = vpop.f32.mrf.mxu0
    %v763 = vpop.f32.mrf.mxu0
    %764 = vdwg.mxu0
    %v765 = vld [vmem:[#allocation7] sm:$0xff]
    %v767 = vlaneseq
    %v768 = vshrl.u32 %v767, 7
    %v769 = vsub.s32 0, %v768
    %v770 = vrot.slane %v765, %v769
    %v771 = vlaneseq
    %v772 = vshrl.u32 %v771, 7
    %v773 = vsub.s32 1, %v772
    %v774 = vrot.slane %v765, %v773
    %v775 = vlaneseq
    %v776 = vshrl.u32 %v775, 7
    %v777 = vsub.s32 2, %v776
    %v778 = vrot.slane %v765, %v777
    %v779 = vlaneseq
    %v780 = vshrl.u32 %v779, 7
    %v781 = vsub.s32 3, %v780
    %v782 = vrot.slane %v765, %v781
    %v783 = vlaneseq
    %v784 = vshrl.u32 %v783, 7
    %v785 = vsub.s32 4, %v784
    %v786 = vrot.slane %v765, %v785
    %v787 = vlaneseq
    %v788 = vshrl.u32 %v787, 7
    %v789 = vsub.s32 5, %v788
    %v790 = vrot.slane %v765, %v789
    %v791 = vlaneseq
    %v792 = vshrl.u32 %v791, 7
    %v793 = vsub.s32 6, %v792
    %v794 = vrot.slane %v765, %v793
    %v795 = vlaneseq
    %v796 = vshrl.u32 %v795, 7
    %v797 = vsub.s32 7, %v796
    %v798 = vrot.slane %v765, %v797
    %v807 = vmul.f32 %v513, %v770
    %v808 = vmul.f32 %v515, %v774
    %v809 = vmul.f32 %v595, %v778
    %v810 = vmul.f32 %v597, %v782
    %v811 = vmul.f32 %v677, %v786
    %v812 = vmul.f32 %v679, %v790
    %v813 = vmul.f32 %v759, %v794
    %v814 = vmul.f32 %v761, %v798
    %v815 = vld [vmem:[#allocation8] sm:$0xff]
    %v817 = vlaneseq
    %v818 = vshrl.u32 %v817, 7
    %v819 = vsub.s32 0, %v818
    %v820 = vrot.slane %v815, %v819
    %v821 = vlaneseq
    %v822 = vshrl.u32 %v821, 7
    %v823 = vsub.s32 1, %v822
    %v824 = vrot.slane %v815, %v823
    %v825 = vlaneseq
    %v826 = vshrl.u32 %v825, 7
    %v827 = vsub.s32 2, %v826
    %v828 = vrot.slane %v815, %v827
    %v829 = vlaneseq
    %v830 = vshrl.u32 %v829, 7
    %v831 = vsub.s32 3, %v830
    %v832 = vrot.slane %v815, %v831
    %v833 = vlaneseq
    %v834 = vshrl.u32 %v833, 7
    %v835 = vsub.s32 4, %v834
    %v836 = vrot.slane %v815, %v835
    %v837 = vlaneseq
    %v838 = vshrl.u32 %v837, 7
    %v839 = vsub.s32 5, %v838
    %v840 = vrot.slane %v815, %v839
    %v841 = vlaneseq
    %v842 = vshrl.u32 %v841, 7
    %v843 = vsub.s32 6, %v842
    %v844 = vrot.slane %v815, %v843
    %v845 = vlaneseq
    %v846 = vshrl.u32 %v845, 7
    %v847 = vsub.s32 7, %v846
    %v848 = vrot.slane %v815, %v847
    %v857 = vadd.f32 %v807, %v820
    %v858 = vadd.f32 %v808, %v824
    %v859 = vadd.f32 %v809, %v828
    %v860 = vadd.f32 %v810, %v832
    %v861 = vadd.f32 %v811, %v836
    %v862 = vadd.f32 %v812, %v840
    %v863 = vadd.f32 %v813, %v844
    %v864 = vadd.f32 %v814, %v848
    %v865 = vmax.f32 %v857, 0.0
    %v866 = vmax.f32 %v858, 0.0
    %v867 = vmax.f32 %v859, 0.0
    %v868 = vmax.f32 %v860, 0.0
    %v869 = vmax.f32 %v861, 0.0
    %v870 = vmax.f32 %v862, 0.0
    %v871 = vmax.f32 %v863, 0.0
    %v872 = vmax.f32 %v864, 0.0
    %v873 = vpack.c.bf16 %v865, %v865
    %v874 = vpack.c.bf16 %v866, %v866
    %v875 = vpack.c.bf16 %v867, %v867
    %v876 = vpack.c.bf16 %v868, %v868
    %v877 = vpack.c.bf16 %v869, %v869
    %v878 = vpack.c.bf16 %v870, %v870
    %v879 = vpack.c.bf16 %v871, %v871
    %v880 = vpack.c.bf16 %v872, %v872
    %v881 = vld [vmem:[#allocation10] sm:$0xff]
    %v882 = vld [vmem:[#allocation10 + $0x8] sm:$0xff]
    %v883 = vld [vmem:[#allocation10 + $0x10] sm:$0xff]
    %v884 = vld [vmem:[#allocation10 + $0x18] sm:$0xff]
    %v885 = vld [vmem:[#allocation10 + $0x20] sm:$0xff]
    %v886 = vld [vmem:[#allocation10 + $0x28] sm:$0xff]
    %v887 = vld [vmem:[#allocation10 + $0x30] sm:$0xff]
    %v888 = vld [vmem:[#allocation10 + $0x38] sm:$0xff]
    %v889 = vld [vmem:[#allocation10 + $0x40] sm:$0xff]
    %v890 = vld [vmem:[#allocation10 + $0x48] sm:$0xff]
    %v891 = vld [vmem:[#allocation10 + $0x50] sm:$0xff]
    %v892 = vld [vmem:[#allocation10 + $0x58] sm:$0xff]
    %v893 = vld [vmem:[#allocation10 + $0x60] sm:$0xff]
    %v894 = vld [vmem:[#allocation10 + $0x68] sm:$0xff]
    %v895 = vld [vmem:[#allocation10 + $0x70] sm:$0xff]
    %v896 = vld [vmem:[#allocation10 + $0x78] sm:$0xff]
    %v897 = vld [vmem:[#allocation10 + $0x80] sm:$0xff]
    %v898 = vld [vmem:[#allocation10 + $0x88] sm:$0xff]
    %v899 = vld [vmem:[#allocation10 + $0x90] sm:$0xff]
    %v900 = vld [vmem:[#allocation10 + $0x98] sm:$0xff]
    %v901 = vld [vmem:[#allocation10 + $0xa0] sm:$0xff]
    %v902 = vld [vmem:[#allocation10 + $0xa8] sm:$0xff]
    %v903 = vld [vmem:[#allocation10 + $0xb0] sm:$0xff]
    %v904 = vld [vmem:[#allocation10 + $0xb8] sm:$0xff]
    %v905 = vld [vmem:[#allocation10 + $0xc0] sm:$0xff]
    %v906 = vld [vmem:[#allocation10 + $0xc8] sm:$0xff]
    %v907 = vld [vmem:[#allocation10 + $0xd0] sm:$0xff]
    %v908 = vld [vmem:[#allocation10 + $0xd8] sm:$0xff]
    %v909 = vld [vmem:[#allocation10 + $0xe0] sm:$0xff]
    %v910 = vld [vmem:[#allocation10 + $0xe8] sm:$0xff]
    %v911 = vld [vmem:[#allocation10 + $0xf0] sm:$0xff]
    %v912 = vld [vmem:[#allocation10 + $0xf8] sm:$0xff]
    %v913 = vld [vmem:[#allocation10 + $0x100] sm:$0xff]
    %v914 = vld [vmem:[#allocation10 + $0x108] sm:$0xff]
    %v915 = vld [vmem:[#allocation10 + $0x110] sm:$0xff]
    %v916 = vld [vmem:[#allocation10 + $0x118] sm:$0xff]
    %v917 = vld [vmem:[#allocation10 + $0x120] sm:$0xff]
    %v918 = vld [vmem:[#allocation10 + $0x128] sm:$0xff]
    %v919 = vld [vmem:[#allocation10 + $0x130] sm:$0xff]
    %v920 = vld [vmem:[#allocation10 + $0x138] sm:$0xff]
    %v921 = vld [vmem:[#allocation10 + $0x140] sm:$0xff]
    %v922 = vld [vmem:[#allocation10 + $0x148] sm:$0xff]
    %v923 = vld [vmem:[#allocation10 + $0x150] sm:$0xff]
    %v924 = vld [vmem:[#allocation10 + $0x158] sm:$0xff]
    %v925 = vld [vmem:[#allocation10 + $0x160] sm:$0xff]
    %v926 = vld [vmem:[#allocation10 + $0x168] sm:$0xff]
    %v927 = vld [vmem:[#allocation10 + $0x170] sm:$0xff]
    %v928 = vld [vmem:[#allocation10 + $0x178] sm:$0xff]
    %v929 = vld [vmem:[#allocation10 + $0x180] sm:$0xff]
    %v930 = vld [vmem:[#allocation10 + $0x188] sm:$0xff]
    %v931 = vld [vmem:[#allocation10 + $0x190] sm:$0xff]
    %v932 = vld [vmem:[#allocation10 + $0x198] sm:$0xff]
    %v933 = vld [vmem:[#allocation10 + $0x1a0] sm:$0xff]
    %v934 = vld [vmem:[#allocation10 + $0x1a8] sm:$0xff]
    %v935 = vld [vmem:[#allocation10 + $0x1b0] sm:$0xff]
    %v936 = vld [vmem:[#allocation10 + $0x1b8] sm:$0xff]
    %v937 = vld [vmem:[#allocation10 + $0x1c0] sm:$0xff]
    %v938 = vld [vmem:[#allocation10 + $0x1c8] sm:$0xff]
    %v939 = vld [vmem:[#allocation10 + $0x1d0] sm:$0xff]
    %v940 = vld [vmem:[#allocation10 + $0x1d8] sm:$0xff]
    %v941 = vld [vmem:[#allocation10 + $0x1e0] sm:$0xff]
    %v942 = vld [vmem:[#allocation10 + $0x1e8] sm:$0xff]
    %v943 = vld [vmem:[#allocation10 + $0x1f0] sm:$0xff]
    %v944 = vld [vmem:[#allocation10 + $0x1f8] sm:$0xff]
    %v945 = vld [vmem:[#allocation10 + $0x200] sm:$0xff]
    %v946 = vld [vmem:[#allocation10 + $0x208] sm:$0xff]
    %v947 = vld [vmem:[#allocation10 + $0x210] sm:$0xff]
    %v948 = vld [vmem:[#allocation10 + $0x218] sm:$0xff]
    %v949 = vld [vmem:[#allocation10 + $0x220] sm:$0xff]
    %v950 = vld [vmem:[#allocation10 + $0x228] sm:$0xff]
    %v951 = vld [vmem:[#allocation10 + $0x230] sm:$0xff]
    %v952 = vld [vmem:[#allocation10 + $0x238] sm:$0xff]
    %v953 = vld [vmem:[#allocation10 + $0x240] sm:$0xff]
    %v954 = vld [vmem:[#allocation10 + $0x248] sm:$0xff]
    %v955 = vld [vmem:[#allocation10 + $0x250] sm:$0xff]
    %v956 = vld [vmem:[#allocation10 + $0x258] sm:$0xff]
    %v957 = vld [vmem:[#allocation10 + $0x260] sm:$0xff]
    %v958 = vld [vmem:[#allocation10 + $0x268] sm:$0xff]
    %v959 = vld [vmem:[#allocation10 + $0x270] sm:$0xff]
    %v960 = vld [vmem:[#allocation10 + $0x278] sm:$0xff]
    %v961 = vld [vmem:[#allocation10 + $0x280] sm:$0xff]
    %v962 = vld [vmem:[#allocation10 + $0x288] sm:$0xff]
    %v963 = vld [vmem:[#allocation10 + $0x290] sm:$0xff]
    %v964 = vld [vmem:[#allocation10 + $0x298] sm:$0xff]
    %v965 = vld [vmem:[#allocation10 + $0x2a0] sm:$0xff]
    %v966 = vld [vmem:[#allocation10 + $0x2a8] sm:$0xff]
    %v967 = vld [vmem:[#allocation10 + $0x2b0] sm:$0xff]
    %v968 = vld [vmem:[#allocation10 + $0x2b8] sm:$0xff]
    %v969 = vld [vmem:[#allocation10 + $0x2c0] sm:$0xff]
    %v970 = vld [vmem:[#allocation10 + $0x2c8] sm:$0xff]
    %v971 = vld [vmem:[#allocation10 + $0x2d0] sm:$0xff]
    %v972 = vld [vmem:[#allocation10 + $0x2d8] sm:$0xff]
    %v973 = vld [vmem:[#allocation10 + $0x2e0] sm:$0xff]
    %v974 = vld [vmem:[#allocation10 + $0x2e8] sm:$0xff]
    %v975 = vld [vmem:[#allocation10 + $0x2f0] sm:$0xff]
    %v976 = vld [vmem:[#allocation10 + $0x2f8] sm:$0xff]
    %v977 = vld [vmem:[#allocation10 + $0x300] sm:$0xff]
    %v978 = vld [vmem:[#allocation10 + $0x308] sm:$0xff]
    %v979 = vld [vmem:[#allocation10 + $0x310] sm:$0xff]
    %v980 = vld [vmem:[#allocation10 + $0x318] sm:$0xff]
    %v981 = vld [vmem:[#allocation10 + $0x320] sm:$0xff]
    %v982 = vld [vmem:[#allocation10 + $0x328] sm:$0xff]
    %v983 = vld [vmem:[#allocation10 + $0x330] sm:$0xff]
    %v984 = vld [vmem:[#allocation10 + $0x338] sm:$0xff]
    %v985 = vld [vmem:[#allocation10 + $0x340] sm:$0xff]
    %v986 = vld [vmem:[#allocation10 + $0x348] sm:$0xff]
    %v987 = vld [vmem:[#allocation10 + $0x350] sm:$0xff]
    %v988 = vld [vmem:[#allocation10 + $0x358] sm:$0xff]
    %v989 = vld [vmem:[#allocation10 + $0x360] sm:$0xff]
    %v990 = vld [vmem:[#allocation10 + $0x368] sm:$0xff]
    %v991 = vld [vmem:[#allocation10 + $0x370] sm:$0xff]
    %v992 = vld [vmem:[#allocation10 + $0x378] sm:$0xff]
    %v993 = vld [vmem:[#allocation10 + $0x380] sm:$0xff]
    %v994 = vld [vmem:[#allocation10 + $0x388] sm:$0xff]
    %v995 = vld [vmem:[#allocation10 + $0x390] sm:$0xff]
    %v996 = vld [vmem:[#allocation10 + $0x398] sm:$0xff]
    %v997 = vld [vmem:[#allocation10 + $0x3a0] sm:$0xff]
    %v998 = vld [vmem:[#allocation10 + $0x3a8] sm:$0xff]
    %v999 = vld [vmem:[#allocation10 + $0x3b0] sm:$0xff]
    %v1000 = vld [vmem:[#allocation10 + $0x3b8] sm:$0xff]
    %v1001 = vld [vmem:[#allocation10 + $0x3c0] sm:$0xff]
    %v1002 = vld [vmem:[#allocation10 + $0x3c8] sm:$0xff]
    %v1003 = vld [vmem:[#allocation10 + $0x3d0] sm:$0xff]
    %v1004 = vld [vmem:[#allocation10 + $0x3d8] sm:$0xff]
    %v1005 = vld [vmem:[#allocation10 + $0x3e0] sm:$0xff]
    %v1006 = vld [vmem:[#allocation10 + $0x3e8] sm:$0xff]
    %v1007 = vld [vmem:[#allocation10 + $0x3f0] sm:$0xff]
    %v1008 = vld [vmem:[#allocation10 + $0x3f8] sm:$0xff]
    %v1009 = vld [vmem:[#allocation10 + $0x400] sm:$0xff]
    %v1010 = vld [vmem:[#allocation10 + $0x408] sm:$0xff]
    %v1011 = vld [vmem:[#allocation10 + $0x410] sm:$0xff]
    %v1012 = vld [vmem:[#allocation10 + $0x418] sm:$0xff]
    %v1013 = vld [vmem:[#allocation10 + $0x420] sm:$0xff]
    %v1014 = vld [vmem:[#allocation10 + $0x428] sm:$0xff]
    %v1015 = vld [vmem:[#allocation10 + $0x430] sm:$0xff]
    %v1016 = vld [vmem:[#allocation10 + $0x438] sm:$0xff]
    %v1017 = vld [vmem:[#allocation10 + $0x440] sm:$0xff]
    %v1018 = vld [vmem:[#allocation10 + $0x448] sm:$0xff]
    %v1019 = vld [vmem:[#allocation10 + $0x450] sm:$0xff]
    %v1020 = vld [vmem:[#allocation10 + $0x458] sm:$0xff]
    %v1021 = vld [vmem:[#allocation10 + $0x460] sm:$0xff]
    %v1022 = vld [vmem:[#allocation10 + $0x468] sm:$0xff]
    %v1023 = vld [vmem:[#allocation10 + $0x470] sm:$0xff]
    %v1024 = vld [vmem:[#allocation10 + $0x478] sm:$0xff]
    %v1025 = vld [vmem:[#allocation10 + $0x480] sm:$0xff]
    %v1026 = vld [vmem:[#allocation10 + $0x488] sm:$0xff]
    %v1027 = vld [vmem:[#allocation10 + $0x490] sm:$0xff]
    %v1028 = vld [vmem:[#allocation10 + $0x498] sm:$0xff]
    %v1029 = vld [vmem:[#allocation10 + $0x4a0] sm:$0xff]
    %v1030 = vld [vmem:[#allocation10 + $0x4a8] sm:$0xff]
    %v1031 = vld [vmem:[#allocation10 + $0x4b0] sm:$0xff]
    %v1032 = vld [vmem:[#allocation10 + $0x4b8] sm:$0xff]
    %v1033 = vld [vmem:[#allocation10 + $0x4c0] sm:$0xff]
    %v1034 = vld [vmem:[#allocation10 + $0x4c8] sm:$0xff]
    %v1035 = vld [vmem:[#allocation10 + $0x4d0] sm:$0xff]
    %v1036 = vld [vmem:[#allocation10 + $0x4d8] sm:$0xff]
    %v1037 = vld [vmem:[#allocation10 + $0x4e0] sm:$0xff]
    %v1038 = vld [vmem:[#allocation10 + $0x4e8] sm:$0xff]
    %v1039 = vld [vmem:[#allocation10 + $0x4f0] sm:$0xff]
    %v1040 = vld [vmem:[#allocation10 + $0x4f8] sm:$0xff]
    %v1041 = vld [vmem:[#allocation10 + $0x500] sm:$0xff]
    %v1042 = vld [vmem:[#allocation10 + $0x508] sm:$0xff]
    %v1043 = vld [vmem:[#allocation10 + $0x510] sm:$0xff]
    %v1044 = vld [vmem:[#allocation10 + $0x518] sm:$0xff]
    %v1045 = vld [vmem:[#allocation10 + $0x520] sm:$0xff]
    %v1046 = vld [vmem:[#allocation10 + $0x528] sm:$0xff]
    %v1047 = vld [vmem:[#allocation10 + $0x530] sm:$0xff]
    %v1048 = vld [vmem:[#allocation10 + $0x538] sm:$0xff]
    %v1049 = vld [vmem:[#allocation10 + $0x540] sm:$0xff]
    %v1050 = vld [vmem:[#allocation10 + $0x548] sm:$0xff]
    %v1051 = vld [vmem:[#allocation10 + $0x550] sm:$0xff]
    %v1052 = vld [vmem:[#allocation10 + $0x558] sm:$0xff]
    %v1053 = vld [vmem:[#allocation10 + $0x560] sm:$0xff]
    %v1054 = vld [vmem:[#allocation10 + $0x568] sm:$0xff]
    %v1055 = vld [vmem:[#allocation10 + $0x570] sm:$0xff]
    %v1056 = vld [vmem:[#allocation10 + $0x578] sm:$0xff]
    %v1057 = vld [vmem:[#allocation10 + $0x580] sm:$0xff]
    %v1058 = vld [vmem:[#allocation10 + $0x588] sm:$0xff]
    %v1059 = vld [vmem:[#allocation10 + $0x590] sm:$0xff]
    %v1060 = vld [vmem:[#allocation10 + $0x598] sm:$0xff]
    %v1061 = vld [vmem:[#allocation10 + $0x5a0] sm:$0xff]
    %v1062 = vld [vmem:[#allocation10 + $0x5a8] sm:$0xff]
    %v1063 = vld [vmem:[#allocation10 + $0x5b0] sm:$0xff]
    %v1064 = vld [vmem:[#allocation10 + $0x5b8] sm:$0xff]
    %v1065 = vld [vmem:[#allocation10 + $0x5c0] sm:$0xff]
    %v1066 = vld [vmem:[#allocation10 + $0x5c8] sm:$0xff]
    %v1067 = vld [vmem:[#allocation10 + $0x5d0] sm:$0xff]
    %v1068 = vld [vmem:[#allocation10 + $0x5d8] sm:$0xff]
    %v1069 = vld [vmem:[#allocation10 + $0x5e0] sm:$0xff]
    %v1070 = vld [vmem:[#allocation10 + $0x5e8] sm:$0xff]
    %v1071 = vld [vmem:[#allocation10 + $0x5f0] sm:$0xff]
    %v1072 = vld [vmem:[#allocation10 + $0x5f8] sm:$0xff]
    %v1073 = vld [vmem:[#allocation10 + $0x600] sm:$0xff]
    %v1074 = vld [vmem:[#allocation10 + $0x608] sm:$0xff]
    %v1075 = vld [vmem:[#allocation10 + $0x610] sm:$0xff]
    %v1076 = vld [vmem:[#allocation10 + $0x618] sm:$0xff]
    %v1077 = vld [vmem:[#allocation10 + $0x620] sm:$0xff]
    %v1078 = vld [vmem:[#allocation10 + $0x628] sm:$0xff]
    %v1079 = vld [vmem:[#allocation10 + $0x630] sm:$0xff]
    %v1080 = vld [vmem:[#allocation10 + $0x638] sm:$0xff]
    %v1081 = vld [vmem:[#allocation10 + $0x640] sm:$0xff]
    %v1082 = vld [vmem:[#allocation10 + $0x648] sm:$0xff]
    %v1083 = vld [vmem:[#allocation10 + $0x650] sm:$0xff]
    %v1084 = vld [vmem:[#allocation10 + $0x658] sm:$0xff]
    %v1085 = vld [vmem:[#allocation10 + $0x660] sm:$0xff]
    %v1086 = vld [vmem:[#allocation10 + $0x668] sm:$0xff]
    %v1087 = vld [vmem:[#allocation10 + $0x670] sm:$0xff]
    %v1088 = vld [vmem:[#allocation10 + $0x678] sm:$0xff]
    %v1089 = vld [vmem:[#allocation10 + $0x680] sm:$0xff]
    %v1090 = vld [vmem:[#allocation10 + $0x688] sm:$0xff]
    %v1091 = vld [vmem:[#allocation10 + $0x690] sm:$0xff]
    %v1092 = vld [vmem:[#allocation10 + $0x698] sm:$0xff]
    %v1093 = vld [vmem:[#allocation10 + $0x6a0] sm:$0xff]
    %v1094 = vld [vmem:[#allocation10 + $0x6a8] sm:$0xff]
    %v1095 = vld [vmem:[#allocation10 + $0x6b0] sm:$0xff]
    %v1096 = vld [vmem:[#allocation10 + $0x6b8] sm:$0xff]
    %v1097 = vld [vmem:[#allocation10 + $0x6c0] sm:$0xff]
    %v1098 = vld [vmem:[#allocation10 + $0x6c8] sm:$0xff]
    %v1099 = vld [vmem:[#allocation10 + $0x6d0] sm:$0xff]
    %v1100 = vld [vmem:[#allocation10 + $0x6d8] sm:$0xff]
    %v1101 = vld [vmem:[#allocation10 + $0x6e0] sm:$0xff]
    %v1102 = vld [vmem:[#allocation10 + $0x6e8] sm:$0xff]
    %v1103 = vld [vmem:[#allocation10 + $0x6f0] sm:$0xff]
    %v1104 = vld [vmem:[#allocation10 + $0x6f8] sm:$0xff]
    %v1105 = vld [vmem:[#allocation10 + $0x700] sm:$0xff]
    %v1106 = vld [vmem:[#allocation10 + $0x708] sm:$0xff]
    %v1107 = vld [vmem:[#allocation10 + $0x710] sm:$0xff]
    %v1108 = vld [vmem:[#allocation10 + $0x718] sm:$0xff]
    %v1109 = vld [vmem:[#allocation10 + $0x720] sm:$0xff]
    %v1110 = vld [vmem:[#allocation10 + $0x728] sm:$0xff]
    %v1111 = vld [vmem:[#allocation10 + $0x730] sm:$0xff]
    %v1112 = vld [vmem:[#allocation10 + $0x738] sm:$0xff]
    %v1113 = vld [vmem:[#allocation10 + $0x740] sm:$0xff]
    %v1114 = vld [vmem:[#allocation10 + $0x748] sm:$0xff]
    %v1115 = vld [vmem:[#allocation10 + $0x750] sm:$0xff]
    %v1116 = vld [vmem:[#allocation10 + $0x758] sm:$0xff]
    %v1117 = vld [vmem:[#allocation10 + $0x760] sm:$0xff]
    %v1118 = vld [vmem:[#allocation10 + $0x768] sm:$0xff]
    %v1119 = vld [vmem:[#allocation10 + $0x770] sm:$0xff]
    %v1120 = vld [vmem:[#allocation10 + $0x778] sm:$0xff]
    %v1121 = vld [vmem:[#allocation10 + $0x780] sm:$0xff]
    %v1122 = vld [vmem:[#allocation10 + $0x788] sm:$0xff]
    %v1123 = vld [vmem:[#allocation10 + $0x790] sm:$0xff]
    %v1124 = vld [vmem:[#allocation10 + $0x798] sm:$0xff]
    %v1125 = vld [vmem:[#allocation10 + $0x7a0] sm:$0xff]
    %v1126 = vld [vmem:[#allocation10 + $0x7a8] sm:$0xff]
    %v1127 = vld [vmem:[#allocation10 + $0x7b0] sm:$0xff]
    %v1128 = vld [vmem:[#allocation10 + $0x7b8] sm:$0xff]
    %v1129 = vld [vmem:[#allocation10 + $0x7c0] sm:$0xff]
    %v1130 = vld [vmem:[#allocation10 + $0x7c8] sm:$0xff]
    %v1131 = vld [vmem:[#allocation10 + $0x7d0] sm:$0xff]
    %v1132 = vld [vmem:[#allocation10 + $0x7d8] sm:$0xff]
    %v1133 = vld [vmem:[#allocation10 + $0x7e0] sm:$0xff]
    %v1134 = vld [vmem:[#allocation10 + $0x7e8] sm:$0xff]
    %v1135 = vld [vmem:[#allocation10 + $0x7f0] sm:$0xff]
    %v1136 = vld [vmem:[#allocation10 + $0x7f8] sm:$0xff]
    %v1137 = vld [vmem:[#allocation11] sm:$0xf]
    %v1139 = vlaneseq
    %v1140 = vshrl.u32 %v1139, 7
    %v1141 = vsub.s32 0, %v1140
    %v1142 = vrot.slane %v1137, %v1141
    %v1143 = vlaneseq
    %v1144 = vshrl.u32 %v1143, 7
    %v1145 = vsub.s32 1, %v1144
    %v1146 = vrot.slane %v1137, %v1145
    %v1147 = vlaneseq
    %v1148 = vshrl.u32 %v1147, 7
    %v1149 = vsub.s32 2, %v1148
    %v1150 = vrot.slane %v1137, %v1149
    %v1151 = vlaneseq
    %v1152 = vshrl.u32 %v1151, 7
    %v1153 = vsub.s32 3, %v1152
    %v1154 = vrot.slane %v1137, %v1153
    %v1415 = vunpack.c.l.b16 %v881
    %v1416 = vunpack.c.h.b16 %v881
    %v1417 = vunpack.c.l.b16 %v882
    %v1418 = vunpack.c.h.b16 %v882
    %v1419 = vunpack.c.l.b16 %v883
    %v1420 = vunpack.c.h.b16 %v883
    %v1421 = vunpack.c.l.b16 %v884
    %v1422 = vunpack.c.h.b16 %v884
    %v1423 = vunpack.c.l.b16 %v885
    %v1424 = vunpack.c.h.b16 %v885
    %v1425 = vunpack.c.l.b16 %v886
    %v1426 = vunpack.c.h.b16 %v886
    %v1427 = vunpack.c.l.b16 %v887
    %v1428 = vunpack.c.h.b16 %v887
    %v1429 = vunpack.c.l.b16 %v888
    %v1430 = vunpack.c.h.b16 %v888
    %v1431 = vunpack.c.l.b16 %v889
    %v1432 = vunpack.c.h.b16 %v889
    %v1433 = vunpack.c.l.b16 %v890
    %v1434 = vunpack.c.h.b16 %v890
    %v1435 = vunpack.c.l.b16 %v891
    %v1436 = vunpack.c.h.b16 %v891
    %v1437 = vunpack.c.l.b16 %v892
    %v1438 = vunpack.c.h.b16 %v892
    %v1439 = vunpack.c.l.b16 %v893
    %v1440 = vunpack.c.h.b16 %v893
    %v1441 = vunpack.c.l.b16 %v894
    %v1442 = vunpack.c.h.b16 %v894
    %v1443 = vunpack.c.l.b16 %v895
    %v1444 = vunpack.c.h.b16 %v895
    %v1445 = vunpack.c.l.b16 %v896
    %v1446 = vunpack.c.h.b16 %v896
    %v1447 = vunpack.c.l.b16 %v897
    %v1448 = vunpack.c.h.b16 %v897
    %v1449 = vunpack.c.l.b16 %v898
    %v1450 = vunpack.c.h.b16 %v898
    %v1451 = vunpack.c.l.b16 %v899
    %v1452 = vunpack.c.h.b16 %v899
    %v1453 = vunpack.c.l.b16 %v900
    %v1454 = vunpack.c.h.b16 %v900
    %v1455 = vunpack.c.l.b16 %v901
    %v1456 = vunpack.c.h.b16 %v901
    %v1457 = vunpack.c.l.b16 %v902
    %v1458 = vunpack.c.h.b16 %v902
    %v1459 = vunpack.c.l.b16 %v903
    %v1460 = vunpack.c.h.b16 %v903
    %v1461 = vunpack.c.l.b16 %v904
    %v1462 = vunpack.c.h.b16 %v904
    %v1463 = vunpack.c.l.b16 %v905
    %v1464 = vunpack.c.h.b16 %v905
    %v1465 = vunpack.c.l.b16 %v906
    %v1466 = vunpack.c.h.b16 %v906
    %v1467 = vunpack.c.l.b16 %v907
    %v1468 = vunpack.c.h.b16 %v907
    %v1469 = vunpack.c.l.b16 %v908
    %v1470 = vunpack.c.h.b16 %v908
    %v1471 = vunpack.c.l.b16 %v909
    %v1472 = vunpack.c.h.b16 %v909
    %v1473 = vunpack.c.l.b16 %v910
    %v1474 = vunpack.c.h.b16 %v910
    %v1475 = vunpack.c.l.b16 %v911
    %v1476 = vunpack.c.h.b16 %v911
    %v1477 = vunpack.c.l.b16 %v912
    %v1478 = vunpack.c.h.b16 %v912
    %v1479 = vunpack.c.l.b16 %v913
    %v1480 = vunpack.c.h.b16 %v913
    %v1481 = vunpack.c.l.b16 %v914
    %v1482 = vunpack.c.h.b16 %v914
    %v1483 = vunpack.c.l.b16 %v915
    %v1484 = vunpack.c.h.b16 %v915
    %v1485 = vunpack.c.l.b16 %v916
    %v1486 = vunpack.c.h.b16 %v916
    %v1487 = vunpack.c.l.b16 %v917
    %v1488 = vunpack.c.h.b16 %v917
    %v1489 = vunpack.c.l.b16 %v918
    %v1490 = vunpack.c.h.b16 %v918
    %v1491 = vunpack.c.l.b16 %v919
    %v1492 = vunpack.c.h.b16 %v919
    %v1493 = vunpack.c.l.b16 %v920
    %v1494 = vunpack.c.h.b16 %v920
    %v1495 = vunpack.c.l.b16 %v921
    %v1496 = vunpack.c.h.b16 %v921
    %v1497 = vunpack.c.l.b16 %v922
    %v1498 = vunpack.c.h.b16 %v922
    %v1499 = vunpack.c.l.b16 %v923
    %v1500 = vunpack.c.h.b16 %v923
    %v1501 = vunpack.c.l.b16 %v924
    %v1502 = vunpack.c.h.b16 %v924
    %v1503 = vunpack.c.l.b16 %v925
    %v1504 = vunpack.c.h.b16 %v925
    %v1505 = vunpack.c.l.b16 %v926
    %v1506 = vunpack.c.h.b16 %v926
    %v1507 = vunpack.c.l.b16 %v927
    %v1508 = vunpack.c.h.b16 %v927
    %v1509 = vunpack.c.l.b16 %v928
    %v1510 = vunpack.c.h.b16 %v928
    %v1511 = vunpack.c.l.b16 %v929
    %v1512 = vunpack.c.h.b16 %v929
    %v1513 = vunpack.c.l.b16 %v930
    %v1514 = vunpack.c.h.b16 %v930
    %v1515 = vunpack.c.l.b16 %v931
    %v1516 = vunpack.c.h.b16 %v931
    %v1517 = vunpack.c.l.b16 %v932
    %v1518 = vunpack.c.h.b16 %v932
    %v1519 = vunpack.c.l.b16 %v933
    %v1520 = vunpack.c.h.b16 %v933
    %v1521 = vunpack.c.l.b16 %v934
    %v1522 = vunpack.c.h.b16 %v934
    %v1523 = vunpack.c.l.b16 %v935
    %v1524 = vunpack.c.h.b16 %v935
    %v1525 = vunpack.c.l.b16 %v936
    %v1526 = vunpack.c.h.b16 %v936
    %v1527 = vunpack.c.l.b16 %v937
    %v1528 = vunpack.c.h.b16 %v937
    %v1529 = vunpack.c.l.b16 %v938
    %v1530 = vunpack.c.h.b16 %v938
    %v1531 = vunpack.c.l.b16 %v939
    %v1532 = vunpack.c.h.b16 %v939
    %v1533 = vunpack.c.l.b16 %v940
    %v1534 = vunpack.c.h.b16 %v940
    %v1535 = vunpack.c.l.b16 %v941
    %v1536 = vunpack.c.h.b16 %v941
    %v1537 = vunpack.c.l.b16 %v942
    %v1538 = vunpack.c.h.b16 %v942
    %v1539 = vunpack.c.l.b16 %v943
    %v1540 = vunpack.c.h.b16 %v943
    %v1541 = vunpack.c.l.b16 %v944
    %v1542 = vunpack.c.h.b16 %v944
    %v1543 = vunpack.c.l.b16 %v945
    %v1544 = vunpack.c.h.b16 %v945
    %v1545 = vunpack.c.l.b16 %v946
    %v1546 = vunpack.c.h.b16 %v946
    %v1547 = vunpack.c.l.b16 %v947
    %v1548 = vunpack.c.h.b16 %v947
    %v1549 = vunpack.c.l.b16 %v948
    %v1550 = vunpack.c.h.b16 %v948
    %v1551 = vunpack.c.l.b16 %v949
    %v1552 = vunpack.c.h.b16 %v949
    %v1553 = vunpack.c.l.b16 %v950
    %v1554 = vunpack.c.h.b16 %v950
    %v1555 = vunpack.c.l.b16 %v951
    %v1556 = vunpack.c.h.b16 %v951
    %v1557 = vunpack.c.l.b16 %v952
    %v1558 = vunpack.c.h.b16 %v952
    %v1559 = vunpack.c.l.b16 %v953
    %v1560 = vunpack.c.h.b16 %v953
    %v1561 = vunpack.c.l.b16 %v954
    %v1562 = vunpack.c.h.b16 %v954
    %v1563 = vunpack.c.l.b16 %v955
    %v1564 = vunpack.c.h.b16 %v955
    %v1565 = vunpack.c.l.b16 %v956
    %v1566 = vunpack.c.h.b16 %v956
    %v1567 = vunpack.c.l.b16 %v957
    %v1568 = vunpack.c.h.b16 %v957
    %v1569 = vunpack.c.l.b16 %v958
    %v1570 = vunpack.c.h.b16 %v958
    %v1571 = vunpack.c.l.b16 %v959
    %v1572 = vunpack.c.h.b16 %v959
    %v1573 = vunpack.c.l.b16 %v960
    %v1574 = vunpack.c.h.b16 %v960
    %v1575 = vunpack.c.l.b16 %v961
    %v1576 = vunpack.c.h.b16 %v961
    %v1577 = vunpack.c.l.b16 %v962
    %v1578 = vunpack.c.h.b16 %v962
    %v1579 = vunpack.c.l.b16 %v963
    %v1580 = vunpack.c.h.b16 %v963
    %v1581 = vunpack.c.l.b16 %v964
    %v1582 = vunpack.c.h.b16 %v964
    %v1583 = vunpack.c.l.b16 %v965
    %v1584 = vunpack.c.h.b16 %v965
    %v1585 = vunpack.c.l.b16 %v966
    %v1586 = vunpack.c.h.b16 %v966
    %v1587 = vunpack.c.l.b16 %v967
    %v1588 = vunpack.c.h.b16 %v967
    %v1589 = vunpack.c.l.b16 %v968
    %v1590 = vunpack.c.h.b16 %v968
    %v1591 = vunpack.c.l.b16 %v969
    %v1592 = vunpack.c.h.b16 %v969
    %v1593 = vunpack.c.l.b16 %v970
    %v1594 = vunpack.c.h.b16 %v970
    %v1595 = vunpack.c.l.b16 %v971
    %v1596 = vunpack.c.h.b16 %v971
    %v1597 = vunpack.c.l.b16 %v972
    %v1598 = vunpack.c.h.b16 %v972
    %v1599 = vunpack.c.l.b16 %v973
    %v1600 = vunpack.c.h.b16 %v973
    %v1601 = vunpack.c.l.b16 %v974
    %v1602 = vunpack.c.h.b16 %v974
    %v1603 = vunpack.c.l.b16 %v975
    %v1604 = vunpack.c.h.b16 %v975
    %v1605 = vunpack.c.l.b16 %v976
    %v1606 = vunpack.c.h.b16 %v976
    %v1607 = vunpack.c.l.b16 %v977
    %v1608 = vunpack.c.h.b16 %v977
    %v1609 = vunpack.c.l.b16 %v978
    %v1610 = vunpack.c.h.b16 %v978
    %v1611 = vunpack.c.l.b16 %v979
    %v1612 = vunpack.c.h.b16 %v979
    %v1613 = vunpack.c.l.b16 %v980
    %v1614 = vunpack.c.h.b16 %v980
    %v1615 = vunpack.c.l.b16 %v981
    %v1616 = vunpack.c.h.b16 %v981
    %v1617 = vunpack.c.l.b16 %v982
    %v1618 = vunpack.c.h.b16 %v982
    %v1619 = vunpack.c.l.b16 %v983
    %v1620 = vunpack.c.h.b16 %v983
    %v1621 = vunpack.c.l.b16 %v984
    %v1622 = vunpack.c.h.b16 %v984
    %v1623 = vunpack.c.l.b16 %v985
    %v1624 = vunpack.c.h.b16 %v985
    %v1625 = vunpack.c.l.b16 %v986
    %v1626 = vunpack.c.h.b16 %v986
    %v1627 = vunpack.c.l.b16 %v987
    %v1628 = vunpack.c.h.b16 %v987
    %v1629 = vunpack.c.l.b16 %v988
    %v1630 = vunpack.c.h.b16 %v988
    %v1631 = vunpack.c.l.b16 %v989
    %v1632 = vunpack.c.h.b16 %v989
    %v1633 = vunpack.c.l.b16 %v990
    %v1634 = vunpack.c.h.b16 %v990
    %v1635 = vunpack.c.l.b16 %v991
    %v1636 = vunpack.c.h.b16 %v991
    %v1637 = vunpack.c.l.b16 %v992
    %v1638 = vunpack.c.h.b16 %v992
    %v1639 = vunpack.c.l.b16 %v993
    %v1640 = vunpack.c.h.b16 %v993
    %v1641 = vunpack.c.l.b16 %v994
    %v1642 = vunpack.c.h.b16 %v994
    %v1643 = vunpack.c.l.b16 %v995
    %v1644 = vunpack.c.h.b16 %v995
    %v1645 = vunpack.c.l.b16 %v996
    %v1646 = vunpack.c.h.b16 %v996
    %v1647 = vunpack.c.l.b16 %v997
    %v1648 = vunpack.c.h.b16 %v997
    %v1649 = vunpack.c.l.b16 %v998
    %v1650 = vunpack.c.h.b16 %v998
    %v1651 = vunpack.c.l.b16 %v999
    %v1652 = vunpack.c.h.b16 %v999
    %v1653 = vunpack.c.l.b16 %v1000
    %v1654 = vunpack.c.h.b16 %v1000
    %v1655 = vunpack.c.l.b16 %v1001
    %v1656 = vunpack.c.h.b16 %v1001
    %v1657 = vunpack.c.l.b16 %v1002
    %v1658 = vunpack.c.h.b16 %v1002
    %v1659 = vunpack.c.l.b16 %v1003
    %v1660 = vunpack.c.h.b16 %v1003
    %v1661 = vunpack.c.l.b16 %v1004
    %v1662 = vunpack.c.h.b16 %v1004
    %v1663 = vunpack.c.l.b16 %v1005
    %v1664 = vunpack.c.h.b16 %v1005
    %v1665 = vunpack.c.l.b16 %v1006
    %v1666 = vunpack.c.h.b16 %v1006
    %v1667 = vunpack.c.l.b16 %v1007
    %v1668 = vunpack.c.h.b16 %v1007
    %v1669 = vunpack.c.l.b16 %v1008
    %v1670 = vunpack.c.h.b16 %v1008
    %v1671 = vunpack.c.l.b16 %v1009
    %v1672 = vunpack.c.h.b16 %v1009
    %v1673 = vunpack.c.l.b16 %v1010
    %v1674 = vunpack.c.h.b16 %v1010
    %v1675 = vunpack.c.l.b16 %v1011
    %v1676 = vunpack.c.h.b16 %v1011
    %v1677 = vunpack.c.l.b16 %v1012
    %v1678 = vunpack.c.h.b16 %v1012
    %v1679 = vunpack.c.l.b16 %v1013
    %v1680 = vunpack.c.h.b16 %v1013
    %v1681 = vunpack.c.l.b16 %v1014
    %v1682 = vunpack.c.h.b16 %v1014
    %v1683 = vunpack.c.l.b16 %v1015
    %v1684 = vunpack.c.h.b16 %v1015
    %v1685 = vunpack.c.l.b16 %v1016
    %v1686 = vunpack.c.h.b16 %v1016
    %v1687 = vunpack.c.l.b16 %v1017
    %v1688 = vunpack.c.h.b16 %v1017
    %v1689 = vunpack.c.l.b16 %v1018
    %v1690 = vunpack.c.h.b16 %v1018
    %v1691 = vunpack.c.l.b16 %v1019
    %v1692 = vunpack.c.h.b16 %v1019
    %v1693 = vunpack.c.l.b16 %v1020
    %v1694 = vunpack.c.h.b16 %v1020
    %v1695 = vunpack.c.l.b16 %v1021
    %v1696 = vunpack.c.h.b16 %v1021
    %v1697 = vunpack.c.l.b16 %v1022
    %v1698 = vunpack.c.h.b16 %v1022
    %v1699 = vunpack.c.l.b16 %v1023
    %v1700 = vunpack.c.h.b16 %v1023
    %v1701 = vunpack.c.l.b16 %v1024
    %v1702 = vunpack.c.h.b16 %v1024
    %v1703 = vunpack.c.l.b16 %v1025
    %v1704 = vunpack.c.h.b16 %v1025
    %v1705 = vunpack.c.l.b16 %v1026
    %v1706 = vunpack.c.h.b16 %v1026
    %v1707 = vunpack.c.l.b16 %v1027
    %v1708 = vunpack.c.h.b16 %v1027
    %v1709 = vunpack.c.l.b16 %v1028
    %v1710 = vunpack.c.h.b16 %v1028
    %v1711 = vunpack.c.l.b16 %v1029
    %v1712 = vunpack.c.h.b16 %v1029
    %v1713 = vunpack.c.l.b16 %v1030
    %v1714 = vunpack.c.h.b16 %v1030
    %v1715 = vunpack.c.l.b16 %v1031
    %v1716 = vunpack.c.h.b16 %v1031
    %v1717 = vunpack.c.l.b16 %v1032
    %v1718 = vunpack.c.h.b16 %v1032
    %v1719 = vunpack.c.l.b16 %v1033
    %v1720 = vunpack.c.h.b16 %v1033
    %v1721 = vunpack.c.l.b16 %v1034
    %v1722 = vunpack.c.h.b16 %v1034
    %v1723 = vunpack.c.l.b16 %v1035
    %v1724 = vunpack.c.h.b16 %v1035
    %v1725 = vunpack.c.l.b16 %v1036
    %v1726 = vunpack.c.h.b16 %v1036
    %v1727 = vunpack.c.l.b16 %v1037
    %v1728 = vunpack.c.h.b16 %v1037
    %v1729 = vunpack.c.l.b16 %v1038
    %v1730 = vunpack.c.h.b16 %v1038
    %v1731 = vunpack.c.l.b16 %v1039
    %v1732 = vunpack.c.h.b16 %v1039
    %v1733 = vunpack.c.l.b16 %v1040
    %v1734 = vunpack.c.h.b16 %v1040
    %v1735 = vunpack.c.l.b16 %v1041
    %v1736 = vunpack.c.h.b16 %v1041
    %v1737 = vunpack.c.l.b16 %v1042
    %v1738 = vunpack.c.h.b16 %v1042
    %v1739 = vunpack.c.l.b16 %v1043
    %v1740 = vunpack.c.h.b16 %v1043
    %v1741 = vunpack.c.l.b16 %v1044
    %v1742 = vunpack.c.h.b16 %v1044
    %v1743 = vunpack.c.l.b16 %v1045
    %v1744 = vunpack.c.h.b16 %v1045
    %v1745 = vunpack.c.l.b16 %v1046
    %v1746 = vunpack.c.h.b16 %v1046
    %v1747 = vunpack.c.l.b16 %v1047
    %v1748 = vunpack.c.h.b16 %v1047
    %v1749 = vunpack.c.l.b16 %v1048
    %v1750 = vunpack.c.h.b16 %v1048
    %v1751 = vunpack.c.l.b16 %v1049
    %v1752 = vunpack.c.h.b16 %v1049
    %v1753 = vunpack.c.l.b16 %v1050
    %v1754 = vunpack.c.h.b16 %v1050
    %v1755 = vunpack.c.l.b16 %v1051
    %v1756 = vunpack.c.h.b16 %v1051
    %v1757 = vunpack.c.l.b16 %v1052
    %v1758 = vunpack.c.h.b16 %v1052
    %v1759 = vunpack.c.l.b16 %v1053
    %v1760 = vunpack.c.h.b16 %v1053
    %v1761 = vunpack.c.l.b16 %v1054
    %v1762 = vunpack.c.h.b16 %v1054
    %v1763 = vunpack.c.l.b16 %v1055
    %v1764 = vunpack.c.h.b16 %v1055
    %v1765 = vunpack.c.l.b16 %v1056
    %v1766 = vunpack.c.h.b16 %v1056
    %v1767 = vunpack.c.l.b16 %v1057
    %v1768 = vunpack.c.h.b16 %v1057
    %v1769 = vunpack.c.l.b16 %v1058
    %v1770 = vunpack.c.h.b16 %v1058
    %v1771 = vunpack.c.l.b16 %v1059
    %v1772 = vunpack.c.h.b16 %v1059
    %v1773 = vunpack.c.l.b16 %v1060
    %v1774 = vunpack.c.h.b16 %v1060
    %v1775 = vunpack.c.l.b16 %v1061
    %v1776 = vunpack.c.h.b16 %v1061
    %v1777 = vunpack.c.l.b16 %v1062
    %v1778 = vunpack.c.h.b16 %v1062
    %v1779 = vunpack.c.l.b16 %v1063
    %v1780 = vunpack.c.h.b16 %v1063
    %v1781 = vunpack.c.l.b16 %v1064
    %v1782 = vunpack.c.h.b16 %v1064
    %v1783 = vunpack.c.l.b16 %v1065
    %v1784 = vunpack.c.h.b16 %v1065
    %v1785 = vunpack.c.l.b16 %v1066
    %v1786 = vunpack.c.h.b16 %v1066
    %v1787 = vunpack.c.l.b16 %v1067
    %v1788 = vunpack.c.h.b16 %v1067
    %v1789 = vunpack.c.l.b16 %v1068
    %v1790 = vunpack.c.h.b16 %v1068
    %v1791 = vunpack.c.l.b16 %v1069
    %v1792 = vunpack.c.h.b16 %v1069
    %v1793 = vunpack.c.l.b16 %v1070
    %v1794 = vunpack.c.h.b16 %v1070
    %v1795 = vunpack.c.l.b16 %v1071
    %v1796 = vunpack.c.h.b16 %v1071
    %v1797 = vunpack.c.l.b16 %v1072
    %v1798 = vunpack.c.h.b16 %v1072
    %v1799 = vunpack.c.l.b16 %v1073
    %v1800 = vunpack.c.h.b16 %v1073
    %v1801 = vunpack.c.l.b16 %v1074
    %v1802 = vunpack.c.h.b16 %v1074
    %v1803 = vunpack.c.l.b16 %v1075
    %v1804 = vunpack.c.h.b16 %v1075
    %v1805 = vunpack.c.l.b16 %v1076
    %v1806 = vunpack.c.h.b16 %v1076
    %v1807 = vunpack.c.l.b16 %v1077
    %v1808 = vunpack.c.h.b16 %v1077
    %v1809 = vunpack.c.l.b16 %v1078
    %v1810 = vunpack.c.h.b16 %v1078
    %v1811 = vunpack.c.l.b16 %v1079
    %v1812 = vunpack.c.h.b16 %v1079
    %v1813 = vunpack.c.l.b16 %v1080
    %v1814 = vunpack.c.h.b16 %v1080
    %v1815 = vunpack.c.l.b16 %v1081
    %v1816 = vunpack.c.h.b16 %v1081
    %v1817 = vunpack.c.l.b16 %v1082
    %v1818 = vunpack.c.h.b16 %v1082
    %v1819 = vunpack.c.l.b16 %v1083
    %v1820 = vunpack.c.h.b16 %v1083
    %v1821 = vunpack.c.l.b16 %v1084
    %v1822 = vunpack.c.h.b16 %v1084
    %v1823 = vunpack.c.l.b16 %v1085
    %v1824 = vunpack.c.h.b16 %v1085
    %v1825 = vunpack.c.l.b16 %v1086
    %v1826 = vunpack.c.h.b16 %v1086
    %v1827 = vunpack.c.l.b16 %v1087
    %v1828 = vunpack.c.h.b16 %v1087
    %v1829 = vunpack.c.l.b16 %v1088
    %v1830 = vunpack.c.h.b16 %v1088
    %v1831 = vunpack.c.l.b16 %v1089
    %v1832 = vunpack.c.h.b16 %v1089
    %v1833 = vunpack.c.l.b16 %v1090
    %v1834 = vunpack.c.h.b16 %v1090
    %v1835 = vunpack.c.l.b16 %v1091
    %v1836 = vunpack.c.h.b16 %v1091
    %v1837 = vunpack.c.l.b16 %v1092
    %v1838 = vunpack.c.h.b16 %v1092
    %v1839 = vunpack.c.l.b16 %v1093
    %v1840 = vunpack.c.h.b16 %v1093
    %v1841 = vunpack.c.l.b16 %v1094
    %v1842 = vunpack.c.h.b16 %v1094
    %v1843 = vunpack.c.l.b16 %v1095
    %v1844 = vunpack.c.h.b16 %v1095
    %v1845 = vunpack.c.l.b16 %v1096
    %v1846 = vunpack.c.h.b16 %v1096
    %v1847 = vunpack.c.l.b16 %v1097
    %v1848 = vunpack.c.h.b16 %v1097
    %v1849 = vunpack.c.l.b16 %v1098
    %v1850 = vunpack.c.h.b16 %v1098
    %v1851 = vunpack.c.l.b16 %v1099
    %v1852 = vunpack.c.h.b16 %v1099
    %v1853 = vunpack.c.l.b16 %v1100
    %v1854 = vunpack.c.h.b16 %v1100
    %v1855 = vunpack.c.l.b16 %v1101
    %v1856 = vunpack.c.h.b16 %v1101
    %v1857 = vunpack.c.l.b16 %v1102
    %v1858 = vunpack.c.h.b16 %v1102
    %v1859 = vunpack.c.l.b16 %v1103
    %v1860 = vunpack.c.h.b16 %v1103
    %v1861 = vunpack.c.l.b16 %v1104
    %v1862 = vunpack.c.h.b16 %v1104
    %v1863 = vunpack.c.l.b16 %v1105
    %v1864 = vunpack.c.h.b16 %v1105
    %v1865 = vunpack.c.l.b16 %v1106
    %v1866 = vunpack.c.h.b16 %v1106
    %v1867 = vunpack.c.l.b16 %v1107
    %v1868 = vunpack.c.h.b16 %v1107
    %v1869 = vunpack.c.l.b16 %v1108
    %v1870 = vunpack.c.h.b16 %v1108
    %v1871 = vunpack.c.l.b16 %v1109
    %v1872 = vunpack.c.h.b16 %v1109
    %v1873 = vunpack.c.l.b16 %v1110
    %v1874 = vunpack.c.h.b16 %v1110
    %v1875 = vunpack.c.l.b16 %v1111
    %v1876 = vunpack.c.h.b16 %v1111
    %v1877 = vunpack.c.l.b16 %v1112
    %v1878 = vunpack.c.h.b16 %v1112
    %v1879 = vunpack.c.l.b16 %v1113
    %v1880 = vunpack.c.h.b16 %v1113
    %v1881 = vunpack.c.l.b16 %v1114
    %v1882 = vunpack.c.h.b16 %v1114
    %v1883 = vunpack.c.l.b16 %v1115
    %v1884 = vunpack.c.h.b16 %v1115
    %v1885 = vunpack.c.l.b16 %v1116
    %v1886 = vunpack.c.h.b16 %v1116
    %v1887 = vunpack.c.l.b16 %v1117
    %v1888 = vunpack.c.h.b16 %v1117
    %v1889 = vunpack.c.l.b16 %v1118
    %v1890 = vunpack.c.h.b16 %v1118
    %v1891 = vunpack.c.l.b16 %v1119
    %v1892 = vunpack.c.h.b16 %v1119
    %v1893 = vunpack.c.l.b16 %v1120
    %v1894 = vunpack.c.h.b16 %v1120
    %v1895 = vunpack.c.l.b16 %v1121
    %v1896 = vunpack.c.h.b16 %v1121
    %v1897 = vunpack.c.l.b16 %v1122
    %v1898 = vunpack.c.h.b16 %v1122
    %v1899 = vunpack.c.l.b16 %v1123
    %v1900 = vunpack.c.h.b16 %v1123
    %v1901 = vunpack.c.l.b16 %v1124
    %v1902 = vunpack.c.h.b16 %v1124
    %v1903 = vunpack.c.l.b16 %v1125
    %v1904 = vunpack.c.h.b16 %v1125
    %v1905 = vunpack.c.l.b16 %v1126
    %v1906 = vunpack.c.h.b16 %v1126
    %v1907 = vunpack.c.l.b16 %v1127
    %v1908 = vunpack.c.h.b16 %v1127
    %v1909 = vunpack.c.l.b16 %v1128
    %v1910 = vunpack.c.h.b16 %v1128
    %v1911 = vunpack.c.l.b16 %v1129
    %v1912 = vunpack.c.h.b16 %v1129
    %v1913 = vunpack.c.l.b16 %v1130
    %v1914 = vunpack.c.h.b16 %v1130
    %v1915 = vunpack.c.l.b16 %v1131
    %v1916 = vunpack.c.h.b16 %v1131
    %v1917 = vunpack.c.l.b16 %v1132
    %v1918 = vunpack.c.h.b16 %v1132
    %v1919 = vunpack.c.l.b16 %v1133
    %v1920 = vunpack.c.h.b16 %v1133
    %v1921 = vunpack.c.l.b16 %v1134
    %v1922 = vunpack.c.h.b16 %v1134
    %v1923 = vunpack.c.l.b16 %v1135
    %v1924 = vunpack.c.h.b16 %v1135
    %v1925 = vunpack.c.l.b16 %v1136
    %v1926 = vunpack.c.h.b16 %v1136
    %v1927 = vpack.c.b16 %v1419, %v1415
    %v1928 = vpack.c.b16 %v1420, %v1416
    %v1929 = vpack.c.b16 %v1421, %v1417
    %v1930 = vpack.c.b16 %v1422, %v1418
    %v1931 = vpack.c.b16 %v1427, %v1423
    %v1932 = vpack.c.b16 %v1428, %v1424
    %v1933 = vpack.c.b16 %v1429, %v1425
    %v1934 = vpack.c.b16 %v1430, %v1426
    %v1935 = vpack.c.b16 %v1435, %v1431
    %v1936 = vpack.c.b16 %v1436, %v1432
    %v1937 = vpack.c.b16 %v1437, %v1433
    %v1938 = vpack.c.b16 %v1438, %v1434
    %v1939 = vpack.c.b16 %v1443, %v1439
    %v1940 = vpack.c.b16 %v1444, %v1440
    %v1941 = vpack.c.b16 %v1445, %v1441
    %v1942 = vpack.c.b16 %v1446, %v1442
    %v1943 = vpack.c.b16 %v1451, %v1447
    %v1944 = vpack.c.b16 %v1452, %v1448
    %v1945 = vpack.c.b16 %v1453, %v1449
    %v1946 = vpack.c.b16 %v1454, %v1450
    %v1947 = vpack.c.b16 %v1459, %v1455
    %v1948 = vpack.c.b16 %v1460, %v1456
    %v1949 = vpack.c.b16 %v1461, %v1457
    %v1950 = vpack.c.b16 %v1462, %v1458
    %v1951 = vpack.c.b16 %v1467, %v1463
    %v1952 = vpack.c.b16 %v1468, %v1464
    %v1953 = vpack.c.b16 %v1469, %v1465
    %v1954 = vpack.c.b16 %v1470, %v1466
    %v1955 = vpack.c.b16 %v1475, %v1471
    %v1956 = vpack.c.b16 %v1476, %v1472
    %v1957 = vpack.c.b16 %v1477, %v1473
    %v1958 = vpack.c.b16 %v1478, %v1474
    %v1959 = vpack.c.b16 %v1483, %v1479
    %v1960 = vpack.c.b16 %v1484, %v1480
    %v1961 = vpack.c.b16 %v1485, %v1481
    %v1962 = vpack.c.b16 %v1486, %v1482
    %v1963 = vpack.c.b16 %v1491, %v1487
    %v1964 = vpack.c.b16 %v1492, %v1488
    %v1965 = vpack.c.b16 %v1493, %v1489
    %v1966 = vpack.c.b16 %v1494, %v1490
    %v1967 = vpack.c.b16 %v1499, %v1495
    %v1968 = vpack.c.b16 %v1500, %v1496
    %v1969 = vpack.c.b16 %v1501, %v1497
    %v1970 = vpack.c.b16 %v1502, %v1498
    %v1971 = vpack.c.b16 %v1507, %v1503
    %v1972 = vpack.c.b16 %v1508, %v1504
    %v1973 = vpack.c.b16 %v1509, %v1505
    %v1974 = vpack.c.b16 %v1510, %v1506
    %v1975 = vpack.c.b16 %v1515, %v1511
    %v1976 = vpack.c.b16 %v1516, %v1512
    %v1977 = vpack.c.b16 %v1517, %v1513
    %v1978 = vpack.c.b16 %v1518, %v1514
    %v1979 = vpack.c.b16 %v1523, %v1519
    %v1980 = vpack.c.b16 %v1524, %v1520
    %v1981 = vpack.c.b16 %v1525, %v1521
    %v1982 = vpack.c.b16 %v1526, %v1522
    %v1983 = vpack.c.b16 %v1531, %v1527
    %v1984 = vpack.c.b16 %v1532, %v1528
    %v1985 = vpack.c.b16 %v1533, %v1529
    %v1986 = vpack.c.b16 %v1534, %v1530
    %v1987 = vpack.c.b16 %v1539, %v1535
    %v1988 = vpack.c.b16 %v1540, %v1536
    %v1989 = vpack.c.b16 %v1541, %v1537
    %v1990 = vpack.c.b16 %v1542, %v1538
    %v1991 = vpack.c.b16 %v1547, %v1543
    %v1992 = vpack.c.b16 %v1548, %v1544
    %v1993 = vpack.c.b16 %v1549, %v1545
    %v1994 = vpack.c.b16 %v1550, %v1546
    %v1995 = vpack.c.b16 %v1555, %v1551
    %v1996 = vpack.c.b16 %v1556, %v1552
    %v1997 = vpack.c.b16 %v1557, %v1553
    %v1998 = vpack.c.b16 %v1558, %v1554
    %v1999 = vpack.c.b16 %v1563, %v1559
    %v2000 = vpack.c.b16 %v1564, %v1560
    %v2001 = vpack.c.b16 %v1565, %v1561
    %v2002 = vpack.c.b16 %v1566, %v1562
    %v2003 = vpack.c.b16 %v1571, %v1567
    %v2004 = vpack.c.b16 %v1572, %v1568
    %v2005 = vpack.c.b16 %v1573, %v1569
    %v2006 = vpack.c.b16 %v1574, %v1570
    %v2007 = vpack.c.b16 %v1579, %v1575
    %v2008 = vpack.c.b16 %v1580, %v1576
    %v2009 = vpack.c.b16 %v1581, %v1577
    %v2010 = vpack.c.b16 %v1582, %v1578
    %v2011 = vpack.c.b16 %v1587, %v1583
    %v2012 = vpack.c.b16 %v1588, %v1584
    %v2013 = vpack.c.b16 %v1589, %v1585
    %v2014 = vpack.c.b16 %v1590, %v1586
    %v2015 = vpack.c.b16 %v1595, %v1591
    %v2016 = vpack.c.b16 %v1596, %v1592
    %v2017 = vpack.c.b16 %v1597, %v1593
    %v2018 = vpack.c.b16 %v1598, %v1594
    %v2019 = vpack.c.b16 %v1603, %v1599
    %v2020 = vpack.c.b16 %v1604, %v1600
    %v2021 = vpack.c.b16 %v1605, %v1601
    %v2022 = vpack.c.b16 %v1606, %v1602
    %v2023 = vpack.c.b16 %v1611, %v1607
    %v2024 = vpack.c.b16 %v1612, %v1608
    %v2025 = vpack.c.b16 %v1613, %v1609
    %v2026 = vpack.c.b16 %v1614, %v1610
    %v2027 = vpack.c.b16 %v1619, %v1615
    %v2028 = vpack.c.b16 %v1620, %v1616
    %v2029 = vpack.c.b16 %v1621, %v1617
    %v2030 = vpack.c.b16 %v1622, %v1618
    %v2031 = vpack.c.b16 %v1627, %v1623
    %v2032 = vpack.c.b16 %v1628, %v1624
    %v2033 = vpack.c.b16 %v1629, %v1625
    %v2034 = vpack.c.b16 %v1630, %v1626
    %v2035 = vpack.c.b16 %v1635, %v1631
    %v2036 = vpack.c.b16 %v1636, %v1632
    %v2037 = vpack.c.b16 %v1637, %v1633
    %v2038 = vpack.c.b16 %v1638, %v1634
    %v2039 = vpack.c.b16 %v1643, %v1639
    %v2040 = vpack.c.b16 %v1644, %v1640
    %v2041 = vpack.c.b16 %v1645, %v1641
    %v2042 = vpack.c.b16 %v1646, %v1642
    %v2043 = vpack.c.b16 %v1651, %v1647
    %v2044 = vpack.c.b16 %v1652, %v1648
    %v2045 = vpack.c.b16 %v1653, %v1649
    %v2046 = vpack.c.b16 %v1654, %v1650
    %v2047 = vpack.c.b16 %v1659, %v1655
    %v2048 = vpack.c.b16 %v1660, %v1656
    %v2049 = vpack.c.b16 %v1661, %v1657
    %v2050 = vpack.c.b16 %v1662, %v1658
    %v2051 = vpack.c.b16 %v1667, %v1663
    %v2052 = vpack.c.b16 %v1668, %v1664
    %v2053 = vpack.c.b16 %v1669, %v1665
    %v2054 = vpack.c.b16 %v1670, %v1666
    %v2055 = vpack.c.b16 %v1675, %v1671
    %v2056 = vpack.c.b16 %v1676, %v1672
    %v2057 = vpack.c.b16 %v1677, %v1673
    %v2058 = vpack.c.b16 %v1678, %v1674
    %v2059 = vpack.c.b16 %v1683, %v1679
    %v2060 = vpack.c.b16 %v1684, %v1680
    %v2061 = vpack.c.b16 %v1685, %v1681
    %v2062 = vpack.c.b16 %v1686, %v1682
    %v2063 = vpack.c.b16 %v1691, %v1687
    %v2064 = vpack.c.b16 %v1692, %v1688
    %v2065 = vpack.c.b16 %v1693, %v1689
    %v2066 = vpack.c.b16 %v1694, %v1690
    %v2067 = vpack.c.b16 %v1699, %v1695
    %v2068 = vpack.c.b16 %v1700, %v1696
    %v2069 = vpack.c.b16 %v1701, %v1697
    %v2070 = vpack.c.b16 %v1702, %v1698
    %v2071 = vpack.c.b16 %v1707, %v1703
    %v2072 = vpack.c.b16 %v1708, %v1704
    %v2073 = vpack.c.b16 %v1709, %v1705
    %v2074 = vpack.c.b16 %v1710, %v1706
    %v2075 = vpack.c.b16 %v1715, %v1711
    %v2076 = vpack.c.b16 %v1716, %v1712
    %v2077 = vpack.c.b16 %v1717, %v1713
    %v2078 = vpack.c.b16 %v1718, %v1714
    %v2079 = vpack.c.b16 %v1723, %v1719
    %v2080 = vpack.c.b16 %v1724, %v1720
    %v2081 = vpack.c.b16 %v1725, %v1721
    %v2082 = vpack.c.b16 %v1726, %v1722
    %v2083 = vpack.c.b16 %v1731, %v1727
    %v2084 = vpack.c.b16 %v1732, %v1728
    %v2085 = vpack.c.b16 %v1733, %v1729
    %v2086 = vpack.c.b16 %v1734, %v1730
    %v2087 = vpack.c.b16 %v1739, %v1735
    %v2088 = vpack.c.b16 %v1740, %v1736
    %v2089 = vpack.c.b16 %v1741, %v1737
    %v2090 = vpack.c.b16 %v1742, %v1738
    %v2091 = vpack.c.b16 %v1747, %v1743
    %v2092 = vpack.c.b16 %v1748, %v1744
    %v2093 = vpack.c.b16 %v1749, %v1745
    %v2094 = vpack.c.b16 %v1750, %v1746
    %v2095 = vpack.c.b16 %v1755, %v1751
    %v2096 = vpack.c.b16 %v1756, %v1752
    %v2097 = vpack.c.b16 %v1757, %v1753
    %v2098 = vpack.c.b16 %v1758, %v1754
    %v2099 = vpack.c.b16 %v1763, %v1759
    %v2100 = vpack.c.b16 %v1764, %v1760
    %v2101 = vpack.c.b16 %v1765, %v1761
    %v2102 = vpack.c.b16 %v1766, %v1762
    %v2103 = vpack.c.b16 %v1771, %v1767
    %v2104 = vpack.c.b16 %v1772, %v1768
    %v2105 = vpack.c.b16 %v1773, %v1769
    %v2106 = vpack.c.b16 %v1774, %v1770
    %v2107 = vpack.c.b16 %v1779, %v1775
    %v2108 = vpack.c.b16 %v1780, %v1776
    %v2109 = vpack.c.b16 %v1781, %v1777
    %v2110 = vpack.c.b16 %v1782, %v1778
    %v2111 = vpack.c.b16 %v1787, %v1783
    %v2112 = vpack.c.b16 %v1788, %v1784
    %v2113 = vpack.c.b16 %v1789, %v1785
    %v2114 = vpack.c.b16 %v1790, %v1786
    %v2115 = vpack.c.b16 %v1795, %v1791
    %v2116 = vpack.c.b16 %v1796, %v1792
    %v2117 = vpack.c.b16 %v1797, %v1793
    %v2118 = vpack.c.b16 %v1798, %v1794
    %v2119 = vpack.c.b16 %v1803, %v1799
    %v2120 = vpack.c.b16 %v1804, %v1800
    %v2121 = vpack.c.b16 %v1805, %v1801
    %v2122 = vpack.c.b16 %v1806, %v1802
    %v2123 = vpack.c.b16 %v1811, %v1807
    %v2124 = vpack.c.b16 %v1812, %v1808
    %v2125 = vpack.c.b16 %v1813, %v1809
    %v2126 = vpack.c.b16 %v1814, %v1810
    %v2127 = vpack.c.b16 %v1819, %v1815
    %v2128 = vpack.c.b16 %v1820, %v1816
    %v2129 = vpack.c.b16 %v1821, %v1817
    %v2130 = vpack.c.b16 %v1822, %v1818
    %v2131 = vpack.c.b16 %v1827, %v1823
    %v2132 = vpack.c.b16 %v1828, %v1824
    %v2133 = vpack.c.b16 %v1829, %v1825
    %v2134 = vpack.c.b16 %v1830, %v1826
    %v2135 = vpack.c.b16 %v1835, %v1831
    %v2136 = vpack.c.b16 %v1836, %v1832
    %v2137 = vpack.c.b16 %v1837, %v1833
    %v2138 = vpack.c.b16 %v1838, %v1834
    %v2139 = vpack.c.b16 %v1843, %v1839
    %v2140 = vpack.c.b16 %v1844, %v1840
    %v2141 = vpack.c.b16 %v1845, %v1841
    %v2142 = vpack.c.b16 %v1846, %v1842
    %v2143 = vpack.c.b16 %v1851, %v1847
    %v2144 = vpack.c.b16 %v1852, %v1848
    %v2145 = vpack.c.b16 %v1853, %v1849
    %v2146 = vpack.c.b16 %v1854, %v1850
    %v2147 = vpack.c.b16 %v1859, %v1855
    %v2148 = vpack.c.b16 %v1860, %v1856
    %v2149 = vpack.c.b16 %v1861, %v1857
    %v2150 = vpack.c.b16 %v1862, %v1858
    %v2151 = vpack.c.b16 %v1867, %v1863
    %v2152 = vpack.c.b16 %v1868, %v1864
    %v2153 = vpack.c.b16 %v1869, %v1865
    %v2154 = vpack.c.b16 %v1870, %v1866
    %v2155 = vpack.c.b16 %v1875, %v1871
    %v2156 = vpack.c.b16 %v1876, %v1872
    %v2157 = vpack.c.b16 %v1877, %v1873
    %v2158 = vpack.c.b16 %v1878, %v1874
    %v2159 = vpack.c.b16 %v1883, %v1879
    %v2160 = vpack.c.b16 %v1884, %v1880
    %v2161 = vpack.c.b16 %v1885, %v1881
    %v2162 = vpack.c.b16 %v1886, %v1882
    %v2163 = vpack.c.b16 %v1891, %v1887
    %v2164 = vpack.c.b16 %v1892, %v1888
    %v2165 = vpack.c.b16 %v1893, %v1889
    %v2166 = vpack.c.b16 %v1894, %v1890
    %v2167 = vpack.c.b16 %v1899, %v1895
    %v2168 = vpack.c.b16 %v1900, %v1896
    %v2169 = vpack.c.b16 %v1901, %v1897
    %v2170 = vpack.c.b16 %v1902, %v1898
    %v2171 = vpack.c.b16 %v1907, %v1903
    %v2172 = vpack.c.b16 %v1908, %v1904
    %v2173 = vpack.c.b16 %v1909, %v1905
    %v2174 = vpack.c.b16 %v1910, %v1906
    %v2175 = vpack.c.b16 %v1915, %v1911
    %v2176 = vpack.c.b16 %v1916, %v1912
    %v2177 = vpack.c.b16 %v1917, %v1913
    %v2178 = vpack.c.b16 %v1918, %v1914
    %v2179 = vpack.c.b16 %v1923, %v1919
    %v2180 = vpack.c.b16 %v1924, %v1920
    %v2181 = vpack.c.b16 %v1925, %v1921
    %v2182 = vpack.c.b16 %v1926, %v1922
    %2439 = vmatprep.subr.bf16.mxu0 %v1956
    %2440 = vmatpush1.bf16.msra.mxu0 %v1955
    %2441 = vmatprep.subr.bf16.mxu0 %v1952
    %2442 = vmatpush1.bf16.msra.mxu0 %v1951
    %2443 = vmatprep.subr.bf16.mxu0 %v1948
    %2444 = vmatpush1.bf16.msra.mxu0 %v1947
    %2445 = vmatprep.subr.bf16.mxu0 %v1944
    %2446 = vmatpush1.bf16.msra.mxu0 %v1943
    %2447 = vmatprep.subr.bf16.mxu0 %v1940
    %2448 = vmatpush1.bf16.msra.mxu0 %v1939
    %2449 = vmatprep.subr.bf16.mxu0 %v1936
    %2450 = vmatpush1.bf16.msra.mxu0 %v1935
    %2451 = vmatprep.subr.bf16.mxu0 %v1932
    %2452 = vmatpush1.bf16.msra.mxu0 %v1931
    %2453 = vmatprep.subr.bf16.mxu0 %v1928
    %2454 = vmatpush1.bf16.msra.mxu0 %v1927
    %2455 = vmatprep.subr.bf16.mxu0 %v1988
    %2456 = vmatpush2.bf16.msra.mxu0 %v1987
    %2457 = vmatprep.subr.bf16.mxu0 %v1984
    %2458 = vmatpush2.bf16.msra.mxu0 %v1983
    %2459 = vmatprep.subr.bf16.mxu0 %v1980
    %2460 = vmatpush2.bf16.msra.mxu0 %v1979
    %2461 = vmatprep.subr.bf16.mxu0 %v1976
    %2462 = vmatpush2.bf16.msra.mxu0 %v1975
    %2463 = vmatprep.subr.bf16.mxu0 %v1972
    %2464 = vmatpush2.bf16.msra.mxu0 %v1971
    %2465 = vmatprep.subr.bf16.mxu0 %v1968
    %2466 = vmatpush2.bf16.msra.mxu0 %v1967
    %2467 = vmatprep.subr.bf16.mxu0 %v1964
    %2468 = vmatpush2.bf16.msra.mxu0 %v1963
    %2469 = vmatprep.subr.bf16.mxu0 %v1960
    %2470 = vmatpush2.bf16.msra.mxu0 %v1959
    %2471 = vmatprep.mubr.bf16.mxu0 %v874
    %2472 = vmatmul.mubr.bf16.gmra.mxu0 %v873
    %v2473 = vpop.f32.mrf.mxu0
    %v2474 = vadd.f32 %v1142, %v2473
    %v2475 = vpop.f32.mrf.mxu0
    %v2476 = vadd.f32 %v1146, %v2475
    %v2477 = vpop.f32.mrf.mxu0
    %v2478 = vpop.f32.mrf.mxu0
    %2479 = vdwg.mxu0
    %2480 = vmatprep.subr.bf16.mxu0 %v2020
    %2481 = vmatpush1.bf16.msra.mxu0 %v2019
    %2482 = vmatprep.subr.bf16.mxu0 %v2016
    %2483 = vmatpush1.bf16.msra.mxu0 %v2015
    %2484 = vmatprep.subr.bf16.mxu0 %v2012
    %2485 = vmatpush1.bf16.msra.mxu0 %v2011
    %2486 = vmatprep.subr.bf16.mxu0 %v2008
    %2487 = vmatpush1.bf16.msra.mxu0 %v2007
    %2488 = vmatprep.subr.bf16.mxu0 %v2004
    %2489 = vmatpush1.bf16.msra.mxu0 %v2003
    %2490 = vmatprep.subr.bf16.mxu0 %v2000
    %2491 = vmatpush1.bf16.msra.mxu0 %v1999
    %2492 = vmatprep.subr.bf16.mxu0 %v1996
    %2493 = vmatpush1.bf16.msra.mxu0 %v1995
    %2494 = vmatprep.subr.bf16.mxu0 %v1992
    %2495 = vmatpush1.bf16.msra.mxu0 %v1991
    %2496 = vmatprep.subr.bf16.mxu0 %v2052
    %2497 = vmatpush2.bf16.msra.mxu0 %v2051
    %2498 = vmatprep.subr.bf16.mxu0 %v2048
    %2499 = vmatpush2.bf16.msra.mxu0 %v2047
    %2500 = vmatprep.subr.bf16.mxu0 %v2044
    %2501 = vmatpush2.bf16.msra.mxu0 %v2043
    %2502 = vmatprep.subr.bf16.mxu0 %v2040
    %2503 = vmatpush2.bf16.msra.mxu0 %v2039
    %2504 = vmatprep.subr.bf16.mxu0 %v2036
    %2505 = vmatpush2.bf16.msra.mxu0 %v2035
    %2506 = vmatprep.subr.bf16.mxu0 %v2032
    %2507 = vmatpush2.bf16.msra.mxu0 %v2031
    %2508 = vmatprep.subr.bf16.mxu0 %v2028
    %2509 = vmatpush2.bf16.msra.mxu0 %v2027
    %2510 = vmatprep.subr.bf16.mxu0 %v2024
    %2511 = vmatpush2.bf16.msra.mxu0 %v2023
    %2512 = vmatprep.mubr.bf16.mxu0 %v876
    %2513 = vmatmul.mubr.bf16.gmra.mxu0 %v875
    %v2514 = vpop.f32.mrf.mxu0
    %v2515 = vadd.f32 %v2474, %v2514
    %v2516 = vpop.f32.mrf.mxu0
    %v2517 = vadd.f32 %v2476, %v2516
    %v2518 = vpop.f32.mrf.mxu0
    %v2519 = vpop.f32.mrf.mxu0
    %2520 = vdwg.mxu0
    %2521 = vmatprep.subr.bf16.mxu0 %v2084
    %2522 = vmatpush1.bf16.msra.mxu0 %v2083
    %2523 = vmatprep.subr.bf16.mxu0 %v2080
    %2524 = vmatpush1.bf16.msra.mxu0 %v2079
    %2525 = vmatprep.subr.bf16.mxu0 %v2076
    %2526 = vmatpush1.bf16.msra.mxu0 %v2075
    %2527 = vmatprep.subr.bf16.mxu0 %v2072
    %2528 = vmatpush1.bf16.msra.mxu0 %v2071
    %2529 = vmatprep.subr.bf16.mxu0 %v2068
    %2530 = vmatpush1.bf16.msra.mxu0 %v2067
    %2531 = vmatprep.subr.bf16.mxu0 %v2064
    %2532 = vmatpush1.bf16.msra.mxu0 %v2063
    %2533 = vmatprep.subr.bf16.mxu0 %v2060
    %2534 = vmatpush1.bf16.msra.mxu0 %v2059
    %2535 = vmatprep.subr.bf16.mxu0 %v2056
    %2536 = vmatpush1.bf16.msra.mxu0 %v2055
    %2537 = vmatprep.subr.bf16.mxu0 %v2116
    %2538 = vmatpush2.bf16.msra.mxu0 %v2115
    %2539 = vmatprep.subr.bf16.mxu0 %v2112
    %2540 = vmatpush2.bf16.msra.mxu0 %v2111
    %2541 = vmatprep.subr.bf16.mxu0 %v2108
    %2542 = vmatpush2.bf16.msra.mxu0 %v2107
    %2543 = vmatprep.subr.bf16.mxu0 %v2104
    %2544 = vmatpush2.bf16.msra.mxu0 %v2103
    %2545 = vmatprep.subr.bf16.mxu0 %v2100
    %2546 = vmatpush2.bf16.msra.mxu0 %v2099
    %2547 = vmatprep.subr.bf16.mxu0 %v2096
    %2548 = vmatpush2.bf16.msra.mxu0 %v2095
    %2549 = vmatprep.subr.bf16.mxu0 %v2092
    %2550 = vmatpush2.bf16.msra.mxu0 %v2091
    %2551 = vmatprep.subr.bf16.mxu0 %v2088
    %2552 = vmatpush2.bf16.msra.mxu0 %v2087
    %2553 = vmatprep.mubr.bf16.mxu0 %v878
    %2554 = vmatmul.mubr.bf16.gmra.mxu0 %v877
    %v2555 = vpop.f32.mrf.mxu0
    %v2556 = vadd.f32 %v2515, %v2555
    %v2557 = vpop.f32.mrf.mxu0
    %v2558 = vadd.f32 %v2517, %v2557
    %v2559 = vpop.f32.mrf.mxu0
    %v2560 = vpop.f32.mrf.mxu0
    %2561 = vdwg.mxu0
    %2562 = vmatprep.subr.bf16.mxu0 %v2148
    %2563 = vmatpush1.bf16.msra.mxu0 %v2147
    %2564 = vmatprep.subr.bf16.mxu0 %v2144
    %2565 = vmatpush1.bf16.msra.mxu0 %v2143
    %2566 = vmatprep.subr.bf16.mxu0 %v2140
    %2567 = vmatpush1.bf16.msra.mxu0 %v2139
    %2568 = vmatprep.subr.bf16.mxu0 %v2136
    %2569 = vmatpush1.bf16.msra.mxu0 %v2135
    %2570 = vmatprep.subr.bf16.mxu0 %v2132
    %2571 = vmatpush1.bf16.msra.mxu0 %v2131
    %2572 = vmatprep.subr.bf16.mxu0 %v2128
    %2573 = vmatpush1.bf16.msra.mxu0 %v2127
    %2574 = vmatprep.subr.bf16.mxu0 %v2124
    %2575 = vmatpush1.bf16.msra.mxu0 %v2123
    %2576 = vmatprep.subr.bf16.mxu0 %v2120
    %2577 = vmatpush1.bf16.msra.mxu0 %v2119
    %2578 = vmatprep.subr.bf16.mxu0 %v2180
    %2579 = vmatpush2.bf16.msra.mxu0 %v2179
    %2580 = vmatprep.subr.bf16.mxu0 %v2176
    %2581 = vmatpush2.bf16.msra.mxu0 %v2175
    %2582 = vmatprep.subr.bf16.mxu0 %v2172
    %2583 = vmatpush2.bf16.msra.mxu0 %v2171
    %2584 = vmatprep.subr.bf16.mxu0 %v2168
    %2585 = vmatpush2.bf16.msra.mxu0 %v2167
    %2586 = vmatprep.subr.bf16.mxu0 %v2164
    %2587 = vmatpush2.bf16.msra.mxu0 %v2163
    %2588 = vmatprep.subr.bf16.mxu0 %v2160
    %2589 = vmatpush2.bf16.msra.mxu0 %v2159
    %2590 = vmatprep.subr.bf16.mxu0 %v2156
    %2591 = vmatpush2.bf16.msra.mxu0 %v2155
    %2592 = vmatprep.subr.bf16.mxu0 %v2152
    %2593 = vmatpush2.bf16.msra.mxu0 %v2151
    %2594 = vmatprep.mubr.bf16.mxu0 %v880
    %2595 = vmatmul.mubr.bf16.gmra.mxu0 %v879
    %v2596 = vpop.f32.mrf.mxu0
    %v2597 = vadd.f32 %v2556, %v2596
    %v2598 = vpop.f32.mrf.mxu0
    %v2599 = vadd.f32 %v2558, %v2598
    %v2600 = vpop.f32.mrf.mxu0
    %v2601 = vpop.f32.mrf.mxu0
    %2602 = vdwg.mxu0
    %2603 = vmatprep.subr.bf16.mxu0 %v1958
    %2604 = vmatpush1.bf16.msra.mxu0 %v1957
    %2605 = vmatprep.subr.bf16.mxu0 %v1954
    %2606 = vmatpush1.bf16.msra.mxu0 %v1953
    %2607 = vmatprep.subr.bf16.mxu0 %v1950
    %2608 = vmatpush1.bf16.msra.mxu0 %v1949
    %2609 = vmatprep.subr.bf16.mxu0 %v1946
    %2610 = vmatpush1.bf16.msra.mxu0 %v1945
    %2611 = vmatprep.subr.bf16.mxu0 %v1942
    %2612 = vmatpush1.bf16.msra.mxu0 %v1941
    %2613 = vmatprep.subr.bf16.mxu0 %v1938
    %2614 = vmatpush1.bf16.msra.mxu0 %v1937
    %2615 = vmatprep.subr.bf16.mxu0 %v1934
    %2616 = vmatpush1.bf16.msra.mxu0 %v1933
    %2617 = vmatprep.subr.bf16.mxu0 %v1930
    %2618 = vmatpush1.bf16.msra.mxu0 %v1929
    %2619 = vmatprep.subr.bf16.mxu0 %v1990
    %2620 = vmatpush2.bf16.msra.mxu0 %v1989
    %2621 = vmatprep.subr.bf16.mxu0 %v1986
    %2622 = vmatpush2.bf16.msra.mxu0 %v1985
    %2623 = vmatprep.subr.bf16.mxu0 %v1982
    %2624 = vmatpush2.bf16.msra.mxu0 %v1981
    %2625 = vmatprep.subr.bf16.mxu0 %v1978
    %2626 = vmatpush2.bf16.msra.mxu0 %v1977
    %2627 = vmatprep.subr.bf16.mxu0 %v1974
    %2628 = vmatpush2.bf16.msra.mxu0 %v1973
    %2629 = vmatprep.subr.bf16.mxu0 %v1970
    %2630 = vmatpush2.bf16.msra.mxu0 %v1969
    %2631 = vmatprep.subr.bf16.mxu0 %v1966
    %2632 = vmatpush2.bf16.msra.mxu0 %v1965
    %2633 = vmatprep.subr.bf16.mxu0 %v1962
    %2634 = vmatpush2.bf16.msra.mxu0 %v1961
    %2635 = vmatprep.mubr.bf16.mxu0 %v874
    %2636 = vmatmul.mubr.bf16.gmra.mxu0 %v873
    %v2637 = vpop.f32.mrf.mxu0
    %v2638 = vadd.f32 %v1150, %v2637
    %v2639 = vpop.f32.mrf.mxu0
    %v2640 = vadd.f32 %v1154, %v2639
    %v2641 = vpop.f32.mrf.mxu0
    %v2642 = vpop.f32.mrf.mxu0
    %2643 = vdwg.mxu0
    %2644 = vmatprep.subr.bf16.mxu0 %v2022
    %2645 = vmatpush1.bf16.msra.mxu0 %v2021
    %2646 = vmatprep.subr.bf16.mxu0 %v2018
    %2647 = vmatpush1.bf16.msra.mxu0 %v2017
    %2648 = vmatprep.subr.bf16.mxu0 %v2014
    %2649 = vmatpush1.bf16.msra.mxu0 %v2013
    %2650 = vmatprep.subr.bf16.mxu0 %v2010
    %2651 = vmatpush1.bf16.msra.mxu0 %v2009
    %2652 = vmatprep.subr.bf16.mxu0 %v2006
    %2653 = vmatpush1.bf16.msra.mxu0 %v2005
    %2654 = vmatprep.subr.bf16.mxu0 %v2002
    %2655 = vmatpush1.bf16.msra.mxu0 %v2001
    %2656 = vmatprep.subr.bf16.mxu0 %v1998
    %2657 = vmatpush1.bf16.msra.mxu0 %v1997
    %2658 = vmatprep.subr.bf16.mxu0 %v1994
    %2659 = vmatpush1.bf16.msra.mxu0 %v1993
    %2660 = vmatprep.subr.bf16.mxu0 %v2054
    %2661 = vmatpush2.bf16.msra.mxu0 %v2053
    %2662 = vmatprep.subr.bf16.mxu0 %v2050
    %2663 = vmatpush2.bf16.msra.mxu0 %v2049
    %2664 = vmatprep.subr.bf16.mxu0 %v2046
    %2665 = vmatpush2.bf16.msra.mxu0 %v2045
    %2666 = vmatprep.subr.bf16.mxu0 %v2042
    %2667 = vmatpush2.bf16.msra.mxu0 %v2041
    %2668 = vmatprep.subr.bf16.mxu0 %v2038
    %2669 = vmatpush2.bf16.msra.mxu0 %v2037
    %2670 = vmatprep.subr.bf16.mxu0 %v2034
    %2671 = vmatpush2.bf16.msra.mxu0 %v2033
    %2672 = vmatprep.subr.bf16.mxu0 %v2030
    %2673 = vmatpush2.bf16.msra.mxu0 %v2029
    %2674 = vmatprep.subr.bf16.mxu0 %v2026
    %2675 = vmatpush2.bf16.msra.mxu0 %v2025
    %2676 = vmatprep.mubr.bf16.mxu0 %v876
    %2677 = vmatmul.mubr.bf16.gmra.mxu0 %v875
    %v2678 = vpop.f32.mrf.mxu0
    %v2679 = vadd.f32 %v2638, %v2678
    %v2680 = vpop.f32.mrf.mxu0
    %v2681 = vadd.f32 %v2640, %v2680
    %v2682 = vpop.f32.mrf.mxu0
    %v2683 = vpop.f32.mrf.mxu0
    %2684 = vdwg.mxu0
    %2685 = vmatprep.subr.bf16.mxu0 %v2086
    %2686 = vmatpush1.bf16.msra.mxu0 %v2085
    %2687 = vmatprep.subr.bf16.mxu0 %v2082
    %2688 = vmatpush1.bf16.msra.mxu0 %v2081
    %2689 = vmatprep.subr.bf16.mxu0 %v2078
    %2690 = vmatpush1.bf16.msra.mxu0 %v2077
    %2691 = vmatprep.subr.bf16.mxu0 %v2074
    %2692 = vmatpush1.bf16.msra.mxu0 %v2073
    %2693 = vmatprep.subr.bf16.mxu0 %v2070
    %2694 = vmatpush1.bf16.msra.mxu0 %v2069
    %2695 = vmatprep.subr.bf16.mxu0 %v2066
    %2696 = vmatpush1.bf16.msra.mxu0 %v2065
    %2697 = vmatprep.subr.bf16.mxu0 %v2062
    %2698 = vmatpush1.bf16.msra.mxu0 %v2061
    %2699 = vmatprep.subr.bf16.mxu0 %v2058
    %2700 = vmatpush1.bf16.msra.mxu0 %v2057
    %2701 = vmatprep.subr.bf16.mxu0 %v2118
    %2702 = vmatpush2.bf16.msra.mxu0 %v2117
    %2703 = vmatprep.subr.bf16.mxu0 %v2114
    %2704 = vmatpush2.bf16.msra.mxu0 %v2113
    %2705 = vmatprep.subr.bf16.mxu0 %v2110
    %2706 = vmatpush2.bf16.msra.mxu0 %v2109
    %2707 = vmatprep.subr.bf16.mxu0 %v2106
    %2708 = vmatpush2.bf16.msra.mxu0 %v2105
    %2709 = vmatprep.subr.bf16.mxu0 %v2102
    %2710 = vmatpush2.bf16.msra.mxu0 %v2101
    %2711 = vmatprep.subr.bf16.mxu0 %v2098
    %2712 = vmatpush2.bf16.msra.mxu0 %v2097
    %2713 = vmatprep.subr.bf16.mxu0 %v2094
    %2714 = vmatpush2.bf16.msra.mxu0 %v2093
    %2715 = vmatprep.subr.bf16.mxu0 %v2090
    %2716 = vmatpush2.bf16.msra.mxu0 %v2089
    %2717 = vmatprep.mubr.bf16.mxu0 %v878
    %2718 = vmatmul.mubr.bf16.gmra.mxu0 %v877
    %v2719 = vpop.f32.mrf.mxu0
    %v2720 = vadd.f32 %v2679, %v2719
    %v2721 = vpop.f32.mrf.mxu0
    %v2722 = vadd.f32 %v2681, %v2721
    %v2723 = vpop.f32.mrf.mxu0
    %v2724 = vpop.f32.mrf.mxu0
    %2725 = vdwg.mxu0
    %2726 = vmatprep.subr.bf16.mxu0 %v2150
    %2727 = vmatpush1.bf16.msra.mxu0 %v2149
    %2728 = vmatprep.subr.bf16.mxu0 %v2146
    %2729 = vmatpush1.bf16.msra.mxu0 %v2145
    %2730 = vmatprep.subr.bf16.mxu0 %v2142
    %2731 = vmatpush1.bf16.msra.mxu0 %v2141
    %2732 = vmatprep.subr.bf16.mxu0 %v2138
    %2733 = vmatpush1.bf16.msra.mxu0 %v2137
    %2734 = vmatprep.subr.bf16.mxu0 %v2134
    %2735 = vmatpush1.bf16.msra.mxu0 %v2133
    %2736 = vmatprep.subr.bf16.mxu0 %v2130
    %2737 = vmatpush1.bf16.msra.mxu0 %v2129
    %2738 = vmatprep.subr.bf16.mxu0 %v2126
    %2739 = vmatpush1.bf16.msra.mxu0 %v2125
    %2740 = vmatprep.subr.bf16.mxu0 %v2122
    %2741 = vmatpush1.bf16.msra.mxu0 %v2121
    %2742 = vmatprep.subr.bf16.mxu0 %v2182
    %2743 = vmatpush2.bf16.msra.mxu0 %v2181
    %2744 = vmatprep.subr.bf16.mxu0 %v2178
    %2745 = vmatpush2.bf16.msra.mxu0 %v2177
    %2746 = vmatprep.subr.bf16.mxu0 %v2174
    %2747 = vmatpush2.bf16.msra.mxu0 %v2173
    %2748 = vmatprep.subr.bf16.mxu0 %v2170
    %2749 = vmatpush2.bf16.msra.mxu0 %v2169
    %2750 = vmatprep.subr.bf16.mxu0 %v2166
    %2751 = vmatpush2.bf16.msra.mxu0 %v2165
    %2752 = vmatprep.subr.bf16.mxu0 %v2162
    %2753 = vmatpush2.bf16.msra.mxu0 %v2161
    %2754 = vmatprep.subr.bf16.mxu0 %v2158
    %2755 = vmatpush2.bf16.msra.mxu0 %v2157
    %2756 = vmatprep.subr.bf16.mxu0 %v2154
    %2757 = vmatpush2.bf16.msra.mxu0 %v2153
    %2758 = vmatprep.mubr.bf16.mxu0 %v880
    %2759 = vmatmul.mubr.bf16.gmra.mxu0 %v879
    %v2760 = vpop.f32.mrf.mxu0
    %v2761 = vadd.f32 %v2720, %v2760
    %v2762 = vpop.f32.mrf.mxu0
    %v2763 = vadd.f32 %v2722, %v2762
    %v2764 = vpop.f32.mrf.mxu0
    %v2765 = vpop.f32.mrf.mxu0
    %2766 = vdwg.mxu0
    %v2767 = vmax.f32 %v2597, 0.0
    %v2768 = vmax.f32 %v2599, 0.0
    %v2769 = vmax.f32 %v2761, 0.0
    %v2770 = vmax.f32 %v2763, 0.0
    %v2771 = vld [vmem:[#allocation13] sm:$0xff]
    %v2772 = vld [vmem:[#allocation13 + $0x8] sm:$0xff]
    %v2773 = vld [vmem:[#allocation13 + $0x10] sm:$0xff]
    %v2774 = vld [vmem:[#allocation13 + $0x18] sm:$0xff]
    %v2775 = vld [vmem:[#allocation13 + $0x20] sm:$0xff]
    %v2776 = vld [vmem:[#allocation13 + $0x28] sm:$0xff]
    %v2777 = vld [vmem:[#allocation13 + $0x30] sm:$0xff]
    %v2778 = vld [vmem:[#allocation13 + $0x38] sm:$0xff]
    %v2779 = vld [vmem:[#allocation13 + $0x40] sm:$0xff]
    %v2780 = vld [vmem:[#allocation13 + $0x48] sm:$0xff]
    %v2781 = vld [vmem:[#allocation13 + $0x50] sm:$0xff]
    %v2782 = vld [vmem:[#allocation13 + $0x58] sm:$0xff]
    %v2783 = vld [vmem:[#allocation13 + $0x60] sm:$0xff]
    %v2784 = vld [vmem:[#allocation13 + $0x68] sm:$0xff]
    %v2785 = vld [vmem:[#allocation13 + $0x70] sm:$0xff]
    %v2786 = vld [vmem:[#allocation13 + $0x78] sm:$0xff]
    %v2787 = vld [vmem:[#allocation13 + $0x80] sm:$0xff]
    %v2788 = vld [vmem:[#allocation13 + $0x88] sm:$0xff]
    %v2789 = vld [vmem:[#allocation13 + $0x90] sm:$0xff]
    %v2790 = vld [vmem:[#allocation13 + $0x98] sm:$0xff]
    %v2791 = vld [vmem:[#allocation13 + $0xa0] sm:$0xff]
    %v2792 = vld [vmem:[#allocation13 + $0xa8] sm:$0xff]
    %v2793 = vld [vmem:[#allocation13 + $0xb0] sm:$0xff]
    %v2794 = vld [vmem:[#allocation13 + $0xb8] sm:$0xff]
    %v2795 = vld [vmem:[#allocation13 + $0xc0] sm:$0xff]
    %v2796 = vld [vmem:[#allocation13 + $0xc8] sm:$0xff]
    %v2797 = vld [vmem:[#allocation13 + $0xd0] sm:$0xff]
    %v2798 = vld [vmem:[#allocation13 + $0xd8] sm:$0xff]
    %v2799 = vld [vmem:[#allocation13 + $0xe0] sm:$0xff]
    %v2800 = vld [vmem:[#allocation13 + $0xe8] sm:$0xff]
    %v2801 = vld [vmem:[#allocation13 + $0xf0] sm:$0xff]
    %v2802 = vld [vmem:[#allocation13 + $0xf8] sm:$0xff]
    %v2803 = vld [vmem:[#allocation13 + $0x100] sm:$0xff]
    %v2804 = vld [vmem:[#allocation13 + $0x108] sm:$0xff]
    %v2805 = vld [vmem:[#allocation13 + $0x110] sm:$0xff]
    %v2806 = vld [vmem:[#allocation13 + $0x118] sm:$0xff]
    %v2807 = vld [vmem:[#allocation13 + $0x120] sm:$0xff]
    %v2808 = vld [vmem:[#allocation13 + $0x128] sm:$0xff]
    %v2809 = vld [vmem:[#allocation13 + $0x130] sm:$0xff]
    %v2810 = vld [vmem:[#allocation13 + $0x138] sm:$0xff]
    %v2811 = vld [vmem:[#allocation13 + $0x140] sm:$0xff]
    %v2812 = vld [vmem:[#allocation13 + $0x148] sm:$0xff]
    %v2813 = vld [vmem:[#allocation13 + $0x150] sm:$0xff]
    %v2814 = vld [vmem:[#allocation13 + $0x158] sm:$0xff]
    %v2815 = vld [vmem:[#allocation13 + $0x160] sm:$0xff]
    %v2816 = vld [vmem:[#allocation13 + $0x168] sm:$0xff]
    %v2817 = vld [vmem:[#allocation13 + $0x170] sm:$0xff]
    %v2818 = vld [vmem:[#allocation13 + $0x178] sm:$0xff]
    %v2819 = vld [vmem:[#allocation13 + $0x180] sm:$0xff]
    %v2820 = vld [vmem:[#allocation13 + $0x188] sm:$0xff]
    %v2821 = vld [vmem:[#allocation13 + $0x190] sm:$0xff]
    %v2822 = vld [vmem:[#allocation13 + $0x198] sm:$0xff]
    %v2823 = vld [vmem:[#allocation13 + $0x1a0] sm:$0xff]
    %v2824 = vld [vmem:[#allocation13 + $0x1a8] sm:$0xff]
    %v2825 = vld [vmem:[#allocation13 + $0x1b0] sm:$0xff]
    %v2826 = vld [vmem:[#allocation13 + $0x1b8] sm:$0xff]
    %v2827 = vld [vmem:[#allocation13 + $0x1c0] sm:$0xff]
    %v2828 = vld [vmem:[#allocation13 + $0x1c8] sm:$0xff]
    %v2829 = vld [vmem:[#allocation13 + $0x1d0] sm:$0xff]
    %v2830 = vld [vmem:[#allocation13 + $0x1d8] sm:$0xff]
    %v2831 = vld [vmem:[#allocation13 + $0x1e0] sm:$0xff]
    %v2832 = vld [vmem:[#allocation13 + $0x1e8] sm:$0xff]
    %v2833 = vld [vmem:[#allocation13 + $0x1f0] sm:$0xff]
    %v2834 = vld [vmem:[#allocation13 + $0x1f8] sm:$0xff]
    %v2835 = vld [vmem:[#allocation13 + $0x200] sm:$0xff]
    %v2836 = vld [vmem:[#allocation13 + $0x208] sm:$0xff]
    %v2837 = vld [vmem:[#allocation13 + $0x210] sm:$0xff]
    %v2838 = vld [vmem:[#allocation13 + $0x218] sm:$0xff]
    %v2839 = vld [vmem:[#allocation13 + $0x220] sm:$0xff]
    %v2840 = vld [vmem:[#allocation13 + $0x228] sm:$0xff]
    %v2841 = vld [vmem:[#allocation13 + $0x230] sm:$0xff]
    %v2842 = vld [vmem:[#allocation13 + $0x238] sm:$0xff]
    %v2843 = vld [vmem:[#allocation13 + $0x240] sm:$0xff]
    %v2844 = vld [vmem:[#allocation13 + $0x248] sm:$0xff]
    %v2845 = vld [vmem:[#allocation13 + $0x250] sm:$0xff]
    %v2846 = vld [vmem:[#allocation13 + $0x258] sm:$0xff]
    %v2847 = vld [vmem:[#allocation13 + $0x260] sm:$0xff]
    %v2848 = vld [vmem:[#allocation13 + $0x268] sm:$0xff]
    %v2849 = vld [vmem:[#allocation13 + $0x270] sm:$0xff]
    %v2850 = vld [vmem:[#allocation13 + $0x278] sm:$0xff]
    %v2851 = vunpack.c.l.s8.bf16 %v2771
    %v2852 = vunpack.c.l.s8.bf16 %v2772
    %v2853 = vunpack.c.l.s8.bf16 %v2773
    %v2854 = vunpack.c.l.s8.bf16 %v2774
    %v2855 = vunpack.c.l.s8.bf16 %v2775
    %v2856 = vunpack.c.h.s8.bf16 %v2771
    %v2857 = vunpack.c.h.s8.bf16 %v2772
    %v2858 = vunpack.c.h.s8.bf16 %v2773
    %v2859 = vunpack.c.h.s8.bf16 %v2774
    %v2860 = vunpack.c.h.s8.bf16 %v2775
    %v2861 = vunpack.c.l.s8.bf16 %v2776
    %v2862 = vunpack.c.l.s8.bf16 %v2777
    %v2863 = vunpack.c.l.s8.bf16 %v2778
    %v2864 = vunpack.c.l.s8.bf16 %v2779
    %v2865 = vunpack.c.l.s8.bf16 %v2780
    %v2866 = vunpack.c.h.s8.bf16 %v2776
    %v2867 = vunpack.c.h.s8.bf16 %v2777
    %v2868 = vunpack.c.h.s8.bf16 %v2778
    %v2869 = vunpack.c.h.s8.bf16 %v2779
    %v2870 = vunpack.c.h.s8.bf16 %v2780
    %v2871 = vunpack.c.l.s8.bf16 %v2781
    %v2872 = vunpack.c.l.s8.bf16 %v2782
    %v2873 = vunpack.c.l.s8.bf16 %v2783
    %v2874 = vunpack.c.l.s8.bf16 %v2784
    %v2875 = vunpack.c.l.s8.bf16 %v2785
    %v2876 = vunpack.c.h.s8.bf16 %v2781
    %v2877 = vunpack.c.h.s8.bf16 %v2782
    %v2878 = vunpack.c.h.s8.bf16 %v2783
    %v2879 = vunpack.c.h.s8.bf16 %v2784
    %v2880 = vunpack.c.h.s8.bf16 %v2785
    %v2881 = vunpack.c.l.s8.bf16 %v2786
    %v2882 = vunpack.c.l.s8.bf16 %v2787
    %v2883 = vunpack.c.l.s8.bf16 %v2788
    %v2884 = vunpack.c.l.s8.bf16 %v2789
    %v2885 = vunpack.c.l.s8.bf16 %v2790
    %v2886 = vunpack.c.h.s8.bf16 %v2786
    %v2887 = vunpack.c.h.s8.bf16 %v2787
    %v2888 = vunpack.c.h.s8.bf16 %v2788
    %v2889 = vunpack.c.h.s8.bf16 %v2789
    %v2890 = vunpack.c.h.s8.bf16 %v2790
    %v2891 = vunpack.c.l.s8.bf16 %v2791
    %v2892 = vunpack.c.l.s8.bf16 %v2792
    %v2893 = vunpack.c.l.s8.bf16 %v2793
    %v2894 = vunpack.c.l.s8.bf16 %v2794
    %v2895 = vunpack.c.l.s8.bf16 %v2795
    %v2896 = vunpack.c.h.s8.bf16 %v2791
    %v2897 = vunpack.c.h.s8.bf16 %v2792
    %v2898 = vunpack.c.h.s8.bf16 %v2793
    %v2899 = vunpack.c.h.s8.bf16 %v2794
    %v2900 = vunpack.c.h.s8.bf16 %v2795
    %v2901 = vunpack.c.l.s8.bf16 %v2796
    %v2902 = vunpack.c.l.s8.bf16 %v2797
    %v2903 = vunpack.c.l.s8.bf16 %v2798
    %v2904 = vunpack.c.l.s8.bf16 %v2799
    %v2905 = vunpack.c.l.s8.bf16 %v2800
    %v2906 = vunpack.c.h.s8.bf16 %v2796
    %v2907 = vunpack.c.h.s8.bf16 %v2797
    %v2908 = vunpack.c.h.s8.bf16 %v2798
    %v2909 = vunpack.c.h.s8.bf16 %v2799
    %v2910 = vunpack.c.h.s8.bf16 %v2800
    %v2911 = vunpack.c.l.s8.bf16 %v2801
    %v2912 = vunpack.c.l.s8.bf16 %v2802
    %v2913 = vunpack.c.l.s8.bf16 %v2803
    %v2914 = vunpack.c.l.s8.bf16 %v2804
    %v2915 = vunpack.c.l.s8.bf16 %v2805
    %v2916 = vunpack.c.h.s8.bf16 %v2801
    %v2917 = vunpack.c.h.s8.bf16 %v2802
    %v2918 = vunpack.c.h.s8.bf16 %v2803
    %v2919 = vunpack.c.h.s8.bf16 %v2804
    %v2920 = vunpack.c.h.s8.bf16 %v2805
    %v2921 = vunpack.c.l.s8.bf16 %v2806
    %v2922 = vunpack.c.l.s8.bf16 %v2807
    %v2923 = vunpack.c.l.s8.bf16 %v2808
    %v2924 = vunpack.c.l.s8.bf16 %v2809
    %v2925 = vunpack.c.l.s8.bf16 %v2810
    %v2926 = vunpack.c.h.s8.bf16 %v2806
    %v2927 = vunpack.c.h.s8.bf16 %v2807
    %v2928 = vunpack.c.h.s8.bf16 %v2808
    %v2929 = vunpack.c.h.s8.bf16 %v2809
    %v2930 = vunpack.c.h.s8.bf16 %v2810
    %v2931 = vunpack.c.l.s8.bf16 %v2811
    %v2932 = vunpack.c.l.s8.bf16 %v2812
    %v2933 = vunpack.c.l.s8.bf16 %v2813
    %v2934 = vunpack.c.l.s8.bf16 %v2814
    %v2935 = vunpack.c.l.s8.bf16 %v2815
    %v2936 = vunpack.c.h.s8.bf16 %v2811
    %v2937 = vunpack.c.h.s8.bf16 %v2812
    %v2938 = vunpack.c.h.s8.bf16 %v2813
    %v2939 = vunpack.c.h.s8.bf16 %v2814
    %v2940 = vunpack.c.h.s8.bf16 %v2815
    %v2941 = vunpack.c.l.s8.bf16 %v2816
    %v2942 = vunpack.c.l.s8.bf16 %v2817
    %v2943 = vunpack.c.l.s8.bf16 %v2818
    %v2944 = vunpack.c.l.s8.bf16 %v2819
    %v2945 = vunpack.c.l.s8.bf16 %v2820
    %v2946 = vunpack.c.h.s8.bf16 %v2816
    %v2947 = vunpack.c.h.s8.bf16 %v2817
    %v2948 = vunpack.c.h.s8.bf16 %v2818
    %v2949 = vunpack.c.h.s8.bf16 %v2819
    %v2950 = vunpack.c.h.s8.bf16 %v2820
    %v2951 = vunpack.c.l.s8.bf16 %v2821
    %v2952 = vunpack.c.l.s8.bf16 %v2822
    %v2953 = vunpack.c.l.s8.bf16 %v2823
    %v2954 = vunpack.c.l.s8.bf16 %v2824
    %v2955 = vunpack.c.l.s8.bf16 %v2825
    %v2956 = vunpack.c.h.s8.bf16 %v2821
    %v2957 = vunpack.c.h.s8.bf16 %v2822
    %v2958 = vunpack.c.h.s8.bf16 %v2823
    %v2959 = vunpack.c.h.s8.bf16 %v2824
    %v2960 = vunpack.c.h.s8.bf16 %v2825
    %v2961 = vunpack.c.l.s8.bf16 %v2826
    %v2962 = vunpack.c.l.s8.bf16 %v2827
    %v2963 = vunpack.c.l.s8.bf16 %v2828
    %v2964 = vunpack.c.l.s8.bf16 %v2829
    %v2965 = vunpack.c.l.s8.bf16 %v2830
    %v2966 = vunpack.c.h.s8.bf16 %v2826
    %v2967 = vunpack.c.h.s8.bf16 %v2827
    %v2968 = vunpack.c.h.s8.bf16 %v2828
    %v2969 = vunpack.c.h.s8.bf16 %v2829
    %v2970 = vunpack.c.h.s8.bf16 %v2830
    %v2971 = vunpack.c.l.s8.bf16 %v2831
    %v2972 = vunpack.c.l.s8.bf16 %v2832
    %v2973 = vunpack.c.l.s8.bf16 %v2833
    %v2974 = vunpack.c.l.s8.bf16 %v2834
    %v2975 = vunpack.c.l.s8.bf16 %v2835
    %v2976 = vunpack.c.h.s8.bf16 %v2831
    %v2977 = vunpack.c.h.s8.bf16 %v2832
    %v2978 = vunpack.c.h.s8.bf16 %v2833
    %v2979 = vunpack.c.h.s8.bf16 %v2834
    %v2980 = vunpack.c.h.s8.bf16 %v2835
    %v2981 = vunpack.c.l.s8.bf16 %v2836
    %v2982 = vunpack.c.l.s8.bf16 %v2837
    %v2983 = vunpack.c.l.s8.bf16 %v2838
    %v2984 = vunpack.c.l.s8.bf16 %v2839
    %v2985 = vunpack.c.l.s8.bf16 %v2840
    %v2986 = vunpack.c.h.s8.bf16 %v2836
    %v2987 = vunpack.c.h.s8.bf16 %v2837
    %v2988 = vunpack.c.h.s8.bf16 %v2838
    %v2989 = vunpack.c.h.s8.bf16 %v2839
    %v2990 = vunpack.c.h.s8.bf16 %v2840
    %v2991 = vunpack.c.l.s8.bf16 %v2841
    %v2992 = vunpack.c.l.s8.bf16 %v2842
    %v2993 = vunpack.c.l.s8.bf16 %v2843
    %v2994 = vunpack.c.l.s8.bf16 %v2844
    %v2995 = vunpack.c.l.s8.bf16 %v2845
    %v2996 = vunpack.c.h.s8.bf16 %v2841
    %v2997 = vunpack.c.h.s8.bf16 %v2842
    %v2998 = vunpack.c.h.s8.bf16 %v2843
    %v2999 = vunpack.c.h.s8.bf16 %v2844
    %v3000 = vunpack.c.h.s8.bf16 %v2845
    %v3001 = vunpack.c.l.s8.bf16 %v2846
    %v3002 = vunpack.c.l.s8.bf16 %v2847
    %v3003 = vunpack.c.l.s8.bf16 %v2848
    %v3004 = vunpack.c.l.s8.bf16 %v2849
    %v3005 = vunpack.c.l.s8.bf16 %v2850
    %v3006 = vunpack.c.h.s8.bf16 %v2846
    %v3007 = vunpack.c.h.s8.bf16 %v2847
    %v3008 = vunpack.c.h.s8.bf16 %v2848
    %v3009 = vunpack.c.h.s8.bf16 %v2849
    %v3010 = vunpack.c.h.s8.bf16 %v2850
    %v3011 = vpack.c.bf16 %v2767, %v2767
    %v3012 = vpack.c.bf16 %v2768, %v2768
    %v3013 = vpack.c.bf16 %v2769, %v2769
    %v3014 = vpack.c.bf16 %v2770, %v2770
    %3015 = vmatprep.subr.bf16.mxu0 %v2887
    %3016 = vmatpush1.bf16.msra.mxu0 %v2886
    %3017 = vmatprep.subr.bf16.mxu0 %v2882
    %3018 = vmatpush1.bf16.msra.mxu0 %v2881
    %3019 = vmatprep.subr.bf16.mxu0 %v2877
    %3020 = vmatpush1.bf16.msra.mxu0 %v2876
    %3021 = vmatprep.subr.bf16.mxu0 %v2872
    %3022 = vmatpush1.bf16.msra.mxu0 %v2871
    %3023 = vmatprep.subr.bf16.mxu0 %v2867
    %3024 = vmatpush1.bf16.msra.mxu0 %v2866
    %3025 = vmatprep.subr.bf16.mxu0 %v2862
    %3026 = vmatpush1.bf16.msra.mxu0 %v2861
    %3027 = vmatprep.subr.bf16.mxu0 %v2857
    %3028 = vmatpush1.bf16.msra.mxu0 %v2856
    %3029 = vmatprep.subr.bf16.mxu0 %v2852
    %3030 = vmatpush1.bf16.msra.mxu0 %v2851
    %3031 = vmatprep.subr.bf16.mxu0 %v2927
    %3032 = vmatpush2.bf16.msra.mxu0 %v2926
    %3033 = vmatprep.subr.bf16.mxu0 %v2922
    %3034 = vmatpush2.bf16.msra.mxu0 %v2921
    %3035 = vmatprep.subr.bf16.mxu0 %v2917
    %3036 = vmatpush2.bf16.msra.mxu0 %v2916
    %3037 = vmatprep.subr.bf16.mxu0 %v2912
    %3038 = vmatpush2.bf16.msra.mxu0 %v2911
    %3039 = vmatprep.subr.bf16.mxu0 %v2907
    %3040 = vmatpush2.bf16.msra.mxu0 %v2906
    %3041 = vmatprep.subr.bf16.mxu0 %v2902
    %3042 = vmatpush2.bf16.msra.mxu0 %v2901
    %3043 = vmatprep.subr.bf16.mxu0 %v2897
    %3044 = vmatpush2.bf16.msra.mxu0 %v2896
    %3045 = vmatprep.subr.bf16.mxu0 %v2892
    %3046 = vmatpush2.bf16.msra.mxu0 %v2891
    %3047 = vmatprep.mubr.bf16.mxu0 %v3012
    %3048 = vmatmul.mubr.bf16.gmra.mxu0 %v3011
    %v3049 = vpop.f32.mrf.mxu0
    %v3050 = vadd.f32 0.0, %v3049
    %v3051 = vpop.f32.mrf.mxu0
    %v3052 = vadd.f32 0.0, %v3051
    %v3053 = vpop.f32.mrf.mxu0
    %v3054 = vpop.f32.mrf.mxu0
    %3055 = vdwg.mxu0
    %3056 = vmatprep.subr.bf16.mxu0 %v2967
    %3057 = vmatpush1.bf16.msra.mxu0 %v2966
    %3058 = vmatprep.subr.bf16.mxu0 %v2962
    %3059 = vmatpush1.bf16.msra.mxu0 %v2961
    %3060 = vmatprep.subr.bf16.mxu0 %v2957
    %3061 = vmatpush1.bf16.msra.mxu0 %v2956
    %3062 = vmatprep.subr.bf16.mxu0 %v2952
    %3063 = vmatpush1.bf16.msra.mxu0 %v2951
    %3064 = vmatprep.subr.bf16.mxu0 %v2947
    %3065 = vmatpush1.bf16.msra.mxu0 %v2946
    %3066 = vmatprep.subr.bf16.mxu0 %v2942
    %3067 = vmatpush1.bf16.msra.mxu0 %v2941
    %3068 = vmatprep.subr.bf16.mxu0 %v2937
    %3069 = vmatpush1.bf16.msra.mxu0 %v2936
    %3070 = vmatprep.subr.bf16.mxu0 %v2932
    %3071 = vmatpush1.bf16.msra.mxu0 %v2931
    %3072 = vmatprep.subr.bf16.mxu0 %v3007
    %3073 = vmatpush2.bf16.msra.mxu0 %v3006
    %3074 = vmatprep.subr.bf16.mxu0 %v3002
    %3075 = vmatpush2.bf16.msra.mxu0 %v3001
    %3076 = vmatprep.subr.bf16.mxu0 %v2997
    %3077 = vmatpush2.bf16.msra.mxu0 %v2996
    %3078 = vmatprep.subr.bf16.mxu0 %v2992
    %3079 = vmatpush2.bf16.msra.mxu0 %v2991
    %3080 = vmatprep.subr.bf16.mxu0 %v2987
    %3081 = vmatpush2.bf16.msra.mxu0 %v2986
    %3082 = vmatprep.subr.bf16.mxu0 %v2982
    %3083 = vmatpush2.bf16.msra.mxu0 %v2981
    %3084 = vmatprep.subr.bf16.mxu0 %v2977
    %3085 = vmatpush2.bf16.msra.mxu0 %v2976
    %3086 = vmatprep.subr.bf16.mxu0 %v2972
    %3087 = vmatpush2.bf16.msra.mxu0 %v2971
    %3088 = vmatprep.mubr.bf16.mxu0 %v3014
    %3089 = vmatmul.mubr.bf16.gmra.mxu0 %v3013
    %v3090 = vpop.f32.mrf.mxu0
    %v3091 = vadd.f32 %v3050, %v3090
    %v3092 = vpop.f32.mrf.mxu0
    %v3093 = vadd.f32 %v3052, %v3092
    %v3094 = vpop.f32.mrf.mxu0
    %v3095 = vpop.f32.mrf.mxu0
    %3096 = vdwg.mxu0
    %3097 = vmatprep.subr.bf16.mxu0 %v2889
    %3098 = vmatpush1.bf16.msra.mxu0 %v2888
    %3099 = vmatprep.subr.bf16.mxu0 %v2884
    %3100 = vmatpush1.bf16.msra.mxu0 %v2883
    %3101 = vmatprep.subr.bf16.mxu0 %v2879
    %3102 = vmatpush1.bf16.msra.mxu0 %v2878
    %3103 = vmatprep.subr.bf16.mxu0 %v2874
    %3104 = vmatpush1.bf16.msra.mxu0 %v2873
    %3105 = vmatprep.subr.bf16.mxu0 %v2869
    %3106 = vmatpush1.bf16.msra.mxu0 %v2868
    %3107 = vmatprep.subr.bf16.mxu0 %v2864
    %3108 = vmatpush1.bf16.msra.mxu0 %v2863
    %3109 = vmatprep.subr.bf16.mxu0 %v2859
    %3110 = vmatpush1.bf16.msra.mxu0 %v2858
    %3111 = vmatprep.subr.bf16.mxu0 %v2854
    %3112 = vmatpush1.bf16.msra.mxu0 %v2853
    %3113 = vmatprep.subr.bf16.mxu0 %v2929
    %3114 = vmatpush2.bf16.msra.mxu0 %v2928
    %3115 = vmatprep.subr.bf16.mxu0 %v2924
    %3116 = vmatpush2.bf16.msra.mxu0 %v2923
    %3117 = vmatprep.subr.bf16.mxu0 %v2919
    %3118 = vmatpush2.bf16.msra.mxu0 %v2918
    %3119 = vmatprep.subr.bf16.mxu0 %v2914
    %3120 = vmatpush2.bf16.msra.mxu0 %v2913
    %3121 = vmatprep.subr.bf16.mxu0 %v2909
    %3122 = vmatpush2.bf16.msra.mxu0 %v2908
    %3123 = vmatprep.subr.bf16.mxu0 %v2904
    %3124 = vmatpush2.bf16.msra.mxu0 %v2903
    %3125 = vmatprep.subr.bf16.mxu0 %v2899
    %3126 = vmatpush2.bf16.msra.mxu0 %v2898
    %3127 = vmatprep.subr.bf16.mxu0 %v2894
    %3128 = vmatpush2.bf16.msra.mxu0 %v2893
    %3129 = vmatprep.mubr.bf16.mxu0 %v3012
    %3130 = vmatmul.mubr.bf16.gmra.mxu0 %v3011
    %v3131 = vpop.f32.mrf.mxu0
    %v3132 = vadd.f32 0.0, %v3131
    %v3133 = vpop.f32.mrf.mxu0
    %v3134 = vadd.f32 0.0, %v3133
    %v3135 = vpop.f32.mrf.mxu0
    %v3136 = vpop.f32.mrf.mxu0
    %3137 = vdwg.mxu0
    %3138 = vmatprep.subr.bf16.mxu0 %v2969
    %3139 = vmatpush1.bf16.msra.mxu0 %v2968
    %3140 = vmatprep.subr.bf16.mxu0 %v2964
    %3141 = vmatpush1.bf16.msra.mxu0 %v2963
    %3142 = vmatprep.subr.bf16.mxu0 %v2959
    %3143 = vmatpush1.bf16.msra.mxu0 %v2958
    %3144 = vmatprep.subr.bf16.mxu0 %v2954
    %3145 = vmatpush1.bf16.msra.mxu0 %v2953
    %3146 = vmatprep.subr.bf16.mxu0 %v2949
    %3147 = vmatpush1.bf16.msra.mxu0 %v2948
    %3148 = vmatprep.subr.bf16.mxu0 %v2944
    %3149 = vmatpush1.bf16.msra.mxu0 %v2943
    %3150 = vmatprep.subr.bf16.mxu0 %v2939
    %3151 = vmatpush1.bf16.msra.mxu0 %v2938
    %3152 = vmatprep.subr.bf16.mxu0 %v2934
    %3153 = vmatpush1.bf16.msra.mxu0 %v2933
    %3154 = vmatprep.subr.bf16.mxu0 %v3009
    %3155 = vmatpush2.bf16.msra.mxu0 %v3008
    %3156 = vmatprep.subr.bf16.mxu0 %v3004
    %3157 = vmatpush2.bf16.msra.mxu0 %v3003
    %3158 = vmatprep.subr.bf16.mxu0 %v2999
    %3159 = vmatpush2.bf16.msra.mxu0 %v2998
    %3160 = vmatprep.subr.bf16.mxu0 %v2994
    %3161 = vmatpush2.bf16.msra.mxu0 %v2993
    %3162 = vmatprep.subr.bf16.mxu0 %v2989
    %3163 = vmatpush2.bf16.msra.mxu0 %v2988
    %3164 = vmatprep.subr.bf16.mxu0 %v2984
    %3165 = vmatpush2.bf16.msra.mxu0 %v2983
    %3166 = vmatprep.subr.bf16.mxu0 %v2979
    %3167 = vmatpush2.bf16.msra.mxu0 %v2978
    %3168 = vmatprep.subr.bf16.mxu0 %v2974
    %3169 = vmatpush2.bf16.msra.mxu0 %v2973
    %3170 = vmatprep.mubr.bf16.mxu0 %v3014
    %3171 = vmatmul.mubr.bf16.gmra.mxu0 %v3013
    %v3172 = vpop.f32.mrf.mxu0
    %v3173 = vadd.f32 %v3132, %v3172
    %v3174 = vpop.f32.mrf.mxu0
    %v3175 = vadd.f32 %v3134, %v3174
    %v3176 = vpop.f32.mrf.mxu0
    %v3177 = vpop.f32.mrf.mxu0
    %3178 = vdwg.mxu0
    %3179 = vmatprep.subr.bf16.mxu0 0
    %3180 = vmatpush1.bf16.msra.mxu0 %v2890
    %3181 = vmatprep.subr.bf16.mxu0 0
    %3182 = vmatpush1.bf16.msra.mxu0 %v2885
    %3183 = vmatprep.subr.bf16.mxu0 0
    %3184 = vmatpush1.bf16.msra.mxu0 %v2880
    %3185 = vmatprep.subr.bf16.mxu0 0
    %3186 = vmatpush1.bf16.msra.mxu0 %v2875
    %3187 = vmatprep.subr.bf16.mxu0 0
    %3188 = vmatpush1.bf16.msra.mxu0 %v2870
    %3189 = vmatprep.subr.bf16.mxu0 0
    %3190 = vmatpush1.bf16.msra.mxu0 %v2865
    %3191 = vmatprep.subr.bf16.mxu0 0
    %3192 = vmatpush1.bf16.msra.mxu0 %v2860
    %3193 = vmatprep.subr.bf16.mxu0 0
    %3194 = vmatpush1.bf16.msra.mxu0 %v2855
    %3195 = vmatprep.subr.bf16.mxu0 0
    %3196 = vmatpush2.bf16.msra.mxu0 %v2930
    %3197 = vmatprep.subr.bf16.mxu0 0
    %3198 = vmatpush2.bf16.msra.mxu0 %v2925
    %3199 = vmatprep.subr.bf16.mxu0 0
    %3200 = vmatpush2.bf16.msra.mxu0 %v2920
    %3201 = vmatprep.subr.bf16.mxu0 0
    %3202 = vmatpush2.bf16.msra.mxu0 %v2915
    %3203 = vmatprep.subr.bf16.mxu0 0
    %3204 = vmatpush2.bf16.msra.mxu0 %v2910
    %3205 = vmatprep.subr.bf16.mxu0 0
    %3206 = vmatpush2.bf16.msra.mxu0 %v2905
    %3207 = vmatprep.subr.bf16.mxu0 0
    %3208 = vmatpush2.bf16.msra.mxu0 %v2900
    %3209 = vmatprep.subr.bf16.mxu0 0
    %3210 = vmatpush2.bf16.msra.mxu0 %v2895
    %3211 = vmatprep.mubr.bf16.mxu0 %v3012
    %3212 = vmatmul.mubr.bf16.gmra.mxu0 %v3011
    %v3213 = vpop.f32.mrf.mxu0
    %v3214 = vadd.f32 0.0, %v3213
    %v3215 = vpop.f32.mrf.mxu0
    %v3216 = vpop.f32.mrf.mxu0
    %v3217 = vpop.f32.mrf.mxu0
    %3218 = vdwg.mxu0
    %3219 = vmatprep.subr.bf16.mxu0 0
    %3220 = vmatpush1.bf16.msra.mxu0 %v2970
    %3221 = vmatprep.subr.bf16.mxu0 0
    %3222 = vmatpush1.bf16.msra.mxu0 %v2965
    %3223 = vmatprep.subr.bf16.mxu0 0
    %3224 = vmatpush1.bf16.msra.mxu0 %v2960
    %3225 = vmatprep.subr.bf16.mxu0 0
    %3226 = vmatpush1.bf16.msra.mxu0 %v2955
    %3227 = vmatprep.subr.bf16.mxu0 0
    %3228 = vmatpush1.bf16.msra.mxu0 %v2950
    %3229 = vmatprep.subr.bf16.mxu0 0
    %3230 = vmatpush1.bf16.msra.mxu0 %v2945
    %3231 = vmatprep.subr.bf16.mxu0 0
    %3232 = vmatpush1.bf16.msra.mxu0 %v2940
    %3233 = vmatprep.subr.bf16.mxu0 0
    %3234 = vmatpush1.bf16.msra.mxu0 %v2935
    %3235 = vmatprep.subr.bf16.mxu0 0
    %3236 = vmatpush2.bf16.msra.mxu0 %v3010
    %3237 = vmatprep.subr.bf16.mxu0 0
    %3238 = vmatpush2.bf16.msra.mxu0 %v3005
    %3239 = vmatprep.subr.bf16.mxu0 0
    %3240 = vmatpush2.bf16.msra.mxu0 %v3000
    %3241 = vmatprep.subr.bf16.mxu0 0
    %3242 = vmatpush2.bf16.msra.mxu0 %v2995
    %3243 = vmatprep.subr.bf16.mxu0 0
    %3244 = vmatpush2.bf16.msra.mxu0 %v2990
    %3245 = vmatprep.subr.bf16.mxu0 0
    %3246 = vmatpush2.bf16.msra.mxu0 %v2985
    %3247 = vmatprep.subr.bf16.mxu0 0
    %3248 = vmatpush2.bf16.msra.mxu0 %v2980
    %3249 = vmatprep.subr.bf16.mxu0 0
    %3250 = vmatpush2.bf16.msra.mxu0 %v2975
    %3251 = vmatprep.mubr.bf16.mxu0 %v3014
    %3252 = vmatmul.mubr.bf16.gmra.mxu0 %v3013
    %v3253 = vpop.f32.mrf.mxu0
    %v3254 = vadd.f32 %v3214, %v3253
    %v3255 = vpop.f32.mrf.mxu0
    %v3256 = vpop.f32.mrf.mxu0
    %v3257 = vpop.f32.mrf.mxu0
    %3258 = vdwg.mxu0
    %v3259 = vld [vmem:[%s7] sm:$0x1f]
    %v3261 = vlaneseq
    %v3262 = vshrl.u32 %v3261, 7
    %v3263 = vsub.s32 0, %v3262
    %v3264 = vrot.slane %v3259, %v3263
    %v3265 = vlaneseq
    %v3266 = vshrl.u32 %v3265, 7
    %v3267 = vsub.s32 1, %v3266
    %v3268 = vrot.slane %v3259, %v3267
    %v3269 = vlaneseq
    %v3270 = vshrl.u32 %v3269, 7
    %v3271 = vsub.s32 2, %v3270
    %v3272 = vrot.slane %v3259, %v3271
    %v3273 = vlaneseq
    %v3274 = vshrl.u32 %v3273, 7
    %v3275 = vsub.s32 3, %v3274
    %v3276 = vrot.slane %v3259, %v3275
    %v3277 = vlaneseq
    %v3278 = vshrl.u32 %v3277, 7
    %v3279 = vsub.s32 4, %v3278
    %v3280 = vrot.slane %v3259, %v3279
    %v3286 = vmul.f32 %v3091, %v3264
    %v3287 = vmul.f32 %v3093, %v3268
    %v3288 = vmul.f32 %v3173, %v3272
    %v3289 = vmul.f32 %v3175, %v3276
    %v3290 = vmul.f32 %v3254, %v3280
    %v3291 = vld [vmem:[%s8] sm:$0x1f]
    %v3293 = vlaneseq
    %v3294 = vshrl.u32 %v3293, 7
    %v3295 = vsub.s32 0, %v3294
    %v3296 = vrot.slane %v3291, %v3295
    %v3297 = vlaneseq
    %v3298 = vshrl.u32 %v3297, 7
    %v3299 = vsub.s32 1, %v3298
    %v3300 = vrot.slane %v3291, %v3299
    %v3301 = vlaneseq
    %v3302 = vshrl.u32 %v3301, 7
    %v3303 = vsub.s32 2, %v3302
    %v3304 = vrot.slane %v3291, %v3303
    %v3305 = vlaneseq
    %v3306 = vshrl.u32 %v3305, 7
    %v3307 = vsub.s32 3, %v3306
    %v3308 = vrot.slane %v3291, %v3307
    %v3309 = vlaneseq
    %v3310 = vshrl.u32 %v3309, 7
    %v3311 = vsub.s32 4, %v3310
    %v3312 = vrot.slane %v3291, %v3311
    %v3318 = vadd.f32 %v3286, %v3296
    %v3319 = vadd.f32 %v3287, %v3300
    %v3320 = vadd.f32 %v3288, %v3304
    %v3321 = vadd.f32 %v3289, %v3308
    %v3322 = vadd.f32 %v3290, %v3312
    %v3328 = vcombine.low %v3318, %v3319
    %v3329 = vcombine.low %v3320, %v3321
    %v3331 = vunpack.c.l.s4 1983009808
    %v3332 = vunpack.c.0.s8 %v3331
    %v3333 = vlaneseq
    %v3334 = vshrl.u32 %v3333, 7
    %v3335 = vsub.s32 %v3332, %v3334
    %v3336 = vrot.slane %v3328, %v3335
    %v3338 = vunpack.c.l.s4 1983009808
    %v3339 = vunpack.c.0.s8 %v3338
    %v3340 = vlaneseq
    %v3341 = vshrl.u32 %v3340, 7
    %v3342 = vsub.s32 %v3339, %v3341
    %v3343 = vrot.slane %v3329, %v3342
    %v3344 = vcombine.low %v3336, %v3343
    %v3346 = vunpack.c.l.s4 1983009808
    %v3347 = vunpack.c.0.s8 %v3346
    %v3348 = vlaneseq
    %v3349 = vshrl.u32 %v3348, 7
    %v3350 = vsub.s32 %v3347, %v3349
    %v3351 = vrot.slane %v3322, %v3350
    %3354 = vst [vmem:[#allocation14] sm:$0xff] %v3344
    %3355 = vst [vmem:[#allocation14 + $0x8] sm:$0x3] %v3351
    // Predicated region
    $region66: #{tpu_custom_call.1} parent=1 // pred_check
      _
    $region67: #{tpu_custom_call.1} parent=1 // pred_check_branch
      %3357 = sbr.rel (0) target = $region69
    $region68: #{tpu_custom_call.1} parent=1 // pred_region
      %s3359 = ssub.s32 160, 160
      %3360 = vsyncadd [#allocation4], %s3359
      %s3362 = sshll.u32 [#allocation14], 4
      %s3363 = int_to_ptr.vmem [resolvable:$true] %s3362
      %3365 = dma.vmem_to_hbm [thread:$0]  %s3363, 160, %s9, [#allocation4]
    $region69: #{tpu_custom_call.1} parent=1 // pred_fallthru
      _
    // Predicated region
    $region70: #{tpu_custom_call.1} parent=1 // pred_check
      _
    $region71: #{tpu_custom_call.1} parent=1 // pred_check_branch
      %3367 = sbr.rel (0) target = $region73
    $region72: #{tpu_custom_call.1} parent=1 // pred_region
      %3368 = dma.done [#allocation4], 160
    $region73: #{tpu_custom_call.1} parent=1 // pred_fallthru
      _
    %3369 = vsyncpa [#allocation3], 1
    %3370 = vsyncpa [#allocation6], 1
    %3371 = vsyncpa [#allocation9], 1
    %3372 = vsyncpa [#allocation12], 1
    %3373 = vsyncpa [#allocation4], 1

// kernel: tpu_custom_call.1
$region0: #{tpu_custom_call.1}
  #allocation0 [shape = 'u32[]', space=smem, size = 0x4, offset = 0x4, fixed_abs, tag = 'smem constant byte address 0x4 - core index']
  #allocation1 [shape = 'u32[144,128]{1,0:T(1,128)}', space=vmem, size = 0x12000, scoped, tag = 'internal scratch']
  %s0 = inlined_call_operand.hbm [shape: bf16[2,384], index: 0, kind: input, shape index: {}]
  %s1 = inlined_call_operand.hbm [shape: s8[384,1024], index: 1, kind: input, shape index: {}]
  %s2 = inlined_call_operand.hbm [shape: f32[1,1024], index: 2, kind: input, shape index: {}]
  %s3 = inlined_call_operand.hbm [shape: f32[1,1024], index: 3, kind: input, shape index: {}]
  %s4 = inlined_call_operand.hbm [shape: bf16[1024,512], index: 4, kind: input, shape index: {}]
  %s5 = inlined_call_operand.hbm [shape: f32[1,512], index: 5, kind: input, shape index: {}]
  %s6 = inlined_call_operand.hbm [shape: s8[512,640], index: 6, kind: input, shape index: {}]
  %s7 = inlined_call_operand.vmem [shape: f32[1,640], index: 7, kind: input, shape index: {}]
  %s8 = inlined_call_operand.vmem [shape: f32[1,640], index: 8, kind: input, shape index: {}]
  %s9 = inlined_call_operand.hbm [shape: f32[2,640], index: 9, kind: output, shape index: {}]
  %s10 = sld [smem:[#allocation0]]
  $region74: #{tpu_custom_call.1} parent=0
    _
  %s12 = ssub.s32 1, %s10
  %s13 = scalar_select 0, %s12, %s10
  $region1: #{tpu_custom_call.1} parent=0
    #allocation2 [shape = 'u8[1536]{0}', space=vmem, size = 0x800, scoped, tag = 'input window, operand 0, single buffered']
    #allocation3 [shape = 's32[1]{0}', space=sflag, size = 0x4, scoped, tag = 'scoped memory for tpu_custom_call.1']
    #allocation4 [shape = 's32[1]{0}', space=sflag, size = 0x4, scoped, tag = 'scoped memory for tpu_custom_call.1']
    #allocation5 [shape = 'u8[393216]{0}', space=vmem, size = 0x60000, scoped, tag = 'input window, operand 1, single buffered']
    #allocation6 [shape = 's32[1]{0}', space=sflag, size = 0x4, scoped, tag = 'scoped memory for tpu_custom_call.1']
    #allocation7 [shape = 'u8[4096]{0}', space=vmem, size = 0x1000, scoped, tag = 'input window, operand 2, single buffered']
    #allocation8 [shape = 'u8[4096]{0}', space=vmem, size = 0x1000, scoped, tag = 'input window, operand 3, single buffered']
    #allocation9 [shape = 's32[1]{0}', space=sflag, size = 0x4, scoped, tag = 'scoped memory for tpu_custom_call.1']
    #allocation10 [shape = 'u8[1048576]{0}', space=vmem, size = 0x100000, scoped, tag = 'input window, operand 4, single buffered']
    #allocation11 [shape = 'u8[2048]{0}', space=vmem, size = 0x800, scoped, tag = 'input window, operand 5, single buffered']
    #allocation12 [shape = 's32[1]{0}', space=sflag, size = 0x4, scoped, tag = 'scoped memory for tpu_custom_call.1']
    #allocation13 [shape = 'u8[327680]{0}', space=vmem, size = 0x50000, scoped, tag = 'input window, operand 6, single buffered']
    #allocation14 [shape = 'u8[5120]{0}', space=vmem, size = 0x1400, scoped, tag = 'output window, operand 0, single buffered']
    %14 = vsyncpa [#allocation3], 0
    %15 = vsyncpa [#allocation6], 0
    %16 = vsyncpa [#allocation9], 0
    %17 = vsyncpa [#allocation12], 0
    %18 = vsyncpa [#allocation4], 0
    // Predicated region
    $region2: #{tpu_custom_call.1} parent=1 // pred_check
      _
    $region3: #{tpu_custom_call.1} parent=1 // pred_check_branch
      %20 = sbr.rel (0) target = $region5
    $region4: #{tpu_custom_call.1} parent=1 // pred_region
      %s22 = ssub.s32 48, 48
      %23 = vsyncadd [#allocation3], %s22
      %s25 = sshll.u32 [#allocation2], 4
      %s26 = int_to_ptr.vmem [resolvable:$true] %s25
      %28 = dma.hbm_to_vmem [thread:$0]  %s0, 48, %s26, [#allocation3]
    $region5: #{tpu_custom_call.1} parent=1 // pred_fallthru
      _
    // Predicated region
    $region6: #{tpu_custom_call.1} parent=1 // pred_check
      _
    $region7: #{tpu_custom_call.1} parent=1 // pred_check_branch
      %30 = sbr.rel (0) target = $region9
    $region8: #{tpu_custom_call.1} parent=1 // pred_region
      %s32 = ssub.s32 12288, 12288
      %33 = vsyncadd [#allocation6], %s32
      %s34 = sshll.u32 [#allocation5], 4
      %s35 = int_to_ptr.vmem [resolvable:$true] %s34
      %40 = dma.hbm_to_vmem [thread:$0]  %s1, 12288, %s35, [#allocation6], 1024, 1024, 64
    $region9: #{tpu_custom_call.1} parent=1 // pred_fallthru
      _
    // Predicated region
    $region10: #{tpu_custom_call.1} parent=1 // pred_check
      _
    $region11: #{tpu_custom_call.1} parent=1 // pred_check_branch
      %42 = sbr.rel (0) target = $region13
    $region12: #{tpu_custom_call.1} parent=1 // pred_region
      %s44 = ssub.s32 128, 128
      %45 = vsyncadd [#allocation6], %s44
      %s47 = sshll.u32 [#allocation7], 4
      %s48 = int_to_ptr.vmem [resolvable:$true] %s47
      %50 = dma.hbm_to_vmem [thread:$0]  %s2, 128, %s48, [#allocation6]
    $region13: #{tpu_custom_call.1} parent=1 // pred_fallthru
      _
    // Predicated region
    $region14: #{tpu_custom_call.1} parent=1 // pred_check
      _
    $region15: #{tpu_custom_call.1} parent=1 // pred_check_branch
      %52 = sbr.rel (0) target = $region17
    $region16: #{tpu_custom_call.1} parent=1 // pred_region
      %s54 = ssub.s32 128, 128
      %55 = vsyncadd [#allocation9], %s54
      %s57 = sshll.u32 [#allocation8], 4
      %s58 = int_to_ptr.vmem [resolvable:$true] %s57
      %60 = dma.hbm_to_vmem [thread:$0]  %s3, 128, %s58, [#allocation9]
    $region17: #{tpu_custom_call.1} parent=1 // pred_fallthru
      _
    // Predicated region
    $region18: #{tpu_custom_call.1} parent=1 // pred_check
      _
    $region19: #{tpu_custom_call.1} parent=1 // pred_check_branch
      %62 = sbr.rel (0) target = $region21
    $region20: #{tpu_custom_call.1} parent=1 // pred_region
      %s64 = ssub.s32 32768, 32768
      %65 = vsyncadd [#allocation9], %s64
      %s66 = sshll.u32 [#allocation10], 4
      %s67 = int_to_ptr.vmem [resolvable:$true] %s66
      %72 = dma.hbm_to_vmem [thread:$0]  %s4, 32768, %s67, [#allocation9], 256, 256, 16
    $region21: #{tpu_custom_call.1} parent=1 // pred_fallthru
      _
    // Predicated region
    $region22: #{tpu_custom_call.1} parent=1 // pred_check
      _
    $region23: #{tpu_custom_call.1} parent=1 // pred_check_branch
      %74 = sbr.rel (0) target = $region25
    $region24: #{tpu_custom_call.1} parent=1 // pred_region
      %s76 = ssub.s32 64, 64
      %77 = vsyncadd [#allocation12], %s76
      %s79 = sshll.u32 [#allocation11], 4
      %s80 = int_to_ptr.vmem [resolvable:$true] %s79
      %82 = dma.hbm_to_vmem [thread:$0]  %s5, 64, %s80, [#allocation12]
    $region25: #{tpu_custom_call.1} parent=1 // pred_fallthru
      _
    // Predicated region
    $region26: #{tpu_custom_call.1} parent=1 // pred_check
      _
    $region27: #{tpu_custom_call.1} parent=1 // pred_check_branch
      %84 = sbr.rel (0) target = $region29
    $region28: #{tpu_custom_call.1} parent=1 // pred_region
      %s86 = ssub.s32 10240, 10240
      %87 = vsyncadd [#allocation12], %s86
      %s88 = sshll.u32 [#allocation13], 4
      %s89 = int_to_ptr.vmem [resolvable:$true] %s88
      %94 = dma.hbm_to_vmem [thread:$0]  %s6, 10240, %s89, [#allocation12], 640, 640, 40
    $region29: #{tpu_custom_call.1} parent=1 // pred_fallthru
      _
    // Predicated region
    $region30: #{tpu_custom_call.1} parent=1 // pred_check
      _
    $region31: #{tpu_custom_call.1} parent=1 // pred_check_branch
      %96 = sbr.rel (0) target = $region33
    $region32: #{tpu_custom_call.1} parent=1 // pred_region
      _
    $region33: #{tpu_custom_call.1} parent=1 // pred_fallthru
      _
    // Predicated region
    $region34: #{tpu_custom_call.1} parent=1 // pred_check
      _
    $region35: #{tpu_custom_call.1} parent=1 // pred_check_branch
      %98 = sbr.rel (0) target = $region37
    $region36: #{tpu_custom_call.1} parent=1 // pred_region
      _
    $region37: #{tpu_custom_call.1} parent=1 // pred_fallthru
      _
    // Predicated region
    $region38: #{tpu_custom_call.1} parent=1 // pred_check
      _
    $region39: #{tpu_custom_call.1} parent=1 // pred_check_branch
      %100 = sbr.rel (0) target = $region41
    $region40: #{tpu_custom_call.1} parent=1 // pred_region
      %101 = dma.done [#allocation3], 48
    $region41: #{tpu_custom_call.1} parent=1 // pred_fallthru
      _
    // Predicated region
    $region42: #{tpu_custom_call.1} parent=1 // pred_check
      _
    $region43: #{tpu_custom_call.1} parent=1 // pred_check_branch
      %103 = sbr.rel (0) target = $region45
    $region44: #{tpu_custom_call.1} parent=1 // pred_region
      %104 = dma.done [#allocation6], 12288
    $region45: #{tpu_custom_call.1} parent=1 // pred_fallthru
      _
    // Predicated region
    $region46: #{tpu_custom_call.1} parent=1 // pred_check
      _
    $region47: #{tpu_custom_call.1} parent=1 // pred_check_branch
      %106 = sbr.rel (0) target = $region49
    $region48: #{tpu_custom_call.1} parent=1 // pred_region
      %107 = dma.done [#allocation6], 128
    $region49: #{tpu_custom_call.1} parent=1 // pred_fallthru
      _
    // Predicated region
    $region50: #{tpu_custom_call.1} parent=1 // pred_check
      _
    $region51: #{tpu_custom_call.1} parent=1 // pred_check_branch
      %109 = sbr.rel (0) target = $region53
    $region52: #{tpu_custom_call.1} parent=1 // pred_region
      %110 = dma.done [#allocation9], 128
    $region53: #{tpu_custom_call.1} parent=1 // pred_fallthru
      _
    // Predicated region
    $region54: #{tpu_custom_call.1} parent=1 // pred_check
      _
    $region55: #{tpu_custom_call.1} parent=1 // pred_check_branch
      %112 = sbr.rel (0) target = $region57
    $region56: #{tpu_custom_call.1} parent=1 // pred_region
      %113 = dma.done [#allocation9], 32768
    $region57: #{tpu_custom_call.1} parent=1 // pred_fallthru
      _
    // Predicated region
    $region58: #{tpu_custom_call.1} parent=1 // pred_check
      _
    $region59: #{tpu_custom_call.1} parent=1 // pred_check_branch
      %115 = sbr.rel (0) target = $region61
    $region60: #{tpu_custom_call.1} parent=1 // pred_region
      %116 = dma.done [#allocation12], 64
    $region61: #{tpu_custom_call.1} parent=1 // pred_fallthru
      _
    // Predicated region
    $region62: #{tpu_custom_call.1} parent=1 // pred_check
      _
    $region63: #{tpu_custom_call.1} parent=1 // pred_check_branch
      %118 = sbr.rel (0) target = $region65
    $region64: #{tpu_custom_call.1} parent=1 // pred_region
      %119 = dma.done [#allocation12], 10240
    $region65: #{tpu_custom_call.1} parent=1 // pred_fallthru
      _
    %v121 = vld [vmem:[#allocation5] sm:$0xff]
    %v122 = vld [vmem:[#allocation5 + $0x8] sm:$0xff]
    %v123 = vld [vmem:[#allocation5 + $0x10] sm:$0xff]
    %v124 = vld [vmem:[#allocation5 + $0x18] sm:$0xff]
    %v125 = vld [vmem:[#allocation5 + $0x20] sm:$0xff]
    %v126 = vld [vmem:[#allocation5 + $0x28] sm:$0xff]
    %v127 = vld [vmem:[#allocation5 + $0x30] sm:$0xff]
    %v128 = vld [vmem:[#allocation5 + $0x38] sm:$0xff]
    %v129 = vld [vmem:[#allocation5 + $0x40] sm:$0xff]
    %v130 = vld [vmem:[#allocation5 + $0x48] sm:$0xff]
    %v131 = vld [vmem:[#allocation5 + $0x50] sm:$0xff]
    %v132 = vld [vmem:[#allocation5 + $0x58] sm:$0xff]
    %v133 = vld [vmem:[#allocation5 + $0x60] sm:$0xff]
    %v134 = vld [vmem:[#allocation5 + $0x68] sm:$0xff]
    %v135 = vld [vmem:[#allocation5 + $0x70] sm:$0xff]
    %v136 = vld [vmem:[#allocation5 + $0x78] sm:$0xff]
    %v137 = vld [vmem:[#allocation5 + $0x80] sm:$0xff]
    %v138 = vld [vmem:[#allocation5 + $0x88] sm:$0xff]
    %v139 = vld [vmem:[#allocation5 + $0x90] sm:$0xff]
    %v140 = vld [vmem:[#allocation5 + $0x98] sm:$0xff]
    %v141 = vld [vmem:[#allocation5 + $0xa0] sm:$0xff]
    %v142 = vld [vmem:[#allocation5 + $0xa8] sm:$0xff]
    %v143 = vld [vmem:[#allocation5 + $0xb0] sm:$0xff]
    %v144 = vld [vmem:[#allocation5 + $0xb8] sm:$0xff]
    %v145 = vld [vmem:[#allocation5 + $0xc0] sm:$0xff]
    %v146 = vld [vmem:[#allocation5 + $0xc8] sm:$0xff]
    %v147 = vld [vmem:[#allocation5 + $0xd0] sm:$0xff]
    %v148 = vld [vmem:[#allocation5 + $0xd8] sm:$0xff]
    %v149 = vld [vmem:[#allocation5 + $0xe0] sm:$0xff]
    %v150 = vld [vmem:[#allocation5 + $0xe8] sm:$0xff]
    %v151 = vld [vmem:[#allocation5 + $0xf0] sm:$0xff]
    %v152 = vld [vmem:[#allocation5 + $0xf8] sm:$0xff]
    %v153 = vld [vmem:[#allocation5 + $0x100] sm:$0xff]
    %v154 = vld [vmem:[#allocation5 + $0x108] sm:$0xff]
    %v155 = vld [vmem:[#allocation5 + $0x110] sm:$0xff]
    %v156 = vld [vmem:[#allocation5 + $0x118] sm:$0xff]
    %v157 = vld [vmem:[#allocation5 + $0x120] sm:$0xff]
    %v158 = vld [vmem:[#allocation5 + $0x128] sm:$0xff]
    %v159 = vld [vmem:[#allocation5 + $0x130] sm:$0xff]
    %v160 = vld [vmem:[#allocation5 + $0x138] sm:$0xff]
    %v161 = vld [vmem:[#allocation5 + $0x140] sm:$0xff]
    %v162 = vld [vmem:[#allocation5 + $0x148] sm:$0xff]
    %v163 = vld [vmem:[#allocation5 + $0x150] sm:$0xff]
    %v164 = vld [vmem:[#allocation5 + $0x158] sm:$0xff]
    %v165 = vld [vmem:[#allocation5 + $0x160] sm:$0xff]
    %v166 = vld [vmem:[#allocation5 + $0x168] sm:$0xff]
    %v167 = vld [vmem:[#allocation5 + $0x170] sm:$0xff]
    %v168 = vld [vmem:[#allocation5 + $0x178] sm:$0xff]
    %v169 = vld [vmem:[#allocation5 + $0x180] sm:$0xff]
    %v170 = vld [vmem:[#allocation5 + $0x188] sm:$0xff]
    %v171 = vld [vmem:[#allocation5 + $0x190] sm:$0xff]
    %v172 = vld [vmem:[#allocation5 + $0x198] sm:$0xff]
    %v173 = vld [vmem:[#allocation5 + $0x1a0] sm:$0xff]
    %v174 = vld [vmem:[#allocation5 + $0x1a8] sm:$0xff]
    %v175 = vld [vmem:[#allocation5 + $0x1b0] sm:$0xff]
    %v176 = vld [vmem:[#allocation5 + $0x1b8] sm:$0xff]
    %v177 = vld [vmem:[#allocation5 + $0x1c0] sm:$0xff]
    %v178 = vld [vmem:[#allocation5 + $0x1c8] sm:$0xff]
    %v179 = vld [vmem:[#allocation5 + $0x1d0] sm:$0xff]
    %v180 = vld [vmem:[#allocation5 + $0x1d8] sm:$0xff]
    %v181 = vld [vmem:[#allocation5 + $0x1e0] sm:$0xff]
    %v182 = vld [vmem:[#allocation5 + $0x1e8] sm:$0xff]
    %v183 = vld [vmem:[#allocation5 + $0x1f0] sm:$0xff]
    %v184 = vld [vmem:[#allocation5 + $0x1f8] sm:$0xff]
    %v185 = vld [vmem:[#allocation5 + $0x200] sm:$0xff]
    %v186 = vld [vmem:[#allocation5 + $0x208] sm:$0xff]
    %v187 = vld [vmem:[#allocation5 + $0x210] sm:$0xff]
    %v188 = vld [vmem:[#allocation5 + $0x218] sm:$0xff]
    %v189 = vld [vmem:[#allocation5 + $0x220] sm:$0xff]
    %v190 = vld [vmem:[#allocation5 + $0x228] sm:$0xff]
    %v191 = vld [vmem:[#allocation5 + $0x230] sm:$0xff]
    %v192 = vld [vmem:[#allocation5 + $0x238] sm:$0xff]
    %v193 = vld [vmem:[#allocation5 + $0x240] sm:$0xff]
    %v194 = vld [vmem:[#allocation5 + $0x248] sm:$0xff]
    %v195 = vld [vmem:[#allocation5 + $0x250] sm:$0xff]
    %v196 = vld [vmem:[#allocation5 + $0x258] sm:$0xff]
    %v197 = vld [vmem:[#allocation5 + $0x260] sm:$0xff]
    %v198 = vld [vmem:[#allocation5 + $0x268] sm:$0xff]
    %v199 = vld [vmem:[#allocation5 + $0x270] sm:$0xff]
    %v200 = vld [vmem:[#allocation5 + $0x278] sm:$0xff]
    %v201 = vld [vmem:[#allocation5 + $0x280] sm:$0xff]
    %v202 = vld [vmem:[#allocation5 + $0x288] sm:$0xff]
    %v203 = vld [vmem:[#allocation5 + $0x290] sm:$0xff]
    %v204 = vld [vmem:[#allocation5 + $0x298] sm:$0xff]
    %v205 = vld [vmem:[#allocation5 + $0x2a0] sm:$0xff]
    %v206 = vld [vmem:[#allocation5 + $0x2a8] sm:$0xff]
    %v207 = vld [vmem:[#allocation5 + $0x2b0] sm:$0xff]
    %v208 = vld [vmem:[#allocation5 + $0x2b8] sm:$0xff]
    %v209 = vld [vmem:[#allocation5 + $0x2c0] sm:$0xff]
    %v210 = vld [vmem:[#allocation5 + $0x2c8] sm:$0xff]
    %v211 = vld [vmem:[#allocation5 + $0x2d0] sm:$0xff]
    %v212 = vld [vmem:[#allocation5 + $0x2d8] sm:$0xff]
    %v213 = vld [vmem:[#allocation5 + $0x2e0] sm:$0xff]
    %v214 = vld [vmem:[#allocation5 + $0x2e8] sm:$0xff]
    %v215 = vld [vmem:[#allocation5 + $0x2f0] sm:$0xff]
    %v216 = vld [vmem:[#allocation5 + $0x2f8] sm:$0xff]
    %v217 = vunpack.c.l.s8.bf16 %v121
    %v218 = vunpack.c.l.s8.bf16 %v122
    %v219 = vunpack.c.l.s8.bf16 %v123
    %v220 = vunpack.c.l.s8.bf16 %v124
    %v221 = vunpack.c.l.s8.bf16 %v125
    %v222 = vunpack.c.l.s8.bf16 %v126
    %v223 = vunpack.c.l.s8.bf16 %v127
    %v224 = vunpack.c.l.s8.bf16 %v128
    %v225 = vunpack.c.h.s8.bf16 %v121
    %v226 = vunpack.c.h.s8.bf16 %v122
    %v227 = vunpack.c.h.s8.bf16 %v123
    %v228 = vunpack.c.h.s8.bf16 %v124
    %v229 = vunpack.c.h.s8.bf16 %v125
    %v230 = vunpack.c.h.s8.bf16 %v126
    %v231 = vunpack.c.h.s8.bf16 %v127
    %v232 = vunpack.c.h.s8.bf16 %v128
    %v233 = vunpack.c.l.s8.bf16 %v129
    %v234 = vunpack.c.l.s8.bf16 %v130
    %v235 = vunpack.c.l.s8.bf16 %v131
    %v236 = vunpack.c.l.s8.bf16 %v132
    %v237 = vunpack.c.l.s8.bf16 %v133
    %v238 = vunpack.c.l.s8.bf16 %v134
    %v239 = vunpack.c.l.s8.bf16 %v135
    %v240 = vunpack.c.l.s8.bf16 %v136
    %v241 = vunpack.c.h.s8.bf16 %v129
    %v242 = vunpack.c.h.s8.bf16 %v130
    %v243 = vunpack.c.h.s8.bf16 %v131
    %v244 = vunpack.c.h.s8.bf16 %v132
    %v245 = vunpack.c.h.s8.bf16 %v133
    %v246 = vunpack.c.h.s8.bf16 %v134
    %v247 = vunpack.c.h.s8.bf16 %v135
    %v248 = vunpack.c.h.s8.bf16 %v136
    %v249 = vunpack.c.l.s8.bf16 %v137
    %v250 = vunpack.c.l.s8.bf16 %v138
    %v251 = vunpack.c.l.s8.bf16 %v139
    %v252 = vunpack.c.l.s8.bf16 %v140
    %v253 = vunpack.c.l.s8.bf16 %v141
    %v254 = vunpack.c.l.s8.bf16 %v142
    %v255 = vunpack.c.l.s8.bf16 %v143
    %v256 = vunpack.c.l.s8.bf16 %v144
    %v257 = vunpack.c.h.s8.bf16 %v137
    %v258 = vunpack.c.h.s8.bf16 %v138
    %v259 = vunpack.c.h.s8.bf16 %v139
    %v260 = vunpack.c.h.s8.bf16 %v140
    %v261 = vunpack.c.h.s8.bf16 %v141
    %v262 = vunpack.c.h.s8.bf16 %v142
    %v263 = vunpack.c.h.s8.bf16 %v143
    %v264 = vunpack.c.h.s8.bf16 %v144
    %v265 = vunpack.c.l.s8.bf16 %v145
    %v266 = vunpack.c.l.s8.bf16 %v146
    %v267 = vunpack.c.l.s8.bf16 %v147
    %v268 = vunpack.c.l.s8.bf16 %v148
    %v269 = vunpack.c.l.s8.bf16 %v149
    %v270 = vunpack.c.l.s8.bf16 %v150
    %v271 = vunpack.c.l.s8.bf16 %v151
    %v272 = vunpack.c.l.s8.bf16 %v152
    %v273 = vunpack.c.h.s8.bf16 %v145
    %v274 = vunpack.c.h.s8.bf16 %v146
    %v275 = vunpack.c.h.s8.bf16 %v147
    %v276 = vunpack.c.h.s8.bf16 %v148
    %v277 = vunpack.c.h.s8.bf16 %v149
    %v278 = vunpack.c.h.s8.bf16 %v150
    %v279 = vunpack.c.h.s8.bf16 %v151
    %v280 = vunpack.c.h.s8.bf16 %v152
    %v281 = vunpack.c.l.s8.bf16 %v153
    %v282 = vunpack.c.l.s8.bf16 %v154
    %v283 = vunpack.c.l.s8.bf16 %v155
    %v284 = vunpack.c.l.s8.bf16 %v156
    %v285 = vunpack.c.l.s8.bf16 %v157
    %v286 = vunpack.c.l.s8.bf16 %v158
    %v287 = vunpack.c.l.s8.bf16 %v159
    %v288 = vunpack.c.l.s8.bf16 %v160
    %v289 = vunpack.c.h.s8.bf16 %v153
    %v290 = vunpack.c.h.s8.bf16 %v154
    %v291 = vunpack.c.h.s8.bf16 %v155
    %v292 = vunpack.c.h.s8.bf16 %v156
    %v293 = vunpack.c.h.s8.bf16 %v157
    %v294 = vunpack.c.h.s8.bf16 %v158
    %v295 = vunpack.c.h.s8.bf16 %v159
    %v296 = vunpack.c.h.s8.bf16 %v160
    %v297 = vunpack.c.l.s8.bf16 %v161
    %v298 = vunpack.c.l.s8.bf16 %v162
    %v299 = vunpack.c.l.s8.bf16 %v163
    %v300 = vunpack.c.l.s8.bf16 %v164
    %v301 = vunpack.c.l.s8.bf16 %v165
    %v302 = vunpack.c.l.s8.bf16 %v166
    %v303 = vunpack.c.l.s8.bf16 %v167
    %v304 = vunpack.c.l.s8.bf16 %v168
    %v305 = vunpack.c.h.s8.bf16 %v161
    %v306 = vunpack.c.h.s8.bf16 %v162
    %v307 = vunpack.c.h.s8.bf16 %v163
    %v308 = vunpack.c.h.s8.bf16 %v164
    %v309 = vunpack.c.h.s8.bf16 %v165
    %v310 = vunpack.c.h.s8.bf16 %v166
    %v311 = vunpack.c.h.s8.bf16 %v167
    %v312 = vunpack.c.h.s8.bf16 %v168
    %v313 = vunpack.c.l.s8.bf16 %v169
    %v314 = vunpack.c.l.s8.bf16 %v170
    %v315 = vunpack.c.l.s8.bf16 %v171
    %v316 = vunpack.c.l.s8.bf16 %v172
    %v317 = vunpack.c.l.s8.bf16 %v173
    %v318 = vunpack.c.l.s8.bf16 %v174
    %v319 = vunpack.c.l.s8.bf16 %v175
    %v320 = vunpack.c.l.s8.bf16 %v176
    %v321 = vunpack.c.h.s8.bf16 %v169
    %v322 = vunpack.c.h.s8.bf16 %v170
    %v323 = vunpack.c.h.s8.bf16 %v171
    %v324 = vunpack.c.h.s8.bf16 %v172
    %v325 = vunpack.c.h.s8.bf16 %v173
    %v326 = vunpack.c.h.s8.bf16 %v174
    %v327 = vunpack.c.h.s8.bf16 %v175
    %v328 = vunpack.c.h.s8.bf16 %v176
    %v329 = vunpack.c.l.s8.bf16 %v177
    %v330 = vunpack.c.l.s8.bf16 %v178
    %v331 = vunpack.c.l.s8.bf16 %v179
    %v332 = vunpack.c.l.s8.bf16 %v180
    %v333 = vunpack.c.l.s8.bf16 %v181
    %v334 = vunpack.c.l.s8.bf16 %v182
    %v335 = vunpack.c.l.s8.bf16 %v183
    %v336 = vunpack.c.l.s8.bf16 %v184
    %v337 = vunpack.c.h.s8.bf16 %v177
    %v338 = vunpack.c.h.s8.bf16 %v178
    %v339 = vunpack.c.h.s8.bf16 %v179
    %v340 = vunpack.c.h.s8.bf16 %v180
    %v341 = vunpack.c.h.s8.bf16 %v181
    %v342 = vunpack.c.h.s8.bf16 %v182
    %v343 = vunpack.c.h.s8.bf16 %v183
    %v344 = vunpack.c.h.s8.bf16 %v184
    %v345 = vunpack.c.l.s8.bf16 %v185
    %v346 = vunpack.c.l.s8.bf16 %v186
    %v347 = vunpack.c.l.s8.bf16 %v187
    %v348 = vunpack.c.l.s8.bf16 %v188
    %v349 = vunpack.c.l.s8.bf16 %v189
    %v350 = vunpack.c.l.s8.bf16 %v190
    %v351 = vunpack.c.l.s8.bf16 %v191
    %v352 = vunpack.c.l.s8.bf16 %v192
    %v353 = vunpack.c.h.s8.bf16 %v185
    %v354 = vunpack.c.h.s8.bf16 %v186
    %v355 = vunpack.c.h.s8.bf16 %v187
    %v356 = vunpack.c.h.s8.bf16 %v188
    %v357 = vunpack.c.h.s8.bf16 %v189
    %v358 = vunpack.c.h.s8.bf16 %v190
    %v359 = vunpack.c.h.s8.bf16 %v191
    %v360 = vunpack.c.h.s8.bf16 %v192
    %v361 = vunpack.c.l.s8.bf16 %v193
    %v362 = vunpack.c.l.s8.bf16 %v194
    %v363 = vunpack.c.l.s8.bf16 %v195
    %v364 = vunpack.c.l.s8.bf16 %v196
    %v365 = vunpack.c.l.s8.bf16 %v197
    %v366 = vunpack.c.l.s8.bf16 %v198
    %v367 = vunpack.c.l.s8.bf16 %v199
    %v368 = vunpack.c.l.s8.bf16 %v200
    %v369 = vunpack.c.h.s8.bf16 %v193
    %v370 = vunpack.c.h.s8.bf16 %v194
    %v371 = vunpack.c.h.s8.bf16 %v195
    %v372 = vunpack.c.h.s8.bf16 %v196
    %v373 = vunpack.c.h.s8.bf16 %v197
    %v374 = vunpack.c.h.s8.bf16 %v198
    %v375 = vunpack.c.h.s8.bf16 %v199
    %v376 = vunpack.c.h.s8.bf16 %v200
    %v377 = vunpack.c.l.s8.bf16 %v201
    %v378 = vunpack.c.l.s8.bf16 %v202
    %v379 = vunpack.c.l.s8.bf16 %v203
    %v380 = vunpack.c.l.s8.bf16 %v204
    %v381 = vunpack.c.l.s8.bf16 %v205
    %v382 = vunpack.c.l.s8.bf16 %v206
    %v383 = vunpack.c.l.s8.bf16 %v207
    %v384 = vunpack.c.l.s8.bf16 %v208
    %v385 = vunpack.c.h.s8.bf16 %v201
    %v386 = vunpack.c.h.s8.bf16 %v202
    %v387 = vunpack.c.h.s8.bf16 %v203
    %v388 = vunpack.c.h.s8.bf16 %v204
    %v389 = vunpack.c.h.s8.bf16 %v205
    %v390 = vunpack.c.h.s8.bf16 %v206
    %v391 = vunpack.c.h.s8.bf16 %v207
    %v392 = vunpack.c.h.s8.bf16 %v208
    %v393 = vunpack.c.l.s8.bf16 %v209
    %v394 = vunpack.c.l.s8.bf16 %v210
    %v395 = vunpack.c.l.s8.bf16 %v211
    %v396 = vunpack.c.l.s8.bf16 %v212
    %v397 = vunpack.c.l.s8.bf16 %v213
    %v398 = vunpack.c.l.s8.bf16 %v214
    %v399 = vunpack.c.l.s8.bf16 %v215
    %v400 = vunpack.c.l.s8.bf16 %v216
    %v401 = vunpack.c.h.s8.bf16 %v209
    %v402 = vunpack.c.h.s8.bf16 %v210
    %v403 = vunpack.c.h.s8.bf16 %v211
    %v404 = vunpack.c.h.s8.bf16 %v212
    %v405 = vunpack.c.h.s8.bf16 %v213
    %v406 = vunpack.c.h.s8.bf16 %v214
    %v407 = vunpack.c.h.s8.bf16 %v215
    %v408 = vunpack.c.h.s8.bf16 %v216
    %v409 = vld [vmem:[#allocation2] sm:$0x7]
    %v412 = vunpack.c.l.s4 1966171168
    %v413 = vunpack.c.0.s8 %v412
    %v414 = vlaneseq
    %v415 = vshrl.u32 %v414, 7
    %v416 = vsub.s32 %v413, %v415
    %v417 = vrot.slane %v409, %v416
    %v418 = vcombine.high %v417, %v417
    %v420 = vunpack.c.l.s4 1966171168
    %v421 = vunpack.c.0.s8 %v420
    %v422 = vlaneseq
    %v423 = vshrl.u32 %v422, 7
    %v424 = vsub.s32 %v421, %v423
    %v425 = vrot.slane %v417, %v424
    %v427 = vunpack.c.l.s4 1966171168
    %v428 = vunpack.c.0.s8 %v427
    %v429 = vlaneseq
    %v430 = vshrl.u32 %v429, 7
    %v431 = vsub.s32 %v428, %v430
    %v432 = vrot.slane %v418, %v431
    %v433 = vcombine.high %v425, %v425
    %437 = vmatprep.subr.bf16.mxu0 %v274
    %438 = vmatpush1.bf16.msra.mxu0 %v273
    %439 = vmatprep.subr.bf16.mxu0 %v266
    %440 = vmatpush1.bf16.msra.mxu0 %v265
    %441 = vmatprep.subr.bf16.mxu0 %v258
    %442 = vmatpush1.bf16.msra.mxu0 %v257
    %443 = vmatprep.subr.bf16.mxu0 %v250
    %444 = vmatpush1.bf16.msra.mxu0 %v249
    %445 = vmatprep.subr.bf16.mxu0 %v242
    %446 = vmatpush1.bf16.msra.mxu0 %v241
    %447 = vmatprep.subr.bf16.mxu0 %v234
    %448 = vmatpush1.bf16.msra.mxu0 %v233
    %449 = vmatprep.subr.bf16.mxu0 %v226
    %450 = vmatpush1.bf16.msra.mxu0 %v225
    %451 = vmatprep.subr.bf16.mxu0 %v218
    %452 = vmatpush1.bf16.msra.mxu0 %v217
    %453 = vmatprep.subr.bf16.mxu0 %v338
    %454 = vmatpush2.bf16.msra.mxu0 %v337
    %455 = vmatprep.subr.bf16.mxu0 %v330
    %456 = vmatpush2.bf16.msra.mxu0 %v329
    %457 = vmatprep.subr.bf16.mxu0 %v322
    %458 = vmatpush2.bf16.msra.mxu0 %v321
    %459 = vmatprep.subr.bf16.mxu0 %v314
    %460 = vmatpush2.bf16.msra.mxu0 %v313
    %461 = vmatprep.subr.bf16.mxu0 %v306
    %462 = vmatpush2.bf16.msra.mxu0 %v305
    %463 = vmatprep.subr.bf16.mxu0 %v298
    %464 = vmatpush2.bf16.msra.mxu0 %v297
    %465 = vmatprep.subr.bf16.mxu0 %v290
    %466 = vmatpush2.bf16.msra.mxu0 %v289
    %467 = vmatprep.subr.bf16.mxu0 %v282
    %468 = vmatpush2.bf16.msra.mxu0 %v281
    %469 = vmatprep.mubr.bf16.mxu0 %v432
    %470 = vmatmul.mubr.bf16.gmra.mxu0 %v425
    %v471 = vpop.f32.mrf.mxu0
    %v472 = vadd.f32 0.0, %v471
    %v473 = vpop.f32.mrf.mxu0
    %v474 = vadd.f32 0.0, %v473
    %v475 = vpop.f32.mrf.mxu0
    %v476 = vpop.f32.mrf.mxu0
    %477 = vdwg.mxu0
    %478 = vmatprep.subr.bf16.mxu0 %v402
    %479 = vmatpush1.bf16.msra.mxu0 %v401
    %480 = vmatprep.subr.bf16.mxu0 %v394
    %481 = vmatpush1.bf16.msra.mxu0 %v393
    %482 = vmatprep.subr.bf16.mxu0 %v386
    %483 = vmatpush1.bf16.msra.mxu0 %v385
    %484 = vmatprep.subr.bf16.mxu0 %v378
    %485 = vmatpush1.bf16.msra.mxu0 %v377
    %486 = vmatprep.subr.bf16.mxu0 %v370
    %487 = vmatpush1.bf16.msra.mxu0 %v369
    %488 = vmatprep.subr.bf16.mxu0 %v362
    %489 = vmatpush1.bf16.msra.mxu0 %v361
    %490 = vmatprep.subr.bf16.mxu0 %v354
    %491 = vmatpush1.bf16.msra.mxu0 %v353
    %492 = vmatprep.subr.bf16.mxu0 %v346
    %493 = vmatpush1.bf16.msra.mxu0 %v345
    %494 = vmatprep.subr.bf16.mxu0 0
    %495 = vmatpush2.bf16.msra.mxu0 0
    %496 = vmatprep.subr.bf16.mxu0 0
    %497 = vmatpush2.bf16.msra.mxu0 0
    %498 = vmatprep.subr.bf16.mxu0 0
    %499 = vmatpush2.bf16.msra.mxu0 0
    %500 = vmatprep.subr.bf16.mxu0 0
    %501 = vmatpush2.bf16.msra.mxu0 0
    %502 = vmatprep.subr.bf16.mxu0 0
    %503 = vmatpush2.bf16.msra.mxu0 0
    %504 = vmatprep.subr.bf16.mxu0 0
    %505 = vmatpush2.bf16.msra.mxu0 0
    %506 = vmatprep.subr.bf16.mxu0 0
    %507 = vmatpush2.bf16.msra.mxu0 0
    %508 = vmatprep.subr.bf16.mxu0 0
    %509 = vmatpush2.bf16.msra.mxu0 0
    %510 = vmatprep.mubr.bf16.mxu0 0
    %511 = vmatmul.mubr.bf16.gmra.mxu0 %v433
    %v512 = vpop.f32.mrf.mxu0
    %v513 = vadd.f32 %v472, %v512
    %v514 = vpop.f32.mrf.mxu0
    %v515 = vadd.f32 %v474, %v514
    %v516 = vpop.f32.mrf.mxu0
    %v517 = vpop.f32.mrf.mxu0
    %518 = vdwg.mxu0
    %519 = vmatprep.subr.bf16.mxu0 %v276
    %520 = vmatpush1.bf16.msra.mxu0 %v275
    %521 = vmatprep.subr.bf16.mxu0 %v268
    %522 = vmatpush1.bf16.msra.mxu0 %v267
    %523 = vmatprep.subr.bf16.mxu0 %v260
    %524 = vmatpush1.bf16.msra.mxu0 %v259
    %525 = vmatprep.subr.bf16.mxu0 %v252
    %526 = vmatpush1.bf16.msra.mxu0 %v251
    %527 = vmatprep.subr.bf16.mxu0 %v244
    %528 = vmatpush1.bf16.msra.mxu0 %v243
    %529 = vmatprep.subr.bf16.mxu0 %v236
    %530 = vmatpush1.bf16.msra.mxu0 %v235
    %531 = vmatprep.subr.bf16.mxu0 %v228
    %532 = vmatpush1.bf16.msra.mxu0 %v227
    %533 = vmatprep.subr.bf16.mxu0 %v220
    %534 = vmatpush1.bf16.msra.mxu0 %v219
    %535 = vmatprep.subr.bf16.mxu0 %v340
    %536 = vmatpush2.bf16.msra.mxu0 %v339
    %537 = vmatprep.subr.bf16.mxu0 %v332
    %538 = vmatpush2.bf16.msra.mxu0 %v331
    %539 = vmatprep.subr.bf16.mxu0 %v324
    %540 = vmatpush2.bf16.msra.mxu0 %v323
    %541 = vmatprep.subr.bf16.mxu0 %v316
    %542 = vmatpush2.bf16.msra.mxu0 %v315
    %543 = vmatprep.subr.bf16.mxu0 %v308
    %544 = vmatpush2.bf16.msra.mxu0 %v307
    %545 = vmatprep.subr.bf16.mxu0 %v300
    %546 = vmatpush2.bf16.msra.mxu0 %v299
    %547 = vmatprep.subr.bf16.mxu0 %v292
    %548 = vmatpush2.bf16.msra.mxu0 %v291
    %549 = vmatprep.subr.bf16.mxu0 %v284
    %550 = vmatpush2.bf16.msra.mxu0 %v283
    %551 = vmatprep.mubr.bf16.mxu0 %v432
    %552 = vmatmul.mubr.bf16.gmra.mxu0 %v425
    %v553 = vpop.f32.mrf.mxu0
    %v554 = vadd.f32 0.0, %v553
    %v555 = vpop.f32.mrf.mxu0
    %v556 = vadd.f32 0.0, %v555
    %v557 = vpop.f32.mrf.mxu0
    %v558 = vpop.f32.mrf.mxu0
    %559 = vdwg.mxu0
    %560 = vmatprep.subr.bf16.mxu0 %v404
    %561 = vmatpush1.bf16.msra.mxu0 %v403
    %562 = vmatprep.subr.bf16.mxu0 %v396
    %563 = vmatpush1.bf16.msra.mxu0 %v395
    %564 = vmatprep.subr.bf16.mxu0 %v388
    %565 = vmatpush1.bf16.msra.mxu0 %v387
    %566 = vmatprep.subr.bf16.mxu0 %v380
    %567 = vmatpush1.bf16.msra.mxu0 %v379
    %568 = vmatprep.subr.bf16.mxu0 %v372
    %569 = vmatpush1.bf16.msra.mxu0 %v371
    %570 = vmatprep.subr.bf16.mxu0 %v364
    %571 = vmatpush1.bf16.msra.mxu0 %v363
    %572 = vmatprep.subr.bf16.mxu0 %v356
    %573 = vmatpush1.bf16.msra.mxu0 %v355
    %574 = vmatprep.subr.bf16.mxu0 %v348
    %575 = vmatpush1.bf16.msra.mxu0 %v347
    %576 = vmatprep.subr.bf16.mxu0 0
    %577 = vmatpush2.bf16.msra.mxu0 0
    %578 = vmatprep.subr.bf16.mxu0 0
    %579 = vmatpush2.bf16.msra.mxu0 0
    %580 = vmatprep.subr.bf16.mxu0 0
    %581 = vmatpush2.bf16.msra.mxu0 0
    %582 = vmatprep.subr.bf16.mxu0 0
    %583 = vmatpush2.bf16.msra.mxu0 0
    %584 = vmatprep.subr.bf16.mxu0 0
    %585 = vmatpush2.bf16.msra.mxu0 0
    %586 = vmatprep.subr.bf16.mxu0 0
    %587 = vmatpush2.bf16.msra.mxu0 0
    %588 = vmatprep.subr.bf16.mxu0 0
    %589 = vmatpush2.bf16.msra.mxu0 0
    %590 = vmatprep.subr.bf16.mxu0 0
    %591 = vmatpush2.bf16.msra.mxu0 0
    %592 = vmatprep.mubr.bf16.mxu0 0
    %593 = vmatmul.mubr.bf16.gmra.mxu0 %v433
    %v594 = vpop.f32.mrf.mxu0
    %v595 = vadd.f32 %v554, %v594
    %v596 = vpop.f32.mrf.mxu0
    %v597 = vadd.f32 %v556, %v596
    %v598 = vpop.f32.mrf.mxu0
    %v599 = vpop.f32.mrf.mxu0
    %600 = vdwg.mxu0
    %601 = vmatprep.subr.bf16.mxu0 %v278
    %602 = vmatpush1.bf16.msra.mxu0 %v277
    %603 = vmatprep.subr.bf16.mxu0 %v270
    %604 = vmatpush1.bf16.msra.mxu0 %v269
    %605 = vmatprep.subr.bf16.mxu0 %v262
    %606 = vmatpush1.bf16.msra.mxu0 %v261
    %607 = vmatprep.subr.bf16.mxu0 %v254
    %608 = vmatpush1.bf16.msra.mxu0 %v253
    %609 = vmatprep.subr.bf16.mxu0 %v246
    %610 = vmatpush1.bf16.msra.mxu0 %v245
    %611 = vmatprep.subr.bf16.mxu0 %v238
    %612 = vmatpush1.bf16.msra.mxu0 %v237
    %613 = vmatprep.subr.bf16.mxu0 %v230
    %614 = vmatpush1.bf16.msra.mxu0 %v229
    %615 = vmatprep.subr.bf16.mxu0 %v222
    %616 = vmatpush1.bf16.msra.mxu0 %v221
    %617 = vmatprep.subr.bf16.mxu0 %v342
    %618 = vmatpush2.bf16.msra.mxu0 %v341
    %619 = vmatprep.subr.bf16.mxu0 %v334
    %620 = vmatpush2.bf16.msra.mxu0 %v333
    %621 = vmatprep.subr.bf16.mxu0 %v326
    %622 = vmatpush2.bf16.msra.mxu0 %v325
    %623 = vmatprep.subr.bf16.mxu0 %v318
    %624 = vmatpush2.bf16.msra.mxu0 %v317
    %625 = vmatprep.subr.bf16.mxu0 %v310
    %626 = vmatpush2.bf16.msra.mxu0 %v309
    %627 = vmatprep.subr.bf16.mxu0 %v302
    %628 = vmatpush2.bf16.msra.mxu0 %v301
    %629 = vmatprep.subr.bf16.mxu0 %v294
    %630 = vmatpush2.bf16.msra.mxu0 %v293
    %631 = vmatprep.subr.bf16.mxu0 %v286
    %632 = vmatpush2.bf16.msra.mxu0 %v285
    %633 = vmatprep.mubr.bf16.mxu0 %v432
    %634 = vmatmul.mubr.bf16.gmra.mxu0 %v425
    %v635 = vpop.f32.mrf.mxu0
    %v636 = vadd.f32 0.0, %v635
    %v637 = vpop.f32.mrf.mxu0
    %v638 = vadd.f32 0.0, %v637
    %v639 = vpop.f32.mrf.mxu0
    %v640 = vpop.f32.mrf.mxu0
    %641 = vdwg.mxu0
    %642 = vmatprep.subr.bf16.mxu0 %v406
    %643 = vmatpush1.bf16.msra.mxu0 %v405
    %644 = vmatprep.subr.bf16.mxu0 %v398
    %645 = vmatpush1.bf16.msra.mxu0 %v397
    %646 = vmatprep.subr.bf16.mxu0 %v390
    %647 = vmatpush1.bf16.msra.mxu0 %v389
    %648 = vmatprep.subr.bf16.mxu0 %v382
    %649 = vmatpush1.bf16.msra.mxu0 %v381
    %650 = vmatprep.subr.bf16.mxu0 %v374
    %651 = vmatpush1.bf16.msra.mxu0 %v373
    %652 = vmatprep.subr.bf16.mxu0 %v366
    %653 = vmatpush1.bf16.msra.mxu0 %v365
    %654 = vmatprep.subr.bf16.mxu0 %v358
    %655 = vmatpush1.bf16.msra.mxu0 %v357
    %656 = vmatprep.subr.bf16.mxu0 %v350
    %657 = vmatpush1.bf16.msra.mxu0 %v349
    %658 = vmatprep.subr.bf16.mxu0 0
    %659 = vmatpush2.bf16.msra.mxu0 0
    %660 = vmatprep.subr.bf16.mxu0 0
    %661 = vmatpush2.bf16.msra.mxu0 0
    %662 = vmatprep.subr.bf16.mxu0 0
    %663 = vmatpush2.bf16.msra.mxu0 0
    %664 = vmatprep.subr.bf16.mxu0 0
    %665 = vmatpush2.bf16.msra.mxu0 0
    %666 = vmatprep.subr.bf16.mxu0 0
    %667 = vmatpush2.bf16.msra.mxu0 0
    %668 = vmatprep.subr.bf16.mxu0 0
    %669 = vmatpush2.bf16.msra.mxu0 0
    %670 = vmatprep.subr.bf16.mxu0 0
    %671 = vmatpush2.bf16.msra.mxu0 0
    %672 = vmatprep.subr.bf16.mxu0 0
    %673 = vmatpush2.bf16.msra.mxu0 0
    %674 = vmatprep.mubr.bf16.mxu0 0
    %675 = vmatmul.mubr.bf16.gmra.mxu0 %v433
    %v676 = vpop.f32.mrf.mxu0
    %v677 = vadd.f32 %v636, %v676
    %v678 = vpop.f32.mrf.mxu0
    %v679 = vadd.f32 %v638, %v678
    %v680 = vpop.f32.mrf.mxu0
    %v681 = vpop.f32.mrf.mxu0
    %682 = vdwg.mxu0
    %683 = vmatprep.subr.bf16.mxu0 %v280
    %684 = vmatpush1.bf16.msra.mxu0 %v279
    %685 = vmatprep.subr.bf16.mxu0 %v272
    %686 = vmatpush1.bf16.msra.mxu0 %v271
    %687 = vmatprep.subr.bf16.mxu0 %v264
    %688 = vmatpush1.bf16.msra.mxu0 %v263
    %689 = vmatprep.subr.bf16.mxu0 %v256
    %690 = vmatpush1.bf16.msra.mxu0 %v255
    %691 = vmatprep.subr.bf16.mxu0 %v248
    %692 = vmatpush1.bf16.msra.mxu0 %v247
    %693 = vmatprep.subr.bf16.mxu0 %v240
    %694 = vmatpush1.bf16.msra.mxu0 %v239
    %695 = vmatprep.subr.bf16.mxu0 %v232
    %696 = vmatpush1.bf16.msra.mxu0 %v231
    %697 = vmatprep.subr.bf16.mxu0 %v224
    %698 = vmatpush1.bf16.msra.mxu0 %v223
    %699 = vmatprep.subr.bf16.mxu0 %v344
    %700 = vmatpush2.bf16.msra.mxu0 %v343
    %701 = vmatprep.subr.bf16.mxu0 %v336
    %702 = vmatpush2.bf16.msra.mxu0 %v335
    %703 = vmatprep.subr.bf16.mxu0 %v328
    %704 = vmatpush2.bf16.msra.mxu0 %v327
    %705 = vmatprep.subr.bf16.mxu0 %v320
    %706 = vmatpush2.bf16.msra.mxu0 %v319
    %707 = vmatprep.subr.bf16.mxu0 %v312
    %708 = vmatpush2.bf16.msra.mxu0 %v311
    %709 = vmatprep.subr.bf16.mxu0 %v304
    %710 = vmatpush2.bf16.msra.mxu0 %v303
    %711 = vmatprep.subr.bf16.mxu0 %v296
    %712 = vmatpush2.bf16.msra.mxu0 %v295
    %713 = vmatprep.subr.bf16.mxu0 %v288
    %714 = vmatpush2.bf16.msra.mxu0 %v287
    %715 = vmatprep.mubr.bf16.mxu0 %v432
    %716 = vmatmul.mubr.bf16.gmra.mxu0 %v425
    %v717 = vpop.f32.mrf.mxu0
    %v718 = vadd.f32 0.0, %v717
    %v719 = vpop.f32.mrf.mxu0
    %v720 = vadd.f32 0.0, %v719
    %v721 = vpop.f32.mrf.mxu0
    %v722 = vpop.f32.mrf.mxu0
    %723 = vdwg.mxu0
    %724 = vmatprep.subr.bf16.mxu0 %v408
    %725 = vmatpush1.bf16.msra.mxu0 %v407
    %726 = vmatprep.subr.bf16.mxu0 %v400
    %727 = vmatpush1.bf16.msra.mxu0 %v399
    %728 = vmatprep.subr.bf16.mxu0 %v392
    %729 = vmatpush1.bf16.msra.mxu0 %v391
    %730 = vmatprep.subr.bf16.mxu0 %v384
    %731 = vmatpush1.bf16.msra.mxu0 %v383
    %732 = vmatprep.subr.bf16.mxu0 %v376
    %733 = vmatpush1.bf16.msra.mxu0 %v375
    %734 = vmatprep.subr.bf16.mxu0 %v368
    %735 = vmatpush1.bf16.msra.mxu0 %v367
    %736 = vmatprep.subr.bf16.mxu0 %v360
    %737 = vmatpush1.bf16.msra.mxu0 %v359
    %738 = vmatprep.subr.bf16.mxu0 %v352
    %739 = vmatpush1.bf16.msra.mxu0 %v351
    %740 = vmatprep.subr.bf16.mxu0 0
    %741 = vmatpush2.bf16.msra.mxu0 0
    %742 = vmatprep.subr.bf16.mxu0 0
    %743 = vmatpush2.bf16.msra.mxu0 0
    %744 = vmatprep.subr.bf16.mxu0 0
    %745 = vmatpush2.bf16.msra.mxu0 0
    %746 = vmatprep.subr.bf16.mxu0 0
    %747 = vmatpush2.bf16.msra.mxu0 0
    %748 = vmatprep.subr.bf16.mxu0 0
    %749 = vmatpush2.bf16.msra.mxu0 0
    %750 = vmatprep.subr.bf16.mxu0 0
    %751 = vmatpush2.bf16.msra.mxu0 0
    %752 = vmatprep.subr.bf16.mxu0 0
    %753 = vmatpush2.bf16.msra.mxu0 0
    %754 = vmatprep.subr.bf16.mxu0 0
    %755 = vmatpush2.bf16.msra.mxu0 0
    %756 = vmatprep.mubr.bf16.mxu0 0
    %757 = vmatmul.mubr.bf16.gmra.mxu0 %v433
    %v758 = vpop.f32.mrf.mxu0
    %v759 = vadd.f32 %v718, %v758
    %v760 = vpop.f32.mrf.mxu0
    %v761 = vadd.f32 %v720, %v760
    %v762 = vpop.f32.mrf.mxu0
    %v763 = vpop.f32.mrf.mxu0
    %764 = vdwg.mxu0
    %v765 = vld [vmem:[#allocation7] sm:$0xff]
    %v767 = vlaneseq
    %v768 = vshrl.u32 %v767, 7
    %v769 = vsub.s32 0, %v768
    %v770 = vrot.slane %v765, %v769
    %v771 = vlaneseq
    %v772 = vshrl.u32 %v771, 7
    %v773 = vsub.s32 1, %v772
    %v774 = vrot.slane %v765, %v773
    %v775 = vlaneseq
    %v776 = vshrl.u32 %v775, 7
    %v777 = vsub.s32 2, %v776
    %v778 = vrot.slane %v765, %v777
    %v779 = vlaneseq
    %v780 = vshrl.u32 %v779, 7
    %v781 = vsub.s32 3, %v780
    %v782 = vrot.slane %v765, %v781
    %v783 = vlaneseq
    %v784 = vshrl.u32 %v783, 7
    %v785 = vsub.s32 4, %v784
    %v786 = vrot.slane %v765, %v785
    %v787 = vlaneseq
    %v788 = vshrl.u32 %v787, 7
    %v789 = vsub.s32 5, %v788
    %v790 = vrot.slane %v765, %v789
    %v791 = vlaneseq
    %v792 = vshrl.u32 %v791, 7
    %v793 = vsub.s32 6, %v792
    %v794 = vrot.slane %v765, %v793
    %v795 = vlaneseq
    %v796 = vshrl.u32 %v795, 7
    %v797 = vsub.s32 7, %v796
    %v798 = vrot.slane %v765, %v797
    %v807 = vmul.f32 %v513, %v770
    %v808 = vmul.f32 %v515, %v774
    %v809 = vmul.f32 %v595, %v778
    %v810 = vmul.f32 %v597, %v782
    %v811 = vmul.f32 %v677, %v786
    %v812 = vmul.f32 %v679, %v790
    %v813 = vmul.f32 %v759, %v794
    %v814 = vmul.f32 %v761, %v798
    %v815 = vld [vmem:[#allocation8] sm:$0xff]
    %v817 = vlaneseq
    %v818 = vshrl.u32 %v817, 7
    %v819 = vsub.s32 0, %v818
    %v820 = vrot.slane %v815, %v819
    %v821 = vlaneseq
    %v822 = vshrl.u32 %v821, 7
    %v823 = vsub.s32 1, %v822
    %v824 = vrot.slane %v815, %v823
    %v825 = vlaneseq
    %v826 = vshrl.u32 %v825, 7
    %v827 = vsub.s32 2, %v826
    %v828 = vrot.slane %v815, %v827
    %v829 = vlaneseq
    %v830 = vshrl.u32 %v829, 7
    %v831 = vsub.s32 3, %v830
    %v832 = vrot.slane %v815, %v831
    %v833 = vlaneseq
    %v834 = vshrl.u32 %v833, 7
    %v835 = vsub.s32 4, %v834
    %v836 = vrot.slane %v815, %v835
    %v837 = vlaneseq
    %v838 = vshrl.u32 %v837, 7
    %v839 = vsub.s32 5, %v838
    %v840 = vrot.slane %v815, %v839
    %v841 = vlaneseq
    %v842 = vshrl.u32 %v841, 7
    %v843 = vsub.s32 6, %v842
    %v844 = vrot.slane %v815, %v843
    %v845 = vlaneseq
    %v846 = vshrl.u32 %v845, 7
    %v847 = vsub.s32 7, %v846
    %v848 = vrot.slane %v815, %v847
    %v857 = vadd.f32 %v807, %v820
    %v858 = vadd.f32 %v808, %v824
    %v859 = vadd.f32 %v809, %v828
    %v860 = vadd.f32 %v810, %v832
    %v861 = vadd.f32 %v811, %v836
    %v862 = vadd.f32 %v812, %v840
    %v863 = vadd.f32 %v813, %v844
    %v864 = vadd.f32 %v814, %v848
    %v865 = vmax.f32 %v857, 0.0
    %v866 = vmax.f32 %v858, 0.0
    %v867 = vmax.f32 %v859, 0.0
    %v868 = vmax.f32 %v860, 0.0
    %v869 = vmax.f32 %v861, 0.0
    %v870 = vmax.f32 %v862, 0.0
    %v871 = vmax.f32 %v863, 0.0
    %v872 = vmax.f32 %v864, 0.0
    %v873 = vpack.c.bf16 %v865, %v865
    %v874 = vpack.c.bf16 %v866, %v866
    %v875 = vpack.c.bf16 %v867, %v867
    %v876 = vpack.c.bf16 %v868, %v868
    %v877 = vpack.c.bf16 %v869, %v869
    %v878 = vpack.c.bf16 %v870, %v870
    %v879 = vpack.c.bf16 %v871, %v871
    %v880 = vpack.c.bf16 %v872, %v872
    %v881 = vld [vmem:[#allocation10] sm:$0xff]
    %v882 = vld [vmem:[#allocation10 + $0x8] sm:$0xff]
    %v883 = vld [vmem:[#allocation10 + $0x10] sm:$0xff]
    %v884 = vld [vmem:[#allocation10 + $0x18] sm:$0xff]
    %v885 = vld [vmem:[#allocation10 + $0x20] sm:$0xff]
    %v886 = vld [vmem:[#allocation10 + $0x28] sm:$0xff]
    %v887 = vld [vmem:[#allocation10 + $0x30] sm:$0xff]
    %v888 = vld [vmem:[#allocation10 + $0x38] sm:$0xff]
    %v889 = vld [vmem:[#allocation10 + $0x40] sm:$0xff]
    %v890 = vld [vmem:[#allocation10 + $0x48] sm:$0xff]
    %v891 = vld [vmem:[#allocation10 + $0x50] sm:$0xff]
    %v892 = vld [vmem:[#allocation10 + $0x58] sm:$0xff]
    %v893 = vld [vmem:[#allocation10 + $0x60] sm:$0xff]
    %v894 = vld [vmem:[#allocation10 + $0x68] sm:$0xff]
    %v895 = vld [vmem:[#allocation10 + $0x70] sm:$0xff]
    %v896 = vld [vmem:[#allocation10 + $0x78] sm:$0xff]
    %v897 = vld [vmem:[#allocation10 + $0x80] sm:$0xff]
    %v898 = vld [vmem:[#allocation10 + $0x88] sm:$0xff]
    %v899 = vld [vmem:[#allocation10 + $0x90] sm:$0xff]
    %v900 = vld [vmem:[#allocation10 + $0x98] sm:$0xff]
    %v901 = vld [vmem:[#allocation10 + $0xa0] sm:$0xff]
    %v902 = vld [vmem:[#allocation10 + $0xa8] sm:$0xff]
    %v903 = vld [vmem:[#allocation10 + $0xb0] sm:$0xff]
    %v904 = vld [vmem:[#allocation10 + $0xb8] sm:$0xff]
    %v905 = vld [vmem:[#allocation10 + $0xc0] sm:$0xff]
    %v906 = vld [vmem:[#allocation10 + $0xc8] sm:$0xff]
    %v907 = vld [vmem:[#allocation10 + $0xd0] sm:$0xff]
    %v908 = vld [vmem:[#allocation10 + $0xd8] sm:$0xff]
    %v909 = vld [vmem:[#allocation10 + $0xe0] sm:$0xff]
    %v910 = vld [vmem:[#allocation10 + $0xe8] sm:$0xff]
    %v911 = vld [vmem:[#allocation10 + $0xf0] sm:$0xff]
    %v912 = vld [vmem:[#allocation10 + $0xf8] sm:$0xff]
    %v913 = vld [vmem:[#allocation10 + $0x100] sm:$0xff]
    %v914 = vld [vmem:[#allocation10 + $0x108] sm:$0xff]
    %v915 = vld [vmem:[#allocation10 + $0x110] sm:$0xff]
    %v916 = vld [vmem:[#allocation10 + $0x118] sm:$0xff]
    %v917 = vld [vmem:[#allocation10 + $0x120] sm:$0xff]
    %v918 = vld [vmem:[#allocation10 + $0x128] sm:$0xff]
    %v919 = vld [vmem:[#allocation10 + $0x130] sm:$0xff]
    %v920 = vld [vmem:[#allocation10 + $0x138] sm:$0xff]
    %v921 = vld [vmem:[#allocation10 + $0x140] sm:$0xff]
    %v922 = vld [vmem:[#allocation10 + $0x148] sm:$0xff]
    %v923 = vld [vmem:[#allocation10 + $0x150] sm:$0xff]
    %v924 = vld [vmem:[#allocation10 + $0x158] sm:$0xff]
    %v925 = vld [vmem:[#allocation10 + $0x160] sm:$0xff]
    %v926 = vld [vmem:[#allocation10 + $0x168] sm:$0xff]
    %v927 = vld [vmem:[#allocation10 + $0x170] sm:$0xff]
    %v928 = vld [vmem:[#allocation10 + $0x178] sm:$0xff]
    %v929 = vld [vmem:[#allocation10 + $0x180] sm:$0xff]
    %v930 = vld [vmem:[#allocation10 + $0x188] sm:$0xff]
    %v931 = vld [vmem:[#allocation10 + $0x190] sm:$0xff]
    %v932 = vld [vmem:[#allocation10 + $0x198] sm:$0xff]
    %v933 = vld [vmem:[#allocation10 + $0x1a0] sm:$0xff]
    %v934 = vld [vmem:[#allocation10 + $0x1a8] sm:$0xff]
    %v935 = vld [vmem:[#allocation10 + $0x1b0] sm:$0xff]
    %v936 = vld [vmem:[#allocation10 + $0x1b8] sm:$0xff]
    %v937 = vld [vmem:[#allocation10 + $0x1c0] sm:$0xff]
    %v938 = vld [vmem:[#allocation10 + $0x1c8] sm:$0xff]
    %v939 = vld [vmem:[#allocation10 + $0x1d0] sm:$0xff]
    %v940 = vld [vmem:[#allocation10 + $0x1d8] sm:$0xff]
    %v941 = vld [vmem:[#allocation10 + $0x1e0] sm:$0xff]
    %v942 = vld [vmem:[#allocation10 + $0x1e8] sm:$0xff]
    %v943 = vld [vmem:[#allocation10 + $0x1f0] sm:$0xff]
    %v944 = vld [vmem:[#allocation10 + $0x1f8] sm:$0xff]
    %v945 = vld [vmem:[#allocation10 + $0x200] sm:$0xff]
    %v946 = vld [vmem:[#allocation10 + $0x208] sm:$0xff]
    %v947 = vld [vmem:[#allocation10 + $0x210] sm:$0xff]
    %v948 = vld [vmem:[#allocation10 + $0x218] sm:$0xff]
    %v949 = vld [vmem:[#allocation10 + $0x220] sm:$0xff]
    %v950 = vld [vmem:[#allocation10 + $0x228] sm:$0xff]
    %v951 = vld [vmem:[#allocation10 + $0x230] sm:$0xff]
    %v952 = vld [vmem:[#allocation10 + $0x238] sm:$0xff]
    %v953 = vld [vmem:[#allocation10 + $0x240] sm:$0xff]
    %v954 = vld [vmem:[#allocation10 + $0x248] sm:$0xff]
    %v955 = vld [vmem:[#allocation10 + $0x250] sm:$0xff]
    %v956 = vld [vmem:[#allocation10 + $0x258] sm:$0xff]
    %v957 = vld [vmem:[#allocation10 + $0x260] sm:$0xff]
    %v958 = vld [vmem:[#allocation10 + $0x268] sm:$0xff]
    %v959 = vld [vmem:[#allocation10 + $0x270] sm:$0xff]
    %v960 = vld [vmem:[#allocation10 + $0x278] sm:$0xff]
    %v961 = vld [vmem:[#allocation10 + $0x280] sm:$0xff]
    %v962 = vld [vmem:[#allocation10 + $0x288] sm:$0xff]
    %v963 = vld [vmem:[#allocation10 + $0x290] sm:$0xff]
    %v964 = vld [vmem:[#allocation10 + $0x298] sm:$0xff]
    %v965 = vld [vmem:[#allocation10 + $0x2a0] sm:$0xff]
    %v966 = vld [vmem:[#allocation10 + $0x2a8] sm:$0xff]
    %v967 = vld [vmem:[#allocation10 + $0x2b0] sm:$0xff]
    %v968 = vld [vmem:[#allocation10 + $0x2b8] sm:$0xff]
    %v969 = vld [vmem:[#allocation10 + $0x2c0] sm:$0xff]
    %v970 = vld [vmem:[#allocation10 + $0x2c8] sm:$0xff]
    %v971 = vld [vmem:[#allocation10 + $0x2d0] sm:$0xff]
    %v972 = vld [vmem:[#allocation10 + $0x2d8] sm:$0xff]
    %v973 = vld [vmem:[#allocation10 + $0x2e0] sm:$0xff]
    %v974 = vld [vmem:[#allocation10 + $0x2e8] sm:$0xff]
    %v975 = vld [vmem:[#allocation10 + $0x2f0] sm:$0xff]
    %v976 = vld [vmem:[#allocation10 + $0x2f8] sm:$0xff]
    %v977 = vld [vmem:[#allocation10 + $0x300] sm:$0xff]
    %v978 = vld [vmem:[#allocation10 + $0x308] sm:$0xff]
    %v979 = vld [vmem:[#allocation10 + $0x310] sm:$0xff]
    %v980 = vld [vmem:[#allocation10 + $0x318] sm:$0xff]
    %v981 = vld [vmem:[#allocation10 + $0x320] sm:$0xff]
    %v982 = vld [vmem:[#allocation10 + $0x328] sm:$0xff]
    %v983 = vld [vmem:[#allocation10 + $0x330] sm:$0xff]
    %v984 = vld [vmem:[#allocation10 + $0x338] sm:$0xff]
    %v985 = vld [vmem:[#allocation10 + $0x340] sm:$0xff]
    %v986 = vld [vmem:[#allocation10 + $0x348] sm:$0xff]
    %v987 = vld [vmem:[#allocation10 + $0x350] sm:$0xff]
    %v988 = vld [vmem:[#allocation10 + $0x358] sm:$0xff]
    %v989 = vld [vmem:[#allocation10 + $0x360] sm:$0xff]
    %v990 = vld [vmem:[#allocation10 + $0x368] sm:$0xff]
    %v991 = vld [vmem:[#allocation10 + $0x370] sm:$0xff]
    %v992 = vld [vmem:[#allocation10 + $0x378] sm:$0xff]
    %v993 = vld [vmem:[#allocation10 + $0x380] sm:$0xff]
    %v994 = vld [vmem:[#allocation10 + $0x388] sm:$0xff]
    %v995 = vld [vmem:[#allocation10 + $0x390] sm:$0xff]
    %v996 = vld [vmem:[#allocation10 + $0x398] sm:$0xff]
    %v997 = vld [vmem:[#allocation10 + $0x3a0] sm:$0xff]
    %v998 = vld [vmem:[#allocation10 + $0x3a8] sm:$0xff]
    %v999 = vld [vmem:[#allocation10 + $0x3b0] sm:$0xff]
    %v1000 = vld [vmem:[#allocation10 + $0x3b8] sm:$0xff]
    %v1001 = vld [vmem:[#allocation10 + $0x3c0] sm:$0xff]
    %v1002 = vld [vmem:[#allocation10 + $0x3c8] sm:$0xff]
    %v1003 = vld [vmem:[#allocation10 + $0x3d0] sm:$0xff]
    %v1004 = vld [vmem:[#allocation10 + $0x3d8] sm:$0xff]
    %v1005 = vld [vmem:[#allocation10 + $0x3e0] sm:$0xff]
    %v1006 = vld [vmem:[#allocation10 + $0x3e8] sm:$0xff]
    %v1007 = vld [vmem:[#allocation10 + $0x3f0] sm:$0xff]
    %v1008 = vld [vmem:[#allocation10 + $0x3f8] sm:$0xff]
    %v1009 = vld [vmem:[#allocation10 + $0x400] sm:$0xff]
    %v1010 = vld [vmem:[#allocation10 + $0x408] sm:$0xff]
    %v1011 = vld [vmem:[#allocation10 + $0x410] sm:$0xff]
    %v1012 = vld [vmem:[#allocation10 + $0x418] sm:$0xff]
    %v1013 = vld [vmem:[#allocation10 + $0x420] sm:$0xff]
    %v1014 = vld [vmem:[#allocation10 + $0x428] sm:$0xff]
    %v1015 = vld [vmem:[#allocation10 + $0x430] sm:$0xff]
    %v1016 = vld [vmem:[#allocation10 + $0x438] sm:$0xff]
    %v1017 = vld [vmem:[#allocation10 + $0x440] sm:$0xff]
    %v1018 = vld [vmem:[#allocation10 + $0x448] sm:$0xff]
    %v1019 = vld [vmem:[#allocation10 + $0x450] sm:$0xff]
    %v1020 = vld [vmem:[#allocation10 + $0x458] sm:$0xff]
    %v1021 = vld [vmem:[#allocation10 + $0x460] sm:$0xff]
    %v1022 = vld [vmem:[#allocation10 + $0x468] sm:$0xff]
    %v1023 = vld [vmem:[#allocation10 + $0x470] sm:$0xff]
    %v1024 = vld [vmem:[#allocation10 + $0x478] sm:$0xff]
    %v1025 = vld [vmem:[#allocation10 + $0x480] sm:$0xff]
    %v1026 = vld [vmem:[#allocation10 + $0x488] sm:$0xff]
    %v1027 = vld [vmem:[#allocation10 + $0x490] sm:$0xff]
    %v1028 = vld [vmem:[#allocation10 + $0x498] sm:$0xff]
    %v1029 = vld [vmem:[#allocation10 + $0x4a0] sm:$0xff]
    %v1030 = vld [vmem:[#allocation10 + $0x4a8] sm:$0xff]
    %v1031 = vld [vmem:[#allocation10 + $0x4b0] sm:$0xff]
    %v1032 = vld [vmem:[#allocation10 + $0x4b8] sm:$0xff]
    %v1033 = vld [vmem:[#allocation10 + $0x4c0] sm:$0xff]
    %v1034 = vld [vmem:[#allocation10 + $0x4c8] sm:$0xff]
    %v1035 = vld [vmem:[#allocation10 + $0x4d0] sm:$0xff]
    %v1036 = vld [vmem:[#allocation10 + $0x4d8] sm:$0xff]
    %v1037 = vld [vmem:[#allocation10 + $0x4e0] sm:$0xff]
    %v1038 = vld [vmem:[#allocation10 + $0x4e8] sm:$0xff]
    %v1039 = vld [vmem:[#allocation10 + $0x4f0] sm:$0xff]
    %v1040 = vld [vmem:[#allocation10 + $0x4f8] sm:$0xff]
    %v1041 = vld [vmem:[#allocation10 + $0x500] sm:$0xff]
    %v1042 = vld [vmem:[#allocation10 + $0x508] sm:$0xff]
    %v1043 = vld [vmem:[#allocation10 + $0x510] sm:$0xff]
    %v1044 = vld [vmem:[#allocation10 + $0x518] sm:$0xff]
    %v1045 = vld [vmem:[#allocation10 + $0x520] sm:$0xff]
    %v1046 = vld [vmem:[#allocation10 + $0x528] sm:$0xff]
    %v1047 = vld [vmem:[#allocation10 + $0x530] sm:$0xff]
    %v1048 = vld [vmem:[#allocation10 + $0x538] sm:$0xff]
    %v1049 = vld [vmem:[#allocation10 + $0x540] sm:$0xff]
    %v1050 = vld [vmem:[#allocation10 + $0x548] sm:$0xff]
    %v1051 = vld [vmem:[#allocation10 + $0x550] sm:$0xff]
    %v1052 = vld [vmem:[#allocation10 + $0x558] sm:$0xff]
    %v1053 = vld [vmem:[#allocation10 + $0x560] sm:$0xff]
    %v1054 = vld [vmem:[#allocation10 + $0x568] sm:$0xff]
    %v1055 = vld [vmem:[#allocation10 + $0x570] sm:$0xff]
    %v1056 = vld [vmem:[#allocation10 + $0x578] sm:$0xff]
    %v1057 = vld [vmem:[#allocation10 + $0x580] sm:$0xff]
    %v1058 = vld [vmem:[#allocation10 + $0x588] sm:$0xff]
    %v1059 = vld [vmem:[#allocation10 + $0x590] sm:$0xff]
    %v1060 = vld [vmem:[#allocation10 + $0x598] sm:$0xff]
    %v1061 = vld [vmem:[#allocation10 + $0x5a0] sm:$0xff]
    %v1062 = vld [vmem:[#allocation10 + $0x5a8] sm:$0xff]
    %v1063 = vld [vmem:[#allocation10 + $0x5b0] sm:$0xff]
    %v1064 = vld [vmem:[#allocation10 + $0x5b8] sm:$0xff]
    %v1065 = vld [vmem:[#allocation10 + $0x5c0] sm:$0xff]
    %v1066 = vld [vmem:[#allocation10 + $0x5c8] sm:$0xff]
    %v1067 = vld [vmem:[#allocation10 + $0x5d0] sm:$0xff]
    %v1068 = vld [vmem:[#allocation10 + $0x5d8] sm:$0xff]
    %v1069 = vld [vmem:[#allocation10 + $0x5e0] sm:$0xff]
    %v1070 = vld [vmem:[#allocation10 + $0x5e8] sm:$0xff]
    %v1071 = vld [vmem:[#allocation10 + $0x5f0] sm:$0xff]
    %v1072 = vld [vmem:[#allocation10 + $0x5f8] sm:$0xff]
    %v1073 = vld [vmem:[#allocation10 + $0x600] sm:$0xff]
    %v1074 = vld [vmem:[#allocation10 + $0x608] sm:$0xff]
    %v1075 = vld [vmem:[#allocation10 + $0x610] sm:$0xff]
    %v1076 = vld [vmem:[#allocation10 + $0x618] sm:$0xff]
    %v1077 = vld [vmem:[#allocation10 + $0x620] sm:$0xff]
    %v1078 = vld [vmem:[#allocation10 + $0x628] sm:$0xff]
    %v1079 = vld [vmem:[#allocation10 + $0x630] sm:$0xff]
    %v1080 = vld [vmem:[#allocation10 + $0x638] sm:$0xff]
    %v1081 = vld [vmem:[#allocation10 + $0x640] sm:$0xff]
    %v1082 = vld [vmem:[#allocation10 + $0x648] sm:$0xff]
    %v1083 = vld [vmem:[#allocation10 + $0x650] sm:$0xff]
    %v1084 = vld [vmem:[#allocation10 + $0x658] sm:$0xff]
    %v1085 = vld [vmem:[#allocation10 + $0x660] sm:$0xff]
    %v1086 = vld [vmem:[#allocation10 + $0x668] sm:$0xff]
    %v1087 = vld [vmem:[#allocation10 + $0x670] sm:$0xff]
    %v1088 = vld [vmem:[#allocation10 + $0x678] sm:$0xff]
    %v1089 = vld [vmem:[#allocation10 + $0x680] sm:$0xff]
    %v1090 = vld [vmem:[#allocation10 + $0x688] sm:$0xff]
    %v1091 = vld [vmem:[#allocation10 + $0x690] sm:$0xff]
    %v1092 = vld [vmem:[#allocation10 + $0x698] sm:$0xff]
    %v1093 = vld [vmem:[#allocation10 + $0x6a0] sm:$0xff]
    %v1094 = vld [vmem:[#allocation10 + $0x6a8] sm:$0xff]
    %v1095 = vld [vmem:[#allocation10 + $0x6b0] sm:$0xff]
    %v1096 = vld [vmem:[#allocation10 + $0x6b8] sm:$0xff]
    %v1097 = vld [vmem:[#allocation10 + $0x6c0] sm:$0xff]
    %v1098 = vld [vmem:[#allocation10 + $0x6c8] sm:$0xff]
    %v1099 = vld [vmem:[#allocation10 + $0x6d0] sm:$0xff]
    %v1100 = vld [vmem:[#allocation10 + $0x6d8] sm:$0xff]
    %v1101 = vld [vmem:[#allocation10 + $0x6e0] sm:$0xff]
    %v1102 = vld [vmem:[#allocation10 + $0x6e8] sm:$0xff]
    %v1103 = vld [vmem:[#allocation10 + $0x6f0] sm:$0xff]
    %v1104 = vld [vmem:[#allocation10 + $0x6f8] sm:$0xff]
    %v1105 = vld [vmem:[#allocation10 + $0x700] sm:$0xff]
    %v1106 = vld [vmem:[#allocation10 + $0x708] sm:$0xff]
    %v1107 = vld [vmem:[#allocation10 + $0x710] sm:$0xff]
    %v1108 = vld [vmem:[#allocation10 + $0x718] sm:$0xff]
    %v1109 = vld [vmem:[#allocation10 + $0x720] sm:$0xff]
    %v1110 = vld [vmem:[#allocation10 + $0x728] sm:$0xff]
    %v1111 = vld [vmem:[#allocation10 + $0x730] sm:$0xff]
    %v1112 = vld [vmem:[#allocation10 + $0x738] sm:$0xff]
    %v1113 = vld [vmem:[#allocation10 + $0x740] sm:$0xff]
    %v1114 = vld [vmem:[#allocation10 + $0x748] sm:$0xff]
    %v1115 = vld [vmem:[#allocation10 + $0x750] sm:$0xff]
    %v1116 = vld [vmem:[#allocation10 + $0x758] sm:$0xff]
    %v1117 = vld [vmem:[#allocation10 + $0x760] sm:$0xff]
    %v1118 = vld [vmem:[#allocation10 + $0x768] sm:$0xff]
    %v1119 = vld [vmem:[#allocation10 + $0x770] sm:$0xff]
    %v1120 = vld [vmem:[#allocation10 + $0x778] sm:$0xff]
    %v1121 = vld [vmem:[#allocation10 + $0x780] sm:$0xff]
    %v1122 = vld [vmem:[#allocation10 + $0x788] sm:$0xff]
    %v1123 = vld [vmem:[#allocation10 + $0x790] sm:$0xff]
    %v1124 = vld [vmem:[#allocation10 + $0x798] sm:$0xff]
    %v1125 = vld [vmem:[#allocation10 + $0x7a0] sm:$0xff]
    %v1126 = vld [vmem:[#allocation10 + $0x7a8] sm:$0xff]
    %v1127 = vld [vmem:[#allocation10 + $0x7b0] sm:$0xff]
    %v1128 = vld [vmem:[#allocation10 + $0x7b8] sm:$0xff]
    %v1129 = vld [vmem:[#allocation10 + $0x7c0] sm:$0xff]
    %v1130 = vld [vmem:[#allocation10 + $0x7c8] sm:$0xff]
    %v1131 = vld [vmem:[#allocation10 + $0x7d0] sm:$0xff]
    %v1132 = vld [vmem:[#allocation10 + $0x7d8] sm:$0xff]
    %v1133 = vld [vmem:[#allocation10 + $0x7e0] sm:$0xff]
    %v1134 = vld [vmem:[#allocation10 + $0x7e8] sm:$0xff]
    %v1135 = vld [vmem:[#allocation10 + $0x7f0] sm:$0xff]
    %v1136 = vld [vmem:[#allocation10 + $0x7f8] sm:$0xff]
    %v1137 = vld [vmem:[#allocation11] sm:$0xf]
    %v1139 = vlaneseq
    %v1140 = vshrl.u32 %v1139, 7
    %v1141 = vsub.s32 0, %v1140
    %v1142 = vrot.slane %v1137, %v1141
    %v1143 = vlaneseq
    %v1144 = vshrl.u32 %v1143, 7
    %v1145 = vsub.s32 1, %v1144
    %v1146 = vrot.slane %v1137, %v1145
    %v1147 = vlaneseq
    %v1148 = vshrl.u32 %v1147, 7
    %v1149 = vsub.s32 2, %v1148
    %v1150 = vrot.slane %v1137, %v1149
    %v1151 = vlaneseq
    %v1152 = vshrl.u32 %v1151, 7
    %v1153 = vsub.s32 3, %v1152
    %v1154 = vrot.slane %v1137, %v1153
    %v1415 = vunpack.c.l.b16 %v881
    %v1416 = vunpack.c.h.b16 %v881
    %v1417 = vunpack.c.l.b16 %v882
    %v1418 = vunpack.c.h.b16 %v882
    %v1419 = vunpack.c.l.b16 %v883
    %v1420 = vunpack.c.h.b16 %v883
    %v1421 = vunpack.c.l.b16 %v884
    %v1422 = vunpack.c.h.b16 %v884
    %v1423 = vunpack.c.l.b16 %v885
    %v1424 = vunpack.c.h.b16 %v885
    %v1425 = vunpack.c.l.b16 %v886
    %v1426 = vunpack.c.h.b16 %v886
    %v1427 = vunpack.c.l.b16 %v887
    %v1428 = vunpack.c.h.b16 %v887
    %v1429 = vunpack.c.l.b16 %v888
    %v1430 = vunpack.c.h.b16 %v888
    %v1431 = vunpack.c.l.b16 %v889
    %v1432 = vunpack.c.h.b16 %v889
    %v1433 = vunpack.c.l.b16 %v890
    %v1434 = vunpack.c.h.b16 %v890
    %v1435 = vunpack.c.l.b16 %v891
    %v1436 = vunpack.c.h.b16 %v891
    %v1437 = vunpack.c.l.b16 %v892
    %v1438 = vunpack.c.h.b16 %v892
    %v1439 = vunpack.c.l.b16 %v893
    %v1440 = vunpack.c.h.b16 %v893
    %v1441 = vunpack.c.l.b16 %v894
    %v1442 = vunpack.c.h.b16 %v894
    %v1443 = vunpack.c.l.b16 %v895
    %v1444 = vunpack.c.h.b16 %v895
    %v1445 = vunpack.c.l.b16 %v896
    %v1446 = vunpack.c.h.b16 %v896
    %v1447 = vunpack.c.l.b16 %v897
    %v1448 = vunpack.c.h.b16 %v897
    %v1449 = vunpack.c.l.b16 %v898
    %v1450 = vunpack.c.h.b16 %v898
    %v1451 = vunpack.c.l.b16 %v899
    %v1452 = vunpack.c.h.b16 %v899
    %v1453 = vunpack.c.l.b16 %v900
    %v1454 = vunpack.c.h.b16 %v900
    %v1455 = vunpack.c.l.b16 %v901
    %v1456 = vunpack.c.h.b16 %v901
    %v1457 = vunpack.c.l.b16 %v902
    %v1458 = vunpack.c.h.b16 %v902
    %v1459 = vunpack.c.l.b16 %v903
    %v1460 = vunpack.c.h.b16 %v903
    %v1461 = vunpack.c.l.b16 %v904
    %v1462 = vunpack.c.h.b16 %v904
    %v1463 = vunpack.c.l.b16 %v905
    %v1464 = vunpack.c.h.b16 %v905
    %v1465 = vunpack.c.l.b16 %v906
    %v1466 = vunpack.c.h.b16 %v906
    %v1467 = vunpack.c.l.b16 %v907
    %v1468 = vunpack.c.h.b16 %v907
    %v1469 = vunpack.c.l.b16 %v908
    %v1470 = vunpack.c.h.b16 %v908
    %v1471 = vunpack.c.l.b16 %v909
    %v1472 = vunpack.c.h.b16 %v909
    %v1473 = vunpack.c.l.b16 %v910
    %v1474 = vunpack.c.h.b16 %v910
    %v1475 = vunpack.c.l.b16 %v911
    %v1476 = vunpack.c.h.b16 %v911
    %v1477 = vunpack.c.l.b16 %v912
    %v1478 = vunpack.c.h.b16 %v912
    %v1479 = vunpack.c.l.b16 %v913
    %v1480 = vunpack.c.h.b16 %v913
    %v1481 = vunpack.c.l.b16 %v914
    %v1482 = vunpack.c.h.b16 %v914
    %v1483 = vunpack.c.l.b16 %v915
    %v1484 = vunpack.c.h.b16 %v915
    %v1485 = vunpack.c.l.b16 %v916
    %v1486 = vunpack.c.h.b16 %v916
    %v1487 = vunpack.c.l.b16 %v917
    %v1488 = vunpack.c.h.b16 %v917
    %v1489 = vunpack.c.l.b16 %v918
    %v1490 = vunpack.c.h.b16 %v918
    %v1491 = vunpack.c.l.b16 %v919
    %v1492 = vunpack.c.h.b16 %v919
    %v1493 = vunpack.c.l.b16 %v920
    %v1494 = vunpack.c.h.b16 %v920
    %v1495 = vunpack.c.l.b16 %v921
    %v1496 = vunpack.c.h.b16 %v921
    %v1497 = vunpack.c.l.b16 %v922
    %v1498 = vunpack.c.h.b16 %v922
    %v1499 = vunpack.c.l.b16 %v923
    %v1500 = vunpack.c.h.b16 %v923
    %v1501 = vunpack.c.l.b16 %v924
    %v1502 = vunpack.c.h.b16 %v924
    %v1503 = vunpack.c.l.b16 %v925
    %v1504 = vunpack.c.h.b16 %v925
    %v1505 = vunpack.c.l.b16 %v926
    %v1506 = vunpack.c.h.b16 %v926
    %v1507 = vunpack.c.l.b16 %v927
    %v1508 = vunpack.c.h.b16 %v927
    %v1509 = vunpack.c.l.b16 %v928
    %v1510 = vunpack.c.h.b16 %v928
    %v1511 = vunpack.c.l.b16 %v929
    %v1512 = vunpack.c.h.b16 %v929
    %v1513 = vunpack.c.l.b16 %v930
    %v1514 = vunpack.c.h.b16 %v930
    %v1515 = vunpack.c.l.b16 %v931
    %v1516 = vunpack.c.h.b16 %v931
    %v1517 = vunpack.c.l.b16 %v932
    %v1518 = vunpack.c.h.b16 %v932
    %v1519 = vunpack.c.l.b16 %v933
    %v1520 = vunpack.c.h.b16 %v933
    %v1521 = vunpack.c.l.b16 %v934
    %v1522 = vunpack.c.h.b16 %v934
    %v1523 = vunpack.c.l.b16 %v935
    %v1524 = vunpack.c.h.b16 %v935
    %v1525 = vunpack.c.l.b16 %v936
    %v1526 = vunpack.c.h.b16 %v936
    %v1527 = vunpack.c.l.b16 %v937
    %v1528 = vunpack.c.h.b16 %v937
    %v1529 = vunpack.c.l.b16 %v938
    %v1530 = vunpack.c.h.b16 %v938
    %v1531 = vunpack.c.l.b16 %v939
    %v1532 = vunpack.c.h.b16 %v939
    %v1533 = vunpack.c.l.b16 %v940
    %v1534 = vunpack.c.h.b16 %v940
    %v1535 = vunpack.c.l.b16 %v941
    %v1536 = vunpack.c.h.b16 %v941
    %v1537 = vunpack.c.l.b16 %v942
    %v1538 = vunpack.c.h.b16 %v942
    %v1539 = vunpack.c.l.b16 %v943
    %v1540 = vunpack.c.h.b16 %v943
    %v1541 = vunpack.c.l.b16 %v944
    %v1542 = vunpack.c.h.b16 %v944
    %v1543 = vunpack.c.l.b16 %v945
    %v1544 = vunpack.c.h.b16 %v945
    %v1545 = vunpack.c.l.b16 %v946
    %v1546 = vunpack.c.h.b16 %v946
    %v1547 = vunpack.c.l.b16 %v947
    %v1548 = vunpack.c.h.b16 %v947
    %v1549 = vunpack.c.l.b16 %v948
    %v1550 = vunpack.c.h.b16 %v948
    %v1551 = vunpack.c.l.b16 %v949
    %v1552 = vunpack.c.h.b16 %v949
    %v1553 = vunpack.c.l.b16 %v950
    %v1554 = vunpack.c.h.b16 %v950
    %v1555 = vunpack.c.l.b16 %v951
    %v1556 = vunpack.c.h.b16 %v951
    %v1557 = vunpack.c.l.b16 %v952
    %v1558 = vunpack.c.h.b16 %v952
    %v1559 = vunpack.c.l.b16 %v953
    %v1560 = vunpack.c.h.b16 %v953
    %v1561 = vunpack.c.l.b16 %v954
    %v1562 = vunpack.c.h.b16 %v954
    %v1563 = vunpack.c.l.b16 %v955
    %v1564 = vunpack.c.h.b16 %v955
    %v1565 = vunpack.c.l.b16 %v956
    %v1566 = vunpack.c.h.b16 %v956
    %v1567 = vunpack.c.l.b16 %v957
    %v1568 = vunpack.c.h.b16 %v957
    %v1569 = vunpack.c.l.b16 %v958
    %v1570 = vunpack.c.h.b16 %v958
    %v1571 = vunpack.c.l.b16 %v959
    %v1572 = vunpack.c.h.b16 %v959
    %v1573 = vunpack.c.l.b16 %v960
    %v1574 = vunpack.c.h.b16 %v960
    %v1575 = vunpack.c.l.b16 %v961
    %v1576 = vunpack.c.h.b16 %v961
    %v1577 = vunpack.c.l.b16 %v962
    %v1578 = vunpack.c.h.b16 %v962
    %v1579 = vunpack.c.l.b16 %v963
    %v1580 = vunpack.c.h.b16 %v963
    %v1581 = vunpack.c.l.b16 %v964
    %v1582 = vunpack.c.h.b16 %v964
    %v1583 = vunpack.c.l.b16 %v965
    %v1584 = vunpack.c.h.b16 %v965
    %v1585 = vunpack.c.l.b16 %v966
    %v1586 = vunpack.c.h.b16 %v966
    %v1587 = vunpack.c.l.b16 %v967
    %v1588 = vunpack.c.h.b16 %v967
    %v1589 = vunpack.c.l.b16 %v968
    %v1590 = vunpack.c.h.b16 %v968
    %v1591 = vunpack.c.l.b16 %v969
    %v1592 = vunpack.c.h.b16 %v969
    %v1593 = vunpack.c.l.b16 %v970
    %v1594 = vunpack.c.h.b16 %v970
    %v1595 = vunpack.c.l.b16 %v971
    %v1596 = vunpack.c.h.b16 %v971
    %v1597 = vunpack.c.l.b16 %v972
    %v1598 = vunpack.c.h.b16 %v972
    %v1599 = vunpack.c.l.b16 %v973
    %v1600 = vunpack.c.h.b16 %v973
    %v1601 = vunpack.c.l.b16 %v974
    %v1602 = vunpack.c.h.b16 %v974
    %v1603 = vunpack.c.l.b16 %v975
    %v1604 = vunpack.c.h.b16 %v975
    %v1605 = vunpack.c.l.b16 %v976
    %v1606 = vunpack.c.h.b16 %v976
    %v1607 = vunpack.c.l.b16 %v977
    %v1608 = vunpack.c.h.b16 %v977
    %v1609 = vunpack.c.l.b16 %v978
    %v1610 = vunpack.c.h.b16 %v978
    %v1611 = vunpack.c.l.b16 %v979
    %v1612 = vunpack.c.h.b16 %v979
    %v1613 = vunpack.c.l.b16 %v980
    %v1614 = vunpack.c.h.b16 %v980
    %v1615 = vunpack.c.l.b16 %v981
    %v1616 = vunpack.c.h.b16 %v981
    %v1617 = vunpack.c.l.b16 %v982
    %v1618 = vunpack.c.h.b16 %v982
    %v1619 = vunpack.c.l.b16 %v983
    %v1620 = vunpack.c.h.b16 %v983
    %v1621 = vunpack.c.l.b16 %v984
    %v1622 = vunpack.c.h.b16 %v984
    %v1623 = vunpack.c.l.b16 %v985
    %v1624 = vunpack.c.h.b16 %v985
    %v1625 = vunpack.c.l.b16 %v986
    %v1626 = vunpack.c.h.b16 %v986
    %v1627 = vunpack.c.l.b16 %v987
    %v1628 = vunpack.c.h.b16 %v987
    %v1629 = vunpack.c.l.b16 %v988
    %v1630 = vunpack.c.h.b16 %v988
    %v1631 = vunpack.c.l.b16 %v989
    %v1632 = vunpack.c.h.b16 %v989
    %v1633 = vunpack.c.l.b16 %v990
    %v1634 = vunpack.c.h.b16 %v990
    %v1635 = vunpack.c.l.b16 %v991
    %v1636 = vunpack.c.h.b16 %v991
    %v1637 = vunpack.c.l.b16 %v992
    %v1638 = vunpack.c.h.b16 %v992
    %v1639 = vunpack.c.l.b16 %v993
    %v1640 = vunpack.c.h.b16 %v993
    %v1641 = vunpack.c.l.b16 %v994
    %v1642 = vunpack.c.h.b16 %v994
    %v1643 = vunpack.c.l.b16 %v995
    %v1644 = vunpack.c.h.b16 %v995
    %v1645 = vunpack.c.l.b16 %v996
    %v1646 = vunpack.c.h.b16 %v996
    %v1647 = vunpack.c.l.b16 %v997
    %v1648 = vunpack.c.h.b16 %v997
    %v1649 = vunpack.c.l.b16 %v998
    %v1650 = vunpack.c.h.b16 %v998
    %v1651 = vunpack.c.l.b16 %v999
    %v1652 = vunpack.c.h.b16 %v999
    %v1653 = vunpack.c.l.b16 %v1000
    %v1654 = vunpack.c.h.b16 %v1000
    %v1655 = vunpack.c.l.b16 %v1001
    %v1656 = vunpack.c.h.b16 %v1001
    %v1657 = vunpack.c.l.b16 %v1002
    %v1658 = vunpack.c.h.b16 %v1002
    %v1659 = vunpack.c.l.b16 %v1003
    %v1660 = vunpack.c.h.b16 %v1003
    %v1661 = vunpack.c.l.b16 %v1004
    %v1662 = vunpack.c.h.b16 %v1004
    %v1663 = vunpack.c.l.b16 %v1005
    %v1664 = vunpack.c.h.b16 %v1005
    %v1665 = vunpack.c.l.b16 %v1006
    %v1666 = vunpack.c.h.b16 %v1006
    %v1667 = vunpack.c.l.b16 %v1007
    %v1668 = vunpack.c.h.b16 %v1007
    %v1669 = vunpack.c.l.b16 %v1008
    %v1670 = vunpack.c.h.b16 %v1008
    %v1671 = vunpack.c.l.b16 %v1009
    %v1672 = vunpack.c.h.b16 %v1009
    %v1673 = vunpack.c.l.b16 %v1010
    %v1674 = vunpack.c.h.b16 %v1010
    %v1675 = vunpack.c.l.b16 %v1011
    %v1676 = vunpack.c.h.b16 %v1011
    %v1677 = vunpack.c.l.b16 %v1012
    %v1678 = vunpack.c.h.b16 %v1012
    %v1679 = vunpack.c.l.b16 %v1013
    %v1680 = vunpack.c.h.b16 %v1013
    %v1681 = vunpack.c.l.b16 %v1014
    %v1682 = vunpack.c.h.b16 %v1014
    %v1683 = vunpack.c.l.b16 %v1015
    %v1684 = vunpack.c.h.b16 %v1015
    %v1685 = vunpack.c.l.b16 %v1016
    %v1686 = vunpack.c.h.b16 %v1016
    %v1687 = vunpack.c.l.b16 %v1017
    %v1688 = vunpack.c.h.b16 %v1017
    %v1689 = vunpack.c.l.b16 %v1018
    %v1690 = vunpack.c.h.b16 %v1018
    %v1691 = vunpack.c.l.b16 %v1019
    %v1692 = vunpack.c.h.b16 %v1019
    %v1693 = vunpack.c.l.b16 %v1020
    %v1694 = vunpack.c.h.b16 %v1020
    %v1695 = vunpack.c.l.b16 %v1021
    %v1696 = vunpack.c.h.b16 %v1021
    %v1697 = vunpack.c.l.b16 %v1022
    %v1698 = vunpack.c.h.b16 %v1022
    %v1699 = vunpack.c.l.b16 %v1023
    %v1700 = vunpack.c.h.b16 %v1023
    %v1701 = vunpack.c.l.b16 %v1024
    %v1702 = vunpack.c.h.b16 %v1024
    %v1703 = vunpack.c.l.b16 %v1025
    %v1704 = vunpack.c.h.b16 %v1025
    %v1705 = vunpack.c.l.b16 %v1026
    %v1706 = vunpack.c.h.b16 %v1026
    %v1707 = vunpack.c.l.b16 %v1027
    %v1708 = vunpack.c.h.b16 %v1027
    %v1709 = vunpack.c.l.b16 %v1028
    %v1710 = vunpack.c.h.b16 %v1028
    %v1711 = vunpack.c.l.b16 %v1029
    %v1712 = vunpack.c.h.b16 %v1029
    %v1713 = vunpack.c.l.b16 %v1030
    %v1714 = vunpack.c.h.b16 %v1030
    %v1715 = vunpack.c.l.b16 %v1031
    %v1716 = vunpack.c.h.b16 %v1031
    %v1717 = vunpack.c.l.b16 %v1032
    %v1718 = vunpack.c.h.b16 %v1032
    %v1719 = vunpack.c.l.b16 %v1033
    %v1720 = vunpack.c.h.b16 %v1033
    %v1721 = vunpack.c.l.b16 %v1034
    %v1722 = vunpack.c.h.b16 %v1034
    %v1723 = vunpack.c.l.b16 %v1035
    %v1724 = vunpack.c.h.b16 %v1035
    %v1725 = vunpack.c.l.b16 %v1036
    %v1726 = vunpack.c.h.b16 %v1036
    %v1727 = vunpack.c.l.b16 %v1037
    %v1728 = vunpack.c.h.b16 %v1037
    %v1729 = vunpack.c.l.b16 %v1038
    %v1730 = vunpack.c.h.b16 %v1038
    %v1731 = vunpack.c.l.b16 %v1039
    %v1732 = vunpack.c.h.b16 %v1039
    %v1733 = vunpack.c.l.b16 %v1040
    %v1734 = vunpack.c.h.b16 %v1040
    %v1735 = vunpack.c.l.b16 %v1041
    %v1736 = vunpack.c.h.b16 %v1041
    %v1737 = vunpack.c.l.b16 %v1042
    %v1738 = vunpack.c.h.b16 %v1042
    %v1739 = vunpack.c.l.b16 %v1043
    %v1740 = vunpack.c.h.b16 %v1043
    %v1741 = vunpack.c.l.b16 %v1044
    %v1742 = vunpack.c.h.b16 %v1044
    %v1743 = vunpack.c.l.b16 %v1045
    %v1744 = vunpack.c.h.b16 %v1045
    %v1745 = vunpack.c.l.b16 %v1046
    %v1746 = vunpack.c.h.b16 %v1046
    %v1747 = vunpack.c.l.b16 %v1047
    %v1748 = vunpack.c.h.b16 %v1047
    %v1749 = vunpack.c.l.b16 %v1048
    %v1750 = vunpack.c.h.b16 %v1048
    %v1751 = vunpack.c.l.b16 %v1049
    %v1752 = vunpack.c.h.b16 %v1049
    %v1753 = vunpack.c.l.b16 %v1050
    %v1754 = vunpack.c.h.b16 %v1050
    %v1755 = vunpack.c.l.b16 %v1051
    %v1756 = vunpack.c.h.b16 %v1051
    %v1757 = vunpack.c.l.b16 %v1052
    %v1758 = vunpack.c.h.b16 %v1052
    %v1759 = vunpack.c.l.b16 %v1053
    %v1760 = vunpack.c.h.b16 %v1053
    %v1761 = vunpack.c.l.b16 %v1054
    %v1762 = vunpack.c.h.b16 %v1054
    %v1763 = vunpack.c.l.b16 %v1055
    %v1764 = vunpack.c.h.b16 %v1055
    %v1765 = vunpack.c.l.b16 %v1056
    %v1766 = vunpack.c.h.b16 %v1056
    %v1767 = vunpack.c.l.b16 %v1057
    %v1768 = vunpack.c.h.b16 %v1057
    %v1769 = vunpack.c.l.b16 %v1058
    %v1770 = vunpack.c.h.b16 %v1058
    %v1771 = vunpack.c.l.b16 %v1059
    %v1772 = vunpack.c.h.b16 %v1059
    %v1773 = vunpack.c.l.b16 %v1060
    %v1774 = vunpack.c.h.b16 %v1060
    %v1775 = vunpack.c.l.b16 %v1061
    %v1776 = vunpack.c.h.b16 %v1061
    %v1777 = vunpack.c.l.b16 %v1062
    %v1778 = vunpack.c.h.b16 %v1062
    %v1779 = vunpack.c.l.b16 %v1063
    %v1780 = vunpack.c.h.b16 %v1063
    %v1781 = vunpack.c.l.b16 %v1064
    %v1782 = vunpack.c.h.b16 %v1064
    %v1783 = vunpack.c.l.b16 %v1065
    %v1784 = vunpack.c.h.b16 %v1065
    %v1785 = vunpack.c.l.b16 %v1066
    %v1786 = vunpack.c.h.b16 %v1066
    %v1787 = vunpack.c.l.b16 %v1067
    %v1788 = vunpack.c.h.b16 %v1067
    %v1789 = vunpack.c.l.b16 %v1068
    %v1790 = vunpack.c.h.b16 %v1068
    %v1791 = vunpack.c.l.b16 %v1069
    %v1792 = vunpack.c.h.b16 %v1069
    %v1793 = vunpack.c.l.b16 %v1070
    %v1794 = vunpack.c.h.b16 %v1070
    %v1795 = vunpack.c.l.b16 %v1071
    %v1796 = vunpack.c.h.b16 %v1071
    %v1797 = vunpack.c.l.b16 %v1072
    %v1798 = vunpack.c.h.b16 %v1072
    %v1799 = vunpack.c.l.b16 %v1073
    %v1800 = vunpack.c.h.b16 %v1073
    %v1801 = vunpack.c.l.b16 %v1074
    %v1802 = vunpack.c.h.b16 %v1074
    %v1803 = vunpack.c.l.b16 %v1075
    %v1804 = vunpack.c.h.b16 %v1075
    %v1805 = vunpack.c.l.b16 %v1076
    %v1806 = vunpack.c.h.b16 %v1076
    %v1807 = vunpack.c.l.b16 %v1077
    %v1808 = vunpack.c.h.b16 %v1077
    %v1809 = vunpack.c.l.b16 %v1078
    %v1810 = vunpack.c.h.b16 %v1078
    %v1811 = vunpack.c.l.b16 %v1079
    %v1812 = vunpack.c.h.b16 %v1079
    %v1813 = vunpack.c.l.b16 %v1080
    %v1814 = vunpack.c.h.b16 %v1080
    %v1815 = vunpack.c.l.b16 %v1081
    %v1816 = vunpack.c.h.b16 %v1081
    %v1817 = vunpack.c.l.b16 %v1082
    %v1818 = vunpack.c.h.b16 %v1082
    %v1819 = vunpack.c.l.b16 %v1083
    %v1820 = vunpack.c.h.b16 %v1083
    %v1821 = vunpack.c.l.b16 %v1084
    %v1822 = vunpack.c.h.b16 %v1084
    %v1823 = vunpack.c.l.b16 %v1085
    %v1824 = vunpack.c.h.b16 %v1085
    %v1825 = vunpack.c.l.b16 %v1086
    %v1826 = vunpack.c.h.b16 %v1086
    %v1827 = vunpack.c.l.b16 %v1087
    %v1828 = vunpack.c.h.b16 %v1087
    %v1829 = vunpack.c.l.b16 %v1088
    %v1830 = vunpack.c.h.b16 %v1088
    %v1831 = vunpack.c.l.b16 %v1089
    %v1832 = vunpack.c.h.b16 %v1089
    %v1833 = vunpack.c.l.b16 %v1090
    %v1834 = vunpack.c.h.b16 %v1090
    %v1835 = vunpack.c.l.b16 %v1091
    %v1836 = vunpack.c.h.b16 %v1091
    %v1837 = vunpack.c.l.b16 %v1092
    %v1838 = vunpack.c.h.b16 %v1092
    %v1839 = vunpack.c.l.b16 %v1093
    %v1840 = vunpack.c.h.b16 %v1093
    %v1841 = vunpack.c.l.b16 %v1094
    %v1842 = vunpack.c.h.b16 %v1094
    %v1843 = vunpack.c.l.b16 %v1095
    %v1844 = vunpack.c.h.b16 %v1095
    %v1845 = vunpack.c.l.b16 %v1096
    %v1846 = vunpack.c.h.b16 %v1096
    %v1847 = vunpack.c.l.b16 %v1097
    %v1848 = vunpack.c.h.b16 %v1097
    %v1849 = vunpack.c.l.b16 %v1098
    %v1850 = vunpack.c.h.b16 %v1098
    %v1851 = vunpack.c.l.b16 %v1099
    %v1852 = vunpack.c.h.b16 %v1099
    %v1853 = vunpack.c.l.b16 %v1100
    %v1854 = vunpack.c.h.b16 %v1100
    %v1855 = vunpack.c.l.b16 %v1101
    %v1856 = vunpack.c.h.b16 %v1101
    %v1857 = vunpack.c.l.b16 %v1102
    %v1858 = vunpack.c.h.b16 %v1102
    %v1859 = vunpack.c.l.b16 %v1103
    %v1860 = vunpack.c.h.b16 %v1103
    %v1861 = vunpack.c.l.b16 %v1104
    %v1862 = vunpack.c.h.b16 %v1104
    %v1863 = vunpack.c.l.b16 %v1105
    %v1864 = vunpack.c.h.b16 %v1105
    %v1865 = vunpack.c.l.b16 %v1106
    %v1866 = vunpack.c.h.b16 %v1106
    %v1867 = vunpack.c.l.b16 %v1107
    %v1868 = vunpack.c.h.b16 %v1107
    %v1869 = vunpack.c.l.b16 %v1108
    %v1870 = vunpack.c.h.b16 %v1108
    %v1871 = vunpack.c.l.b16 %v1109
    %v1872 = vunpack.c.h.b16 %v1109
    %v1873 = vunpack.c.l.b16 %v1110
    %v1874 = vunpack.c.h.b16 %v1110
    %v1875 = vunpack.c.l.b16 %v1111
    %v1876 = vunpack.c.h.b16 %v1111
    %v1877 = vunpack.c.l.b16 %v1112
    %v1878 = vunpack.c.h.b16 %v1112
    %v1879 = vunpack.c.l.b16 %v1113
    %v1880 = vunpack.c.h.b16 %v1113
    %v1881 = vunpack.c.l.b16 %v1114
    %v1882 = vunpack.c.h.b16 %v1114
    %v1883 = vunpack.c.l.b16 %v1115
    %v1884 = vunpack.c.h.b16 %v1115
    %v1885 = vunpack.c.l.b16 %v1116
    %v1886 = vunpack.c.h.b16 %v1116
    %v1887 = vunpack.c.l.b16 %v1117
    %v1888 = vunpack.c.h.b16 %v1117
    %v1889 = vunpack.c.l.b16 %v1118
    %v1890 = vunpack.c.h.b16 %v1118
    %v1891 = vunpack.c.l.b16 %v1119
    %v1892 = vunpack.c.h.b16 %v1119
    %v1893 = vunpack.c.l.b16 %v1120
    %v1894 = vunpack.c.h.b16 %v1120
    %v1895 = vunpack.c.l.b16 %v1121
    %v1896 = vunpack.c.h.b16 %v1121
    %v1897 = vunpack.c.l.b16 %v1122
    %v1898 = vunpack.c.h.b16 %v1122
    %v1899 = vunpack.c.l.b16 %v1123
    %v1900 = vunpack.c.h.b16 %v1123
    %v1901 = vunpack.c.l.b16 %v1124
    %v1902 = vunpack.c.h.b16 %v1124
    %v1903 = vunpack.c.l.b16 %v1125
    %v1904 = vunpack.c.h.b16 %v1125
    %v1905 = vunpack.c.l.b16 %v1126
    %v1906 = vunpack.c.h.b16 %v1126
    %v1907 = vunpack.c.l.b16 %v1127
    %v1908 = vunpack.c.h.b16 %v1127
    %v1909 = vunpack.c.l.b16 %v1128
    %v1910 = vunpack.c.h.b16 %v1128
    %v1911 = vunpack.c.l.b16 %v1129
    %v1912 = vunpack.c.h.b16 %v1129
    %v1913 = vunpack.c.l.b16 %v1130
    %v1914 = vunpack.c.h.b16 %v1130
    %v1915 = vunpack.c.l.b16 %v1131
    %v1916 = vunpack.c.h.b16 %v1131
    %v1917 = vunpack.c.l.b16 %v1132
    %v1918 = vunpack.c.h.b16 %v1132
    %v1919 = vunpack.c.l.b16 %v1133
    %v1920 = vunpack.c.h.b16 %v1133
    %v1921 = vunpack.c.l.b16 %v1134
    %v1922 = vunpack.c.h.b16 %v1134
    %v1923 = vunpack.c.l.b16 %v1135
    %v1924 = vunpack.c.h.b16 %v1135
    %v1925 = vunpack.c.l.b16 %v1136
    %v1926 = vunpack.c.h.b16 %v1136
    %v1927 = vpack.c.b16 %v1419, %v1415
    %v1928 = vpack.c.b16 %v1420, %v1416
    %v1929 = vpack.c.b16 %v1421, %v1417
    %v1930 = vpack.c.b16 %v1422, %v1418
    %v1931 = vpack.c.b16 %v1427, %v1423
    %v1932 = vpack.c.b16 %v1428, %v1424
    %v1933 = vpack.c.b16 %v1429, %v1425
    %v1934 = vpack.c.b16 %v1430, %v1426
    %v1935 = vpack.c.b16 %v1435, %v1431
    %v1936 = vpack.c.b16 %v1436, %v1432
    %v1937 = vpack.c.b16 %v1437, %v1433
    %v1938 = vpack.c.b16 %v1438, %v1434
    %v1939 = vpack.c.b16 %v1443, %v1439
    %v1940 = vpack.c.b16 %v1444, %v1440
    %v1941 = vpack.c.b16 %v1445, %v1441
    %v1942 = vpack.c.b16 %v1446, %v1442
    %v1943 = vpack.c.b16 %v1451, %v1447
    %v1944 = vpack.c.b16 %v1452, %v1448
    %v1945 = vpack.c.b16 %v1453, %v1449
    %v1946 = vpack.c.b16 %v1454, %v1450
    %v1947 = vpack.c.b16 %v1459, %v1455
    %v1948 = vpack.c.b16 %v1460, %v1456
    %v1949 = vpack.c.b16 %v1461, %v1457
    %v1950 = vpack.c.b16 %v1462, %v1458
    %v1951 = vpack.c.b16 %v1467, %v1463
    %v1952 = vpack.c.b16 %v1468, %v1464
    %v1953 = vpack.c.b16 %v1469, %v1465
    %v1954 = vpack.c.b16 %v1470, %v1466
    %v1955 = vpack.c.b16 %v1475, %v1471
    %v1956 = vpack.c.b16 %v1476, %v1472
    %v1957 = vpack.c.b16 %v1477, %v1473
    %v1958 = vpack.c.b16 %v1478, %v1474
    %v1959 = vpack.c.b16 %v1483, %v1479
    %v1960 = vpack.c.b16 %v1484, %v1480
    %v1961 = vpack.c.b16 %v1485, %v1481
    %v1962 = vpack.c.b16 %v1486, %v1482
    %v1963 = vpack.c.b16 %v1491, %v1487
    %v1964 = vpack.c.b16 %v1492, %v1488
    %v1965 = vpack.c.b16 %v1493, %v1489
    %v1966 = vpack.c.b16 %v1494, %v1490
    %v1967 = vpack.c.b16 %v1499, %v1495
    %v1968 = vpack.c.b16 %v1500, %v1496
    %v1969 = vpack.c.b16 %v1501, %v1497
    %v1970 = vpack.c.b16 %v1502, %v1498
    %v1971 = vpack.c.b16 %v1507, %v1503
    %v1972 = vpack.c.b16 %v1508, %v1504
    %v1973 = vpack.c.b16 %v1509, %v1505
    %v1974 = vpack.c.b16 %v1510, %v1506
    %v1975 = vpack.c.b16 %v1515, %v1511
    %v1976 = vpack.c.b16 %v1516, %v1512
    %v1977 = vpack.c.b16 %v1517, %v1513
    %v1978 = vpack.c.b16 %v1518, %v1514
    %v1979 = vpack.c.b16 %v1523, %v1519
    %v1980 = vpack.c.b16 %v1524, %v1520
    %v1981 = vpack.c.b16 %v1525, %v1521
    %v1982 = vpack.c.b16 %v1526, %v1522
    %v1983 = vpack.c.b16 %v1531, %v1527
    %v1984 = vpack.c.b16 %v1532, %v1528
    %v1985 = vpack.c.b16 %v1533, %v1529
    %v1986 = vpack.c.b16 %v1534, %v1530
    %v1987 = vpack.c.b16 %v1539, %v1535
    %v1988 = vpack.c.b16 %v1540, %v1536
    %v1989 = vpack.c.b16 %v1541, %v1537
    %v1990 = vpack.c.b16 %v1542, %v1538
    %v1991 = vpack.c.b16 %v1547, %v1543
    %v1992 = vpack.c.b16 %v1548, %v1544
    %v1993 = vpack.c.b16 %v1549, %v1545
    %v1994 = vpack.c.b16 %v1550, %v1546
    %v1995 = vpack.c.b16 %v1555, %v1551
    %v1996 = vpack.c.b16 %v1556, %v1552
    %v1997 = vpack.c.b16 %v1557, %v1553
    %v1998 = vpack.c.b16 %v1558, %v1554
    %v1999 = vpack.c.b16 %v1563, %v1559
    %v2000 = vpack.c.b16 %v1564, %v1560
    %v2001 = vpack.c.b16 %v1565, %v1561
    %v2002 = vpack.c.b16 %v1566, %v1562
    %v2003 = vpack.c.b16 %v1571, %v1567
    %v2004 = vpack.c.b16 %v1572, %v1568
    %v2005 = vpack.c.b16 %v1573, %v1569
    %v2006 = vpack.c.b16 %v1574, %v1570
    %v2007 = vpack.c.b16 %v1579, %v1575
    %v2008 = vpack.c.b16 %v1580, %v1576
    %v2009 = vpack.c.b16 %v1581, %v1577
    %v2010 = vpack.c.b16 %v1582, %v1578
    %v2011 = vpack.c.b16 %v1587, %v1583
    %v2012 = vpack.c.b16 %v1588, %v1584
    %v2013 = vpack.c.b16 %v1589, %v1585
    %v2014 = vpack.c.b16 %v1590, %v1586
    %v2015 = vpack.c.b16 %v1595, %v1591
    %v2016 = vpack.c.b16 %v1596, %v1592
    %v2017 = vpack.c.b16 %v1597, %v1593
    %v2018 = vpack.c.b16 %v1598, %v1594
    %v2019 = vpack.c.b16 %v1603, %v1599
    %v2020 = vpack.c.b16 %v1604, %v1600
    %v2021 = vpack.c.b16 %v1605, %v1601
    %v2022 = vpack.c.b16 %v1606, %v1602
    %v2023 = vpack.c.b16 %v1611, %v1607
    %v2024 = vpack.c.b16 %v1612, %v1608
    %v2025 = vpack.c.b16 %v1613, %v1609
    %v2026 = vpack.c.b16 %v1614, %v1610
    %v2027 = vpack.c.b16 %v1619, %v1615
    %v2028 = vpack.c.b16 %v1620, %v1616
    %v2029 = vpack.c.b16 %v1621, %v1617
    %v2030 = vpack.c.b16 %v1622, %v1618
    %v2031 = vpack.c.b16 %v1627, %v1623
    %v2032 = vpack.c.b16 %v1628, %v1624
    %v2033 = vpack.c.b16 %v1629, %v1625
    %v2034 = vpack.c.b16 %v1630, %v1626
    %v2035 = vpack.c.b16 %v1635, %v1631
    %v2036 = vpack.c.b16 %v1636, %v1632
    %v2037 = vpack.c.b16 %v1637, %v1633
    %v2038 = vpack.c.b16 %v1638, %v1634
    %v2039 = vpack.c.b16 %v1643, %v1639
    %v2040 = vpack.c.b16 %v1644, %v1640
    %v2041 = vpack.c.b16 %v1645, %v1641
    %v2042 = vpack.c.b16 %v1646, %v1642
    %v2043 = vpack.c.b16 %v1651, %v1647
    %v2044 = vpack.c.b16 %v1652, %v1648
    %v2045 = vpack.c.b16 %v1653, %v1649
    %v2046 = vpack.c.b16 %v1654, %v1650
    %v2047 = vpack.c.b16 %v1659, %v1655
    %v2048 = vpack.c.b16 %v1660, %v1656
    %v2049 = vpack.c.b16 %v1661, %v1657
    %v2050 = vpack.c.b16 %v1662, %v1658
    %v2051 = vpack.c.b16 %v1667, %v1663
    %v2052 = vpack.c.b16 %v1668, %v1664
    %v2053 = vpack.c.b16 %v1669, %v1665
    %v2054 = vpack.c.b16 %v1670, %v1666
    %v2055 = vpack.c.b16 %v1675, %v1671
    %v2056 = vpack.c.b16 %v1676, %v1672
    %v2057 = vpack.c.b16 %v1677, %v1673
    %v2058 = vpack.c.b16 %v1678, %v1674
    %v2059 = vpack.c.b16 %v1683, %v1679
    %v2060 = vpack.c.b16 %v1684, %v1680
    %v2061 = vpack.c.b16 %v1685, %v1681
    %v2062 = vpack.c.b16 %v1686, %v1682
    %v2063 = vpack.c.b16 %v1691, %v1687
    %v2064 = vpack.c.b16 %v1692, %v1688
    %v2065 = vpack.c.b16 %v1693, %v1689
    %v2066 = vpack.c.b16 %v1694, %v1690
    %v2067 = vpack.c.b16 %v1699, %v1695
    %v2068 = vpack.c.b16 %v1700, %v1696
    %v2069 = vpack.c.b16 %v1701, %v1697
    %v2070 = vpack.c.b16 %v1702, %v1698
    %v2071 = vpack.c.b16 %v1707, %v1703
    %v2072 = vpack.c.b16 %v1708, %v1704
    %v2073 = vpack.c.b16 %v1709, %v1705
    %v2074 = vpack.c.b16 %v1710, %v1706
    %v2075 = vpack.c.b16 %v1715, %v1711
    %v2076 = vpack.c.b16 %v1716, %v1712
    %v2077 = vpack.c.b16 %v1717, %v1713
    %v2078 = vpack.c.b16 %v1718, %v1714
    %v2079 = vpack.c.b16 %v1723, %v1719
    %v2080 = vpack.c.b16 %v1724, %v1720
    %v2081 = vpack.c.b16 %v1725, %v1721
    %v2082 = vpack.c.b16 %v1726, %v1722
    %v2083 = vpack.c.b16 %v1731, %v1727
    %v2084 = vpack.c.b16 %v1732, %v1728
    %v2085 = vpack.c.b16 %v1733, %v1729
    %v2086 = vpack.c.b16 %v1734, %v1730
    %v2087 = vpack.c.b16 %v1739, %v1735
    %v2088 = vpack.c.b16 %v1740, %v1736
    %v2089 = vpack.c.b16 %v1741, %v1737
    %v2090 = vpack.c.b16 %v1742, %v1738
    %v2091 = vpack.c.b16 %v1747, %v1743
    %v2092 = vpack.c.b16 %v1748, %v1744
    %v2093 = vpack.c.b16 %v1749, %v1745
    %v2094 = vpack.c.b16 %v1750, %v1746
    %v2095 = vpack.c.b16 %v1755, %v1751
    %v2096 = vpack.c.b16 %v1756, %v1752
    %v2097 = vpack.c.b16 %v1757, %v1753
    %v2098 = vpack.c.b16 %v1758, %v1754
    %v2099 = vpack.c.b16 %v1763, %v1759
    %v2100 = vpack.c.b16 %v1764, %v1760
    %v2101 = vpack.c.b16 %v1765, %v1761
    %v2102 = vpack.c.b16 %v1766, %v1762
    %v2103 = vpack.c.b16 %v1771, %v1767
    %v2104 = vpack.c.b16 %v1772, %v1768
    %v2105 = vpack.c.b16 %v1773, %v1769
    %v2106 = vpack.c.b16 %v1774, %v1770
    %v2107 = vpack.c.b16 %v1779, %v1775
    %v2108 = vpack.c.b16 %v1780, %v1776
    %v2109 = vpack.c.b16 %v1781, %v1777
    %v2110 = vpack.c.b16 %v1782, %v1778
    %v2111 = vpack.c.b16 %v1787, %v1783
    %v2112 = vpack.c.b16 %v1788, %v1784
    %v2113 = vpack.c.b16 %v1789, %v1785
    %v2114 = vpack.c.b16 %v1790, %v1786
    %v2115 = vpack.c.b16 %v1795, %v1791
    %v2116 = vpack.c.b16 %v1796, %v1792
    %v2117 = vpack.c.b16 %v1797, %v1793
    %v2118 = vpack.c.b16 %v1798, %v1794
    %v2119 = vpack.c.b16 %v1803, %v1799
    %v2120 = vpack.c.b16 %v1804, %v1800
    %v2121 = vpack.c.b16 %v1805, %v1801
    %v2122 = vpack.c.b16 %v1806, %v1802
    %v2123 = vpack.c.b16 %v1811, %v1807
    %v2124 = vpack.c.b16 %v1812, %v1808
    %v2125 = vpack.c.b16 %v1813, %v1809
    %v2126 = vpack.c.b16 %v1814, %v1810
    %v2127 = vpack.c.b16 %v1819, %v1815
    %v2128 = vpack.c.b16 %v1820, %v1816
    %v2129 = vpack.c.b16 %v1821, %v1817
    %v2130 = vpack.c.b16 %v1822, %v1818
    %v2131 = vpack.c.b16 %v1827, %v1823
    %v2132 = vpack.c.b16 %v1828, %v1824
    %v2133 = vpack.c.b16 %v1829, %v1825
    %v2134 = vpack.c.b16 %v1830, %v1826
    %v2135 = vpack.c.b16 %v1835, %v1831
    %v2136 = vpack.c.b16 %v1836, %v1832
    %v2137 = vpack.c.b16 %v1837, %v1833
    %v2138 = vpack.c.b16 %v1838, %v1834
    %v2139 = vpack.c.b16 %v1843, %v1839
    %v2140 = vpack.c.b16 %v1844, %v1840
    %v2141 = vpack.c.b16 %v1845, %v1841
    %v2142 = vpack.c.b16 %v1846, %v1842
    %v2143 = vpack.c.b16 %v1851, %v1847
    %v2144 = vpack.c.b16 %v1852, %v1848
    %v2145 = vpack.c.b16 %v1853, %v1849
    %v2146 = vpack.c.b16 %v1854, %v1850
    %v2147 = vpack.c.b16 %v1859, %v1855
    %v2148 = vpack.c.b16 %v1860, %v1856
    %v2149 = vpack.c.b16 %v1861, %v1857
    %v2150 = vpack.c.b16 %v1862, %v1858
    %v2151 = vpack.c.b16 %v1867, %v1863
    %v2152 = vpack.c.b16 %v1868, %v1864
    %v2153 = vpack.c.b16 %v1869, %v1865
    %v2154 = vpack.c.b16 %v1870, %v1866
    %v2155 = vpack.c.b16 %v1875, %v1871
    %v2156 = vpack.c.b16 %v1876, %v1872
    %v2157 = vpack.c.b16 %v1877, %v1873
    %v2158 = vpack.c.b16 %v1878, %v1874
    %v2159 = vpack.c.b16 %v1883, %v1879
    %v2160 = vpack.c.b16 %v1884, %v1880
    %v2161 = vpack.c.b16 %v1885, %v1881
    %v2162 = vpack.c.b16 %v1886, %v1882
    %v2163 = vpack.c.b16 %v1891, %v1887
    %v2164 = vpack.c.b16 %v1892, %v1888
    %v2165 = vpack.c.b16 %v1893, %v1889
    %v2166 = vpack.c.b16 %v1894, %v1890
    %v2167 = vpack.c.b16 %v1899, %v1895
    %v2168 = vpack.c.b16 %v1900, %v1896
    %v2169 = vpack.c.b16 %v1901, %v1897
    %v2170 = vpack.c.b16 %v1902, %v1898
    %v2171 = vpack.c.b16 %v1907, %v1903
    %v2172 = vpack.c.b16 %v1908, %v1904
    %v2173 = vpack.c.b16 %v1909, %v1905
    %v2174 = vpack.c.b16 %v1910, %v1906
    %v2175 = vpack.c.b16 %v1915, %v1911
    %v2176 = vpack.c.b16 %v1916, %v1912
    %v2177 = vpack.c.b16 %v1917, %v1913
    %v2178 = vpack.c.b16 %v1918, %v1914
    %v2179 = vpack.c.b16 %v1923, %v1919
    %v2180 = vpack.c.b16 %v1924, %v1920
    %v2181 = vpack.c.b16 %v1925, %v1921
    %v2182 = vpack.c.b16 %v1926, %v1922
    %2439 = vmatprep.subr.bf16.mxu0 %v1956
    %2440 = vmatpush1.bf16.msra.mxu0 %v1955
    %2441 = vmatprep.subr.bf16.mxu0 %v1952
    %2442 = vmatpush1.bf16.msra.mxu0 %v1951
    %2443 = vmatprep.subr.bf16.mxu0 %v1948
    %2444 = vmatpush1.bf16.msra.mxu0 %v1947
    %2445 = vmatprep.subr.bf16.mxu0 %v1944
    %2446 = vmatpush1.bf16.msra.mxu0 %v1943
    %2447 = vmatprep.subr.bf16.mxu0 %v1940
    %2448 = vmatpush1.bf16.msra.mxu0 %v1939
    %2449 = vmatprep.subr.bf16.mxu0 %v1936
    %2450 = vmatpush1.bf16.msra.mxu0 %v1935
    %2451 = vmatprep.subr.bf16.mxu0 %v1932
    %2452 = vmatpush1.bf16.msra.mxu0 %v1931
    %2453 = vmatprep.subr.bf16.mxu0 %v1928
    %2454 = vmatpush1.bf16.msra.mxu0 %v1927
    %2455 = vmatprep.subr.bf16.mxu0 %v1988
    %2456 = vmatpush2.bf16.msra.mxu0 %v1987
    %2457 = vmatprep.subr.bf16.mxu0 %v1984
    %2458 = vmatpush2.bf16.msra.mxu0 %v1983
    %2459 = vmatprep.subr.bf16.mxu0 %v1980
    %2460 = vmatpush2.bf16.msra.mxu0 %v1979
    %2461 = vmatprep.subr.bf16.mxu0 %v1976
    %2462 = vmatpush2.bf16.msra.mxu0 %v1975
    %2463 = vmatprep.subr.bf16.mxu0 %v1972
    %2464 = vmatpush2.bf16.msra.mxu0 %v1971
    %2465 = vmatprep.subr.bf16.mxu0 %v1968
    %2466 = vmatpush2.bf16.msra.mxu0 %v1967
    %2467 = vmatprep.subr.bf16.mxu0 %v1964
    %2468 = vmatpush2.bf16.msra.mxu0 %v1963
    %2469 = vmatprep.subr.bf16.mxu0 %v1960
    %2470 = vmatpush2.bf16.msra.mxu0 %v1959
    %2471 = vmatprep.mubr.bf16.mxu0 %v874
    %2472 = vmatmul.mubr.bf16.gmra.mxu0 %v873
    %v2473 = vpop.f32.mrf.mxu0
    %v2474 = vadd.f32 %v1142, %v2473
    %v2475 = vpop.f32.mrf.mxu0
    %v2476 = vadd.f32 %v1146, %v2475
    %v2477 = vpop.f32.mrf.mxu0
    %v2478 = vpop.f32.mrf.mxu0
    %2479 = vdwg.mxu0
    %2480 = vmatprep.subr.bf16.mxu0 %v2020
    %2481 = vmatpush1.bf16.msra.mxu0 %v2019
    %2482 = vmatprep.subr.bf16.mxu0 %v2016
    %2483 = vmatpush1.bf16.msra.mxu0 %v2015
    %2484 = vmatprep.subr.bf16.mxu0 %v2012
    %2485 = vmatpush1.bf16.msra.mxu0 %v2011
    %2486 = vmatprep.subr.bf16.mxu0 %v2008
    %2487 = vmatpush1.bf16.msra.mxu0 %v2007
    %2488 = vmatprep.subr.bf16.mxu0 %v2004
    %2489 = vmatpush1.bf16.msra.mxu0 %v2003
    %2490 = vmatprep.subr.bf16.mxu0 %v2000
    %2491 = vmatpush1.bf16.msra.mxu0 %v1999
    %2492 = vmatprep.subr.bf16.mxu0 %v1996
    %2493 = vmatpush1.bf16.msra.mxu0 %v1995
    %2494 = vmatprep.subr.bf16.mxu0 %v1992
    %2495 = vmatpush1.bf16.msra.mxu0 %v1991
    %2496 = vmatprep.subr.bf16.mxu0 %v2052
    %2497 = vmatpush2.bf16.msra.mxu0 %v2051
    %2498 = vmatprep.subr.bf16.mxu0 %v2048
    %2499 = vmatpush2.bf16.msra.mxu0 %v2047
    %2500 = vmatprep.subr.bf16.mxu0 %v2044
    %2501 = vmatpush2.bf16.msra.mxu0 %v2043
    %2502 = vmatprep.subr.bf16.mxu0 %v2040
    %2503 = vmatpush2.bf16.msra.mxu0 %v2039
    %2504 = vmatprep.subr.bf16.mxu0 %v2036
    %2505 = vmatpush2.bf16.msra.mxu0 %v2035
    %2506 = vmatprep.subr.bf16.mxu0 %v2032
    %2507 = vmatpush2.bf16.msra.mxu0 %v2031
    %2508 = vmatprep.subr.bf16.mxu0 %v2028
    %2509 = vmatpush2.bf16.msra.mxu0 %v2027
    %2510 = vmatprep.subr.bf16.mxu0 %v2024
    %2511 = vmatpush2.bf16.msra.mxu0 %v2023
    %2512 = vmatprep.mubr.bf16.mxu0 %v876
    %2513 = vmatmul.mubr.bf16.gmra.mxu0 %v875
    %v2514 = vpop.f32.mrf.mxu0
    %v2515 = vadd.f32 %v2474, %v2514
    %v2516 = vpop.f32.mrf.mxu0
    %v2517 = vadd.f32 %v2476, %v2516
    %v2518 = vpop.f32.mrf.mxu0
    %v2519 = vpop.f32.mrf.mxu0
    %2520 = vdwg.mxu0
    %2521 = vmatprep.subr.bf16.mxu0 %v2084
    %2522 = vmatpush1.bf16.msra.mxu0 %v2083
    %2523 = vmatprep.subr.bf16.mxu0 %v2080
    %2524 = vmatpush1.bf16.msra.mxu0 %v2079
    %2525 = vmatprep.subr.bf16.mxu0 %v2076
    %2526 = vmatpush1.bf16.msra.mxu0 %v2075
    %2527 = vmatprep.subr.bf16.mxu0 %v2072
    %2528 = vmatpush1.bf16.msra.mxu0 %v2071
    %2529 = vmatprep.subr.bf16.mxu0 %v2068
    %2530 = vmatpush1.bf16.msra.mxu0 %v2067
    %2531 = vmatprep.subr.bf16.mxu0 %v2064
    %2532 = vmatpush1.bf16.msra.mxu0 %v2063
    %2533 = vmatprep.subr.bf16.mxu0 %v2060
    %2534 = vmatpush1.bf16.msra.mxu0 %v2059
    %2535 = vmatprep.subr.bf16.mxu0 %v2056
    %2536 = vmatpush1.bf16.msra.mxu0 %v2055
    %2537 = vmatprep.subr.bf16.mxu0 %v2116
    %2538 = vmatpush2.bf16.msra.mxu0 %v2115
    %2539 = vmatprep.subr.bf16.mxu0 %v2112
    %2540 = vmatpush2.bf16.msra.mxu0 %v2111
    %2541 = vmatprep.subr.bf16.mxu0 %v2108
    %2542 = vmatpush2.bf16.msra.mxu0 %v2107
    %2543 = vmatprep.subr.bf16.mxu0 %v2104
    %2544 = vmatpush2.bf16.msra.mxu0 %v2103
    %2545 = vmatprep.subr.bf16.mxu0 %v2100
    %2546 = vmatpush2.bf16.msra.mxu0 %v2099
    %2547 = vmatprep.subr.bf16.mxu0 %v2096
    %2548 = vmatpush2.bf16.msra.mxu0 %v2095
    %2549 = vmatprep.subr.bf16.mxu0 %v2092
    %2550 = vmatpush2.bf16.msra.mxu0 %v2091
    %2551 = vmatprep.subr.bf16.mxu0 %v2088
    %2552 = vmatpush2.bf16.msra.mxu0 %v2087
    %2553 = vmatprep.mubr.bf16.mxu0 %v878
    %2554 = vmatmul.mubr.bf16.gmra.mxu0 %v877
    %v2555 = vpop.f32.mrf.mxu0
    %v2556 = vadd.f32 %v2515, %v2555
    %v2557 = vpop.f32.mrf.mxu0
    %v2558 = vadd.f32 %v2517, %v2557
    %v2559 = vpop.f32.mrf.mxu0
    %v2560 = vpop.f32.mrf.mxu0
    %2561 = vdwg.mxu0
    %2562 = vmatprep.subr.bf16.mxu0 %v2148
    %2563 = vmatpush1.bf16.msra.mxu0 %v2147
    %2564 = vmatprep.subr.bf16.mxu0 %v2144
    %2565 = vmatpush1.bf16.msra.mxu0 %v2143
    %2566 = vmatprep.subr.bf16.mxu0 %v2140
    %2567 = vmatpush1.bf16.msra.mxu0 %v2139
    %2568 = vmatprep.subr.bf16.mxu0 %v2136
    %2569 = vmatpush1.bf16.msra.mxu0 %v2135
    %2570 = vmatprep.subr.bf16.mxu0 %v2132
    %2571 = vmatpush1.bf16.msra.mxu0 %v2131
    %2572 = vmatprep.subr.bf16.mxu0 %v2128
    %2573 = vmatpush1.bf16.msra.mxu0 %v2127
    %2574 = vmatprep.subr.bf16.mxu0 %v2124
    %2575 = vmatpush1.bf16.msra.mxu0 %v2123
    %2576 = vmatprep.subr.bf16.mxu0 %v2120
    %2577 = vmatpush1.bf16.msra.mxu0 %v2119
    %2578 = vmatprep.subr.bf16.mxu0 %v2180
    %2579 = vmatpush2.bf16.msra.mxu0 %v2179
    %2580 = vmatprep.subr.bf16.mxu0 %v2176
    %2581 = vmatpush2.bf16.msra.mxu0 %v2175
    %2582 = vmatprep.subr.bf16.mxu0 %v2172
    %2583 = vmatpush2.bf16.msra.mxu0 %v2171
    %2584 = vmatprep.subr.bf16.mxu0 %v2168
    %2585 = vmatpush2.bf16.msra.mxu0 %v2167
    %2586 = vmatprep.subr.bf16.mxu0 %v2164
    %2587 = vmatpush2.bf16.msra.mxu0 %v2163
    %2588 = vmatprep.subr.bf16.mxu0 %v2160
    %2589 = vmatpush2.bf16.msra.mxu0 %v2159
    %2590 = vmatprep.subr.bf16.mxu0 %v2156
    %2591 = vmatpush2.bf16.msra.mxu0 %v2155
    %2592 = vmatprep.subr.bf16.mxu0 %v2152
    %2593 = vmatpush2.bf16.msra.mxu0 %v2151
    %2594 = vmatprep.mubr.bf16.mxu0 %v880
    %2595 = vmatmul.mubr.bf16.gmra.mxu0 %v879
    %v2596 = vpop.f32.mrf.mxu0
    %v2597 = vadd.f32 %v2556, %v2596
    %v2598 = vpop.f32.mrf.mxu0
    %v2599 = vadd.f32 %v2558, %v2598
    %v2600 = vpop.f32.mrf.mxu0
    %v2601 = vpop.f32.mrf.mxu0
    %2602 = vdwg.mxu0
    %2603 = vmatprep.subr.bf16.mxu0 %v1958
    %2604 = vmatpush1.bf16.msra.mxu0 %v1957
    %2605 = vmatprep.subr.bf16.mxu0 %v1954
    %2606 = vmatpush1.bf16.msra.mxu0 %v1953
    %2607 = vmatprep.subr.bf16.mxu0 %v1950
    %2608 = vmatpush1.bf16.msra.mxu0 %v1949
    %2609 = vmatprep.subr.bf16.mxu0 %v1946
    %2610 = vmatpush1.bf16.msra.mxu0 %v1945
    %2611 = vmatprep.subr.bf16.mxu0 %v1942
    %2612 = vmatpush1.bf16.msra.mxu0 %v1941
    %2613 = vmatprep.subr.bf16.mxu0 %v1938
    %2614 = vmatpush1.bf16.msra.mxu0 %v1937
    %2615 = vmatprep.subr.bf16.mxu0 %v1934
    %2616 = vmatpush1.bf16.msra.mxu0 %v1933
    %2617 = vmatprep.subr.bf16.mxu0 %v1930
    %2618 = vmatpush1.bf16.msra.mxu0 %v1929
    %2619 = vmatprep.subr.bf16.mxu0 %v1990
    %2620 = vmatpush2.bf16.msra.mxu0 %v1989
    %2621 = vmatprep.subr.bf16.mxu0 %v1986
    %2622 = vmatpush2.bf16.msra.mxu0 %v1985
    %2623 = vmatprep.subr.bf16.mxu0 %v1982
    %2624 = vmatpush2.bf16.msra.mxu0 %v1981
    %2625 = vmatprep.subr.bf16.mxu0 %v1978
    %2626 = vmatpush2.bf16.msra.mxu0 %v1977
    %2627 = vmatprep.subr.bf16.mxu0 %v1974
    %2628 = vmatpush2.bf16.msra.mxu0 %v1973
    %2629 = vmatprep.subr.bf16.mxu0 %v1970
    %2630 = vmatpush2.bf16.msra.mxu0 %v1969
    %2631 = vmatprep.subr.bf16.mxu0 %v1966
    %2632 = vmatpush2.bf16.msra.mxu0 %v1965
    %2633 = vmatprep.subr.bf16.mxu0 %v1962
    %2634 = vmatpush2.bf16.msra.mxu0 %v1961
    %2635 = vmatprep.mubr.bf16.mxu0 %v874
    %2636 = vmatmul.mubr.bf16.gmra.mxu0 %v873
    %v2637 = vpop.f32.mrf.mxu0
    %v2638 = vadd.f32 %v1150, %v2637
    %v2639 = vpop.f32.mrf.mxu0
    %v2640 = vadd.f32 %v1154, %v2639
    %v2641 = vpop.f32.mrf.mxu0
    %v2642 = vpop.f32.mrf.mxu0
    %2643 = vdwg.mxu0
    %2644 = vmatprep.subr.bf16.mxu0 %v2022
    %2645 = vmatpush1.bf16.msra.mxu0 %v2021
    %2646 = vmatprep.subr.bf16.mxu0 %v2018
    %2647 = vmatpush1.bf16.msra.mxu0 %v2017
    %2648 = vmatprep.subr.bf16.mxu0 %v2014
    %2649 = vmatpush1.bf16.msra.mxu0 %v2013
    %2650 = vmatprep.subr.bf16.mxu0 %v2010
    %2651 = vmatpush1.bf16.msra.mxu0 %v2009
    %2652 = vmatprep.subr.bf16.mxu0 %v2006
    %2653 = vmatpush1.bf16.msra.mxu0 %v2005
    %2654 = vmatprep.subr.bf16.mxu0 %v2002
    %2655 = vmatpush1.bf16.msra.mxu0 %v2001
    %2656 = vmatprep.subr.bf16.mxu0 %v1998
    %2657 = vmatpush1.bf16.msra.mxu0 %v1997
    %2658 = vmatprep.subr.bf16.mxu0 %v1994
    %2659 = vmatpush1.bf16.msra.mxu0 %v1993
    %2660 = vmatprep.subr.bf16.mxu0 %v2054
    %2661 = vmatpush2.bf16.msra.mxu0 %v2053
    %2662 = vmatprep.subr.bf16.mxu0 %v2050
    %2663 = vmatpush2.bf16.msra.mxu0 %v2049
    %2664 = vmatprep.subr.bf16.mxu0 %v2046
    %2665 = vmatpush2.bf16.msra.mxu0 %v2045
    %2666 = vmatprep.subr.bf16.mxu0 %v2042
    %2667 = vmatpush2.bf16.msra.mxu0 %v2041
    %2668 = vmatprep.subr.bf16.mxu0 %v2038
    %2669 = vmatpush2.bf16.msra.mxu0 %v2037
    %2670 = vmatprep.subr.bf16.mxu0 %v2034
    %2671 = vmatpush2.bf16.msra.mxu0 %v2033
    %2672 = vmatprep.subr.bf16.mxu0 %v2030
    %2673 = vmatpush2.bf16.msra.mxu0 %v2029
    %2674 = vmatprep.subr.bf16.mxu0 %v2026
    %2675 = vmatpush2.bf16.msra.mxu0 %v2025
    %2676 = vmatprep.mubr.bf16.mxu0 %v876
    %2677 = vmatmul.mubr.bf16.gmra.mxu0 %v875
    %v2678 = vpop.f32.mrf.mxu0
    %v2679 = vadd.f32 %v2638, %v2678
    %v2680 = vpop.f32.mrf.mxu0
    %v2681 = vadd.f32 %v2640, %v2680
    %v2682 = vpop.f32.mrf.mxu0
    %v2683 = vpop.f32.mrf.mxu0
    %2684 = vdwg.mxu0
    %2685 = vmatprep.subr.bf16.mxu0 %v2086
    %2686 = vmatpush1.bf16.msra.mxu0 %v2085
    %2687 = vmatprep.subr.bf16.mxu0 %v2082
    %2688 = vmatpush1.bf16.msra.mxu0 %v2081
    %2689 = vmatprep.subr.bf16.mxu0 %v2078
    %2690 = vmatpush1.bf16.msra.mxu0 %v2077
    %2691 = vmatprep.subr.bf16.mxu0 %v2074
    %2692 = vmatpush1.bf16.msra.mxu0 %v2073
    %2693 = vmatprep.subr.bf16.mxu0 %v2070
    %2694 = vmatpush1.bf16.msra.mxu0 %v2069
    %2695 = vmatprep.subr.bf16.mxu0 %v2066
    %2696 = vmatpush1.bf16.msra.mxu0 %v2065
    %2697 = vmatprep.subr.bf16.mxu0 %v2062
    %2698 = vmatpush1.bf16.msra.mxu0 %v2061
    %2699 = vmatprep.subr.bf16.mxu0 %v2058
    %2700 = vmatpush1.bf16.msra.mxu0 %v2057
    %2701 = vmatprep.subr.bf16.mxu0 %v2118
    %2702 = vmatpush2.bf16.msra.mxu0 %v2117
    %2703 = vmatprep.subr.bf16.mxu0 %v2114
    %2704 = vmatpush2.bf16.msra.mxu0 %v2113
    %2705 = vmatprep.subr.bf16.mxu0 %v2110
    %2706 = vmatpush2.bf16.msra.mxu0 %v2109
    %2707 = vmatprep.subr.bf16.mxu0 %v2106
    %2708 = vmatpush2.bf16.msra.mxu0 %v2105
    %2709 = vmatprep.subr.bf16.mxu0 %v2102
    %2710 = vmatpush2.bf16.msra.mxu0 %v2101
    %2711 = vmatprep.subr.bf16.mxu0 %v2098
    %2712 = vmatpush2.bf16.msra.mxu0 %v2097
    %2713 = vmatprep.subr.bf16.mxu0 %v2094
    %2714 = vmatpush2.bf16.msra.mxu0 %v2093
    %2715 = vmatprep.subr.bf16.mxu0 %v2090
    %2716 = vmatpush2.bf16.msra.mxu0 %v2089
    %2717 = vmatprep.mubr.bf16.mxu0 %v878
    %2718 = vmatmul.mubr.bf16.gmra.mxu0 %v877
    %v2719 = vpop.f32.mrf.mxu0
    %v2720 = vadd.f32 %v2679, %v2719
    %v2721 = vpop.f32.mrf.mxu0
    %v2722 = vadd.f32 %v2681, %v2721
    %v2723 = vpop.f32.mrf.mxu0
    %v2724 = vpop.f32.mrf.mxu0
    %2725 = vdwg.mxu0
    %2726 = vmatprep.subr.bf16.mxu0 %v2150
    %2727 = vmatpush1.bf16.msra.mxu0 %v2149
    %2728 = vmatprep.subr.bf16.mxu0 %v2146
    %2729 = vmatpush1.bf16.msra.mxu0 %v2145
    %2730 = vmatprep.subr.bf16.mxu0 %v2142
    %2731 = vmatpush1.bf16.msra.mxu0 %v2141
    %2732 = vmatprep.subr.bf16.mxu0 %v2138
    %2733 = vmatpush1.bf16.msra.mxu0 %v2137
    %2734 = vmatprep.subr.bf16.mxu0 %v2134
    %2735 = vmatpush1.bf16.msra.mxu0 %v2133
    %2736 = vmatprep.subr.bf16.mxu0 %v2130
    %2737 = vmatpush1.bf16.msra.mxu0 %v2129
    %2738 = vmatprep.subr.bf16.mxu0 %v2126
    %2739 = vmatpush1.bf16.msra.mxu0 %v2125
    %2740 = vmatprep.subr.bf16.mxu0 %v2122
    %2741 = vmatpush1.bf16.msra.mxu0 %v2121
    %2742 = vmatprep.subr.bf16.mxu0 %v2182
    %2743 = vmatpush2.bf16.msra.mxu0 %v2181
    %2744 = vmatprep.subr.bf16.mxu0 %v2178
    %2745 = vmatpush2.bf16.msra.mxu0 %v2177
    %2746 = vmatprep.subr.bf16.mxu0 %v2174
    %2747 = vmatpush2.bf16.msra.mxu0 %v2173
    %2748 = vmatprep.subr.bf16.mxu0 %v2170
    %2749 = vmatpush2.bf16.msra.mxu0 %v2169
    %2750 = vmatprep.subr.bf16.mxu0 %v2166
    %2751 = vmatpush2.bf16.msra.mxu0 %v2165
    %2752 = vmatprep.subr.bf16.mxu0 %v2162
    %2753 = vmatpush2.bf16.msra.mxu0 %v2161
    %2754 = vmatprep.subr.bf16.mxu0 %v2158
    %2755 = vmatpush2.bf16.msra.mxu0 %v2157
    %2756 = vmatprep.subr.bf16.mxu0 %v2154
    %2757 = vmatpush2.bf16.msra.mxu0 %v2153
    %2758 = vmatprep.mubr.bf16.mxu0 %v880
    %2759 = vmatmul.mubr.bf16.gmra.mxu0 %v879
    %v2760 = vpop.f32.mrf.mxu0
    %v2761 = vadd.f32 %v2720, %v2760
    %v2762 = vpop.f32.mrf.mxu0
    %v2763 = vadd.f32 %v2722, %v2762
    %v2764 = vpop.f32.mrf.mxu0
    %v2765 = vpop.f32.mrf.mxu0
    %2766 = vdwg.mxu0
    %v2767 = vmax.f32 %v2597, 0.0
    %v2768 = vmax.f32 %v2599, 0.0
    %v2769 = vmax.f32 %v2761, 0.0
    %v2770 = vmax.f32 %v2763, 0.0
    %v2771 = vld [vmem:[#allocation13] sm:$0xff]
    %v2772 = vld [vmem:[#allocation13 + $0x8] sm:$0xff]
    %v2773 = vld [vmem:[#allocation13 + $0x10] sm:$0xff]
    %v2774 = vld [vmem:[#allocation13 + $0x18] sm:$0xff]
    %v2775 = vld [vmem:[#allocation13 + $0x20] sm:$0xff]
    %v2776 = vld [vmem:[#allocation13 + $0x28] sm:$0xff]
    %v2777 = vld [vmem:[#allocation13 + $0x30] sm:$0xff]
    %v2778 = vld [vmem:[#allocation13 + $0x38] sm:$0xff]
    %v2779 = vld [vmem:[#allocation13 + $0x40] sm:$0xff]
    %v2780 = vld [vmem:[#allocation13 + $0x48] sm:$0xff]
    %v2781 = vld [vmem:[#allocation13 + $0x50] sm:$0xff]
    %v2782 = vld [vmem:[#allocation13 + $0x58] sm:$0xff]
    %v2783 = vld [vmem:[#allocation13 + $0x60] sm:$0xff]
    %v2784 = vld [vmem:[#allocation13 + $0x68] sm:$0xff]
    %v2785 = vld [vmem:[#allocation13 + $0x70] sm:$0xff]
    %v2786 = vld [vmem:[#allocation13 + $0x78] sm:$0xff]
    %v2787 = vld [vmem:[#allocation13 + $0x80] sm:$0xff]
    %v2788 = vld [vmem:[#allocation13 + $0x88] sm:$0xff]
    %v2789 = vld [vmem:[#allocation13 + $0x90] sm:$0xff]
    %v2790 = vld [vmem:[#allocation13 + $0x98] sm:$0xff]
    %v2791 = vld [vmem:[#allocation13 + $0xa0] sm:$0xff]
    %v2792 = vld [vmem:[#allocation13 + $0xa8] sm:$0xff]
    %v2793 = vld [vmem:[#allocation13 + $0xb0] sm:$0xff]
    %v2794 = vld [vmem:[#allocation13 + $0xb8] sm:$0xff]
    %v2795 = vld [vmem:[#allocation13 + $0xc0] sm:$0xff]
    %v2796 = vld [vmem:[#allocation13 + $0xc8] sm:$0xff]
    %v2797 = vld [vmem:[#allocation13 + $0xd0] sm:$0xff]
    %v2798 = vld [vmem:[#allocation13 + $0xd8] sm:$0xff]
    %v2799 = vld [vmem:[#allocation13 + $0xe0] sm:$0xff]
    %v2800 = vld [vmem:[#allocation13 + $0xe8] sm:$0xff]
    %v2801 = vld [vmem:[#allocation13 + $0xf0] sm:$0xff]
    %v2802 = vld [vmem:[#allocation13 + $0xf8] sm:$0xff]
    %v2803 = vld [vmem:[#allocation13 + $0x100] sm:$0xff]
    %v2804 = vld [vmem:[#allocation13 + $0x108] sm:$0xff]
    %v2805 = vld [vmem:[#allocation13 + $0x110] sm:$0xff]
    %v2806 = vld [vmem:[#allocation13 + $0x118] sm:$0xff]
    %v2807 = vld [vmem:[#allocation13 + $0x120] sm:$0xff]
    %v2808 = vld [vmem:[#allocation13 + $0x128] sm:$0xff]
    %v2809 = vld [vmem:[#allocation13 + $0x130] sm:$0xff]
    %v2810 = vld [vmem:[#allocation13 + $0x138] sm:$0xff]
    %v2811 = vld [vmem:[#allocation13 + $0x140] sm:$0xff]
    %v2812 = vld [vmem:[#allocation13 + $0x148] sm:$0xff]
    %v2813 = vld [vmem:[#allocation13 + $0x150] sm:$0xff]
    %v2814 = vld [vmem:[#allocation13 + $0x158] sm:$0xff]
    %v2815 = vld [vmem:[#allocation13 + $0x160] sm:$0xff]
    %v2816 = vld [vmem:[#allocation13 + $0x168] sm:$0xff]
    %v2817 = vld [vmem:[#allocation13 + $0x170] sm:$0xff]
    %v2818 = vld [vmem:[#allocation13 + $0x178] sm:$0xff]
    %v2819 = vld [vmem:[#allocation13 + $0x180] sm:$0xff]
    %v2820 = vld [vmem:[#allocation13 + $0x188] sm:$0xff]
    %v2821 = vld [vmem:[#allocation13 + $0x190] sm:$0xff]
    %v2822 = vld [vmem:[#allocation13 + $0x198] sm:$0xff]
    %v2823 = vld [vmem:[#allocation13 + $0x1a0] sm:$0xff]
    %v2824 = vld [vmem:[#allocation13 + $0x1a8] sm:$0xff]
    %v2825 = vld [vmem:[#allocation13 + $0x1b0] sm:$0xff]
    %v2826 = vld [vmem:[#allocation13 + $0x1b8] sm:$0xff]
    %v2827 = vld [vmem:[#allocation13 + $0x1c0] sm:$0xff]
    %v2828 = vld [vmem:[#allocation13 + $0x1c8] sm:$0xff]
    %v2829 = vld [vmem:[#allocation13 + $0x1d0] sm:$0xff]
    %v2830 = vld [vmem:[#allocation13 + $0x1d8] sm:$0xff]
    %v2831 = vld [vmem:[#allocation13 + $0x1e0] sm:$0xff]
    %v2832 = vld [vmem:[#allocation13 + $0x1e8] sm:$0xff]
    %v2833 = vld [vmem:[#allocation13 + $0x1f0] sm:$0xff]
    %v2834 = vld [vmem:[#allocation13 + $0x1f8] sm:$0xff]
    %v2835 = vld [vmem:[#allocation13 + $0x200] sm:$0xff]
    %v2836 = vld [vmem:[#allocation13 + $0x208] sm:$0xff]
    %v2837 = vld [vmem:[#allocation13 + $0x210] sm:$0xff]
    %v2838 = vld [vmem:[#allocation13 + $0x218] sm:$0xff]
    %v2839 = vld [vmem:[#allocation13 + $0x220] sm:$0xff]
    %v2840 = vld [vmem:[#allocation13 + $0x228] sm:$0xff]
    %v2841 = vld [vmem:[#allocation13 + $0x230] sm:$0xff]
    %v2842 = vld [vmem:[#allocation13 + $0x238] sm:$0xff]
    %v2843 = vld [vmem:[#allocation13 + $0x240] sm:$0xff]
    %v2844 = vld [vmem:[#allocation13 + $0x248] sm:$0xff]
    %v2845 = vld [vmem:[#allocation13 + $0x250] sm:$0xff]
    %v2846 = vld [vmem:[#allocation13 + $0x258] sm:$0xff]
    %v2847 = vld [vmem:[#allocation13 + $0x260] sm:$0xff]
    %v2848 = vld [vmem:[#allocation13 + $0x268] sm:$0xff]
    %v2849 = vld [vmem:[#allocation13 + $0x270] sm:$0xff]
    %v2850 = vld [vmem:[#allocation13 + $0x278] sm:$0xff]
    %v2851 = vunpack.c.l.s8.bf16 %v2771
    %v2852 = vunpack.c.l.s8.bf16 %v2772
    %v2853 = vunpack.c.l.s8.bf16 %v2773
    %v2854 = vunpack.c.l.s8.bf16 %v2774
    %v2855 = vunpack.c.l.s8.bf16 %v2775
    %v2856 = vunpack.c.h.s8.bf16 %v2771
    %v2857 = vunpack.c.h.s8.bf16 %v2772
    %v2858 = vunpack.c.h.s8.bf16 %v2773
    %v2859 = vunpack.c.h.s8.bf16 %v2774
    %v2860 = vunpack.c.h.s8.bf16 %v2775
    %v2861 = vunpack.c.l.s8.bf16 %v2776
    %v2862 = vunpack.c.l.s8.bf16 %v2777
    %v2863 = vunpack.c.l.s8.bf16 %v2778
    %v2864 = vunpack.c.l.s8.bf16 %v2779
    %v2865 = vunpack.c.l.s8.bf16 %v2780
    %v2866 = vunpack.c.h.s8.bf16 %v2776
    %v2867 = vunpack.c.h.s8.bf16 %v2777
    %v2868 = vunpack.c.h.s8.bf16 %v2778
    %v2869 = vunpack.c.h.s8.bf16 %v2779
    %v2870 = vunpack.c.h.s8.bf16 %v2780
    %v2871 = vunpack.c.l.s8.bf16 %v2781
    %v2872 = vunpack.c.l.s8.bf16 %v2782
    %v2873 = vunpack.c.l.s8.bf16 %v2783
    %v2874 = vunpack.c.l.s8.bf16 %v2784
    %v2875 = vunpack.c.l.s8.bf16 %v2785
    %v2876 = vunpack.c.h.s8.bf16 %v2781
    %v2877 = vunpack.c.h.s8.bf16 %v2782
    %v2878 = vunpack.c.h.s8.bf16 %v2783
    %v2879 = vunpack.c.h.s8.bf16 %v2784
    %v2880 = vunpack.c.h.s8.bf16 %v2785
    %v2881 = vunpack.c.l.s8.bf16 %v2786
    %v2882 = vunpack.c.l.s8.bf16 %v2787
    %v2883 = vunpack.c.l.s8.bf16 %v2788
    %v2884 = vunpack.c.l.s8.bf16 %v2789
    %v2885 = vunpack.c.l.s8.bf16 %v2790
    %v2886 = vunpack.c.h.s8.bf16 %v2786
    %v2887 = vunpack.c.h.s8.bf16 %v2787
    %v2888 = vunpack.c.h.s8.bf16 %v2788
    %v2889 = vunpack.c.h.s8.bf16 %v2789
    %v2890 = vunpack.c.h.s8.bf16 %v2790
    %v2891 = vunpack.c.l.s8.bf16 %v2791
    %v2892 = vunpack.c.l.s8.bf16 %v2792
    %v2893 = vunpack.c.l.s8.bf16 %v2793
    %v2894 = vunpack.c.l.s8.bf16 %v2794
    %v2895 = vunpack.c.l.s8.bf16 %v2795
    %v2896 = vunpack.c.h.s8.bf16 %v2791
    %v2897 = vunpack.c.h.s8.bf16 %v2792
    %v2898 = vunpack.c.h.s8.bf16 %v2793
    %v2899 = vunpack.c.h.s8.bf16 %v2794
    %v2900 = vunpack.c.h.s8.bf16 %v2795
    %v2901 = vunpack.c.l.s8.bf16 %v2796
    %v2902 = vunpack.c.l.s8.bf16 %v2797
    %v2903 = vunpack.c.l.s8.bf16 %v2798
    %v2904 = vunpack.c.l.s8.bf16 %v2799
    %v2905 = vunpack.c.l.s8.bf16 %v2800
    %v2906 = vunpack.c.h.s8.bf16 %v2796
    %v2907 = vunpack.c.h.s8.bf16 %v2797
    %v2908 = vunpack.c.h.s8.bf16 %v2798
    %v2909 = vunpack.c.h.s8.bf16 %v2799
    %v2910 = vunpack.c.h.s8.bf16 %v2800
    %v2911 = vunpack.c.l.s8.bf16 %v2801
    %v2912 = vunpack.c.l.s8.bf16 %v2802
    %v2913 = vunpack.c.l.s8.bf16 %v2803
    %v2914 = vunpack.c.l.s8.bf16 %v2804
    %v2915 = vunpack.c.l.s8.bf16 %v2805
    %v2916 = vunpack.c.h.s8.bf16 %v2801
    %v2917 = vunpack.c.h.s8.bf16 %v2802
    %v2918 = vunpack.c.h.s8.bf16 %v2803
    %v2919 = vunpack.c.h.s8.bf16 %v2804
    %v2920 = vunpack.c.h.s8.bf16 %v2805
    %v2921 = vunpack.c.l.s8.bf16 %v2806
    %v2922 = vunpack.c.l.s8.bf16 %v2807
    %v2923 = vunpack.c.l.s8.bf16 %v2808
    %v2924 = vunpack.c.l.s8.bf16 %v2809
    %v2925 = vunpack.c.l.s8.bf16 %v2810
    %v2926 = vunpack.c.h.s8.bf16 %v2806
    %v2927 = vunpack.c.h.s8.bf16 %v2807
    %v2928 = vunpack.c.h.s8.bf16 %v2808
    %v2929 = vunpack.c.h.s8.bf16 %v2809
    %v2930 = vunpack.c.h.s8.bf16 %v2810
    %v2931 = vunpack.c.l.s8.bf16 %v2811
    %v2932 = vunpack.c.l.s8.bf16 %v2812
    %v2933 = vunpack.c.l.s8.bf16 %v2813
    %v2934 = vunpack.c.l.s8.bf16 %v2814
    %v2935 = vunpack.c.l.s8.bf16 %v2815
    %v2936 = vunpack.c.h.s8.bf16 %v2811
    %v2937 = vunpack.c.h.s8.bf16 %v2812
    %v2938 = vunpack.c.h.s8.bf16 %v2813
    %v2939 = vunpack.c.h.s8.bf16 %v2814
    %v2940 = vunpack.c.h.s8.bf16 %v2815
    %v2941 = vunpack.c.l.s8.bf16 %v2816
    %v2942 = vunpack.c.l.s8.bf16 %v2817
    %v2943 = vunpack.c.l.s8.bf16 %v2818
    %v2944 = vunpack.c.l.s8.bf16 %v2819
    %v2945 = vunpack.c.l.s8.bf16 %v2820
    %v2946 = vunpack.c.h.s8.bf16 %v2816
    %v2947 = vunpack.c.h.s8.bf16 %v2817
    %v2948 = vunpack.c.h.s8.bf16 %v2818
    %v2949 = vunpack.c.h.s8.bf16 %v2819
    %v2950 = vunpack.c.h.s8.bf16 %v2820
    %v2951 = vunpack.c.l.s8.bf16 %v2821
    %v2952 = vunpack.c.l.s8.bf16 %v2822
    %v2953 = vunpack.c.l.s8.bf16 %v2823
    %v2954 = vunpack.c.l.s8.bf16 %v2824
    %v2955 = vunpack.c.l.s8.bf16 %v2825
    %v2956 = vunpack.c.h.s8.bf16 %v2821
    %v2957 = vunpack.c.h.s8.bf16 %v2822
    %v2958 = vunpack.c.h.s8.bf16 %v2823
    %v2959 = vunpack.c.h.s8.bf16 %v2824
    %v2960 = vunpack.c.h.s8.bf16 %v2825
    %v2961 = vunpack.c.l.s8.bf16 %v2826
    %v2962 = vunpack.c.l.s8.bf16 %v2827
    %v2963 = vunpack.c.l.s8.bf16 %v2828
    %v2964 = vunpack.c.l.s8.bf16 %v2829
    %v2965 = vunpack.c.l.s8.bf16 %v2830
    %v2966 = vunpack.c.h.s8.bf16 %v2826
    %v2967 = vunpack.c.h.s8.bf16 %v2827
    %v2968 = vunpack.c.h.s8.bf16 %v2828
    %v2969 = vunpack.c.h.s8.bf16 %v2829
    %v2970 = vunpack.c.h.s8.bf16 %v2830
    %v2971 = vunpack.c.l.s8.bf16 %v2831
    %v2972 = vunpack.c.l.s8.bf16 %v2832
    %v2973 = vunpack.c.l.s8.bf16 %v2833
    %v2974 = vunpack.c.l.s8.bf16 %v2834
    %v2975 = vunpack.c.l.s8.bf16 %v2835
    %v2976 = vunpack.c.h.s8.bf16 %v2831
    %v2977 = vunpack.c.h.s8.bf16 %v2832
    %v2978 = vunpack.c.h.s8.bf16 %v2833
    %v2979 = vunpack.c.h.s8.bf16 %v2834
    %v2980 = vunpack.c.h.s8.bf16 %v2835
    %v2981 = vunpack.c.l.s8.bf16 %v2836
    %v2982 = vunpack.c.l.s8.bf16 %v2837
    %v2983 = vunpack.c.l.s8.bf16 %v2838
    %v2984 = vunpack.c.l.s8.bf16 %v2839
    %v2985 = vunpack.c.l.s8.bf16 %v2840
    %v2986 = vunpack.c.h.s8.bf16 %v2836
    %v2987 = vunpack.c.h.s8.bf16 %v2837
    %v2988 = vunpack.c.h.s8.bf16 %v2838
    %v2989 = vunpack.c.h.s8.bf16 %v2839
    %v2990 = vunpack.c.h.s8.bf16 %v2840
    %v2991 = vunpack.c.l.s8.bf16 %v2841
    %v2992 = vunpack.c.l.s8.bf16 %v2842
    %v2993 = vunpack.c.l.s8.bf16 %v2843
    %v2994 = vunpack.c.l.s8.bf16 %v2844
    %v2995 = vunpack.c.l.s8.bf16 %v2845
    %v2996 = vunpack.c.h.s8.bf16 %v2841
    %v2997 = vunpack.c.h.s8.bf16 %v2842
    %v2998 = vunpack.c.h.s8.bf16 %v2843
    %v2999 = vunpack.c.h.s8.bf16 %v2844
    %v3000 = vunpack.c.h.s8.bf16 %v2845
    %v3001 = vunpack.c.l.s8.bf16 %v2846
    %v3002 = vunpack.c.l.s8.bf16 %v2847
    %v3003 = vunpack.c.l.s8.bf16 %v2848
    %v3004 = vunpack.c.l.s8.bf16 %v2849
    %v3005 = vunpack.c.l.s8.bf16 %v2850
    %v3006 = vunpack.c.h.s8.bf16 %v2846
    %v3007 = vunpack.c.h.s8.bf16 %v2847
    %v3008 = vunpack.c.h.s8.bf16 %v2848
    %v3009 = vunpack.c.h.s8.bf16 %v2849
    %v3010 = vunpack.c.h.s8.bf16 %v2850
    %v3011 = vpack.c.bf16 %v2767, %v2767
    %v3012 = vpack.c.bf16 %v2768, %v2768
    %v3013 = vpack.c.bf16 %v2769, %v2769
    %v3014 = vpack.c.bf16 %v2770, %v2770
    %3015 = vmatprep.subr.bf16.mxu0 %v2887
    %3016 = vmatpush1.bf16.msra.mxu0 %v2886
    %3017 = vmatprep.subr.bf16.mxu0 %v2882
    %3018 = vmatpush1.bf16.msra.mxu0 %v2881
    %3019 = vmatprep.subr.bf16.mxu0 %v2877
    %3020 = vmatpush1.bf16.msra.mxu0 %v2876
    %3021 = vmatprep.subr.bf16.mxu0 %v2872
    %3022 = vmatpush1.bf16.msra.mxu0 %v2871
    %3023 = vmatprep.subr.bf16.mxu0 %v2867
    %3024 = vmatpush1.bf16.msra.mxu0 %v2866
    %3025 = vmatprep.subr.bf16.mxu0 %v2862
    %3026 = vmatpush1.bf16.msra.mxu0 %v2861
    %3027 = vmatprep.subr.bf16.mxu0 %v2857
    %3028 = vmatpush1.bf16.msra.mxu0 %v2856
    %3029 = vmatprep.subr.bf16.mxu0 %v2852
    %3030 = vmatpush1.bf16.msra.mxu0 %v2851
    %3031 = vmatprep.subr.bf16.mxu0 %v2927
    %3032 = vmatpush2.bf16.msra.mxu0 %v2926
    %3033 = vmatprep.subr.bf16.mxu0 %v2922
    %3034 = vmatpush2.bf16.msra.mxu0 %v2921
    %3035 = vmatprep.subr.bf16.mxu0 %v2917
    %3036 = vmatpush2.bf16.msra.mxu0 %v2916
    %3037 = vmatprep.subr.bf16.mxu0 %v2912
    %3038 = vmatpush2.bf16.msra.mxu0 %v2911
    %3039 = vmatprep.subr.bf16.mxu0 %v2907
    %3040 = vmatpush2.bf16.msra.mxu0 %v2906
    %3041 = vmatprep.subr.bf16.mxu0 %v2902
    %3042 = vmatpush2.bf16.msra.mxu0 %v2901
    %3043 = vmatprep.subr.bf16.mxu0 %v2897
    %3044 = vmatpush2.bf16.msra.mxu0 %v2896
    %3045 = vmatprep.subr.bf16.mxu0 %v2892
    %3046 = vmatpush2.bf16.msra.mxu0 %v2891
    %3047 = vmatprep.mubr.bf16.mxu0 %v3012
    %3048 = vmatmul.mubr.bf16.gmra.mxu0 %v3011
    %v3049 = vpop.f32.mrf.mxu0
    %v3050 = vadd.f32 0.0, %v3049
    %v3051 = vpop.f32.mrf.mxu0
    %v3052 = vadd.f32 0.0, %v3051
    %v3053 = vpop.f32.mrf.mxu0
    %v3054 = vpop.f32.mrf.mxu0
    %3055 = vdwg.mxu0
    %3056 = vmatprep.subr.bf16.mxu0 %v2967
    %3057 = vmatpush1.bf16.msra.mxu0 %v2966
    %3058 = vmatprep.subr.bf16.mxu0 %v2962
    %3059 = vmatpush1.bf16.msra.mxu0 %v2961
    %3060 = vmatprep.subr.bf16.mxu0 %v2957
    %3061 = vmatpush1.bf16.msra.mxu0 %v2956
    %3062 = vmatprep.subr.bf16.mxu0 %v2952
    %3063 = vmatpush1.bf16.msra.mxu0 %v2951
    %3064 = vmatprep.subr.bf16.mxu0 %v2947
    %3065 = vmatpush1.bf16.msra.mxu0 %v2946
    %3066 = vmatprep.subr.bf16.mxu0 %v2942
    %3067 = vmatpush1.bf16.msra.mxu0 %v2941
    %3068 = vmatprep.subr.bf16.mxu0 %v2937
    %3069 = vmatpush1.bf16.msra.mxu0 %v2936
    %3070 = vmatprep.subr.bf16.mxu0 %v2932
    %3071 = vmatpush1.bf16.msra.mxu0 %v2931
    %3072 = vmatprep.subr.bf16.mxu0 %v3007
    %3073 = vmatpush2.bf16.msra.mxu0 %v3006
    %3074 = vmatprep.subr.bf16.mxu0 %v3002
    %3075 = vmatpush2.bf16.msra.mxu0 %v3001
    %3076 = vmatprep.subr.bf16.mxu0 %v2997
    %3077 = vmatpush2.bf16.msra.mxu0 %v2996
    %3078 = vmatprep.subr.bf16.mxu0 %v2992
    %3079 = vmatpush2.bf16.msra.mxu0 %v2991
    %3080 = vmatprep.subr.bf16.mxu0 %v2987
    %3081 = vmatpush2.bf16.msra.mxu0 %v2986
    %3082 = vmatprep.subr.bf16.mxu0 %v2982
    %3083 = vmatpush2.bf16.msra.mxu0 %v2981
    %3084 = vmatprep.subr.bf16.mxu0 %v2977
    %3085 = vmatpush2.bf16.msra.mxu0 %v2976
    %3086 = vmatprep.subr.bf16.mxu0 %v2972
    %3087 = vmatpush2.bf16.msra.mxu0 %v2971
    %3088 = vmatprep.mubr.bf16.mxu0 %v3014
    %3089 = vmatmul.mubr.bf16.gmra.mxu0 %v3013
    %v3090 = vpop.f32.mrf.mxu0
    %v3091 = vadd.f32 %v3050, %v3090
    %v3092 = vpop.f32.mrf.mxu0
    %v3093 = vadd.f32 %v3052, %v3092
    %v3094 = vpop.f32.mrf.mxu0
    %v3095 = vpop.f32.mrf.mxu0
    %3096 = vdwg.mxu0
    %3097 = vmatprep.subr.bf16.mxu0 %v2889
    %3098 = vmatpush1.bf16.msra.mxu0 %v2888
    %3099 = vmatprep.subr.bf16.mxu0 %v2884
    %3100 = vmatpush1.bf16.msra.mxu0 %v2883
    %3101 = vmatprep.subr.bf16.mxu0 %v2879
    %3102 = vmatpush1.bf16.msra.mxu0 %v2878
    %3103 = vmatprep.subr.bf16.mxu0 %v2874
    %3104 = vmatpush1.bf16.msra.mxu0 %v2873
    %3105 = vmatprep.subr.bf16.mxu0 %v2869
    %3106 = vmatpush1.bf16.msra.mxu0 %v2868
    %3107 = vmatprep.subr.bf16.mxu0 %v2864
    %3108 = vmatpush1.bf16.msra.mxu0 %v2863
    %3109 = vmatprep.subr.bf16.mxu0 %v2859
    %3110 = vmatpush1.bf16.msra.mxu0 %v2858
    %3111 = vmatprep.subr.bf16.mxu0 %v2854
    %3112 = vmatpush1.bf16.msra.mxu0 %v2853
    %3113 = vmatprep.subr.bf16.mxu0 %v2929
    %3114 = vmatpush2.bf16.msra.mxu0 %v2928
    %3115 = vmatprep.subr.bf16.mxu0 %v2924
    %3116 = vmatpush2.bf16.msra.mxu0 %v2923
    %3117 = vmatprep.subr.bf16.mxu0 %v2919
    %3118 = vmatpush2.bf16.msra.mxu0 %v2918
    %3119 = vmatprep.subr.bf16.mxu0 %v2914
    %3120 = vmatpush2.bf16.msra.mxu0 %v2913
    %3121 = vmatprep.subr.bf16.mxu0 %v2909
    %3122 = vmatpush2.bf16.msra.mxu0 %v2908
    %3123 = vmatprep.subr.bf16.mxu0 %v2904
    %3124 = vmatpush2.bf16.msra.mxu0 %v2903
    %3125 = vmatprep.subr.bf16.mxu0 %v2899
    %3126 = vmatpush2.bf16.msra.mxu0 %v2898
    %3127 = vmatprep.subr.bf16.mxu0 %v2894
    %3128 = vmatpush2.bf16.msra.mxu0 %v2893
    %3129 = vmatprep.mubr.bf16.mxu0 %v3012
    %3130 = vmatmul.mubr.bf16.gmra.mxu0 %v3011
    %v3131 = vpop.f32.mrf.mxu0
    %v3132 = vadd.f32 0.0, %v3131
    %v3133 = vpop.f32.mrf.mxu0
    %v3134 = vadd.f32 0.0, %v3133
    %v3135 = vpop.f32.mrf.mxu0
    %v3136 = vpop.f32.mrf.mxu0
    %3137 = vdwg.mxu0
    %3138 = vmatprep.subr.bf16.mxu0 %v2969
    %3139 = vmatpush1.bf16.msra.mxu0 %v2968
    %3140 = vmatprep.subr.bf16.mxu0 %v2964
    %3141 = vmatpush1.bf16.msra.mxu0 %v2963
    %3142 = vmatprep.subr.bf16.mxu0 %v2959
    %3143 = vmatpush1.bf16.msra.mxu0 %v2958
    %3144 = vmatprep.subr.bf16.mxu0 %v2954
    %3145 = vmatpush1.bf16.msra.mxu0 %v2953
    %3146 = vmatprep.subr.bf16.mxu0 %v2949
    %3147 = vmatpush1.bf16.msra.mxu0 %v2948
    %3148 = vmatprep.subr.bf16.mxu0 %v2944
    %3149 = vmatpush1.bf16.msra.mxu0 %v2943
    %3150 = vmatprep.subr.bf16.mxu0 %v2939
    %3151 = vmatpush1.bf16.msra.mxu0 %v2938
    %3152 = vmatprep.subr.bf16.mxu0 %v2934
    %3153 = vmatpush1.bf16.msra.mxu0 %v2933
    %3154 = vmatprep.subr.bf16.mxu0 %v3009
    %3155 = vmatpush2.bf16.msra.mxu0 %v3008
    %3156 = vmatprep.subr.bf16.mxu0 %v3004
    %3157 = vmatpush2.bf16.msra.mxu0 %v3003
    %3158 = vmatprep.subr.bf16.mxu0 %v2999
    %3159 = vmatpush2.bf16.msra.mxu0 %v2998
    %3160 = vmatprep.subr.bf16.mxu0 %v2994
    %3161 = vmatpush2.bf16.msra.mxu0 %v2993
    %3162 = vmatprep.subr.bf16.mxu0 %v2989
    %3163 = vmatpush2.bf16.msra.mxu0 %v2988
    %3164 = vmatprep.subr.bf16.mxu0 %v2984
    %3165 = vmatpush2.bf16.msra.mxu0 %v2983
    %3166 = vmatprep.subr.bf16.mxu0 %v2979
    %3167 = vmatpush2.bf16.msra.mxu0 %v2978
    %3168 = vmatprep.subr.bf16.mxu0 %v2974
    %3169 = vmatpush2.bf16.msra.mxu0 %v2973
    %3170 = vmatprep.mubr.bf16.mxu0 %v3014
    %3171 = vmatmul.mubr.bf16.gmra.mxu0 %v3013
    %v3172 = vpop.f32.mrf.mxu0
    %v3173 = vadd.f32 %v3132, %v3172
    %v3174 = vpop.f32.mrf.mxu0
    %v3175 = vadd.f32 %v3134, %v3174
    %v3176 = vpop.f32.mrf.mxu0
    %v3177 = vpop.f32.mrf.mxu0
    %3178 = vdwg.mxu0
    %3179 = vmatprep.subr.bf16.mxu0 0
    %3180 = vmatpush1.bf16.msra.mxu0 %v2890
    %3181 = vmatprep.subr.bf16.mxu0 0
    %3182 = vmatpush1.bf16.msra.mxu0 %v2885
    %3183 = vmatprep.subr.bf16.mxu0 0
    %3184 = vmatpush1.bf16.msra.mxu0 %v2880
    %3185 = vmatprep.subr.bf16.mxu0 0
    %3186 = vmatpush1.bf16.msra.mxu0 %v2875
    %3187 = vmatprep.subr.bf16.mxu0 0
    %3188 = vmatpush1.bf16.msra.mxu0 %v2870
    %3189 = vmatprep.subr.bf16.mxu0 0
    %3190 = vmatpush1.bf16.msra.mxu0 %v2865
    %3191 = vmatprep.subr.bf16.mxu0 0
    %3192 = vmatpush1.bf16.msra.mxu0 %v2860
    %3193 = vmatprep.subr.bf16.mxu0 0
    %3194 = vmatpush1.bf16.msra.mxu0 %v2855
    %3195 = vmatprep.subr.bf16.mxu0 0
    %3196 = vmatpush2.bf16.msra.mxu0 %v2930
    %3197 = vmatprep.subr.bf16.mxu0 0
    %3198 = vmatpush2.bf16.msra.mxu0 %v2925
    %3199 = vmatprep.subr.bf16.mxu0 0
    %3200 = vmatpush2.bf16.msra.mxu0 %v2920
    %3201 = vmatprep.subr.bf16.mxu0 0
    %3202 = vmatpush2.bf16.msra.mxu0 %v2915
    %3203 = vmatprep.subr.bf16.mxu0 0
    %3204 = vmatpush2.bf16.msra.mxu0 %v2910
    %3205 = vmatprep.subr.bf16.mxu0 0
    %3206 = vmatpush2.bf16.msra.mxu0 %v2905
    %3207 = vmatprep.subr.bf16.mxu0 0
    %3208 = vmatpush2.bf16.msra.mxu0 %v2900
    %3209 = vmatprep.subr.bf16.mxu0 0
    %3210 = vmatpush2.bf16.msra.mxu0 %v2895
    %3211 = vmatprep.mubr.bf16.mxu0 %v3012
    %3212 = vmatmul.mubr.bf16.gmra.mxu0 %v3011
    %v3213 = vpop.f32.mrf.mxu0
    %v3214 = vadd.f32 0.0, %v3213
    %v3215 = vpop.f32.mrf.mxu0
    %v3216 = vpop.f32.mrf.mxu0
    %v3217 = vpop.f32.mrf.mxu0
    %3218 = vdwg.mxu0
    %3219 = vmatprep.subr.bf16.mxu0 0
    %3220 = vmatpush1.bf16.msra.mxu0 %v2970
    %3221 = vmatprep.subr.bf16.mxu0 0
    %3222 = vmatpush1.bf16.msra.mxu0 %v2965
    %3223 = vmatprep.subr.bf16.mxu0 0
    %3224 = vmatpush1.bf16.msra.mxu0 %v2960
    %3225 = vmatprep.subr.bf16.mxu0 0
    %3226 = vmatpush1.bf16.msra.mxu0 %v2955
    %3227 = vmatprep.subr.bf16.mxu0 0
    %3228 = vmatpush1.bf16.msra.mxu0 %v2950
    %3229 = vmatprep.subr.bf16.mxu0 0
    %3230 = vmatpush1.bf16.msra.mxu0 %v2945
    %3231 = vmatprep.subr.bf16.mxu0 0
    %3232 = vmatpush1.bf16.msra.mxu0 %v2940
    %3233 = vmatprep.subr.bf16.mxu0 0
    %3234 = vmatpush1.bf16.msra.mxu0 %v2935
    %3235 = vmatprep.subr.bf16.mxu0 0
    %3236 = vmatpush2.bf16.msra.mxu0 %v3010
    %3237 = vmatprep.subr.bf16.mxu0 0
    %3238 = vmatpush2.bf16.msra.mxu0 %v3005
    %3239 = vmatprep.subr.bf16.mxu0 0
    %3240 = vmatpush2.bf16.msra.mxu0 %v3000
    %3241 = vmatprep.subr.bf16.mxu0 0
    %3242 = vmatpush2.bf16.msra.mxu0 %v2995
    %3243 = vmatprep.subr.bf16.mxu0 0
    %3244 = vmatpush2.bf16.msra.mxu0 %v2990
    %3245 = vmatprep.subr.bf16.mxu0 0
    %3246 = vmatpush2.bf16.msra.mxu0 %v2985
    %3247 = vmatprep.subr.bf16.mxu0 0
    %3248 = vmatpush2.bf16.msra.mxu0 %v2980
    %3249 = vmatprep.subr.bf16.mxu0 0
    %3250 = vmatpush2.bf16.msra.mxu0 %v2975
    %3251 = vmatprep.mubr.bf16.mxu0 %v3014
    %3252 = vmatmul.mubr.bf16.gmra.mxu0 %v3013
    %v3253 = vpop.f32.mrf.mxu0
    %v3254 = vadd.f32 %v3214, %v3253
    %v3255 = vpop.f32.mrf.mxu0
    %v3256 = vpop.f32.mrf.mxu0
    %v3257 = vpop.f32.mrf.mxu0
    %3258 = vdwg.mxu0
    %v3259 = vld [vmem:[%s7] sm:$0x1f]
    %v3261 = vlaneseq
    %v3262 = vshrl.u32 %v3261, 7
    %v3263 = vsub.s32 0, %v3262
    %v3264 = vrot.slane %v3259, %v3263
    %v3265 = vlaneseq
    %v3266 = vshrl.u32 %v3265, 7
    %v3267 = vsub.s32 1, %v3266
    %v3268 = vrot.slane %v3259, %v3267
    %v3269 = vlaneseq
    %v3270 = vshrl.u32 %v3269, 7
    %v3271 = vsub.s32 2, %v3270
    %v3272 = vrot.slane %v3259, %v3271
    %v3273 = vlaneseq
    %v3274 = vshrl.u32 %v3273, 7
    %v3275 = vsub.s32 3, %v3274
    %v3276 = vrot.slane %v3259, %v3275
    %v3277 = vlaneseq
    %v3278 = vshrl.u32 %v3277, 7
    %v3279 = vsub.s32 4, %v3278
    %v3280 = vrot.slane %v3259, %v3279
    %v3286 = vmul.f32 %v3091, %v3264
    %v3287 = vmul.f32 %v3093, %v3268
    %v3288 = vmul.f32 %v3173, %v3272
    %v3289 = vmul.f32 %v3175, %v3276
    %v3290 = vmul.f32 %v3254, %v3280
    %v3291 = vld [vmem:[%s8] sm:$0x1f]
    %v3293 = vlaneseq
    %v3294 = vshrl.u32 %v3293, 7
    %v3295 = vsub.s32 0, %v3294
    %v3296 = vrot.slane %v3291, %v3295
    %v3297 = vlaneseq
    %v3298 = vshrl.u32 %v3297, 7
    %v3299 = vsub.s32 1, %v3298
    %v3300 = vrot.slane %v3291, %v3299
    %v3301 = vlaneseq
    %v3302 = vshrl.u32 %v3301, 7
    %v3303 = vsub.s32 2, %v3302
    %v3304 = vrot.slane %v3291, %v3303
    %v3305 = vlaneseq
    %v3306 = vshrl.u32 %v3305, 7
    %v3307 = vsub.s32 3, %v3306
    %v3308 = vrot.slane %v3291, %v3307
    %v3309 = vlaneseq
    %v3310 = vshrl.u32 %v3309, 7
    %v3311 = vsub.s32 4, %v3310
    %v3312 = vrot.slane %v3291, %v3311
    %v3318 = vadd.f32 %v3286, %v3296
    %v3319 = vadd.f32 %v3287, %v3300
    %v3320 = vadd.f32 %v3288, %v3304
    %v3321 = vadd.f32 %v3289, %v3308
    %v3322 = vadd.f32 %v3290, %v3312
    %v3328 = vcombine.low %v3318, %v3319
    %v3329 = vcombine.low %v3320, %v3321
    %v3331 = vunpack.c.l.s4 1983009808
    %v3332 = vunpack.c.0.s8 %v3331
    %v3333 = vlaneseq
    %v3334 = vshrl.u32 %v3333, 7
    %v3335 = vsub.s32 %v3332, %v3334
    %v3336 = vrot.slane %v3328, %v3335
    %v3338 = vunpack.c.l.s4 1983009808
    %v3339 = vunpack.c.0.s8 %v3338
    %v3340 = vlaneseq
    %v3341 = vshrl.u32 %v3340, 7
    %v3342 = vsub.s32 %v3339, %v3341
    %v3343 = vrot.slane %v3329, %v3342
    %v3344 = vcombine.low %v3336, %v3343
    %v3346 = vunpack.c.l.s4 1983009808
    %v3347 = vunpack.c.0.s8 %v3346
    %v3348 = vlaneseq
    %v3349 = vshrl.u32 %v3348, 7
    %v3350 = vsub.s32 %v3347, %v3349
    %v3351 = vrot.slane %v3322, %v3350
    %3354 = vst [vmem:[#allocation14] sm:$0xff] %v3344
    %3355 = vst [vmem:[#allocation14 + $0x8] sm:$0x3] %v3351
    // Predicated region
    $region66: #{tpu_custom_call.1} parent=1 // pred_check
      _
    $region67: #{tpu_custom_call.1} parent=1 // pred_check_branch
      %3357 = sbr.rel (0) target = $region69
    $region68: #{tpu_custom_call.1} parent=1 // pred_region
      %s3359 = ssub.s32 160, 160
      %3360 = vsyncadd [#allocation4], %s3359
      %s3362 = sshll.u32 [#allocation14], 4
      %s3363 = int_to_ptr.vmem [resolvable:$true] %s3362
      %3365 = dma.vmem_to_hbm [thread:$0]  %s3363, 160, %s9, [#allocation4]
    $region69: #{tpu_custom_call.1} parent=1 // pred_fallthru
      _
    // Predicated region
    $region70: #{tpu_custom_call.1} parent=1 // pred_check
      _
    $region71: #{tpu_custom_call.1} parent=1 // pred_check_branch
      %3367 = sbr.rel (0) target = $region73
    $region72: #{tpu_custom_call.1} parent=1 // pred_region
      %3368 = dma.done [#allocation4], 160
    $region73: #{tpu_custom_call.1} parent=1 // pred_fallthru
      _
    %3369 = vsyncpa [#allocation3], 1
    %3370 = vsyncpa [#allocation6], 1
    %3371 = vsyncpa [#allocation9], 1
    %3372 = vsyncpa [#allocation12], 1
    %3373 = vsyncpa [#allocation4], 1

</llo_original>
